<compile_context>
chip_gen: v7x
topology: tpu7x:2x2x1
jax: 0.10.0
libtpu: 0.0.40
codegen_flags: <defaults>
</compile_context>

<pallas_src>
import math
import functools

import jax
import jax.numpy as jnp
from jax import lax
from jax.experimental import pallas as pl
from jax.experimental.pallas import tpu as pltpu


def _layer_norm(v, g, b, eps=1e-5):
    mu = jnp.mean(v, axis=-1, keepdims=True)
    var = jnp.mean((v - mu) ** 2, axis=-1, keepdims=True)
    return (v - mu) * lax.rsqrt(var + eps) * g + b


def _decoder_kernel(H, dh, kclip, c_valid,
                    xq_ref, sa_kT_ref, sa_v_ref, ca_kT_ref, ca_v_ref,
                    s_wq, s_bq, s_wo, s_bo, s_relT, s_g, s_b,
                    c_wq, c_bq, c_wo, c_bo, c_relT, c_g, c_b,
                    f_w1, f_b1, f_w2, f_b2, f_g, f_b,
                    o_ref, attw_ref):
    cdt = s_wq.dtype                       # compute (MXU-operand) dtype
    xq = xq_ref[0].astype(jnp.float32)     # (TQ, D) query rows of this grid step
    TQ, D = xq.shape
    scale = 1.0 / math.sqrt(dh)
    row0 = pl.program_id(1) * TQ           # global row offset of this q-tile

    def mha(q_in, kT, v, wq, bq, wo, bo, relT, causal, n_valid, exact_softmax):
        Sk = kT.shape[-1]
        # q projection; 1/sqrt(dh) folded into q (cheaper than scaling scores)
        q = (jnp.dot(q_in.astype(cdt), wq[...],
                     preferred_element_type=jnp.float32) + bq[...]) * scale
        qh = q.reshape(TQ, H, dh).astype(cdt)

        # content-content scores (K passed pre-projected, head-major, transposed)
        scores = jnp.einsum('qhd,hdk->hqk', qh, kT,
                            preferred_element_type=jnp.float32)        # (H,TQ,Sk)

        # Shaw relative-position bias: one matmul against the (dh, 2k+1) table,
        # then a clipped-distance select-add (no (TQ,Sk,dh) tensor is built).
        rs = jnp.einsum('qhd,dr->hqr', qh, relT[...],
                        preferred_element_type=jnp.float32)            # (H,TQ,R)
        rows = row0 + lax.broadcasted_iota(jnp.int32, (TQ, Sk), 0)
        cols = lax.broadcasted_iota(jnp.int32, (TQ, Sk), 1)
        dist = cols - rows
        ridx = jnp.clip(dist, -kclip, kclip) + kclip                   # (TQ,Sk)

        # For causal attention, buckets with dist >= 1 only touch positions that
        # get -1e30 anyway, so the loop stops at r == kclip (2x fewer passes).
        # TODO(synk): replace with a skew (pad/reshape) gather once cross-lane
        # reshapes are reliably supported by the lowering.
        r_hi = kclip if causal else 2 * kclip
        for r in range(r_hi + 1):
            scores = scores + jnp.where((ridx == r)[None],
                                        rs[:, :, r][:, :, None], 0.0)

        # single combined additive mask (causal + key padding): one pass
        if causal or (n_valid < Sk):
            madd = jnp.zeros((TQ, Sk), jnp.float32)
            if causal:
                madd = jnp.where(dist <= 0, madd, -1e30)
            if n_valid < Sk:          # static: mask lane-padded context keys
                madd = jnp.where(cols < n_valid, madd, -1e30)
            scores = scores + madd[None]

        # TODO(synk): for very long sequences, add a K-block loop with online
        # softmax (and skip blocks above the causal diagonal) so scores stay
        # O(H*TQ*TK) instead of O(H*TQ*Sk).
        m = jnp.max(scores, axis=-1, keepdims=True)
        p = jnp.exp(scores - m)
        denom = jnp.sum(p, axis=-1, keepdims=True)
        if exact_softmax:             # returned weights: exact normalization
            p = p / denom
        else:
            p = p * pl.reciprocal(denom, approx=True)

        out = jnp.einsum('hqk,hkd->qhd', p.astype(cdt), v,
                         preferred_element_type=jnp.float32).reshape(TQ, D)
        out = jnp.dot(out.astype(cdt), wo[...],
                      preferred_element_type=jnp.float32) + bo[...]
        return out, p

    # --- causal self-attention + add & norm ---
    sa_out, _ = mha(xq, sa_kT_ref[0], sa_v_ref[0], s_wq, s_bq, s_wo, s_bo, s_relT,
                    causal=True, n_valid=sa_kT_ref.shape[-1], exact_softmax=False)
    x1 = _layer_norm(xq + sa_out, s_g[...], s_b[...])

    # --- cross-attention + add & norm ---
    # TODO(synk): optional padding `mask` argument of Decoder.forward is not
    # plumbed (the reference forward is exercised with mask=None).
    ca_out, attw = mha(x1, ca_kT_ref[0], ca_v_ref[0], c_wq, c_bq, c_wo, c_bo, c_relT,
                       causal=False, n_valid=c_valid, exact_softmax=True)
    x2 = _layer_norm(x1 + ca_out, c_g[...], c_b[...])

    # --- feed-forward + add & norm ---
    h = jnp.maximum(jnp.dot(x2.astype(cdt), f_w1[...],
                            preferred_element_type=jnp.float32) + f_b1[...], 0.0)
    ff = jnp.dot(h.astype(cdt), f_w2[...],
                 preferred_element_type=jnp.float32) + f_b2[...]
    x3 = _layer_norm(x2 + ff, f_g[...], f_b[...])

    o_ref[0] = x3.astype(o_ref.dtype)
    attw_ref[0] = attw.astype(attw_ref.dtype)


def _supports_buffered():
    """Cheap constructor probe (no kernel compile/run, no error masking)."""
    if not hasattr(pl, "Buffered"):
        return False
    try:
        pl.BlockSpec((8, 128), lambda i: (0, 0), pipeline_mode=pl.Buffered(1))
        return True
    except (TypeError, ValueError):
        return False


_BUFFERED_KW = {"pipeline_mode": pl.Buffered(1)} if _supports_buffered() else {}


def _vmem_limit_bytes():
    """Generation-aware scoped-VMEM budget (v7x: ~40 MiB; v5e/v6e: 96 MiB)."""
    try:
        cap = int(pltpu.get_tpu_info().vmem_capacity_bytes)
    except Exception:
        return 48 * 1024 * 1024
    return max(32 * 1024 * 1024, min(cap - 24 * 1024 * 1024, 96 * 1024 * 1024))


def decoder_forward(x, context, params, *, num_heads, k, tq=None, compute_dtype=None):
    B, S, D = x.shape
    Bc, C, Dc = context.shape
    assert Bc == B and Dc == D
    H = num_heads
    assert D % H == 0
    dh = D // H

    # q-block tile size
    if tq is None:
        tq = 128 if (S % 128 == 0) else S
    assert S % tq == 0 and (tq % 8 == 0 or tq == S)
    nq = S // tq

    # lane-dense context / attention-weight padding (multiple of 128 lanes)
    c_pad = ((C + 127) // 128) * 128

    # MXU operand dtype: follows activations unless overridden (bf16 recommended)
    cdt = jnp.dtype(compute_dtype) if compute_dtype is not None else x.dtype

    # ---- K/V projections hoisted out of the q-tile loop (once per batch) ----
    def project_kv(src, p, pad_to):
        Sk = src.shape[1]
        kk = jnp.einsum('bsd,df->bsf', src.astype(cdt), p['wk'].astype(cdt),
                        preferred_element_type=jnp.float32) + p['bk']
        vv = jnp.einsum('bsd,df->bsf', src.astype(cdt), p['wv'].astype(cdt),
                        preferred_element_type=jnp.float32) + p['bv']
        kk = kk.reshape(B, Sk, H, dh)
        vv = vv.reshape(B, Sk, H, dh)
        kT = jnp.transpose(kk, (0, 2, 3, 1))          # (B, H, dh, Sk)
        v = jnp.transpose(vv, (0, 2, 1, 3))           # (B, H, Sk, dh)
        if pad_to > Sk:
            kT = jnp.pad(kT, ((0, 0), (0, 0), (0, 0), (0, pad_to - Sk)))
            v = jnp.pad(v, ((0, 0), (0, 0), (0, pad_to - Sk), (0, 0)))
        return kT.astype(cdt), v.astype(cdt)

    sa_kT, sa_v = project_kv(x, params['self'], S)
    ca_kT, ca_v = project_kv(context, params['cross'], c_pad)

    def attn_weights(p):
        return [p['wq'].astype(cdt), p['bq'].astype(jnp.float32),
                p['wo'].astype(cdt), p['bo'].astype(jnp.float32),
                jnp.transpose(p['rel_emb']).astype(cdt),   # (dh, 2k+1)
                p['ln_g'].astype(jnp.float32), p['ln_b'].astype(jnp.float32)]

    fp = params['ffn']
    weight_list = (attn_weights(params['self']) + attn_weights(params['cross']) +
                   [fp['w1'].astype(cdt), fp['b1'].astype(jnp.float32),
                    fp['w2'].astype(cdt), fp['b2'].astype(jnp.float32),
                    fp['ln_g'].astype(jnp.float32), fp['ln_b'].astype(jnp.float32)])

    def const_spec(a):    # grid-invariant operand: single-buffered
        n = a.ndim
        return pl.BlockSpec(a.shape, lambda b, q, _n=n: (0,) * _n, **_BUFFERED_KW)

    def batch_spec(a):    # changes only with the batch index: single-buffered
        n = a.ndim
        return pl.BlockSpec((1,) + a.shape[1:],
                            lambda b, q, _n=n: (b,) + (0,) * (_n - 1), **_BUFFERED_KW)

    in_specs = ([pl.BlockSpec((1, tq, D), lambda b, q: (b, q, 0)),   # query rows
                 batch_spec(sa_kT), batch_spec(sa_v),
                 batch_spec(ca_kT), batch_spec(ca_v)]
                + [const_spec(w) for w in weight_list])

    out_specs = (pl.BlockSpec((1, tq, D), lambda b, q: (b, q, 0)),
                 pl.BlockSpec((1, H, tq, c_pad), lambda b, q: (b, 0, q, 0)))
    out_shape = (jax.ShapeDtypeStruct((B, S, D), x.dtype),
                 jax.ShapeDtypeStruct((B, H, S, c_pad), x.dtype))

    kernel = functools.partial(_decoder_kernel, H, dh, k, C)

    y, attw = pl.pallas_call(
        kernel,
        grid=(B, nq),
        in_specs=in_specs,
        out_specs=out_specs,
        out_shape=out_shape,
        compiler_params=pltpu.CompilerParams(
            dimension_semantics=("parallel", "parallel"),
            vmem_limit_bytes=_vmem_limit_bytes(),
        ),
    )(x, sa_kT, sa_v, ca_kT, ca_v, *weight_list)

    return y, attw[..., :C]


def decoder_reference(x, context, params, *, num_heads, k):
    """Pure-JAX reference of the same forward pass (for correctness checking)."""
    B, S, D = x.shape
    H = num_heads
    dh = D // H
    scale = 1.0 / math.sqrt(dh)

    def ln(v, g, b, eps=1e-5):
        mu = v.mean(-1, keepdims=True)
        var = ((v - mu) ** 2).mean(-1, keepdims=True)
        return (v - mu) / jnp.sqrt(var + eps) * g + b

    def mha(q_in, kv_in, p, causal):
        Sq, Sk = q_in.shape[1], kv_in.shape[1]
        q = (q_in @ p['wq'] + p['bq']).reshape(B, Sq, H, dh)
        kk = (kv_in @ p['wk'] + p['bk']).reshape(B, Sk, H, dh)
        v = (kv_in @ p['wv'] + p['bv']).reshape(B, Sk, H, dh)
        idx = jnp.clip(jnp.arange(Sk)[None, :] - jnp.arange(Sq)[:, None], -k, k) + k
        rel = p['rel_emb'][idx]                                   # (Sq, Sk, dh)
        scores = jnp.einsum('bqhd,bkhd->bhqk', q, kk)
        scores = scores + jnp.einsum('bqhd,qkd->bhqk', q, rel)
        scores = scores * scale
        if causal:
            mask = jnp.tril(jnp.ones((Sq, Sk), bool))
            scores = jnp.where(mask[None, None], scores, -1e30)
        w = jax.nn.softmax(scores, axis=-1)
        out = jnp.einsum('bhqk,bkhd->bqhd', w, v).reshape(B, Sq, D)
        return out @ p['wo'] + p['bo'], w

    sa, _ = mha(x, x, params['self'], True)
    x1 = ln(x + sa, params['self']['ln_g'], params['self']['ln_b'])
    ca, attw = mha(x1, context, params['cross'], False)
    x2 = ln(x1 + ca, params['cross']['ln_g'], params['cross']['ln_b'])
    f = params['ffn']
    h = jnp.maximum(x2 @ f['w1'] + f['b1'], 0.0)
    x3 = ln(x2 + h @ f['w2'] + f['b2'], f['ln_g'], f['ln_b'])
    return x3, attw


def init_params(key, d_model, num_heads, k, dff):
    dh = d_model // num_heads
    std = 0.02
    keys = iter(jax.random.split(key, 40))

    def lin(shape):
        return std * jax.random.normal(next(keys), shape, jnp.float32)

    def attn_block():
        return dict(
            wq=lin((d_model, d_model)), bq=jnp.zeros((1, d_model), jnp.float32),
            wk=lin((d_model, d_model)), bk=jnp.zeros((1, d_model), jnp.float32),
            wv=lin((d_model, d_model)), bv=jnp.zeros((1, d_model), jnp.float32),
            wo=lin((d_model, d_model)), bo=jnp.zeros((1, d_model), jnp.float32),
            rel_emb=lin((2 * k + 1, dh)),
            ln_g=jnp.ones((1, d_model), jnp.float32),
            ln_b=jnp.zeros((1, d_model), jnp.float32),
        )

    return dict(
        self=attn_block(),
        cross=attn_block(),
        ffn=dict(
            w1=lin((d_model, dff)), b1=jnp.zeros((1, dff), jnp.float32),
            w2=lin((dff, d_model)), b2=jnp.zeros((1, d_model), jnp.float32),
            ln_g=jnp.ones((1, d_model), jnp.float32),
            ln_b=jnp.zeros((1, d_model), jnp.float32),
        ),
    )


if __name__ == "__main__":
    d_model, num_heads, k, dff = 32, 4, 4, 64
    B, S, C = 2, 16, 10          # S=16, tq=8 exercises 2 q-tiles incl. cross-tile causal mask

    key = jax.random.PRNGKey(0)
    kx, kc, kp = jax.random.split(key, 3)
    x = jax.random.normal(kx, (B, S, d_model), jnp.float32)
    context = jax.random.normal(kc, (B, C, d_model), jnp.float32)
    params = init_params(kp, d_model, num_heads, k, dff)

    y, attw = decoder_forward(x, context, params, num_heads=num_heads, k=k, tq=8)
    jax.block_until_ready((y, attw))

    assert y.shape == (B, S, d_model)
    assert attw.shape == (B, num_heads, S, C)
    assert bool(jnp.all(jnp.isfinite(y)))

    y_ref, attw_ref = decoder_reference(x, context, params, num_heads=num_heads, k=k)
    assert bool(jnp.allclose(y, y_ref, rtol=5e-2, atol=5e-2)), \
        f"max |dy| = {float(jnp.max(jnp.abs(y - y_ref)))}"
    assert bool(jnp.allclose(attw, attw_ref, rtol=5e-2, atol=2e-2)), \
        f"max |dw| = {float(jnp.max(jnp.abs(attw - attw_ref)))}"

    print("KERNEL_OK")
</pallas_src>

<mosaic_0001>
module attributes {stable_mosaic.version = 11 : i64} {
  func.func @_decoder_kernel(%arg0: i32, %arg1: i32, %arg2: memref<1x8x32xf32, #tpu.memory_space<vmem>>, %arg3: memref<1x4x8x16xf32, #tpu.memory_space<vmem>>, %arg4: memref<1x4x16x8xf32, #tpu.memory_space<vmem>>, %arg5: memref<1x4x8x128xf32, #tpu.memory_space<vmem>>, %arg6: memref<1x4x128x8xf32, #tpu.memory_space<vmem>>, %arg7: memref<32x32xf32, #tpu.memory_space<vmem>>, %arg8: memref<1x32xf32, #tpu.memory_space<vmem>>, %arg9: memref<32x32xf32, #tpu.memory_space<vmem>>, %arg10: memref<1x32xf32, #tpu.memory_space<vmem>>, %arg11: memref<8x9xf32, #tpu.memory_space<vmem>>, %arg12: memref<1x32xf32, #tpu.memory_space<vmem>>, %arg13: memref<1x32xf32, #tpu.memory_space<vmem>>, %arg14: memref<32x32xf32, #tpu.memory_space<vmem>>, %arg15: memref<1x32xf32, #tpu.memory_space<vmem>>, %arg16: memref<32x32xf32, #tpu.memory_space<vmem>>, %arg17: memref<1x32xf32, #tpu.memory_space<vmem>>, %arg18: memref<8x9xf32, #tpu.memory_space<vmem>>, %arg19: memref<1x32xf32, #tpu.memory_space<vmem>>, %arg20: memref<1x32xf32, #tpu.memory_space<vmem>>, %arg21: memref<32x64xf32, #tpu.memory_space<vmem>>, %arg22: memref<1x64xf32, #tpu.memory_space<vmem>>, %arg23: memref<64x32xf32, #tpu.memory_space<vmem>>, %arg24: memref<1x32xf32, #tpu.memory_space<vmem>>, %arg25: memref<1x32xf32, #tpu.memory_space<vmem>>, %arg26: memref<1x32xf32, #tpu.memory_space<vmem>>, %arg27: memref<1x8x32xf32, #tpu.memory_space<vmem>>, %arg28: memref<1x4x8x128xf32, #tpu.memory_space<vmem>>) attributes {dimension_semantics = [#tpu.dimension_semantics<parallel>, #tpu.dimension_semantics<parallel>], iteration_bounds = array<i64: 2, 2>, scalar_prefetch = 0 : i64, scratch_operands = 0 : i64, tpu.core_type = #tpu.core_type<tc>, window_params = [{transform_indices = @transform_0, window_bounds = array<i64: 1, 8, 32>}, {pipeline_mode = #tpu.pipeline_mode<synchronous>, transform_indices = @transform_1, window_bounds = array<i64: 1, 4, 8, 16>}, {pipeline_mode = #tpu.pipeline_mode<synchronous>, transform_indices = @transform_2, window_bounds = array<i64: 1, 4, 16, 8>}, {pipeline_mode = #tpu.pipeline_mode<synchronous>, transform_indices = @transform_3, window_bounds = array<i64: 1, 4, 8, 128>}, {pipeline_mode = #tpu.pipeline_mode<synchronous>, transform_indices = @transform_4, window_bounds = array<i64: 1, 4, 128, 8>}, {pipeline_mode = #tpu.pipeline_mode<synchronous>, transform_indices = @transform_5, window_bounds = array<i64: 32, 32>}, {pipeline_mode = #tpu.pipeline_mode<synchronous>, transform_indices = @transform_6, window_bounds = array<i64: 1, 32>}, {pipeline_mode = #tpu.pipeline_mode<synchronous>, transform_indices = @transform_7, window_bounds = array<i64: 32, 32>}, {pipeline_mode = #tpu.pipeline_mode<synchronous>, transform_indices = @transform_8, window_bounds = array<i64: 1, 32>}, {pipeline_mode = #tpu.pipeline_mode<synchronous>, transform_indices = @transform_9, window_bounds = array<i64: 8, 9>}, {pipeline_mode = #tpu.pipeline_mode<synchronous>, transform_indices = @transform_10, window_bounds = array<i64: 1, 32>}, {pipeline_mode = #tpu.pipeline_mode<synchronous>, transform_indices = @transform_11, window_bounds = array<i64: 1, 32>}, {pipeline_mode = #tpu.pipeline_mode<synchronous>, transform_indices = @transform_12, window_bounds = array<i64: 32, 32>}, {pipeline_mode = #tpu.pipeline_mode<synchronous>, transform_indices = @transform_13, window_bounds = array<i64: 1, 32>}, {pipeline_mode = #tpu.pipeline_mode<synchronous>, transform_indices = @transform_14, window_bounds = array<i64: 32, 32>}, {pipeline_mode = #tpu.pipeline_mode<synchronous>, transform_indices = @transform_15, window_bounds = array<i64: 1, 32>}, {pipeline_mode = #tpu.pipeline_mode<synchronous>, transform_indices = @transform_16, window_bounds = array<i64: 8, 9>}, {pipeline_mode = #tpu.pipeline_mode<synchronous>, transform_indices = @transform_17, window_bounds = array<i64: 1, 32>}, {pipeline_mode = #tpu.pipeline_mode<synchronous>, transform_indices = @transform_18, window_bounds = array<i64: 1, 32>}, {pipeline_mode = #tpu.pipeline_mode<synchronous>, transform_indices = @transform_19, window_bounds = array<i64: 32, 64>}, {pipeline_mode = #tpu.pipeline_mode<synchronous>, transform_indices = @transform_20, window_bounds = array<i64: 1, 64>}, {pipeline_mode = #tpu.pipeline_mode<synchronous>, transform_indices = @transform_21, window_bounds = array<i64: 64, 32>}, {pipeline_mode = #tpu.pipeline_mode<synchronous>, transform_indices = @transform_22, window_bounds = array<i64: 1, 32>}, {pipeline_mode = #tpu.pipeline_mode<synchronous>, transform_indices = @transform_23, window_bounds = array<i64: 1, 32>}, {pipeline_mode = #tpu.pipeline_mode<synchronous>, transform_indices = @transform_24, window_bounds = array<i64: 1, 32>}, {transform_indices = @transform_25, window_bounds = array<i64: 1, 8, 32>}, {transform_indices = @transform_26, window_bounds = array<i64: 1, 4, 8, 128>}]} {
    %c0 = arith.constant 0 : index
    %c0_0 = arith.constant 0 : index
    %c0_1 = arith.constant 0 : index
    %0 = vector.load %arg2[%c0, %c0_0, %c0_1] : memref<1x8x32xf32, #tpu.memory_space<vmem>>, vector<1x8x32xf32>
    %1 = vector.shape_cast %0 : vector<1x8x32xf32> to vector<8x32xf32>
    %c8_i32 = arith.constant 8 : i32
    %2 = arith.muli %arg1, %c8_i32 : i32
    %c0_2 = arith.constant 0 : index
    %c0_3 = arith.constant 0 : index
    %c0_4 = arith.constant 0 : index
    %c0_5 = arith.constant 0 : index
    %3 = vector.load %arg3[%c0_2, %c0_3, %c0_4, %c0_5] : memref<1x4x8x16xf32, #tpu.memory_space<vmem>>, vector<1x4x8x16xf32>
    %4 = vector.shape_cast %3 : vector<1x4x8x16xf32> to vector<4x8x16xf32>
    %c0_6 = arith.constant 0 : index
    %c0_7 = arith.constant 0 : index
    %c0_8 = arith.constant 0 : index
    %c0_9 = arith.constant 0 : index
    %5 = vector.load %arg4[%c0_6, %c0_7, %c0_8, %c0_9] : memref<1x4x16x8xf32, #tpu.memory_space<vmem>>, vector<1x4x16x8xf32>
    %6 = vector.shape_cast %5 : vector<1x4x16x8xf32> to vector<4x16x8xf32>
    %c0_10 = arith.constant 0 : index
    %c0_11 = arith.constant 0 : index
    %7 = vector.load %arg7[%c0_10, %c0_11] : memref<32x32xf32, #tpu.memory_space<vmem>>, vector<32x32xf32>
    %cst = arith.constant dense<0.000000e+00> : vector<8x32xf32>
    %8 = tpu.matmul %1, %7, %cst {dimension_numbers = #tpu.dot_dimension_numbers<[1], [0], [0], [1], [0, 0, 1, 1], [], []>} : vector<8x32xf32>, vector<32x32xf32>, vector<8x32xf32> -> vector<8x32xf32>
    %c0_12 = arith.constant 0 : index
    %c0_13 = arith.constant 0 : index
    %9 = vector.load %arg8[%c0_12, %c0_13] : memref<1x32xf32, #tpu.memory_space<vmem>>, vector<1x32xf32>
    %10 = vector.broadcast %9 : vector<1x32xf32> to vector<8x32xf32>
    %11 = arith.addf %8, %10 : vector<8x32xf32>
    %cst_14 = arith.constant 0.353553385 : f32
    %12 = vector.broadcast %cst_14 : f32 to vector<8x32xf32>
    %13 = arith.mulf %11, %12 : vector<8x32xf32>
    %14 = vector.shape_cast %13 : vector<8x32xf32> to vector<8x4x8xf32>
    "tpu.trace_start"() <{level = 10 : i32, message = "qhd,hdk->hqk"}> : () -> ()
    %cst_15 = arith.constant dense<0.000000e+00> : vector<4x8x16xf32>
    %15 = tpu.matmul %14, %4, %cst_15 {dimension_numbers = #tpu.dot_dimension_numbers<[2], [1], [0], [2], [0, 1, 0, 0, 1, 2], [1], [0]>} : vector<8x4x8xf32>, vector<4x8x16xf32>, vector<4x8x16xf32> -> vector<4x8x16xf32>
    "tpu.trace_stop"() : () -> ()
    %c0_16 = arith.constant 0 : index
    %c0_17 = arith.constant 0 : index
    %16 = vector.load %arg11[%c0_16, %c0_17] : memref<8x9xf32, #tpu.memory_space<vmem>>, vector<8x9xf32>
    "tpu.trace_start"() <{level = 10 : i32, message = "qhd,dr->hqr"}> : () -> ()
    %cst_18 = arith.constant dense<0.000000e+00> : vector<9x8x4xf32>
    %17 = tpu.matmul %16, %14, %cst_18 {dimension_numbers = #tpu.dot_dimension_numbers<[0], [2], [1], [0, 1], [0, 1, 1, 0, 1, 1], [], []>} : vector<8x9xf32>, vector<8x4x8xf32>, vector<9x8x4xf32> -> vector<9x8x4xf32>
    %18 = tpu.transpose %17, [2, 1, 0] : vector<9x8x4xf32> -> vector<4x8x9xf32>
    "tpu.trace_stop"() : () -> ()
    %19 = tpu.iota {dimensions = array<i32: 0>} : vector<8x16xi32>
    %20 = vector.broadcast %2 : i32 to vector<8x16xi32>
    %21 = arith.addi %20, %19 : vector<8x16xi32>
    %22 = tpu.iota {dimensions = array<i32: 1>} : vector<8x16xi32>
    %23 = arith.subi %22, %21 : vector<8x16xi32>
    %c-4_i32 = arith.constant -4 : i32
    %c4_i32 = arith.constant 4 : i32
    %24 = vector.broadcast %c-4_i32 : i32 to vector<8x16xi32>
    %25 = arith.maxsi %24, %23 : vector<8x16xi32>
    %26 = vector.broadcast %c4_i32 : i32 to vector<8x16xi32>
    %27 = arith.minsi %26, %25 : vector<8x16xi32>
    %c4_i32_19 = arith.constant 4 : i32
    %28 = vector.broadcast %c4_i32_19 : i32 to vector<8x16xi32>
    %29 = arith.addi %27, %28 : vector<8x16xi32>
    %c0_i32 = arith.constant 0 : i32
    %30 = vector.broadcast %c0_i32 : i32 to vector<8x16xi32>
    %31 = arith.cmpi eq, %29, %30 : vector<8x16xi32>
    %32 = vector.shape_cast %31 : vector<8x16xi1> to vector<1x8x16xi1>
    %33 = vector.extract_strided_slice %18 {offsets = [0, 0, 0], sizes = [4, 8, 1], strides = [1, 1, 1]} : vector<4x8x9xf32> to vector<4x8x1xf32>
    %34 = vector.shape_cast %33 : vector<4x8x1xf32> to vector<4x8xf32>
    %35 = vector.shape_cast %34 : vector<4x8xf32> to vector<4x8x1xf32>
    %cst_20 = arith.constant 0.000000e+00 : f32
    %36 = vector.shape_cast %32 : vector<1x8x16xi1> to vector<1x8x16xi1>
    %37 = vector.broadcast %36 : vector<1x8x16xi1> to vector<4x8x16xi1>
    %38 = vector.shape_cast %35 : vector<4x8x1xf32> to vector<4x8x1xf32>
    %39 = vector.broadcast %38 : vector<4x8x1xf32> to vector<4x8x16xf32>
    %40 = vector.broadcast %cst_20 : f32 to vector<4x8x16xf32>
    %41 = arith.select %37, %39, %40 : vector<4x8x16xi1>, vector<4x8x16xf32>
    %42 = arith.addf %15, %41 : vector<4x8x16xf32>
    %c1_i32 = arith.constant 1 : i32
    %43 = vector.broadcast %c1_i32 : i32 to vector<8x16xi32>
    %44 = arith.cmpi eq, %29, %43 : vector<8x16xi32>
    %45 = vector.shape_cast %44 : vector<8x16xi1> to vector<1x8x16xi1>
    %46 = vector.extract_strided_slice %18 {offsets = [0, 0, 1], sizes = [4, 8, 1], strides = [1, 1, 1]} : vector<4x8x9xf32> to vector<4x8x1xf32>
    %47 = vector.shape_cast %46 : vector<4x8x1xf32> to vector<4x8xf32>
    %48 = vector.shape_cast %47 : vector<4x8xf32> to vector<4x8x1xf32>
    %cst_21 = arith.constant 0.000000e+00 : f32
    %49 = vector.shape_cast %45 : vector<1x8x16xi1> to vector<1x8x16xi1>
    %50 = vector.broadcast %49 : vector<1x8x16xi1> to vector<4x8x16xi1>
    %51 = vector.shape_cast %48 : vector<4x8x1xf32> to vector<4x8x1xf32>
    %52 = vector.broadcast %51 : vector<4x8x1xf32> to vector<4x8x16xf32>
    %53 = vector.broadcast %cst_21 : f32 to vector<4x8x16xf32>
    %54 = arith.select %50, %52, %53 : vector<4x8x16xi1>, vector<4x8x16xf32>
    %55 = arith.addf %42, %54 : vector<4x8x16xf32>
    %c2_i32 = arith.constant 2 : i32
    %56 = vector.broadcast %c2_i32 : i32 to vector<8x16xi32>
    %57 = arith.cmpi eq, %29, %56 : vector<8x16xi32>
    %58 = vector.shape_cast %57 : vector<8x16xi1> to vector<1x8x16xi1>
    %59 = vector.extract_strided_slice %18 {offsets = [0, 0, 2], sizes = [4, 8, 1], strides = [1, 1, 1]} : vector<4x8x9xf32> to vector<4x8x1xf32>
    %60 = vector.shape_cast %59 : vector<4x8x1xf32> to vector<4x8xf32>
    %61 = vector.shape_cast %60 : vector<4x8xf32> to vector<4x8x1xf32>
    %cst_22 = arith.constant 0.000000e+00 : f32
    %62 = vector.shape_cast %58 : vector<1x8x16xi1> to vector<1x8x16xi1>
    %63 = vector.broadcast %62 : vector<1x8x16xi1> to vector<4x8x16xi1>
    %64 = vector.shape_cast %61 : vector<4x8x1xf32> to vector<4x8x1xf32>
    %65 = vector.broadcast %64 : vector<4x8x1xf32> to vector<4x8x16xf32>
    %66 = vector.broadcast %cst_22 : f32 to vector<4x8x16xf32>
    %67 = arith.select %63, %65, %66 : vector<4x8x16xi1>, vector<4x8x16xf32>
    %68 = arith.addf %55, %67 : vector<4x8x16xf32>
    %c3_i32 = arith.constant 3 : i32
    %69 = vector.broadcast %c3_i32 : i32 to vector<8x16xi32>
    %70 = arith.cmpi eq, %29, %69 : vector<8x16xi32>
    %71 = vector.shape_cast %70 : vector<8x16xi1> to vector<1x8x16xi1>
    %72 = vector.extract_strided_slice %18 {offsets = [0, 0, 3], sizes = [4, 8, 1], strides = [1, 1, 1]} : vector<4x8x9xf32> to vector<4x8x1xf32>
    %73 = vector.shape_cast %72 : vector<4x8x1xf32> to vector<4x8xf32>
    %74 = vector.shape_cast %73 : vector<4x8xf32> to vector<4x8x1xf32>
    %cst_23 = arith.constant 0.000000e+00 : f32
    %75 = vector.shape_cast %71 : vector<1x8x16xi1> to vector<1x8x16xi1>
    %76 = vector.broadcast %75 : vector<1x8x16xi1> to vector<4x8x16xi1>
    %77 = vector.shape_cast %74 : vector<4x8x1xf32> to vector<4x8x1xf32>
    %78 = vector.broadcast %77 : vector<4x8x1xf32> to vector<4x8x16xf32>
    %79 = vector.broadcast %cst_23 : f32 to vector<4x8x16xf32>
    %80 = arith.select %76, %78, %79 : vector<4x8x16xi1>, vector<4x8x16xf32>
    %81 = arith.addf %68, %80 : vector<4x8x16xf32>
    %c4_i32_24 = arith.constant 4 : i32
    %82 = vector.broadcast %c4_i32_24 : i32 to vector<8x16xi32>
    %83 = arith.cmpi eq, %29, %82 : vector<8x16xi32>
    %84 = vector.shape_cast %83 : vector<8x16xi1> to vector<1x8x16xi1>
    %85 = vector.extract_strided_slice %18 {offsets = [0, 0, 4], sizes = [4, 8, 1], strides = [1, 1, 1]} : vector<4x8x9xf32> to vector<4x8x1xf32>
    %86 = vector.shape_cast %85 : vector<4x8x1xf32> to vector<4x8xf32>
    %87 = vector.shape_cast %86 : vector<4x8xf32> to vector<4x8x1xf32>
    %cst_25 = arith.constant 0.000000e+00 : f32
    %88 = vector.shape_cast %84 : vector<1x8x16xi1> to vector<1x8x16xi1>
    %89 = vector.broadcast %88 : vector<1x8x16xi1> to vector<4x8x16xi1>
    %90 = vector.shape_cast %87 : vector<4x8x1xf32> to vector<4x8x1xf32>
    %91 = vector.broadcast %90 : vector<4x8x1xf32> to vector<4x8x16xf32>
    %92 = vector.broadcast %cst_25 : f32 to vector<4x8x16xf32>
    %93 = arith.select %89, %91, %92 : vector<4x8x16xi1>, vector<4x8x16xf32>
    %94 = arith.addf %81, %93 : vector<4x8x16xf32>
    %cst_26 = arith.constant 0.000000e+00 : f32
    %95 = vector.broadcast %cst_26 : f32 to vector<8x16xf32>
    %c0_i32_27 = arith.constant 0 : i32
    %96 = vector.broadcast %c0_i32_27 : i32 to vector<8x16xi32>
    %97 = arith.cmpi sle, %23, %96 : vector<8x16xi32>
    %cst_28 = arith.constant -1.000000e+30 : f32
    %98 = vector.broadcast %cst_28 : f32 to vector<8x16xf32>
    %99 = arith.select %97, %95, %98 : vector<8x16xi1>, vector<8x16xf32>
    %100 = vector.shape_cast %99 : vector<8x16xf32> to vector<1x8x16xf32>
    %101 = vector.broadcast %100 : vector<1x8x16xf32> to vector<4x8x16xf32>
    %102 = arith.addf %94, %101 : vector<4x8x16xf32>
    %cst_29 = arith.constant dense<0xFF800000> : vector<4x8xf32>
    %103 = vector.multi_reduction <maximumf>, %102, %cst_29 [2] : vector<4x8x16xf32> to vector<4x8xf32>
    %104 = vector.shape_cast %103 : vector<4x8xf32> to vector<4x8x1xf32>
    %105 = vector.broadcast %104 : vector<4x8x1xf32> to vector<4x8x16xf32>
    %106 = arith.subf %102, %105 : vector<4x8x16xf32>
    %107 = math.exp %106 : vector<4x8x16xf32>
    %cst_30 = arith.constant dense<0.000000e+00> : vector<4x8xf32>
    %108 = vector.multi_reduction <add>, %107, %cst_30 [2] : vector<4x8x16xf32> to vector<4x8xf32>
    %109 = vector.shape_cast %108 : vector<4x8xf32> to vector<4x8x1xf32>
    %110 = tpu.reciprocal %109 {approx = true} : vector<4x8x1xf32> -> vector<4x8x1xf32>
    %111 = vector.broadcast %110 : vector<4x8x1xf32> to vector<4x8x16xf32>
    %112 = arith.mulf %107, %111 : vector<4x8x16xf32>
    "tpu.trace_start"() <{level = 10 : i32, message = "hqk,hkd->qhd"}> : () -> ()
    %cst_31 = arith.constant dense<0.000000e+00> : vector<4x8x8xf32>
    %113 = tpu.matmul %6, %112, %cst_31 {dimension_numbers = #tpu.dot_dimension_numbers<[1], [2], [2], [1], [0, 0, 0, 2, 1, 1], [0], [0]>} : vector<4x16x8xf32>, vector<4x8x16xf32>, vector<4x8x8xf32> -> vector<4x8x8xf32>
    %114 = tpu.transpose %113, [2, 0, 1] : vector<4x8x8xf32> -> vector<8x4x8xf32>
    "tpu.trace_stop"() : () -> ()
    %115 = vector.shape_cast %114 : vector<8x4x8xf32> to vector<8x32xf32>
    %c0_32 = arith.constant 0 : index
    %c0_33 = arith.constant 0 : index
    %116 = vector.load %arg9[%c0_32, %c0_33] : memref<32x32xf32, #tpu.memory_space<vmem>>, vector<32x32xf32>
    %cst_34 = arith.constant dense<0.000000e+00> : vector<8x32xf32>
    %117 = tpu.matmul %115, %116, %cst_34 {dimension_numbers = #tpu.dot_dimension_numbers<[1], [0], [0], [1], [0, 0, 1, 1], [], []>} : vector<8x32xf32>, vector<32x32xf32>, vector<8x32xf32> -> vector<8x32xf32>
    %c0_35 = arith.constant 0 : index
    %c0_36 = arith.constant 0 : index
    %118 = vector.load %arg10[%c0_35, %c0_36] : memref<1x32xf32, #tpu.memory_space<vmem>>, vector<1x32xf32>
    %119 = vector.broadcast %118 : vector<1x32xf32> to vector<8x32xf32>
    %120 = arith.addf %117, %119 : vector<8x32xf32>
    %121 = arith.addf %1, %120 : vector<8x32xf32>
    %c0_37 = arith.constant 0 : index
    %c0_38 = arith.constant 0 : index
    %122 = vector.load %arg12[%c0_37, %c0_38] : memref<1x32xf32, #tpu.memory_space<vmem>>, vector<1x32xf32>
    %c0_39 = arith.constant 0 : index
    %c0_40 = arith.constant 0 : index
    %123 = vector.load %arg13[%c0_39, %c0_40] : memref<1x32xf32, #tpu.memory_space<vmem>>, vector<1x32xf32>
    %cst_41 = arith.constant dense<0.000000e+00> : vector<8xf32>
    %124 = vector.multi_reduction <add>, %121, %cst_41 [1] : vector<8x32xf32> to vector<8xf32>
    %125 = vector.shape_cast %124 : vector<8xf32> to vector<8x1xf32>
    %cst_42 = arith.constant 3.200000e+01 : f32
    %126 = vector.broadcast %cst_42 : f32 to vector<8x1xf32>
    %127 = arith.divf %125, %126 : vector<8x1xf32>
    %128 = vector.broadcast %127 : vector<8x1xf32> to vector<8x32xf32>
    %129 = arith.subf %121, %128 : vector<8x32xf32>
    %130 = arith.mulf %129, %129 : vector<8x32xf32>
    %cst_43 = arith.constant dense<0.000000e+00> : vector<8xf32>
    %131 = vector.multi_reduction <add>, %130, %cst_43 [1] : vector<8x32xf32> to vector<8xf32>
    %132 = vector.shape_cast %131 : vector<8xf32> to vector<8x1xf32>
    %cst_44 = arith.constant 3.200000e+01 : f32
    %133 = vector.broadcast %cst_44 : f32 to vector<8x1xf32>
    %134 = arith.divf %132, %133 : vector<8x1xf32>
    %135 = vector.broadcast %127 : vector<8x1xf32> to vector<8x32xf32>
    %136 = arith.subf %121, %135 : vector<8x32xf32>
    %cst_45 = arith.constant 9.99999974E-6 : f32
    %137 = vector.broadcast %cst_45 : f32 to vector<8x1xf32>
    %138 = arith.addf %134, %137 : vector<8x1xf32>
    %139 = math.rsqrt %138 : vector<8x1xf32>
    %140 = vector.broadcast %139 : vector<8x1xf32> to vector<8x32xf32>
    %141 = arith.mulf %136, %140 : vector<8x32xf32>
    %142 = vector.broadcast %122 : vector<1x32xf32> to vector<8x32xf32>
    %143 = arith.mulf %141, %142 : vector<8x32xf32>
    %144 = vector.broadcast %123 : vector<1x32xf32> to vector<8x32xf32>
    %145 = arith.addf %143, %144 : vector<8x32xf32>
    %c0_46 = arith.constant 0 : index
    %c0_47 = arith.constant 0 : index
    %c0_48 = arith.constant 0 : index
    %c0_49 = arith.constant 0 : index
    %146 = vector.load %arg5[%c0_46, %c0_47, %c0_48, %c0_49] : memref<1x4x8x128xf32, #tpu.memory_space<vmem>>, vector<1x4x8x128xf32>
    %147 = vector.shape_cast %146 : vector<1x4x8x128xf32> to vector<4x8x128xf32>
    %c0_50 = arith.constant 0 : index
    %c0_51 = arith.constant 0 : index
    %c0_52 = arith.constant 0 : index
    %c0_53 = arith.constant 0 : index
    %148 = vector.load %arg6[%c0_50, %c0_51, %c0_52, %c0_53] : memref<1x4x128x8xf32, #tpu.memory_space<vmem>>, vector<1x4x128x8xf32>
    %149 = vector.shape_cast %148 : vector<1x4x128x8xf32> to vector<4x128x8xf32>
    %c0_54 = arith.constant 0 : index
    %c0_55 = arith.constant 0 : index
    %150 = vector.load %arg14[%c0_54, %c0_55] : memref<32x32xf32, #tpu.memory_space<vmem>>, vector<32x32xf32>
    %cst_56 = arith.constant dense<0.000000e+00> : vector<8x32xf32>
    %151 = tpu.matmul %145, %150, %cst_56 {dimension_numbers = #tpu.dot_dimension_numbers<[1], [0], [0], [1], [0, 0, 1, 1], [], []>} : vector<8x32xf32>, vector<32x32xf32>, vector<8x32xf32> -> vector<8x32xf32>
    %c0_57 = arith.constant 0 : index
    %c0_58 = arith.constant 0 : index
    %152 = vector.load %arg15[%c0_57, %c0_58] : memref<1x32xf32, #tpu.memory_space<vmem>>, vector<1x32xf32>
    %153 = vector.broadcast %152 : vector<1x32xf32> to vector<8x32xf32>
    %154 = arith.addf %151, %153 : vector<8x32xf32>
    %cst_59 = arith.constant 0.353553385 : f32
    %155 = vector.broadcast %cst_59 : f32 to vector<8x32xf32>
    %156 = arith.mulf %154, %155 : vector<8x32xf32>
    %157 = vector.shape_cast %156 : vector<8x32xf32> to vector<8x4x8xf32>
    "tpu.trace_start"() <{level = 10 : i32, message = "qhd,hdk->hqk"}> : () -> ()
    %cst_60 = arith.constant dense<0.000000e+00> : vector<4x8x128xf32>
    %158 = tpu.matmul %157, %147, %cst_60 {dimension_numbers = #tpu.dot_dimension_numbers<[2], [1], [0], [2], [0, 1, 0, 0, 1, 2], [1], [0]>} : vector<8x4x8xf32>, vector<4x8x128xf32>, vector<4x8x128xf32> -> vector<4x8x128xf32>
    "tpu.trace_stop"() : () -> ()
    %c0_61 = arith.constant 0 : index
    %c0_62 = arith.constant 0 : index
    %159 = vector.load %arg18[%c0_61, %c0_62] : memref<8x9xf32, #tpu.memory_space<vmem>>, vector<8x9xf32>
    "tpu.trace_start"() <{level = 10 : i32, message = "qhd,dr->hqr"}> : () -> ()
    %cst_63 = arith.constant dense<0.000000e+00> : vector<9x8x4xf32>
    %160 = tpu.matmul %159, %157, %cst_63 {dimension_numbers = #tpu.dot_dimension_numbers<[0], [2], [1], [0, 1], [0, 1, 1, 0, 1, 1], [], []>} : vector<8x9xf32>, vector<8x4x8xf32>, vector<9x8x4xf32> -> vector<9x8x4xf32>
    %161 = tpu.transpose %160, [2, 1, 0] : vector<9x8x4xf32> -> vector<4x8x9xf32>
    "tpu.trace_stop"() : () -> ()
    %162 = tpu.iota {dimensions = array<i32: 0>} : vector<8x128xi32>
    %163 = vector.broadcast %2 : i32 to vector<8x128xi32>
    %164 = arith.addi %163, %162 : vector<8x128xi32>
    %165 = tpu.iota {dimensions = array<i32: 1>} : vector<8x128xi32>
    %166 = arith.subi %165, %164 : vector<8x128xi32>
    %c-4_i32_64 = arith.constant -4 : i32
    %c4_i32_65 = arith.constant 4 : i32
    %167 = vector.broadcast %c-4_i32_64 : i32 to vector<8x128xi32>
    %168 = arith.maxsi %167, %166 : vector<8x128xi32>
    %169 = vector.broadcast %c4_i32_65 : i32 to vector<8x128xi32>
    %170 = arith.minsi %169, %168 : vector<8x128xi32>
    %c4_i32_66 = arith.constant 4 : i32
    %171 = vector.broadcast %c4_i32_66 : i32 to vector<8x128xi32>
    %172 = arith.addi %170, %171 : vector<8x128xi32>
    %c0_i32_67 = arith.constant 0 : i32
    %173 = vector.broadcast %c0_i32_67 : i32 to vector<8x128xi32>
    %174 = arith.cmpi eq, %172, %173 : vector<8x128xi32>
    %175 = vector.shape_cast %174 : vector<8x128xi1> to vector<1x8x128xi1>
    %176 = vector.extract_strided_slice %161 {offsets = [0, 0, 0], sizes = [4, 8, 1], strides = [1, 1, 1]} : vector<4x8x9xf32> to vector<4x8x1xf32>
    %177 = vector.shape_cast %176 : vector<4x8x1xf32> to vector<4x8xf32>
    %178 = vector.shape_cast %177 : vector<4x8xf32> to vector<4x8x1xf32>
    %cst_68 = arith.constant 0.000000e+00 : f32
    %179 = vector.shape_cast %175 : vector<1x8x128xi1> to vector<1x8x128xi1>
    %180 = vector.broadcast %179 : vector<1x8x128xi1> to vector<4x8x128xi1>
    %181 = vector.shape_cast %178 : vector<4x8x1xf32> to vector<4x8x1xf32>
    %182 = vector.broadcast %181 : vector<4x8x1xf32> to vector<4x8x128xf32>
    %183 = vector.broadcast %cst_68 : f32 to vector<4x8x128xf32>
    %184 = arith.select %180, %182, %183 : vector<4x8x128xi1>, vector<4x8x128xf32>
    %185 = arith.addf %158, %184 : vector<4x8x128xf32>
    %c1_i32_69 = arith.constant 1 : i32
    %186 = vector.broadcast %c1_i32_69 : i32 to vector<8x128xi32>
    %187 = arith.cmpi eq, %172, %186 : vector<8x128xi32>
    %188 = vector.shape_cast %187 : vector<8x128xi1> to vector<1x8x128xi1>
    %189 = vector.extract_strided_slice %161 {offsets = [0, 0, 1], sizes = [4, 8, 1], strides = [1, 1, 1]} : vector<4x8x9xf32> to vector<4x8x1xf32>
    %190 = vector.shape_cast %189 : vector<4x8x1xf32> to vector<4x8xf32>
    %191 = vector.shape_cast %190 : vector<4x8xf32> to vector<4x8x1xf32>
    %cst_70 = arith.constant 0.000000e+00 : f32
    %192 = vector.shape_cast %188 : vector<1x8x128xi1> to vector<1x8x128xi1>
    %193 = vector.broadcast %192 : vector<1x8x128xi1> to vector<4x8x128xi1>
    %194 = vector.shape_cast %191 : vector<4x8x1xf32> to vector<4x8x1xf32>
    %195 = vector.broadcast %194 : vector<4x8x1xf32> to vector<4x8x128xf32>
    %196 = vector.broadcast %cst_70 : f32 to vector<4x8x128xf32>
    %197 = arith.select %193, %195, %196 : vector<4x8x128xi1>, vector<4x8x128xf32>
    %198 = arith.addf %185, %197 : vector<4x8x128xf32>
    %c2_i32_71 = arith.constant 2 : i32
    %199 = vector.broadcast %c2_i32_71 : i32 to vector<8x128xi32>
    %200 = arith.cmpi eq, %172, %199 : vector<8x128xi32>
    %201 = vector.shape_cast %200 : vector<8x128xi1> to vector<1x8x128xi1>
    %202 = vector.extract_strided_slice %161 {offsets = [0, 0, 2], sizes = [4, 8, 1], strides = [1, 1, 1]} : vector<4x8x9xf32> to vector<4x8x1xf32>
    %203 = vector.shape_cast %202 : vector<4x8x1xf32> to vector<4x8xf32>
    %204 = vector.shape_cast %203 : vector<4x8xf32> to vector<4x8x1xf32>
    %cst_72 = arith.constant 0.000000e+00 : f32
    %205 = vector.shape_cast %201 : vector<1x8x128xi1> to vector<1x8x128xi1>
    %206 = vector.broadcast %205 : vector<1x8x128xi1> to vector<4x8x128xi1>
    %207 = vector.shape_cast %204 : vector<4x8x1xf32> to vector<4x8x1xf32>
    %208 = vector.broadcast %207 : vector<4x8x1xf32> to vector<4x8x128xf32>
    %209 = vector.broadcast %cst_72 : f32 to vector<4x8x128xf32>
    %210 = arith.select %206, %208, %209 : vector<4x8x128xi1>, vector<4x8x128xf32>
    %211 = arith.addf %198, %210 : vector<4x8x128xf32>
    %c3_i32_73 = arith.constant 3 : i32
    %212 = vector.broadcast %c3_i32_73 : i32 to vector<8x128xi32>
    %213 = arith.cmpi eq, %172, %212 : vector<8x128xi32>
    %214 = vector.shape_cast %213 : vector<8x128xi1> to vector<1x8x128xi1>
    %215 = vector.extract_strided_slice %161 {offsets = [0, 0, 3], sizes = [4, 8, 1], strides = [1, 1, 1]} : vector<4x8x9xf32> to vector<4x8x1xf32>
    %216 = vector.shape_cast %215 : vector<4x8x1xf32> to vector<4x8xf32>
    %217 = vector.shape_cast %216 : vector<4x8xf32> to vector<4x8x1xf32>
    %cst_74 = arith.constant 0.000000e+00 : f32
    %218 = vector.shape_cast %214 : vector<1x8x128xi1> to vector<1x8x128xi1>
    %219 = vector.broadcast %218 : vector<1x8x128xi1> to vector<4x8x128xi1>
    %220 = vector.shape_cast %217 : vector<4x8x1xf32> to vector<4x8x1xf32>
    %221 = vector.broadcast %220 : vector<4x8x1xf32> to vector<4x8x128xf32>
    %222 = vector.broadcast %cst_74 : f32 to vector<4x8x128xf32>
    %223 = arith.select %219, %221, %222 : vector<4x8x128xi1>, vector<4x8x128xf32>
    %224 = arith.addf %211, %223 : vector<4x8x128xf32>
    %c4_i32_75 = arith.constant 4 : i32
    %225 = vector.broadcast %c4_i32_75 : i32 to vector<8x128xi32>
    %226 = arith.cmpi eq, %172, %225 : vector<8x128xi32>
    %227 = vector.shape_cast %226 : vector<8x128xi1> to vector<1x8x128xi1>
    %228 = vector.extract_strided_slice %161 {offsets = [0, 0, 4], sizes = [4, 8, 1], strides = [1, 1, 1]} : vector<4x8x9xf32> to vector<4x8x1xf32>
    %229 = vector.shape_cast %228 : vector<4x8x1xf32> to vector<4x8xf32>
    %230 = vector.shape_cast %229 : vector<4x8xf32> to vector<4x8x1xf32>
    %cst_76 = arith.constant 0.000000e+00 : f32
    %231 = vector.shape_cast %227 : vector<1x8x128xi1> to vector<1x8x128xi1>
    %232 = vector.broadcast %231 : vector<1x8x128xi1> to vector<4x8x128xi1>
    %233 = vector.shape_cast %230 : vector<4x8x1xf32> to vector<4x8x1xf32>
    %234 = vector.broadcast %233 : vector<4x8x1xf32> to vector<4x8x128xf32>
    %235 = vector.broadcast %cst_76 : f32 to vector<4x8x128xf32>
    %236 = arith.select %232, %234, %235 : vector<4x8x128xi1>, vector<4x8x128xf32>
    %237 = arith.addf %224, %236 : vector<4x8x128xf32>
    %c5_i32 = arith.constant 5 : i32
    %238 = vector.broadcast %c5_i32 : i32 to vector<8x128xi32>
    %239 = arith.cmpi eq, %172, %238 : vector<8x128xi32>
    %240 = vector.shape_cast %239 : vector<8x128xi1> to vector<1x8x128xi1>
    %241 = vector.extract_strided_slice %161 {offsets = [0, 0, 5], sizes = [4, 8, 1], strides = [1, 1, 1]} : vector<4x8x9xf32> to vector<4x8x1xf32>
    %242 = vector.shape_cast %241 : vector<4x8x1xf32> to vector<4x8xf32>
    %243 = vector.shape_cast %242 : vector<4x8xf32> to vector<4x8x1xf32>
    %cst_77 = arith.constant 0.000000e+00 : f32
    %244 = vector.shape_cast %240 : vector<1x8x128xi1> to vector<1x8x128xi1>
    %245 = vector.broadcast %244 : vector<1x8x128xi1> to vector<4x8x128xi1>
    %246 = vector.shape_cast %243 : vector<4x8x1xf32> to vector<4x8x1xf32>
    %247 = vector.broadcast %246 : vector<4x8x1xf32> to vector<4x8x128xf32>
    %248 = vector.broadcast %cst_77 : f32 to vector<4x8x128xf32>
    %249 = arith.select %245, %247, %248 : vector<4x8x128xi1>, vector<4x8x128xf32>
    %250 = arith.addf %237, %249 : vector<4x8x128xf32>
    %c6_i32 = arith.constant 6 : i32
    %251 = vector.broadcast %c6_i32 : i32 to vector<8x128xi32>
    %252 = arith.cmpi eq, %172, %251 : vector<8x128xi32>
    %253 = vector.shape_cast %252 : vector<8x128xi1> to vector<1x8x128xi1>
    %254 = vector.extract_strided_slice %161 {offsets = [0, 0, 6], sizes = [4, 8, 1], strides = [1, 1, 1]} : vector<4x8x9xf32> to vector<4x8x1xf32>
    %255 = vector.shape_cast %254 : vector<4x8x1xf32> to vector<4x8xf32>
    %256 = vector.shape_cast %255 : vector<4x8xf32> to vector<4x8x1xf32>
    %cst_78 = arith.constant 0.000000e+00 : f32
    %257 = vector.shape_cast %253 : vector<1x8x128xi1> to vector<1x8x128xi1>
    %258 = vector.broadcast %257 : vector<1x8x128xi1> to vector<4x8x128xi1>
    %259 = vector.shape_cast %256 : vector<4x8x1xf32> to vector<4x8x1xf32>
    %260 = vector.broadcast %259 : vector<4x8x1xf32> to vector<4x8x128xf32>
    %261 = vector.broadcast %cst_78 : f32 to vector<4x8x128xf32>
    %262 = arith.select %258, %260, %261 : vector<4x8x128xi1>, vector<4x8x128xf32>
    %263 = arith.addf %250, %262 : vector<4x8x128xf32>
    %c7_i32 = arith.constant 7 : i32
    %264 = vector.broadcast %c7_i32 : i32 to vector<8x128xi32>
    %265 = arith.cmpi eq, %172, %264 : vector<8x128xi32>
    %266 = vector.shape_cast %265 : vector<8x128xi1> to vector<1x8x128xi1>
    %267 = vector.extract_strided_slice %161 {offsets = [0, 0, 7], sizes = [4, 8, 1], strides = [1, 1, 1]} : vector<4x8x9xf32> to vector<4x8x1xf32>
    %268 = vector.shape_cast %267 : vector<4x8x1xf32> to vector<4x8xf32>
    %269 = vector.shape_cast %268 : vector<4x8xf32> to vector<4x8x1xf32>
    %cst_79 = arith.constant 0.000000e+00 : f32
    %270 = vector.shape_cast %266 : vector<1x8x128xi1> to vector<1x8x128xi1>
    %271 = vector.broadcast %270 : vector<1x8x128xi1> to vector<4x8x128xi1>
    %272 = vector.shape_cast %269 : vector<4x8x1xf32> to vector<4x8x1xf32>
    %273 = vector.broadcast %272 : vector<4x8x1xf32> to vector<4x8x128xf32>
    %274 = vector.broadcast %cst_79 : f32 to vector<4x8x128xf32>
    %275 = arith.select %271, %273, %274 : vector<4x8x128xi1>, vector<4x8x128xf32>
    %276 = arith.addf %263, %275 : vector<4x8x128xf32>
    %c8_i32_80 = arith.constant 8 : i32
    %277 = vector.broadcast %c8_i32_80 : i32 to vector<8x128xi32>
    %278 = arith.cmpi eq, %172, %277 : vector<8x128xi32>
    %279 = vector.shape_cast %278 : vector<8x128xi1> to vector<1x8x128xi1>
    %280 = vector.extract_strided_slice %161 {offsets = [0, 0, 8], sizes = [4, 8, 1], strides = [1, 1, 1]} : vector<4x8x9xf32> to vector<4x8x1xf32>
    %281 = vector.shape_cast %280 : vector<4x8x1xf32> to vector<4x8xf32>
    %282 = vector.shape_cast %281 : vector<4x8xf32> to vector<4x8x1xf32>
    %cst_81 = arith.constant 0.000000e+00 : f32
    %283 = vector.shape_cast %279 : vector<1x8x128xi1> to vector<1x8x128xi1>
    %284 = vector.broadcast %283 : vector<1x8x128xi1> to vector<4x8x128xi1>
    %285 = vector.shape_cast %282 : vector<4x8x1xf32> to vector<4x8x1xf32>
    %286 = vector.broadcast %285 : vector<4x8x1xf32> to vector<4x8x128xf32>
    %287 = vector.broadcast %cst_81 : f32 to vector<4x8x128xf32>
    %288 = arith.select %284, %286, %287 : vector<4x8x128xi1>, vector<4x8x128xf32>
    %289 = arith.addf %276, %288 : vector<4x8x128xf32>
    %cst_82 = arith.constant 0.000000e+00 : f32
    %290 = vector.broadcast %cst_82 : f32 to vector<8x128xf32>
    %c10_i32 = arith.constant 10 : i32
    %291 = vector.broadcast %c10_i32 : i32 to vector<8x128xi32>
    %292 = arith.cmpi slt, %165, %291 : vector<8x128xi32>
    %cst_83 = arith.constant -1.000000e+30 : f32
    %293 = vector.broadcast %cst_83 : f32 to vector<8x128xf32>
    %294 = arith.select %292, %290, %293 : vector<8x128xi1>, vector<8x128xf32>
    %295 = vector.shape_cast %294 : vector<8x128xf32> to vector<1x8x128xf32>
    %296 = vector.broadcast %295 : vector<1x8x128xf32> to vector<4x8x128xf32>
    %297 = arith.addf %289, %296 : vector<4x8x128xf32>
    %cst_84 = arith.constant dense<0xFF800000> : vector<4x8xf32>
    %298 = vector.multi_reduction <maximumf>, %297, %cst_84 [2] : vector<4x8x128xf32> to vector<4x8xf32>
    %299 = vector.shape_cast %298 : vector<4x8xf32> to vector<4x8x1xf32>
    %300 = vector.broadcast %299 : vector<4x8x1xf32> to vector<4x8x128xf32>
    %301 = arith.subf %297, %300 : vector<4x8x128xf32>
    %302 = math.exp %301 : vector<4x8x128xf32>
    %cst_85 = arith.constant dense<0.000000e+00> : vector<4x8xf32>
    %303 = vector.multi_reduction <add>, %302, %cst_85 [2] : vector<4x8x128xf32> to vector<4x8xf32>
    %304 = vector.shape_cast %303 : vector<4x8xf32> to vector<4x8x1xf32>
    %305 = vector.broadcast %304 : vector<4x8x1xf32> to vector<4x8x128xf32>
    %306 = arith.divf %302, %305 : vector<4x8x128xf32>
    "tpu.trace_start"() <{level = 10 : i32, message = "hqk,hkd->qhd"}> : () -> ()
    %cst_86 = arith.constant dense<0.000000e+00> : vector<4x8x8xf32>
    %307 = tpu.matmul %149, %306, %cst_86 {dimension_numbers = #tpu.dot_dimension_numbers<[1], [2], [2], [1], [0, 0, 0, 2, 1, 1], [0], [0]>} : vector<4x128x8xf32>, vector<4x8x128xf32>, vector<4x8x8xf32> -> vector<4x8x8xf32>
    %308 = tpu.transpose %307, [2, 0, 1] : vector<4x8x8xf32> -> vector<8x4x8xf32>
    "tpu.trace_stop"() : () -> ()
    %309 = vector.shape_cast %308 : vector<8x4x8xf32> to vector<8x32xf32>
    %c0_87 = arith.constant 0 : index
    %c0_88 = arith.constant 0 : index
    %310 = vector.load %arg16[%c0_87, %c0_88] : memref<32x32xf32, #tpu.memory_space<vmem>>, vector<32x32xf32>
    %cst_89 = arith.constant dense<0.000000e+00> : vector<8x32xf32>
    %311 = tpu.matmul %309, %310, %cst_89 {dimension_numbers = #tpu.dot_dimension_numbers<[1], [0], [0], [1], [0, 0, 1, 1], [], []>} : vector<8x32xf32>, vector<32x32xf32>, vector<8x32xf32> -> vector<8x32xf32>
    %c0_90 = arith.constant 0 : index
    %c0_91 = arith.constant 0 : index
    %312 = vector.load %arg17[%c0_90, %c0_91] : memref<1x32xf32, #tpu.memory_space<vmem>>, vector<1x32xf32>
    %313 = vector.broadcast %312 : vector<1x32xf32> to vector<8x32xf32>
    %314 = arith.addf %311, %313 : vector<8x32xf32>
    %315 = arith.addf %145, %314 : vector<8x32xf32>
    %c0_92 = arith.constant 0 : index
    %c0_93 = arith.constant 0 : index
    %316 = vector.load %arg19[%c0_92, %c0_93] : memref<1x32xf32, #tpu.memory_space<vmem>>, vector<1x32xf32>
    %c0_94 = arith.constant 0 : index
    %c0_95 = arith.constant 0 : index
    %317 = vector.load %arg20[%c0_94, %c0_95] : memref<1x32xf32, #tpu.memory_space<vmem>>, vector<1x32xf32>
    %cst_96 = arith.constant dense<0.000000e+00> : vector<8xf32>
    %318 = vector.multi_reduction <add>, %315, %cst_96 [1] : vector<8x32xf32> to vector<8xf32>
    %319 = vector.shape_cast %318 : vector<8xf32> to vector<8x1xf32>
    %cst_97 = arith.constant 3.200000e+01 : f32
    %320 = vector.broadcast %cst_97 : f32 to vector<8x1xf32>
    %321 = arith.divf %319, %320 : vector<8x1xf32>
    %322 = vector.broadcast %321 : vector<8x1xf32> to vector<8x32xf32>
    %323 = arith.subf %315, %322 : vector<8x32xf32>
    %324 = arith.mulf %323, %323 : vector<8x32xf32>
    %cst_98 = arith.constant dense<0.000000e+00> : vector<8xf32>
    %325 = vector.multi_reduction <add>, %324, %cst_98 [1] : vector<8x32xf32> to vector<8xf32>
    %326 = vector.shape_cast %325 : vector<8xf32> to vector<8x1xf32>
    %cst_99 = arith.constant 3.200000e+01 : f32
    %327 = vector.broadcast %cst_99 : f32 to vector<8x1xf32>
    %328 = arith.divf %326, %327 : vector<8x1xf32>
    %329 = vector.broadcast %321 : vector<8x1xf32> to vector<8x32xf32>
    %330 = arith.subf %315, %329 : vector<8x32xf32>
    %cst_100 = arith.constant 9.99999974E-6 : f32
    %331 = vector.broadcast %cst_100 : f32 to vector<8x1xf32>
    %332 = arith.addf %328, %331 : vector<8x1xf32>
    %333 = math.rsqrt %332 : vector<8x1xf32>
    %334 = vector.broadcast %333 : vector<8x1xf32> to vector<8x32xf32>
    %335 = arith.mulf %330, %334 : vector<8x32xf32>
    %336 = vector.broadcast %316 : vector<1x32xf32> to vector<8x32xf32>
    %337 = arith.mulf %335, %336 : vector<8x32xf32>
    %338 = vector.broadcast %317 : vector<1x32xf32> to vector<8x32xf32>
    %339 = arith.addf %337, %338 : vector<8x32xf32>
    %c0_101 = arith.constant 0 : index
    %c0_102 = arith.constant 0 : index
    %340 = vector.load %arg21[%c0_101, %c0_102] : memref<32x64xf32, #tpu.memory_space<vmem>>, vector<32x64xf32>
    %cst_103 = arith.constant dense<0.000000e+00> : vector<8x64xf32>
    %341 = tpu.matmul %339, %340, %cst_103 {dimension_numbers = #tpu.dot_dimension_numbers<[1], [0], [0], [1], [0, 0, 1, 1], [], []>} : vector<8x32xf32>, vector<32x64xf32>, vector<8x64xf32> -> vector<8x64xf32>
    %c0_104 = arith.constant 0 : index
    %c0_105 = arith.constant 0 : index
    %342 = vector.load %arg22[%c0_104, %c0_105] : memref<1x64xf32, #tpu.memory_space<vmem>>, vector<1x64xf32>
    %343 = vector.broadcast %342 : vector<1x64xf32> to vector<8x64xf32>
    %344 = arith.addf %341, %343 : vector<8x64xf32>
    %cst_106 = arith.constant 0.000000e+00 : f32
    %345 = vector.broadcast %cst_106 : f32 to vector<8x64xf32>
    %346 = arith.maximumf %344, %345 : vector<8x64xf32>
    %c0_107 = arith.constant 0 : index
    %c0_108 = arith.constant 0 : index
    %347 = vector.load %arg23[%c0_107, %c0_108] : memref<64x32xf32, #tpu.memory_space<vmem>>, vector<64x32xf32>
    %cst_109 = arith.constant dense<0.000000e+00> : vector<8x32xf32>
    %348 = tpu.matmul %346, %347, %cst_109 {dimension_numbers = #tpu.dot_dimension_numbers<[1], [0], [0], [1], [0, 0, 1, 1], [], []>} : vector<8x64xf32>, vector<64x32xf32>, vector<8x32xf32> -> vector<8x32xf32>
    %c0_110 = arith.constant 0 : index
    %c0_111 = arith.constant 0 : index
    %349 = vector.load %arg24[%c0_110, %c0_111] : memref<1x32xf32, #tpu.memory_space<vmem>>, vector<1x32xf32>
    %350 = vector.broadcast %349 : vector<1x32xf32> to vector<8x32xf32>
    %351 = arith.addf %348, %350 : vector<8x32xf32>
    %352 = arith.addf %339, %351 : vector<8x32xf32>
    %c0_112 = arith.constant 0 : index
    %c0_113 = arith.constant 0 : index
    %353 = vector.load %arg25[%c0_112, %c0_113] : memref<1x32xf32, #tpu.memory_space<vmem>>, vector<1x32xf32>
    %c0_114 = arith.constant 0 : index
    %c0_115 = arith.constant 0 : index
    %354 = vector.load %arg26[%c0_114, %c0_115] : memref<1x32xf32, #tpu.memory_space<vmem>>, vector<1x32xf32>
    %cst_116 = arith.constant dense<0.000000e+00> : vector<8xf32>
    %355 = vector.multi_reduction <add>, %352, %cst_116 [1] : vector<8x32xf32> to vector<8xf32>
    %356 = vector.shape_cast %355 : vector<8xf32> to vector<8x1xf32>
    %cst_117 = arith.constant 3.200000e+01 : f32
    %357 = vector.broadcast %cst_117 : f32 to vector<8x1xf32>
    %358 = arith.divf %356, %357 : vector<8x1xf32>
    %359 = vector.broadcast %358 : vector<8x1xf32> to vector<8x32xf32>
    %360 = arith.subf %352, %359 : vector<8x32xf32>
    %361 = arith.mulf %360, %360 : vector<8x32xf32>
    %cst_118 = arith.constant dense<0.000000e+00> : vector<8xf32>
    %362 = vector.multi_reduction <add>, %361, %cst_118 [1] : vector<8x32xf32> to vector<8xf32>
    %363 = vector.shape_cast %362 : vector<8xf32> to vector<8x1xf32>
    %cst_119 = arith.constant 3.200000e+01 : f32
    %364 = vector.broadcast %cst_119 : f32 to vector<8x1xf32>
    %365 = arith.divf %363, %364 : vector<8x1xf32>
    %366 = vector.broadcast %358 : vector<8x1xf32> to vector<8x32xf32>
    %367 = arith.subf %352, %366 : vector<8x32xf32>
    %cst_120 = arith.constant 9.99999974E-6 : f32
    %368 = vector.broadcast %cst_120 : f32 to vector<8x1xf32>
    %369 = arith.addf %365, %368 : vector<8x1xf32>
    %370 = math.rsqrt %369 : vector<8x1xf32>
    %371 = vector.broadcast %370 : vector<8x1xf32> to vector<8x32xf32>
    %372 = arith.mulf %367, %371 : vector<8x32xf32>
    %373 = vector.broadcast %353 : vector<1x32xf32> to vector<8x32xf32>
    %374 = arith.mulf %372, %373 : vector<8x32xf32>
    %375 = vector.broadcast %354 : vector<1x32xf32> to vector<8x32xf32>
    %376 = arith.addf %374, %375 : vector<8x32xf32>
    %c0_121 = arith.constant 0 : index
    %c0_122 = arith.constant 0 : index
    %c0_123 = arith.constant 0 : index
    %377 = vector.load %arg27[%c0_121, %c0_122, %c0_123] : memref<1x8x32xf32, #tpu.memory_space<vmem>>, vector<1x8x32xf32>
    %378 = vector.shape_cast %377 : vector<1x8x32xf32> to vector<8x32xf32>
    %379 = vector.shape_cast %376 : vector<8x32xf32> to vector<1x8x32xf32>
    tpu.vector_store %arg27[%c0_121, %c0_122, %c0_123], %379 {strides = array<i32>} : memref<1x8x32xf32, #tpu.memory_space<vmem>>, vector<1x8x32xf32>,
    %c0_124 = arith.constant 0 : index
    %c0_125 = arith.constant 0 : index
    %c0_126 = arith.constant 0 : index
    %c0_127 = arith.constant 0 : index
    %380 = vector.load %arg28[%c0_124, %c0_125, %c0_126, %c0_127] : memref<1x4x8x128xf32, #tpu.memory_space<vmem>>, vector<1x4x8x128xf32>
    %381 = vector.shape_cast %380 : vector<1x4x8x128xf32> to vector<4x8x128xf32>
    %382 = vector.shape_cast %306 : vector<4x8x128xf32> to vector<1x4x8x128xf32>
    tpu.vector_store %arg28[%c0_124, %c0_125, %c0_126, %c0_127], %382 {strides = array<i32>} : memref<1x4x8x128xf32, #tpu.memory_space<vmem>>, vector<1x4x8x128xf32>,
    return
  }
  func.func @transform_0(%arg0: i32, %arg1: i32) -> (i32, i32, i32) {
    %c0_i32 = arith.constant 0 : i32
    %c0_i32_0 = arith.constant 0 : i32
    return %arg0, %arg1, %c0_i32 : i32, i32, i32
  }
  func.func @transform_1(%arg0: i32, %arg1: i32) -> (i32, i32, i32, i32) {
    %c0_i32 = arith.constant 0 : i32
    %c0_i32_0 = arith.constant 0 : i32
    %c0_i32_1 = arith.constant 0 : i32
    %c0_i32_2 = arith.constant 0 : i32
    return %arg0, %c0_i32, %c0_i32_0, %c0_i32_1 : i32, i32, i32, i32
  }
  func.func @transform_2(%arg0: i32, %arg1: i32) -> (i32, i32, i32, i32) {
    %c0_i32 = arith.constant 0 : i32
    %c0_i32_0 = arith.constant 0 : i32
    %c0_i32_1 = arith.constant 0 : i32
    %c0_i32_2 = arith.constant 0 : i32
    return %arg0, %c0_i32, %c0_i32_0, %c0_i32_1 : i32, i32, i32, i32
  }
  func.func @transform_3(%arg0: i32, %arg1: i32) -> (i32, i32, i32, i32) {
    %c0_i32 = arith.constant 0 : i32
    %c0_i32_0 = arith.constant 0 : i32
    %c0_i32_1 = arith.constant 0 : i32
    %c0_i32_2 = arith.constant 0 : i32
    return %arg0, %c0_i32, %c0_i32_0, %c0_i32_1 : i32, i32, i32, i32
  }
  func.func @transform_4(%arg0: i32, %arg1: i32) -> (i32, i32, i32, i32) {
    %c0_i32 = arith.constant 0 : i32
    %c0_i32_0 = arith.constant 0 : i32
    %c0_i32_1 = arith.constant 0 : i32
    %c0_i32_2 = arith.constant 0 : i32
    return %arg0, %c0_i32, %c0_i32_0, %c0_i32_1 : i32, i32, i32, i32
  }
  func.func @transform_5(%arg0: i32, %arg1: i32) -> (i32, i32) {
    %c0_i32 = arith.constant 0 : i32
    %c0_i32_0 = arith.constant 0 : i32
    %c0_i32_1 = arith.constant 0 : i32
    return %c0_i32, %c0_i32_0 : i32, i32
  }
  func.func @transform_6(%arg0: i32, %arg1: i32) -> (i32, i32) {
    %c0_i32 = arith.constant 0 : i32
    %c0_i32_0 = arith.constant 0 : i32
    %c0_i32_1 = arith.constant 0 : i32
    return %c0_i32, %c0_i32_0 : i32, i32
  }
  func.func @transform_7(%arg0: i32, %arg1: i32) -> (i32, i32) {
    %c0_i32 = arith.constant 0 : i32
    %c0_i32_0 = arith.constant 0 : i32
    %c0_i32_1 = arith.constant 0 : i32
    return %c0_i32, %c0_i32_0 : i32, i32
  }
  func.func @transform_8(%arg0: i32, %arg1: i32) -> (i32, i32) {
    %c0_i32 = arith.constant 0 : i32
    %c0_i32_0 = arith.constant 0 : i32
    %c0_i32_1 = arith.constant 0 : i32
    return %c0_i32, %c0_i32_0 : i32, i32
  }
  func.func @transform_9(%arg0: i32, %arg1: i32) -> (i32, i32) {
    %c0_i32 = arith.constant 0 : i32
    %c0_i32_0 = arith.constant 0 : i32
    %c0_i32_1 = arith.constant 0 : i32
    return %c0_i32, %c0_i32_0 : i32, i32
  }
  func.func @transform_10(%arg0: i32, %arg1: i32) -> (i32, i32) {
    %c0_i32 = arith.constant 0 : i32
    %c0_i32_0 = arith.constant 0 : i32
    %c0_i32_1 = arith.constant 0 : i32
    return %c0_i32, %c0_i32_0 : i32, i32
  }
  func.func @transform_11(%arg0: i32, %arg1: i32) -> (i32, i32) {
    %c0_i32 = arith.constant 0 : i32
    %c0_i32_0 = arith.constant 0 : i32
    %c0_i32_1 = arith.constant 0 : i32
    return %c0_i32, %c0_i32_0 : i32, i32
  }
  func.func @transform_12(%arg0: i32, %arg1: i32) -> (i32, i32) {
    %c0_i32 = arith.constant 0 : i32
    %c0_i32_0 = arith.constant 0 : i32
    %c0_i32_1 = arith.constant 0 : i32
    return %c0_i32, %c0_i32_0 : i32, i32
  }
  func.func @transform_13(%arg0: i32, %arg1: i32) -> (i32, i32) {
    %c0_i32 = arith.constant 0 : i32
    %c0_i32_0 = arith.constant 0 : i32
    %c0_i32_1 = arith.constant 0 : i32
    return %c0_i32, %c0_i32_0 : i32, i32
  }
  func.func @transform_14(%arg0: i32, %arg1: i32) -> (i32, i32) {
    %c0_i32 = arith.constant 0 : i32
    %c0_i32_0 = arith.constant 0 : i32
    %c0_i32_1 = arith.constant 0 : i32
    return %c0_i32, %c0_i32_0 : i32, i32
  }
  func.func @transform_15(%arg0: i32, %arg1: i32) -> (i32, i32) {
    %c0_i32 = arith.constant 0 : i32
    %c0_i32_0 = arith.constant 0 : i32
    %c0_i32_1 = arith.constant 0 : i32
    return %c0_i32, %c0_i32_0 : i32, i32
  }
  func.func @transform_16(%arg0: i32, %arg1: i32) -> (i32, i32) {
    %c0_i32 = arith.constant 0 : i32
    %c0_i32_0 = arith.constant 0 : i32
    %c0_i32_1 = arith.constant 0 : i32
    return %c0_i32, %c0_i32_0 : i32, i32
  }
  func.func @transform_17(%arg0: i32, %arg1: i32) -> (i32, i32) {
    %c0_i32 = arith.constant 0 : i32
    %c0_i32_0 = arith.constant 0 : i32
    %c0_i32_1 = arith.constant 0 : i32
    return %c0_i32, %c0_i32_0 : i32, i32
  }
  func.func @transform_18(%arg0: i32, %arg1: i32) -> (i32, i32) {
    %c0_i32 = arith.constant 0 : i32
    %c0_i32_0 = arith.constant 0 : i32
    %c0_i32_1 = arith.constant 0 : i32
    return %c0_i32, %c0_i32_0 : i32, i32
  }
  func.func @transform_19(%arg0: i32, %arg1: i32) -> (i32, i32) {
    %c0_i32 = arith.constant 0 : i32
    %c0_i32_0 = arith.constant 0 : i32
    %c0_i32_1 = arith.constant 0 : i32
    return %c0_i32, %c0_i32_0 : i32, i32
  }
  func.func @transform_20(%arg0: i32, %arg1: i32) -> (i32, i32) {
    %c0_i32 = arith.constant 0 : i32
    %c0_i32_0 = arith.constant 0 : i32
    %c0_i32_1 = arith.constant 0 : i32
    return %c0_i32, %c0_i32_0 : i32, i32
  }
  func.func @transform_21(%arg0: i32, %arg1: i32) -> (i32, i32) {
    %c0_i32 = arith.constant 0 : i32
    %c0_i32_0 = arith.constant 0 : i32
    %c0_i32_1 = arith.constant 0 : i32
    return %c0_i32, %c0_i32_0 : i32, i32
  }
  func.func @transform_22(%arg0: i32, %arg1: i32) -> (i32, i32) {
    %c0_i32 = arith.constant 0 : i32
    %c0_i32_0 = arith.constant 0 : i32
    %c0_i32_1 = arith.constant 0 : i32
    return %c0_i32, %c0_i32_0 : i32, i32
  }
  func.func @transform_23(%arg0: i32, %arg1: i32) -> (i32, i32) {
    %c0_i32 = arith.constant 0 : i32
    %c0_i32_0 = arith.constant 0 : i32
    %c0_i32_1 = arith.constant 0 : i32
    return %c0_i32, %c0_i32_0 : i32, i32
  }
  func.func @transform_24(%arg0: i32, %arg1: i32) -> (i32, i32) {
    %c0_i32 = arith.constant 0 : i32
    %c0_i32_0 = arith.constant 0 : i32
    %c0_i32_1 = arith.constant 0 : i32
    return %c0_i32, %c0_i32_0 : i32, i32
  }
  func.func @transform_25(%arg0: i32, %arg1: i32) -> (i32, i32, i32) {
    %c0_i32 = arith.constant 0 : i32
    %c0_i32_0 = arith.constant 0 : i32
    return %arg0, %arg1, %c0_i32 : i32, i32, i32
  }
  func.func @transform_26(%arg0: i32, %arg1: i32) -> (i32, i32, i32, i32) {
    %c0_i32 = arith.constant 0 : i32
    %c0_i32_0 = arith.constant 0 : i32
    %c0_i32_1 = arith.constant 0 : i32
    return %arg0, %c0_i32, %arg1, %c0_i32_0 : i32, i32, i32, i32
  }
}

</mosaic_0001>

<llo_original>
// kernel: tpu_custom_call.1
$region0: #{tpu_custom_call.1}
  #allocation0 [shape = 'u32[]', space=smem, size = 0x4, offset = 0x4, fixed_abs, tag = 'smem constant byte address 0x4 - core index']
  #allocation1 [shape = 'u32[144,128]{1,0:T(1,128)}', space=vmem, size = 0x12000, scoped, tag = 'internal scratch']
  %s0 = inlined_call_operand.vmem [shape: f32[2,16,32], index: 0, kind: input, shape index: {}]
  %s1 = inlined_call_operand.vmem [shape: f32[2,4,8,16], index: 1, kind: input, shape index: {}]
  %s2 = inlined_call_operand.vmem [shape: f32[2,4,16,8], index: 2, kind: input, shape index: {}]
  %s3 = inlined_call_operand.vmem [shape: f32[2,4,8,128], index: 3, kind: input, shape index: {}]
  %s4 = inlined_call_operand.vmem [shape: f32[2,4,128,8], index: 4, kind: input, shape index: {}]
  %s5 = inlined_call_operand.vmem [shape: f32[32,32], index: 5, kind: input, shape index: {}]
  %s6 = inlined_call_operand.vmem [shape: f32[1,32], index: 6, kind: input, shape index: {}]
  %s7 = inlined_call_operand.vmem [shape: f32[32,32], index: 7, kind: input, shape index: {}]
  %s8 = inlined_call_operand.vmem [shape: f32[1,32], index: 8, kind: input, shape index: {}]
  %s9 = inlined_call_operand.vmem [shape: f32[8,9], index: 9, kind: input, shape index: {}]
  %s10 = inlined_call_operand.vmem [shape: f32[1,32], index: 10, kind: input, shape index: {}]
  %s11 = inlined_call_operand.vmem [shape: f32[1,32], index: 11, kind: input, shape index: {}]
  %s12 = inlined_call_operand.vmem [shape: f32[32,32], index: 12, kind: input, shape index: {}]
  %s13 = inlined_call_operand.vmem [shape: f32[1,32], index: 13, kind: input, shape index: {}]
  %s14 = inlined_call_operand.vmem [shape: f32[32,32], index: 14, kind: input, shape index: {}]
  %s15 = inlined_call_operand.vmem [shape: f32[1,32], index: 15, kind: input, shape index: {}]
  %s16 = inlined_call_operand.vmem [shape: f32[8,9], index: 16, kind: input, shape index: {}]
  %s17 = inlined_call_operand.vmem [shape: f32[1,32], index: 17, kind: input, shape index: {}]
  %s18 = inlined_call_operand.vmem [shape: f32[1,32], index: 18, kind: input, shape index: {}]
  %s19 = inlined_call_operand.vmem [shape: f32[32,64], index: 19, kind: input, shape index: {}]
  %s20 = inlined_call_operand.vmem [shape: f32[1,64], index: 20, kind: input, shape index: {}]
  %s21 = inlined_call_operand.vmem [shape: f32[64,32], index: 21, kind: input, shape index: {}]
  %s22 = inlined_call_operand.vmem [shape: f32[1,32], index: 22, kind: input, shape index: {}]
  %s23 = inlined_call_operand.vmem [shape: f32[1,32], index: 23, kind: input, shape index: {}]
  %s24 = inlined_call_operand.vmem [shape: f32[1,32], index: 24, kind: input, shape index: {}]
  %s25 = inlined_call_operand.hbm [shape: f32[2,16,32], index: 25, kind: output, shape index: {0}]
  %s26 = inlined_call_operand.hbm [shape: f32[2,4,16,128], index: 26, kind: output, shape index: {1}]
  %27 = xla_tuple %s25, %s26
  %s28 = sld [smem:[#allocation0]]
  $region141: #{tpu_custom_call.1} parent=0
    _
  %s30 = ssub.s32 1, %s28
  %s31 = scalar_select 0, %s30, %s28
  $region1: #{tpu_custom_call.1} parent=0
    #allocation2 [shape = 'u8[8192]{0}', space=vmem, size = 0x2000, scoped, tag = 'output window, operand 0']
    #allocation3 [shape = 's32[2]{0}', space=sflag, size = 0x8, scoped, tag = 'scoped memory for tpu_custom_call.1']
    #allocation4 [shape = 'u8[32768]{0}', space=vmem, size = 0x8000, scoped, tag = 'output window, operand 1']
    #allocation5 [shape = 's32[2]{0}', space=sflag, size = 0x8, scoped, tag = 'scoped memory for tpu_custom_call.1']
    %32 = vsyncpa [#allocation3], 0
    %s33 = scalar_lea.sflag [#allocation3], 1
    %34 = vsyncpa %s33, 0
    %35 = vsyncpa [#allocation5], 0
    %s36 = scalar_lea.sflag [#allocation5], 1
    %37 = vsyncpa %s36, 0
    loop: start=0, step=1, limit=6
    $region2: #{tpu_custom_call.1} parent=1 // loop_pre_header
      _
    $region3: #{tpu_custom_call.1} parent=1 // loop_header
      %s39 = sphi 0, %s43
      %p40 = scmp.ge.s32.totalorder %s39, 6
      %s46 = sphi 0, %s58
      %s47 = sphi 0, %s54
      %s48 = sphi 0, %s46
      %s49 = sphi 0, %s47
      %s50 = sphi 0, %s48
      %s51 = sphi 0, %s49
      %s63 = sphi 0, %s65
      %s66 = sphi 0, %s63
      %s67 = sphi 0, %s66
      %s83 = sphi 0, %s67
      %s89 = sphi 0, %s91
      %s92 = sphi 0, %s89
      %s93 = sphi 0, %s92
      %s109 = sphi 0, %s93
      %s115 = sphi 0, %s117
      %s118 = sphi 0, %s115
      %s119 = sphi 0, %s118
      %s135 = sphi 0, %s119
      %s141 = sphi 0, %s143
      %s144 = sphi 0, %s141
      %s145 = sphi 0, %s144
      %s161 = sphi 0, %s145
      %s167 = sphi 0, %s169
      %s170 = sphi 0, %s167
      %s171 = sphi 0, %s170
      %s187 = sphi 0, %s171
      %s191 = sphi 0, %s191
      %s193 = sphi 0, %s191
      %s194 = sphi 0, %s193
      %s208 = sphi 0, %s194
      %s212 = sphi 0, %s212
      %s214 = sphi 0, %s212
      %s215 = sphi 0, %s214
      %s229 = sphi 0, %s215
      %s233 = sphi 0, %s233
      %s235 = sphi 0, %s233
      %s236 = sphi 0, %s235
      %s250 = sphi 0, %s236
      %s254 = sphi 0, %s254
      %s256 = sphi 0, %s254
      %s257 = sphi 0, %s256
      %s271 = sphi 0, %s257
      %s275 = sphi 0, %s275
      %s277 = sphi 0, %s275
      %s278 = sphi 0, %s277
      %s292 = sphi 0, %s278
      %s296 = sphi 0, %s296
      %s298 = sphi 0, %s296
      %s299 = sphi 0, %s298
      %s313 = sphi 0, %s299
      %s317 = sphi 0, %s317
      %s319 = sphi 0, %s317
      %s320 = sphi 0, %s319
      %s334 = sphi 0, %s320
      %s338 = sphi 0, %s338
      %s340 = sphi 0, %s338
      %s341 = sphi 0, %s340
      %s355 = sphi 0, %s341
      %s359 = sphi 0, %s359
      %s361 = sphi 0, %s359
      %s362 = sphi 0, %s361
      %s376 = sphi 0, %s362
      %s380 = sphi 0, %s380
      %s382 = sphi 0, %s380
      %s383 = sphi 0, %s382
      %s397 = sphi 0, %s383
      %s401 = sphi 0, %s401
      %s403 = sphi 0, %s401
      %s404 = sphi 0, %s403
      %s418 = sphi 0, %s404
      %s422 = sphi 0, %s422
      %s424 = sphi 0, %s422
      %s425 = sphi 0, %s424
      %s439 = sphi 0, %s425
      %s443 = sphi 0, %s443
      %s445 = sphi 0, %s443
      %s446 = sphi 0, %s445
      %s460 = sphi 0, %s446
      %s464 = sphi 0, %s464
      %s466 = sphi 0, %s464
      %s467 = sphi 0, %s466
      %s481 = sphi 0, %s467
      %s485 = sphi 0, %s485
      %s487 = sphi 0, %s485
      %s488 = sphi 0, %s487
      %s502 = sphi 0, %s488
      %s506 = sphi 0, %s506
      %s508 = sphi 0, %s506
      %s509 = sphi 0, %s508
      %s523 = sphi 0, %s509
      %s527 = sphi 0, %s527
      %s529 = sphi 0, %s527
      %s530 = sphi 0, %s529
      %s544 = sphi 0, %s530
      %s548 = sphi 0, %s548
      %s550 = sphi 0, %s548
      %s551 = sphi 0, %s550
      %s565 = sphi 0, %s551
      %s569 = sphi 0, %s569
      %s571 = sphi 0, %s569
      %s572 = sphi 0, %s571
      %s586 = sphi 0, %s572
      %s590 = sphi 0, %s590
      %s592 = sphi 0, %s590
      %s593 = sphi 0, %s592
      %s607 = sphi 0, %s593
      %s615 = sphi 0, %s617
      %s618 = sphi 0, %s615
      %s619 = sphi 0, %s618
      %s635 = sphi 0, %s619
      %s643 = sphi 0, %s645
      %s646 = sphi 0, %s643
      %s647 = sphi 0, %s646
      %s663 = sphi 0, %s647
    $region4: #{tpu_custom_call.1} parent=1 // loop_header_branch
      %42 = sbr.rel (%p40) target = $region8
    $region5: #{tpu_custom_call.1} parent=1 // loop_body
      %s44 = ssub.s32 %s39, 1
      %s45 = ssub.s32 %s39, 2
      %s52 = sadd.s32 1, %s47
      %p53 = scmp.ge.s32.totalorder %s52, 2
      %s54 = scalar_select %p53, 0, %s52
      %s55 = sadd.s32 1, %s46
      %s56 = scalar_select %p53, %s55, %s46
      %p57 = scmp.ge.s32.totalorder %s56, 2
      %s58 = scalar_select %p57, 0, %s56
      %s59 = ssub.s32 %s46, %s58
      %s60 = ssub.s32 %s47, %s54
      %s61 = sor.u32 %s59, %s60
      %p62 = scmp.eq.s32.totalorder %s61, 0
      %s64 = sadd.s32 %s63, 1
      %s65 = scalar_select %p62, %s63, %s64
      %p68 = pneg %p62
      %p69 = scmp.eq.s32.totalorder %s39, 3
      %p70 = por %p68, %p69
      %p71 = scmp.ne.s32.totalorder %s63, %s66
      %p72 = scmp.eq.s32.totalorder %s39, 0
      %p73 = por %p71, %p72
      %p74 = scmp.ne.s32.totalorder %s63, %s66
      %p75 = scmp.eq.s32.totalorder %s44, 3
      %p76 = por %p74, %p75
      %p77 = scmp.ne.s32.totalorder %s66, %s67
      %p78 = scmp.eq.s32.totalorder %s44, 0
      %p79 = por %p77, %p78
      %p80 = scmp.ne.s32.totalorder %s66, %s67
      %p81 = scmp.eq.s32.totalorder %s45, 3
      %p82 = por %p80, %p81
      %p84 = scmp.ne.s32.totalorder %s67, %s83
      %p85 = scmp.eq.s32.totalorder %s45, 0
      %p86 = por %p84, %p85
      %s87 = ssub.s32 %s46, %s58
      %p88 = scmp.eq.s32.totalorder %s87, 0
      %s90 = sadd.s32 %s89, 1
      %s91 = scalar_select %p88, %s89, %s90
      %p94 = pneg %p88
      %p95 = scmp.eq.s32.totalorder %s39, 3
      %p96 = por %p94, %p95
      %p97 = scmp.ne.s32.totalorder %s89, %s92
      %p98 = scmp.eq.s32.totalorder %s39, 0
      %p99 = por %p97, %p98
      %p100 = scmp.ne.s32.totalorder %s89, %s92
      %p101 = scmp.eq.s32.totalorder %s44, 3
      %p102 = por %p100, %p101
      %p103 = scmp.ne.s32.totalorder %s92, %s93
      %p104 = scmp.eq.s32.totalorder %s44, 0
      %p105 = por %p103, %p104
      %p106 = scmp.ne.s32.totalorder %s92, %s93
      %p107 = scmp.eq.s32.totalorder %s45, 3
      %p108 = por %p106, %p107
      %p110 = scmp.ne.s32.totalorder %s93, %s109
      %p111 = scmp.eq.s32.totalorder %s45, 0
      %p112 = por %p110, %p111
      %s113 = ssub.s32 %s46, %s58
      %p114 = scmp.eq.s32.totalorder %s113, 0
      %s116 = sadd.s32 %s115, 1
      %s117 = scalar_select %p114, %s115, %s116
      %p120 = pneg %p114
      %p121 = scmp.eq.s32.totalorder %s39, 3
      %p122 = por %p120, %p121
      %p123 = scmp.ne.s32.totalorder %s115, %s118
      %p124 = scmp.eq.s32.totalorder %s39, 0
      %p125 = por %p123, %p124
      %p126 = scmp.ne.s32.totalorder %s115, %s118
      %p127 = scmp.eq.s32.totalorder %s44, 3
      %p128 = por %p126, %p127
      %p129 = scmp.ne.s32.totalorder %s118, %s119
      %p130 = scmp.eq.s32.totalorder %s44, 0
      %p131 = por %p129, %p130
      %p132 = scmp.ne.s32.totalorder %s118, %s119
      %p133 = scmp.eq.s32.totalorder %s45, 3
      %p134 = por %p132, %p133
      %p136 = scmp.ne.s32.totalorder %s119, %s135
      %p137 = scmp.eq.s32.totalorder %s45, 0
      %p138 = por %p136, %p137
      %s139 = ssub.s32 %s46, %s58
      %p140 = scmp.eq.s32.totalorder %s139, 0
      %s142 = sadd.s32 %s141, 1
      %s143 = scalar_select %p140, %s141, %s142
      %p146 = pneg %p140
      %p147 = scmp.eq.s32.totalorder %s39, 3
      %p148 = por %p146, %p147
      %p149 = scmp.ne.s32.totalorder %s141, %s144
      %p150 = scmp.eq.s32.totalorder %s39, 0
      %p151 = por %p149, %p150
      %p152 = scmp.ne.s32.totalorder %s141, %s144
      %p153 = scmp.eq.s32.totalorder %s44, 3
      %p154 = por %p152, %p153
      %p155 = scmp.ne.s32.totalorder %s144, %s145
      %p156 = scmp.eq.s32.totalorder %s44, 0
      %p157 = por %p155, %p156
      %p158 = scmp.ne.s32.totalorder %s144, %s145
      %p159 = scmp.eq.s32.totalorder %s45, 3
      %p160 = por %p158, %p159
      %p162 = scmp.ne.s32.totalorder %s145, %s161
      %p163 = scmp.eq.s32.totalorder %s45, 0
      %p164 = por %p162, %p163
      %s165 = ssub.s32 %s46, %s58
      %p166 = scmp.eq.s32.totalorder %s165, 0
      %s168 = sadd.s32 %s167, 1
      %s169 = scalar_select %p166, %s167, %s168
      %p172 = pneg %p166
      %p173 = scmp.eq.s32.totalorder %s39, 3
      %p174 = por %p172, %p173
      %p175 = scmp.ne.s32.totalorder %s167, %s170
      %p176 = scmp.eq.s32.totalorder %s39, 0
      %p177 = por %p175, %p176
      %p178 = scmp.ne.s32.totalorder %s167, %s170
      %p179 = scmp.eq.s32.totalorder %s44, 3
      %p180 = por %p178, %p179
      %p181 = scmp.ne.s32.totalorder %s170, %s171
      %p182 = scmp.eq.s32.totalorder %s44, 0
      %p183 = por %p181, %p182
      %p184 = scmp.ne.s32.totalorder %s170, %s171
      %p185 = scmp.eq.s32.totalorder %s45, 3
      %p186 = por %p184, %p185
      %p188 = scmp.ne.s32.totalorder %s171, %s187
      %p189 = scmp.eq.s32.totalorder %s45, 0
      %p190 = por %p188, %p189
      %s192 = sadd.s32 %s191, 1
      %p195 = scmp.eq.s32.totalorder %s39, 3
      %p196 = scmp.ne.s32.totalorder %s191, %s193
      %p197 = scmp.eq.s32.totalorder %s39, 0
      %p198 = por %p196, %p197
      %p199 = scmp.ne.s32.totalorder %s191, %s193
      %p200 = scmp.eq.s32.totalorder %s44, 3
      %p201 = por %p199, %p200
      %p202 = scmp.ne.s32.totalorder %s193, %s194
      %p203 = scmp.eq.s32.totalorder %s44, 0
      %p204 = por %p202, %p203
      %p205 = scmp.ne.s32.totalorder %s193, %s194
      %p206 = scmp.eq.s32.totalorder %s45, 3
      %p207 = por %p205, %p206
      %p209 = scmp.ne.s32.totalorder %s194, %s208
      %p210 = scmp.eq.s32.totalorder %s45, 0
      %p211 = por %p209, %p210
      %s213 = sadd.s32 %s212, 1
      %p216 = scmp.eq.s32.totalorder %s39, 3
      %p217 = scmp.ne.s32.totalorder %s212, %s214
      %p218 = scmp.eq.s32.totalorder %s39, 0
      %p219 = por %p217, %p218
      %p220 = scmp.ne.s32.totalorder %s212, %s214
      %p221 = scmp.eq.s32.totalorder %s44, 3
      %p222 = por %p220, %p221
      %p223 = scmp.ne.s32.totalorder %s214, %s215
      %p224 = scmp.eq.s32.totalorder %s44, 0
      %p225 = por %p223, %p224
      %p226 = scmp.ne.s32.totalorder %s214, %s215
      %p227 = scmp.eq.s32.totalorder %s45, 3
      %p228 = por %p226, %p227
      %p230 = scmp.ne.s32.totalorder %s215, %s229
      %p231 = scmp.eq.s32.totalorder %s45, 0
      %p232 = por %p230, %p231
      %s234 = sadd.s32 %s233, 1
      %p237 = scmp.eq.s32.totalorder %s39, 3
      %p238 = scmp.ne.s32.totalorder %s233, %s235
      %p239 = scmp.eq.s32.totalorder %s39, 0
      %p240 = por %p238, %p239
      %p241 = scmp.ne.s32.totalorder %s233, %s235
      %p242 = scmp.eq.s32.totalorder %s44, 3
      %p243 = por %p241, %p242
      %p244 = scmp.ne.s32.totalorder %s235, %s236
      %p245 = scmp.eq.s32.totalorder %s44, 0
      %p246 = por %p244, %p245
      %p247 = scmp.ne.s32.totalorder %s235, %s236
      %p248 = scmp.eq.s32.totalorder %s45, 3
      %p249 = por %p247, %p248
      %p251 = scmp.ne.s32.totalorder %s236, %s250
      %p252 = scmp.eq.s32.totalorder %s45, 0
      %p253 = por %p251, %p252
      %s255 = sadd.s32 %s254, 1
      %p258 = scmp.eq.s32.totalorder %s39, 3
      %p259 = scmp.ne.s32.totalorder %s254, %s256
      %p260 = scmp.eq.s32.totalorder %s39, 0
      %p261 = por %p259, %p260
      %p262 = scmp.ne.s32.totalorder %s254, %s256
      %p263 = scmp.eq.s32.totalorder %s44, 3
      %p264 = por %p262, %p263
      %p265 = scmp.ne.s32.totalorder %s256, %s257
      %p266 = scmp.eq.s32.totalorder %s44, 0
      %p267 = por %p265, %p266
      %p268 = scmp.ne.s32.totalorder %s256, %s257
      %p269 = scmp.eq.s32.totalorder %s45, 3
      %p270 = por %p268, %p269
      %p272 = scmp.ne.s32.totalorder %s257, %s271
      %p273 = scmp.eq.s32.totalorder %s45, 0
      %p274 = por %p272, %p273
      %s276 = sadd.s32 %s275, 1
      %p279 = scmp.eq.s32.totalorder %s39, 3
      %p280 = scmp.ne.s32.totalorder %s275, %s277
      %p281 = scmp.eq.s32.totalorder %s39, 0
      %p282 = por %p280, %p281
      %p283 = scmp.ne.s32.totalorder %s275, %s277
      %p284 = scmp.eq.s32.totalorder %s44, 3
      %p285 = por %p283, %p284
      %p286 = scmp.ne.s32.totalorder %s277, %s278
      %p287 = scmp.eq.s32.totalorder %s44, 0
      %p288 = por %p286, %p287
      %p289 = scmp.ne.s32.totalorder %s277, %s278
      %p290 = scmp.eq.s32.totalorder %s45, 3
      %p291 = por %p289, %p290
      %p293 = scmp.ne.s32.totalorder %s278, %s292
      %p294 = scmp.eq.s32.totalorder %s45, 0
      %p295 = por %p293, %p294
      %s297 = sadd.s32 %s296, 1
      %p300 = scmp.eq.s32.totalorder %s39, 3
      %p301 = scmp.ne.s32.totalorder %s296, %s298
      %p302 = scmp.eq.s32.totalorder %s39, 0
      %p303 = por %p301, %p302
      %p304 = scmp.ne.s32.totalorder %s296, %s298
      %p305 = scmp.eq.s32.totalorder %s44, 3
      %p306 = por %p304, %p305
      %p307 = scmp.ne.s32.totalorder %s298, %s299
      %p308 = scmp.eq.s32.totalorder %s44, 0
      %p309 = por %p307, %p308
      %p310 = scmp.ne.s32.totalorder %s298, %s299
      %p311 = scmp.eq.s32.totalorder %s45, 3
      %p312 = por %p310, %p311
      %p314 = scmp.ne.s32.totalorder %s299, %s313
      %p315 = scmp.eq.s32.totalorder %s45, 0
      %p316 = por %p314, %p315
      %s318 = sadd.s32 %s317, 1
      %p321 = scmp.eq.s32.totalorder %s39, 3
      %p322 = scmp.ne.s32.totalorder %s317, %s319
      %p323 = scmp.eq.s32.totalorder %s39, 0
      %p324 = por %p322, %p323
      %p325 = scmp.ne.s32.totalorder %s317, %s319
      %p326 = scmp.eq.s32.totalorder %s44, 3
      %p327 = por %p325, %p326
      %p328 = scmp.ne.s32.totalorder %s319, %s320
      %p329 = scmp.eq.s32.totalorder %s44, 0
      %p330 = por %p328, %p329
      %p331 = scmp.ne.s32.totalorder %s319, %s320
      %p332 = scmp.eq.s32.totalorder %s45, 3
      %p333 = por %p331, %p332
      %p335 = scmp.ne.s32.totalorder %s320, %s334
      %p336 = scmp.eq.s32.totalorder %s45, 0
      %p337 = por %p335, %p336
      %s339 = sadd.s32 %s338, 1
      %p342 = scmp.eq.s32.totalorder %s39, 3
      %p343 = scmp.ne.s32.totalorder %s338, %s340
      %p344 = scmp.eq.s32.totalorder %s39, 0
      %p345 = por %p343, %p344
      %p346 = scmp.ne.s32.totalorder %s338, %s340
      %p347 = scmp.eq.s32.totalorder %s44, 3
      %p348 = por %p346, %p347
      %p349 = scmp.ne.s32.totalorder %s340, %s341
      %p350 = scmp.eq.s32.totalorder %s44, 0
      %p351 = por %p349, %p350
      %p352 = scmp.ne.s32.totalorder %s340, %s341
      %p353 = scmp.eq.s32.totalorder %s45, 3
      %p354 = por %p352, %p353
      %p356 = scmp.ne.s32.totalorder %s341, %s355
      %p357 = scmp.eq.s32.totalorder %s45, 0
      %p358 = por %p356, %p357
      %s360 = sadd.s32 %s359, 1
      %p363 = scmp.eq.s32.totalorder %s39, 3
      %p364 = scmp.ne.s32.totalorder %s359, %s361
      %p365 = scmp.eq.s32.totalorder %s39, 0
      %p366 = por %p364, %p365
      %p367 = scmp.ne.s32.totalorder %s359, %s361
      %p368 = scmp.eq.s32.totalorder %s44, 3
      %p369 = por %p367, %p368
      %p370 = scmp.ne.s32.totalorder %s361, %s362
      %p371 = scmp.eq.s32.totalorder %s44, 0
      %p372 = por %p370, %p371
      %p373 = scmp.ne.s32.totalorder %s361, %s362
      %p374 = scmp.eq.s32.totalorder %s45, 3
      %p375 = por %p373, %p374
      %p377 = scmp.ne.s32.totalorder %s362, %s376
      %p378 = scmp.eq.s32.totalorder %s45, 0
      %p379 = por %p377, %p378
      %s381 = sadd.s32 %s380, 1
      %p384 = scmp.eq.s32.totalorder %s39, 3
      %p385 = scmp.ne.s32.totalorder %s380, %s382
      %p386 = scmp.eq.s32.totalorder %s39, 0
      %p387 = por %p385, %p386
      %p388 = scmp.ne.s32.totalorder %s380, %s382
      %p389 = scmp.eq.s32.totalorder %s44, 3
      %p390 = por %p388, %p389
      %p391 = scmp.ne.s32.totalorder %s382, %s383
      %p392 = scmp.eq.s32.totalorder %s44, 0
      %p393 = por %p391, %p392
      %p394 = scmp.ne.s32.totalorder %s382, %s383
      %p395 = scmp.eq.s32.totalorder %s45, 3
      %p396 = por %p394, %p395
      %p398 = scmp.ne.s32.totalorder %s383, %s397
      %p399 = scmp.eq.s32.totalorder %s45, 0
      %p400 = por %p398, %p399
      %s402 = sadd.s32 %s401, 1
      %p405 = scmp.eq.s32.totalorder %s39, 3
      %p406 = scmp.ne.s32.totalorder %s401, %s403
      %p407 = scmp.eq.s32.totalorder %s39, 0
      %p408 = por %p406, %p407
      %p409 = scmp.ne.s32.totalorder %s401, %s403
      %p410 = scmp.eq.s32.totalorder %s44, 3
      %p411 = por %p409, %p410
      %p412 = scmp.ne.s32.totalorder %s403, %s404
      %p413 = scmp.eq.s32.totalorder %s44, 0
      %p414 = por %p412, %p413
      %p415 = scmp.ne.s32.totalorder %s403, %s404
      %p416 = scmp.eq.s32.totalorder %s45, 3
      %p417 = por %p415, %p416
      %p419 = scmp.ne.s32.totalorder %s404, %s418
      %p420 = scmp.eq.s32.totalorder %s45, 0
      %p421 = por %p419, %p420
      %s423 = sadd.s32 %s422, 1
      %p426 = scmp.eq.s32.totalorder %s39, 3
      %p427 = scmp.ne.s32.totalorder %s422, %s424
      %p428 = scmp.eq.s32.totalorder %s39, 0
      %p429 = por %p427, %p428
      %p430 = scmp.ne.s32.totalorder %s422, %s424
      %p431 = scmp.eq.s32.totalorder %s44, 3
      %p432 = por %p430, %p431
      %p433 = scmp.ne.s32.totalorder %s424, %s425
      %p434 = scmp.eq.s32.totalorder %s44, 0
      %p435 = por %p433, %p434
      %p436 = scmp.ne.s32.totalorder %s424, %s425
      %p437 = scmp.eq.s32.totalorder %s45, 3
      %p438 = por %p436, %p437
      %p440 = scmp.ne.s32.totalorder %s425, %s439
      %p441 = scmp.eq.s32.totalorder %s45, 0
      %p442 = por %p440, %p441
      %s444 = sadd.s32 %s443, 1
      %p447 = scmp.eq.s32.totalorder %s39, 3
      %p448 = scmp.ne.s32.totalorder %s443, %s445
      %p449 = scmp.eq.s32.totalorder %s39, 0
      %p450 = por %p448, %p449
      %p451 = scmp.ne.s32.totalorder %s443, %s445
      %p452 = scmp.eq.s32.totalorder %s44, 3
      %p453 = por %p451, %p452
      %p454 = scmp.ne.s32.totalorder %s445, %s446
      %p455 = scmp.eq.s32.totalorder %s44, 0
      %p456 = por %p454, %p455
      %p457 = scmp.ne.s32.totalorder %s445, %s446
      %p458 = scmp.eq.s32.totalorder %s45, 3
      %p459 = por %p457, %p458
      %p461 = scmp.ne.s32.totalorder %s446, %s460
      %p462 = scmp.eq.s32.totalorder %s45, 0
      %p463 = por %p461, %p462
      %s465 = sadd.s32 %s464, 1
      %p468 = scmp.eq.s32.totalorder %s39, 3
      %p469 = scmp.ne.s32.totalorder %s464, %s466
      %p470 = scmp.eq.s32.totalorder %s39, 0
      %p471 = por %p469, %p470
      %p472 = scmp.ne.s32.totalorder %s464, %s466
      %p473 = scmp.eq.s32.totalorder %s44, 3
      %p474 = por %p472, %p473
      %p475 = scmp.ne.s32.totalorder %s466, %s467
      %p476 = scmp.eq.s32.totalorder %s44, 0
      %p477 = por %p475, %p476
      %p478 = scmp.ne.s32.totalorder %s466, %s467
      %p479 = scmp.eq.s32.totalorder %s45, 3
      %p480 = por %p478, %p479
      %p482 = scmp.ne.s32.totalorder %s467, %s481
      %p483 = scmp.eq.s32.totalorder %s45, 0
      %p484 = por %p482, %p483
      %s486 = sadd.s32 %s485, 1
      %p489 = scmp.eq.s32.totalorder %s39, 3
      %p490 = scmp.ne.s32.totalorder %s485, %s487
      %p491 = scmp.eq.s32.totalorder %s39, 0
      %p492 = por %p490, %p491
      %p493 = scmp.ne.s32.totalorder %s485, %s487
      %p494 = scmp.eq.s32.totalorder %s44, 3
      %p495 = por %p493, %p494
      %p496 = scmp.ne.s32.totalorder %s487, %s488
      %p497 = scmp.eq.s32.totalorder %s44, 0
      %p498 = por %p496, %p497
      %p499 = scmp.ne.s32.totalorder %s487, %s488
      %p500 = scmp.eq.s32.totalorder %s45, 3
      %p501 = por %p499, %p500
      %p503 = scmp.ne.s32.totalorder %s488, %s502
      %p504 = scmp.eq.s32.totalorder %s45, 0
      %p505 = por %p503, %p504
      %s507 = sadd.s32 %s506, 1
      %p510 = scmp.eq.s32.totalorder %s39, 3
      %p511 = scmp.ne.s32.totalorder %s506, %s508
      %p512 = scmp.eq.s32.totalorder %s39, 0
      %p513 = por %p511, %p512
      %p514 = scmp.ne.s32.totalorder %s506, %s508
      %p515 = scmp.eq.s32.totalorder %s44, 3
      %p516 = por %p514, %p515
      %p517 = scmp.ne.s32.totalorder %s508, %s509
      %p518 = scmp.eq.s32.totalorder %s44, 0
      %p519 = por %p517, %p518
      %p520 = scmp.ne.s32.totalorder %s508, %s509
      %p521 = scmp.eq.s32.totalorder %s45, 3
      %p522 = por %p520, %p521
      %p524 = scmp.ne.s32.totalorder %s509, %s523
      %p525 = scmp.eq.s32.totalorder %s45, 0
      %p526 = por %p524, %p525
      %s528 = sadd.s32 %s527, 1
      %p531 = scmp.eq.s32.totalorder %s39, 3
      %p532 = scmp.ne.s32.totalorder %s527, %s529
      %p533 = scmp.eq.s32.totalorder %s39, 0
      %p534 = por %p532, %p533
      %p535 = scmp.ne.s32.totalorder %s527, %s529
      %p536 = scmp.eq.s32.totalorder %s44, 3
      %p537 = por %p535, %p536
      %p538 = scmp.ne.s32.totalorder %s529, %s530
      %p539 = scmp.eq.s32.totalorder %s44, 0
      %p540 = por %p538, %p539
      %p541 = scmp.ne.s32.totalorder %s529, %s530
      %p542 = scmp.eq.s32.totalorder %s45, 3
      %p543 = por %p541, %p542
      %p545 = scmp.ne.s32.totalorder %s530, %s544
      %p546 = scmp.eq.s32.totalorder %s45, 0
      %p547 = por %p545, %p546
      %s549 = sadd.s32 %s548, 1
      %p552 = scmp.eq.s32.totalorder %s39, 3
      %p553 = scmp.ne.s32.totalorder %s548, %s550
      %p554 = scmp.eq.s32.totalorder %s39, 0
      %p555 = por %p553, %p554
      %p556 = scmp.ne.s32.totalorder %s548, %s550
      %p557 = scmp.eq.s32.totalorder %s44, 3
      %p558 = por %p556, %p557
      %p559 = scmp.ne.s32.totalorder %s550, %s551
      %p560 = scmp.eq.s32.totalorder %s44, 0
      %p561 = por %p559, %p560
      %p562 = scmp.ne.s32.totalorder %s550, %s551
      %p563 = scmp.eq.s32.totalorder %s45, 3
      %p564 = por %p562, %p563
      %p566 = scmp.ne.s32.totalorder %s551, %s565
      %p567 = scmp.eq.s32.totalorder %s45, 0
      %p568 = por %p566, %p567
      %s570 = sadd.s32 %s569, 1
      %p573 = scmp.eq.s32.totalorder %s39, 3
      %p574 = scmp.ne.s32.totalorder %s569, %s571
      %p575 = scmp.eq.s32.totalorder %s39, 0
      %p576 = por %p574, %p575
      %p577 = scmp.ne.s32.totalorder %s569, %s571
      %p578 = scmp.eq.s32.totalorder %s44, 3
      %p579 = por %p577, %p578
      %p580 = scmp.ne.s32.totalorder %s571, %s572
      %p581 = scmp.eq.s32.totalorder %s44, 0
      %p582 = por %p580, %p581
      %p583 = scmp.ne.s32.totalorder %s571, %s572
      %p584 = scmp.eq.s32.totalorder %s45, 3
      %p585 = por %p583, %p584
      %p587 = scmp.ne.s32.totalorder %s572, %s586
      %p588 = scmp.eq.s32.totalorder %s45, 0
      %p589 = por %p587, %p588
      %s591 = sadd.s32 %s590, 1
      %p594 = scmp.eq.s32.totalorder %s39, 3
      %p595 = scmp.ne.s32.totalorder %s590, %s592
      %p596 = scmp.eq.s32.totalorder %s39, 0
      %p597 = por %p595, %p596
      %p598 = scmp.ne.s32.totalorder %s590, %s592
      %p599 = scmp.eq.s32.totalorder %s44, 3
      %p600 = por %p598, %p599
      %p601 = scmp.ne.s32.totalorder %s592, %s593
      %p602 = scmp.eq.s32.totalorder %s44, 0
      %p603 = por %p601, %p602
      %p604 = scmp.ne.s32.totalorder %s592, %s593
      %p605 = scmp.eq.s32.totalorder %s45, 3
      %p606 = por %p604, %p605
      %p608 = scmp.ne.s32.totalorder %s593, %s607
      %p609 = scmp.eq.s32.totalorder %s45, 0
      %p610 = por %p608, %p609
      %s611 = ssub.s32 %s46, %s58
      %s612 = ssub.s32 %s47, %s54
      %s613 = sor.u32 %s611, %s612
      %p614 = scmp.eq.s32.totalorder %s613, 0
      %s616 = sadd.s32 %s615, 1
      %s617 = scalar_select %p614, %s615, %s616
      %p620 = pneg %p614
      %p621 = scmp.eq.s32.totalorder %s39, 3
      %p622 = por %p620, %p621
      %p623 = scmp.ne.s32.totalorder %s615, %s618
      %p624 = scmp.eq.s32.totalorder %s39, 0
      %p625 = por %p623, %p624
      %p626 = scmp.ne.s32.totalorder %s615, %s618
      %p627 = scmp.eq.s32.totalorder %s44, 3
      %p628 = por %p626, %p627
      %p629 = scmp.ne.s32.totalorder %s618, %s619
      %p630 = scmp.eq.s32.totalorder %s44, 0
      %p631 = por %p629, %p630
      %p632 = scmp.ne.s32.totalorder %s618, %s619
      %p633 = scmp.eq.s32.totalorder %s45, 3
      %p634 = por %p632, %p633
      %p636 = scmp.ne.s32.totalorder %s619, %s635
      %p637 = scmp.eq.s32.totalorder %s45, 0
      %p638 = por %p636, %p637
      %s639 = ssub.s32 %s46, %s58
      %s640 = ssub.s32 %s47, %s54
      %s641 = sor.u32 %s639, %s640
      %p642 = scmp.eq.s32.totalorder %s641, 0
      %s644 = sadd.s32 %s643, 1
      %s645 = scalar_select %p642, %s643, %s644
      %p648 = pneg %p642
      %p649 = scmp.eq.s32.totalorder %s39, 3
      %p650 = por %p648, %p649
      %p651 = scmp.ne.s32.totalorder %s643, %s646
      %p652 = scmp.eq.s32.totalorder %s39, 0
      %p653 = por %p651, %p652
      %p654 = scmp.ne.s32.totalorder %s643, %s646
      %p655 = scmp.eq.s32.totalorder %s44, 3
      %p656 = por %p654, %p655
      %p657 = scmp.ne.s32.totalorder %s646, %s647
      %p658 = scmp.eq.s32.totalorder %s44, 0
      %p659 = por %p657, %p658
      %p660 = scmp.ne.s32.totalorder %s646, %s647
      %p661 = scmp.eq.s32.totalorder %s45, 3
      %p662 = por %p660, %p661
      %p664 = scmp.ne.s32.totalorder %s647, %s663
      %p665 = scmp.eq.s32.totalorder %s45, 0
      %p666 = por %p664, %p665
      %p667 = scmp.le.s32.totalorder 1, %s39
      %p668 = scmp.lt.s32.totalorder %s39, 5
      %p669 = pnand %p667, %p668
      %p670 = pneg %p669
      // Predicated region
      $region9: #{tpu_custom_call.1} parent=5 // pred_check
        _
      $region10: #{tpu_custom_call.1} parent=5 // pred_check_branch
        %672 = sbr.rel (%p669) target = $region12
      $region11: #{tpu_custom_call.1} parent=5 // pred_region
        %s673 = ssub.s32 %s39, 1
        // Predicated region
        $region13: #{tpu_custom_call.1} parent=11 // pred_check
          %p674 = pneg %p105
        $region14: #{tpu_custom_call.1} parent=11 // pred_check_branch
          %676 = sbr.rel (%p674) target = $region16
        $region15: #{tpu_custom_call.1} parent=11 // pred_region
          %p677 = scmp.lt.s32.totalorder %s48, 1
          %s678 = scalar_select %p677, %s48, 1
          %s679 = smul.addr %s678, 4
          %s680 = smul.addr %s679, 8
          %s681 = scalar_lea.vmem %s1, %s680
        $region16: #{tpu_custom_call.1} parent=11 // pred_fallthru
          _
        // Predicated region
        $region17: #{tpu_custom_call.1} parent=11 // pred_check
          %p682 = pneg %p131
        $region18: #{tpu_custom_call.1} parent=11 // pred_check_branch
          %684 = sbr.rel (%p682) target = $region20
        $region19: #{tpu_custom_call.1} parent=11 // pred_region
          %p685 = scmp.lt.s32.totalorder %s48, 1
          %s686 = scalar_select %p685, %s48, 1
          %s687 = smul.addr %s686, 8
          %s688 = smul.addr %s687, 8
          %s689 = scalar_lea.vmem %s2, %s688
        $region20: #{tpu_custom_call.1} parent=11 // pred_fallthru
          _
        // Predicated region
        $region21: #{tpu_custom_call.1} parent=11 // pred_check
          %p690 = pneg %p157
        $region22: #{tpu_custom_call.1} parent=11 // pred_check_branch
          %692 = sbr.rel (%p690) target = $region24
        $region23: #{tpu_custom_call.1} parent=11 // pred_region
          %p693 = scmp.lt.s32.totalorder %s48, 1
          %s694 = scalar_select %p693, %s48, 1
          %s695 = smul.addr %s694, 4
          %s696 = smul.addr %s695, 8
          %s697 = scalar_lea.vmem %s3, %s696
        $region24: #{tpu_custom_call.1} parent=11 // pred_fallthru
          _
        // Predicated region
        $region25: #{tpu_custom_call.1} parent=11 // pred_check
          %p698 = pneg %p183
        $region26: #{tpu_custom_call.1} parent=11 // pred_check_branch
          %700 = sbr.rel (%p698) target = $region28
        $region27: #{tpu_custom_call.1} parent=11 // pred_region
          %p701 = scmp.lt.s32.totalorder %s48, 1
          %s702 = scalar_select %p701, %s48, 1
          %s703 = smul.addr %s702, 64
          %s704 = smul.addr %s703, 8
          %s705 = scalar_lea.vmem %s4, %s704
        $region28: #{tpu_custom_call.1} parent=11 // pred_fallthru
          _
        // Predicated region
        $region29: #{tpu_custom_call.1} parent=11 // pred_check
          %p706 = pneg %p204
        $region30: #{tpu_custom_call.1} parent=11 // pred_check_branch
          %708 = sbr.rel (%p706) target = $region32
        $region31: #{tpu_custom_call.1} parent=11 // pred_region
          _
        $region32: #{tpu_custom_call.1} parent=11 // pred_fallthru
          _
        // Predicated region
        $region33: #{tpu_custom_call.1} parent=11 // pred_check
          %p709 = pneg %p225
        $region34: #{tpu_custom_call.1} parent=11 // pred_check_branch
          %711 = sbr.rel (%p709) target = $region36
        $region35: #{tpu_custom_call.1} parent=11 // pred_region
          _
        $region36: #{tpu_custom_call.1} parent=11 // pred_fallthru
          _
        // Predicated region
        $region37: #{tpu_custom_call.1} parent=11 // pred_check
          %p712 = pneg %p246
        $region38: #{tpu_custom_call.1} parent=11 // pred_check_branch
          %714 = sbr.rel (%p712) target = $region40
        $region39: #{tpu_custom_call.1} parent=11 // pred_region
          _
        $region40: #{tpu_custom_call.1} parent=11 // pred_fallthru
          _
        // Predicated region
        $region41: #{tpu_custom_call.1} parent=11 // pred_check
          %p715 = pneg %p267
        $region42: #{tpu_custom_call.1} parent=11 // pred_check_branch
          %717 = sbr.rel (%p715) target = $region44
        $region43: #{tpu_custom_call.1} parent=11 // pred_region
          _
        $region44: #{tpu_custom_call.1} parent=11 // pred_fallthru
          _
        // Predicated region
        $region45: #{tpu_custom_call.1} parent=11 // pred_check
          %p718 = pneg %p288
        $region46: #{tpu_custom_call.1} parent=11 // pred_check_branch
          %720 = sbr.rel (%p718) target = $region48
        $region47: #{tpu_custom_call.1} parent=11 // pred_region
          _
        $region48: #{tpu_custom_call.1} parent=11 // pred_fallthru
          _
        // Predicated region
        $region49: #{tpu_custom_call.1} parent=11 // pred_check
          %p721 = pneg %p309
        $region50: #{tpu_custom_call.1} parent=11 // pred_check_branch
          %723 = sbr.rel (%p721) target = $region52
        $region51: #{tpu_custom_call.1} parent=11 // pred_region
          _
        $region52: #{tpu_custom_call.1} parent=11 // pred_fallthru
          _
        // Predicated region
        $region53: #{tpu_custom_call.1} parent=11 // pred_check
          %p724 = pneg %p330
        $region54: #{tpu_custom_call.1} parent=11 // pred_check_branch
          %726 = sbr.rel (%p724) target = $region56
        $region55: #{tpu_custom_call.1} parent=11 // pred_region
          _
        $region56: #{tpu_custom_call.1} parent=11 // pred_fallthru
          _
        // Predicated region
        $region57: #{tpu_custom_call.1} parent=11 // pred_check
          %p727 = pneg %p351
        $region58: #{tpu_custom_call.1} parent=11 // pred_check_branch
          %729 = sbr.rel (%p727) target = $region60
        $region59: #{tpu_custom_call.1} parent=11 // pred_region
          _
        $region60: #{tpu_custom_call.1} parent=11 // pred_fallthru
          _
        // Predicated region
        $region61: #{tpu_custom_call.1} parent=11 // pred_check
          %p730 = pneg %p372
        $region62: #{tpu_custom_call.1} parent=11 // pred_check_branch
          %732 = sbr.rel (%p730) target = $region64
        $region63: #{tpu_custom_call.1} parent=11 // pred_region
          _
        $region64: #{tpu_custom_call.1} parent=11 // pred_fallthru
          _
        // Predicated region
        $region65: #{tpu_custom_call.1} parent=11 // pred_check
          %p733 = pneg %p393
        $region66: #{tpu_custom_call.1} parent=11 // pred_check_branch
          %735 = sbr.rel (%p733) target = $region68
        $region67: #{tpu_custom_call.1} parent=11 // pred_region
          _
        $region68: #{tpu_custom_call.1} parent=11 // pred_fallthru
          _
        // Predicated region
        $region69: #{tpu_custom_call.1} parent=11 // pred_check
          %p736 = pneg %p414
        $region70: #{tpu_custom_call.1} parent=11 // pred_check_branch
          %738 = sbr.rel (%p736) target = $region72
        $region71: #{tpu_custom_call.1} parent=11 // pred_region
          _
        $region72: #{tpu_custom_call.1} parent=11 // pred_fallthru
          _
        // Predicated region
        $region73: #{tpu_custom_call.1} parent=11 // pred_check
          %p739 = pneg %p435
        $region74: #{tpu_custom_call.1} parent=11 // pred_check_branch
          %741 = sbr.rel (%p739) target = $region76
        $region75: #{tpu_custom_call.1} parent=11 // pred_region
          _
        $region76: #{tpu_custom_call.1} parent=11 // pred_fallthru
          _
        // Predicated region
        $region77: #{tpu_custom_call.1} parent=11 // pred_check
          %p742 = pneg %p456
        $region78: #{tpu_custom_call.1} parent=11 // pred_check_branch
          %744 = sbr.rel (%p742) target = $region80
        $region79: #{tpu_custom_call.1} parent=11 // pred_region
          _
        $region80: #{tpu_custom_call.1} parent=11 // pred_fallthru
          _
        // Predicated region
        $region81: #{tpu_custom_call.1} parent=11 // pred_check
          %p745 = pneg %p477
        $region82: #{tpu_custom_call.1} parent=11 // pred_check_branch
          %747 = sbr.rel (%p745) target = $region84
        $region83: #{tpu_custom_call.1} parent=11 // pred_region
          _
        $region84: #{tpu_custom_call.1} parent=11 // pred_fallthru
          _
        // Predicated region
        $region85: #{tpu_custom_call.1} parent=11 // pred_check
          %p748 = pneg %p498
        $region86: #{tpu_custom_call.1} parent=11 // pred_check_branch
          %750 = sbr.rel (%p748) target = $region88
        $region87: #{tpu_custom_call.1} parent=11 // pred_region
          _
        $region88: #{tpu_custom_call.1} parent=11 // pred_fallthru
          _
        // Predicated region
        $region89: #{tpu_custom_call.1} parent=11 // pred_check
          %p751 = pneg %p519
        $region90: #{tpu_custom_call.1} parent=11 // pred_check_branch
          %753 = sbr.rel (%p751) target = $region92
        $region91: #{tpu_custom_call.1} parent=11 // pred_region
          _
        $region92: #{tpu_custom_call.1} parent=11 // pred_fallthru
          _
        // Predicated region
        $region93: #{tpu_custom_call.1} parent=11 // pred_check
          %p754 = pneg %p540
        $region94: #{tpu_custom_call.1} parent=11 // pred_check_branch
          %756 = sbr.rel (%p754) target = $region96
        $region95: #{tpu_custom_call.1} parent=11 // pred_region
          _
        $region96: #{tpu_custom_call.1} parent=11 // pred_fallthru
          _
        // Predicated region
        $region97: #{tpu_custom_call.1} parent=11 // pred_check
          %p757 = pneg %p561
        $region98: #{tpu_custom_call.1} parent=11 // pred_check_branch
          %759 = sbr.rel (%p757) target = $region100
        $region99: #{tpu_custom_call.1} parent=11 // pred_region
          _
        $region100: #{tpu_custom_call.1} parent=11 // pred_fallthru
          _
        // Predicated region
        $region101: #{tpu_custom_call.1} parent=11 // pred_check
          %p760 = pneg %p582
        $region102: #{tpu_custom_call.1} parent=11 // pred_check_branch
          %762 = sbr.rel (%p760) target = $region104
        $region103: #{tpu_custom_call.1} parent=11 // pred_region
          _
        $region104: #{tpu_custom_call.1} parent=11 // pred_fallthru
          _
        // Predicated region
        $region105: #{tpu_custom_call.1} parent=11 // pred_check
          %p763 = pneg %p603
        $region106: #{tpu_custom_call.1} parent=11 // pred_check_branch
          %765 = sbr.rel (%p763) target = $region108
        $region107: #{tpu_custom_call.1} parent=11 // pred_region
          _
        $region108: #{tpu_custom_call.1} parent=11 // pred_fallthru
          _
      $region12: #{tpu_custom_call.1} parent=5 // pred_fallthru
        _
      %p766 = scmp.lt.s32.totalorder %s39, 4
      // Predicated region
      $region109: #{tpu_custom_call.1} parent=5 // pred_check
        %p767 = pneg %p766
      $region110: #{tpu_custom_call.1} parent=5 // pred_check_branch
        %769 = sbr.rel (%p767) target = $region112
      $region111: #{tpu_custom_call.1} parent=5 // pred_region
        // Predicated region
        $region113: #{tpu_custom_call.1} parent=111 // pred_check
          %p770 = pneg %p73
        $region114: #{tpu_custom_call.1} parent=111 // pred_check_branch
          %772 = sbr.rel (%p770) target = $region116
        $region115: #{tpu_custom_call.1} parent=111 // pred_region
          %p773 = scmp.lt.s32.totalorder %s46, 1
          %s774 = scalar_select %p773, %s46, 1
          %p775 = scmp.lt.s32.totalorder %s47, 1
          %s776 = scalar_select %p775, %s47, 1
          %s777 = smul.addr %s774, 2
          %s778 = sadd.s32 %s776, %s777
          %s779 = smul.addr %s778, 8
          %s780 = scalar_lea.vmem %s0, %s779
        $region116: #{tpu_custom_call.1} parent=111 // pred_fallthru
          _
      $region112: #{tpu_custom_call.1} parent=5 // pred_fallthru
        _
      %p781 = scmp.le.s32.totalorder 1, %s39
      %p782 = scmp.lt.s32.totalorder %s39, 5
      %p783 = pnand %p781, %p782
      %p784 = pneg %p783
      // Predicated region
      $region117: #{tpu_custom_call.1} parent=5 // pred_check
        _
      $region118: #{tpu_custom_call.1} parent=5 // pred_check_branch
        %786 = sbr.rel (%p783) target = $region120
      $region119: #{tpu_custom_call.1} parent=5 // pred_region
        %s787 = ssub.s32 %s39, 1
        %p788 = scmp.lt.s32.totalorder %s48, 1
        %s789 = scalar_select %p788, %s48, 1
        %p790 = scmp.lt.s32.totalorder %s49, 1
        %s791 = scalar_select %p790, %s49, 1
        %s792 = smul.addr %s789, 2
        %s793 = sadd.s32 %s791, %s792
        %s794 = smul.addr %s793, 8
        %s795 = scalar_lea.vmem %s0, %s794
        %p796 = pneg %p79
        %p797 = pneg %p76
        %p798 = scmp.lt.s32.totalorder %s48, 1
        %s799 = scalar_select %p798, %s48, 1
        %s800 = smul.addr %s799, 4
        %s801 = smul.addr %s800, 8
        %s802 = scalar_lea.vmem %s1, %s801
        %p803 = pneg %p105
        %p804 = pneg %p102
        %p805 = scmp.lt.s32.totalorder %s48, 1
        %s806 = scalar_select %p805, %s48, 1
        %s807 = smul.addr %s806, 8
        %s808 = smul.addr %s807, 8
        %s809 = scalar_lea.vmem %s2, %s808
        %p810 = pneg %p131
        %p811 = pneg %p128
        %p812 = scmp.lt.s32.totalorder %s48, 1
        %s813 = scalar_select %p812, %s48, 1
        %s814 = smul.addr %s813, 4
        %s815 = smul.addr %s814, 8
        %s816 = scalar_lea.vmem %s3, %s815
        %p817 = pneg %p157
        %p818 = pneg %p154
        %p819 = scmp.lt.s32.totalorder %s48, 1
        %s820 = scalar_select %p819, %s48, 1
        %s821 = smul.addr %s820, 64
        %s822 = smul.addr %s821, 8
        %s823 = scalar_lea.vmem %s4, %s822
        %p824 = pneg %p183
        %p825 = pneg %p180
        %p826 = pneg %p204
        %p827 = pneg %p201
        %p828 = pneg %p225
        %p829 = pneg %p222
        %p830 = pneg %p246
        %p831 = pneg %p243
        %p832 = pneg %p267
        %p833 = pneg %p264
        %p834 = pneg %p288
        %p835 = pneg %p285
        %p836 = pneg %p309
        %p837 = pneg %p306
        %p838 = pneg %p330
        %p839 = pneg %p327
        %p840 = pneg %p351
        %p841 = pneg %p348
        %p842 = pneg %p372
        %p843 = pneg %p369
        %p844 = pneg %p393
        %p845 = pneg %p390
        %p846 = pneg %p414
        %p847 = pneg %p411
        %p848 = pneg %p435
        %p849 = pneg %p432
        %p850 = pneg %p456
        %p851 = pneg %p453
        %p852 = pneg %p477
        %p853 = pneg %p474
        %p854 = pneg %p498
        %p855 = pneg %p495
        %p856 = pneg %p519
        %p857 = pneg %p516
        %p858 = pneg %p540
        %p859 = pneg %p537
        %p860 = pneg %p561
        %p861 = pneg %p558
        %p862 = pneg %p582
        %p863 = pneg %p579
        %p864 = pneg %p603
        %p865 = pneg %p600
        %p866 = pneg %p631
        %p867 = pneg %p628
        %s868 = sand.u32 %s618, 1
        %s869 = scalar_lea.sflag [#allocation3], %s868
        %s870 = sand.u32 %s618, 1
        %s871 = smul.addr %s870, 8
        %s872 = scalar_lea.vmem [#allocation2], %s871
        %p873 = pneg %p659
        %p874 = pneg %p656
        %s875 = sand.u32 %s646, 1
        %s876 = scalar_lea.sflag [#allocation5], %s875
        %s877 = sand.u32 %s646, 1
        %s878 = smul.addr %s877, 32
        %s879 = scalar_lea.vmem [#allocation4], %s878
        %p880 = scmp.lt.s32.totalorder %s48, 1
        %s881 = scalar_select %p880, %s48, 1
        %p882 = scmp.lt.s32.totalorder %s49, 1
        %s883 = scalar_select %p882, %s49, 1
        %s884 = smul.addr %s881, 2
        %s885 = sadd.s32 %s883, %s884
        %s886 = smul.addr %s885, 8
        %s887 = scalar_lea.vmem %s0, %s886
        %p888 = scmp.lt.s32.totalorder %s48, 1
        %s889 = scalar_select %p888, %s48, 1
        %s890 = smul.addr %s889, 4
        %s891 = smul.addr %s890, 8
        %s892 = scalar_lea.vmem %s1, %s891
        %p893 = scmp.lt.s32.totalorder %s48, 1
        %s894 = scalar_select %p893, %s48, 1
        %s895 = smul.addr %s894, 8
        %s896 = smul.addr %s895, 8
        %s897 = scalar_lea.vmem %s2, %s896
        %p898 = scmp.lt.s32.totalorder %s48, 1
        %s899 = scalar_select %p898, %s48, 1
        %s900 = smul.addr %s899, 4
        %s901 = smul.addr %s900, 8
        %s902 = scalar_lea.vmem %s3, %s901
        %p903 = scmp.lt.s32.totalorder %s48, 1
        %s904 = scalar_select %p903, %s48, 1
        %s905 = smul.addr %s904, 64
        %s906 = smul.addr %s905, 8
        %s907 = scalar_lea.vmem %s4, %s906
        %v908 = vld [vmem:[%s887] sm:$0xff]
        %s909 = smul.u32 %s49, 8
        %v910 = vld [vmem:[%s892] sm:$0xff]
        %v911 = vld [vmem:[%s892 + $0x8] sm:$0xff]
        %v912 = vld [vmem:[%s892 + $0x10] sm:$0xff]
        %v913 = vld [vmem:[%s892 + $0x18] sm:$0xff]
        %v914 = vld [vmem:[%s897] sm:$0xff]
        %v915 = vld [vmem:[%s897 + $0x8] sm:$0xff]
        %v916 = vld [vmem:[%s897 + $0x10] sm:$0xff]
        %v917 = vld [vmem:[%s897 + $0x18] sm:$0xff]
        %v918 = vld [vmem:[%s897 + $0x20] sm:$0xff]
        %v919 = vld [vmem:[%s897 + $0x28] sm:$0xff]
        %v920 = vld [vmem:[%s897 + $0x30] sm:$0xff]
        %v921 = vld [vmem:[%s897 + $0x38] sm:$0xff]
        %v922 = vld [vmem:[%s5] sm:$0xff]
        %v923 = vld [vmem:[%s5 + $0x8] sm:$0xff]
        %v924 = vld [vmem:[%s5 + $0x10] sm:$0xff]
        %v925 = vld [vmem:[%s5 + $0x18] sm:$0xff]
        %v926 = vld [vmem:[%s6] sm:$0x1]
        %v928 = vlaneseq
        %v929 = vshrl.u32 %v928, 7
        %v930 = vsub.s32 0, %v929
        %v931 = vrot.slane %v926, %v930
        %vm933 = vcmask 261120
        %v935 = vsel %vm933, %v908, 0
        %937 = vmatprep.subr.mxu0 0.0
        %938 = vmatpush1.msra.mxu0 %v922
        %939 = vmatprep.subr.mxu0 0.0
        %940 = vmatpush1.msra.mxu0 %v923
        %941 = vmatprep.subr.mxu0 0.0
        %942 = vmatpush1.msra.mxu0 %v924
        %943 = vmatprep.subr.mxu0 0.0
        %944 = vmatpush1.msra.mxu0 %v925
        %945 = vmatprep.subr.mxu0 0.0
        %946 = vmatpush1.msra.mxu0 0.0
        %947 = vmatprep.subr.mxu0 0.0
        %948 = vmatpush1.msra.mxu0 0.0
        %949 = vmatprep.subr.mxu0 0.0
        %950 = vmatpush1.msra.mxu0 0.0
        %951 = vmatprep.subr.mxu0 0.0
        %952 = vmatpush1.msra.mxu0 0.0
        %953 = vmatprep.subr.mxu0 0.0
        %954 = vmatpush1.msra.mxu0 0.0
        %955 = vmatprep.subr.mxu0 0.0
        %956 = vmatpush1.msra.mxu0 0.0
        %957 = vmatprep.subr.mxu0 0.0
        %958 = vmatpush1.msra.mxu0 0.0
        %959 = vmatprep.subr.mxu0 0.0
        %960 = vmatpush1.msra.mxu0 0.0
        %961 = vmatprep.subr.mxu0 0.0
        %962 = vmatpush1.msra.mxu0 0.0
        %963 = vmatprep.subr.mxu0 0.0
        %964 = vmatpush1.msra.mxu0 0.0
        %965 = vmatprep.subr.mxu0 0.0
        %966 = vmatpush1.msra.mxu0 0.0
        %967 = vmatprep.subr.mxu0 0.0
        %968 = vmatpush1.msra.mxu0 0.0
        %969 = vmatprep.subr.mxu0 0.0
        %970 = vmatpush1.msra.mxu0 0.0
        %971 = vmatprep.subr.mxu0 0.0
        %972 = vmatpush1.msra.mxu0 0.0
        %973 = vmatprep.subr.mxu0 0.0
        %974 = vmatpush1.msra.mxu0 0.0
        %975 = vmatprep.subr.mxu0 0.0
        %976 = vmatpush1.msra.mxu0 0.0
        %977 = vmatprep.subr.mxu0 0.0
        %978 = vmatpush1.msra.mxu0 0.0
        %979 = vmatprep.subr.mxu0 0.0
        %980 = vmatpush1.msra.mxu0 0.0
        %981 = vmatprep.subr.mxu0 0.0
        %982 = vmatpush1.msra.mxu0 0.0
        %983 = vmatprep.subr.mxu0 0.0
        %984 = vmatpush1.msra.mxu0 0.0
        %985 = vmatprep.subr.mxu0 0.0
        %986 = vmatpush1.msra.mxu0 0.0
        %987 = vmatprep.subr.mxu0 0.0
        %988 = vmatpush1.msra.mxu0 0.0
        %989 = vmatprep.subr.mxu0 0.0
        %990 = vmatpush1.msra.mxu0 0.0
        %991 = vmatprep.subr.mxu0 0.0
        %992 = vmatpush1.msra.mxu0 0.0
        %993 = vmatprep.subr.mxu0 0.0
        %994 = vmatpush1.msra.mxu0 0.0
        %995 = vmatprep.subr.mxu0 0.0
        %996 = vmatpush1.msra.mxu0 0.0
        %997 = vmatprep.subr.mxu0 0.0
        %998 = vmatpush1.msra.mxu0 0.0
        %999 = vmatprep.subr.mxu0 0.0
        %1000 = vmatpush1.msra.mxu0 0.0
        %1001 = vmatprep.mubr.f32.mxu0 0.0
        %1002 = vmatmul.mubr.f32.gmra.mrb[0].mxu0 %v935
        %v1003 = vpop.f32.mrb[0].mxu0
        %v1004 = vadd.f32 %v931, %v1003
        %v1005 = vpop.f32.mrb[0].mxu0
        %1006 = vdwg.mxu0
        %v1007 = vmul.f32 %v1004, 0.35355338
        %1009 = vrot.lane.b32.xlu0 %v1007, 120
        %v1010 = vpop.permute.xlu0 %1009
        %1012 = vrot.lane.b32.xlu0 %v1007, 112
        %v1013 = vpop.permute.xlu0 %1012
        %1015 = vrot.lane.b32.xlu0 %v1007, 104
        %v1016 = vpop.permute.xlu0 %1015
        %v1018 = vcombine.low %v1007, %v1013
        %v1019 = vcombine.high %v1007, %v1013
        %v1021 = vunpack.c.l.s4 1983009808
        %v1022 = vunpack.c.0.s8 %v1021
        %v1023 = vlaneseq
        %v1024 = vshrl.u32 %v1023, 7
        %v1025 = vsub.s32 %v1022, %v1024
        %v1026 = vrot.slane %v1018, %v1025
        %v1028 = vunpack.c.l.s4 1983009808
        %v1029 = vunpack.c.0.s8 %v1028
        %v1030 = vlaneseq
        %v1031 = vshrl.u32 %v1030, 7
        %v1032 = vsub.s32 %v1029, %v1031
        %v1033 = vrot.slane %v1019, %v1032
        %v1034 = vcombine.low %v1010, %v1016
        %v1035 = vcombine.high %v1010, %v1016
        %v1037 = vunpack.c.l.s4 1983009808
        %v1038 = vunpack.c.0.s8 %v1037
        %v1039 = vlaneseq
        %v1040 = vshrl.u32 %v1039, 7
        %v1041 = vsub.s32 %v1038, %v1040
        %v1042 = vrot.slane %v1034, %v1041
        %v1044 = vunpack.c.l.s4 1983009808
        %v1045 = vunpack.c.0.s8 %v1044
        %v1046 = vlaneseq
        %v1047 = vshrl.u32 %v1046, 7
        %v1048 = vsub.s32 %v1045, %v1047
        %v1049 = vrot.slane %v1035, %v1048
        %v1050 = vcombine.low %v1026, %v1042
        %v1051 = vcombine.high %v1026, %v1042
        %v1053 = vunpack.c.l.s4 1934713408
        %v1054 = vunpack.c.0.s8 %v1053
        %v1055 = vlaneseq
        %v1056 = vshrl.u32 %v1055, 7
        %v1057 = vsub.s32 %v1054, %v1056
        %v1058 = vrot.slane %v1050, %v1057
        %v1060 = vunpack.c.l.s4 1934713408
        %v1061 = vunpack.c.0.s8 %v1060
        %v1062 = vlaneseq
        %v1063 = vshrl.u32 %v1062, 7
        %v1064 = vsub.s32 %v1061, %v1063
        %v1065 = vrot.slane %v1051, %v1064
        %v1066 = vcombine.low %v1033, %v1049
        %v1067 = vcombine.high %v1033, %v1049
        %v1069 = vunpack.c.l.s4 1934713408
        %v1070 = vunpack.c.0.s8 %v1069
        %v1071 = vlaneseq
        %v1072 = vshrl.u32 %v1071, 7
        %v1073 = vsub.s32 %v1070, %v1072
        %v1074 = vrot.slane %v1066, %v1073
        %v1076 = vunpack.c.l.s4 1934713408
        %v1077 = vunpack.c.0.s8 %v1076
        %v1078 = vlaneseq
        %v1079 = vshrl.u32 %v1078, 7
        %v1080 = vsub.s32 %v1077, %v1079
        %v1081 = vrot.slane %v1067, %v1080
        %v1082 = vcombine.high %v1058, 0.0
        %v1083 = vcombine.high %v1065, 0.0
        %v1084 = vcombine.high %v1074, 0.0
        %v1085 = vcombine.high %v1081, 0.0
        %v1086 = vld [vmem:[%s9] sm:$0xff]
        %v1087 = vcombine.low 0.0, 0.0
        %v1088 = vcombine.high 0.0, 0.0
        %v1090 = vunpack.c.l.s4 1983009808
        %v1091 = vunpack.c.0.s8 %v1090
        %v1092 = vlaneseq
        %v1093 = vshrl.u32 %v1092, 7
        %v1094 = vsub.s32 %v1091, %v1093
        %v1095 = vrot.slane %v1087, %v1094
        %v1097 = vunpack.c.l.s4 1983009808
        %v1098 = vunpack.c.0.s8 %v1097
        %v1099 = vlaneseq
        %v1100 = vshrl.u32 %v1099, 7
        %v1101 = vsub.s32 %v1098, %v1100
        %v1102 = vrot.slane %v1088, %v1101
        %v1103 = vcombine.low %v1095, %v1095
        %v1104 = vcombine.high %v1095, %v1095
        %v1106 = vunpack.c.l.s4 1934713408
        %v1107 = vunpack.c.0.s8 %v1106
        %v1108 = vlaneseq
        %v1109 = vshrl.u32 %v1108, 7
        %v1110 = vsub.s32 %v1107, %v1109
        %v1111 = vrot.slane %v1103, %v1110
        %v1113 = vunpack.c.l.s4 1934713408
        %v1114 = vunpack.c.0.s8 %v1113
        %v1115 = vlaneseq
        %v1116 = vshrl.u32 %v1115, 7
        %v1117 = vsub.s32 %v1114, %v1116
        %v1118 = vrot.slane %v1104, %v1117
        %v1119 = vcombine.low %v1102, %v1102
        %v1120 = vcombine.high %v1102, %v1102
        %v1122 = vunpack.c.l.s4 1934713408
        %v1123 = vunpack.c.0.s8 %v1122
        %v1124 = vlaneseq
        %v1125 = vshrl.u32 %v1124, 7
        %v1126 = vsub.s32 %v1123, %v1125
        %v1127 = vrot.slane %v1119, %v1126
        %v1129 = vunpack.c.l.s4 1934713408
        %v1130 = vunpack.c.0.s8 %v1129
        %v1131 = vlaneseq
        %v1132 = vshrl.u32 %v1131, 7
        %v1133 = vsub.s32 %v1130, %v1132
        %v1134 = vrot.slane %v1120, %v1133
        %v1135 = vcombine.low %v1111, %v1111
        %v1136 = vcombine.high %v1111, %v1111
        %v1137 = vcombine.low %v1118, %v1118
        %v1138 = vcombine.high %v1118, %v1118
        %v1139 = vcombine.low %v1127, %v1127
        %v1140 = vcombine.high %v1127, %v1127
        %v1141 = vcombine.low %v1134, %v1134
        %v1142 = vcombine.high %v1134, %v1134
        %v1144 = vunpack.c.l.s4 1983009808
        %v1145 = vunpack.c.0.s8 %v1144
        %v1146 = vlaneseq
        %v1147 = vshrl.u32 %v1146, 7
        %v1148 = vsub.s32 %v1145, %v1147
        %v1149 = vcombine.high 0.0, 0.0
        %v1151 = vunpack.c.l.s4 1934713408
        %v1152 = vunpack.c.0.s8 %v1151
        %v1153 = vlaneseq
        %v1154 = vshrl.u32 %v1153, 7
        %v1155 = vsub.s32 %v1152, %v1154
        %v1157 = vunpack.c.l.s4 1934713408
        %v1158 = vunpack.c.0.s8 %v1157
        %v1159 = vlaneseq
        %v1160 = vshrl.u32 %v1159, 7
        %v1161 = vsub.s32 %v1158, %v1160
        %v1162 = vrot.slane %v1149, %v1161
        %v1163 = vcombine.high %v1102, 0.0
        %v1165 = vunpack.c.l.s4 1934713408
        %v1166 = vunpack.c.0.s8 %v1165
        %v1167 = vlaneseq
        %v1168 = vshrl.u32 %v1167, 7
        %v1169 = vsub.s32 %v1166, %v1168
        %v1170 = vrot.slane %v1102, %v1169
        %v1172 = vunpack.c.l.s4 1934713408
        %v1173 = vunpack.c.0.s8 %v1172
        %v1174 = vlaneseq
        %v1175 = vshrl.u32 %v1174, 7
        %v1176 = vsub.s32 %v1173, %v1175
        %v1177 = vrot.slane %v1163, %v1176
        %v1178 = vcombine.high 0.0, 0.0
        %v1179 = vcombine.high %v1162, 0.0
        %v1180 = vcombine.high %v1170, 0.0
        %v1181 = vcombine.high %v1177, 0.0
        %1184 = vrot.lane.b32.xlu0 %v1136, 4
        %v1185 = vpop.permute.xlu0 %1184
        %1186 = vrot.lane.b32.xlu0 %v1178, 4
        %v1187 = vpop.permute.xlu0 %1186
        %1192 = vrot.lane.b32.xlu0 %v1137, 8
        %v1193 = vpop.permute.xlu0 %1192
        %1194 = vrot.lane.b32.xlu0 %v1162, 8
        %v1195 = vpop.permute.xlu0 %1194
        %1200 = vrot.lane.b32.xlu0 %v1138, 12
        %v1201 = vpop.permute.xlu0 %1200
        %1202 = vrot.lane.b32.xlu0 %v1179, 12
        %v1203 = vpop.permute.xlu0 %1202
        %1208 = vrot.lane.b32.xlu0 %v1139, 16
        %v1209 = vpop.permute.xlu0 %1208
        %1210 = vrot.lane.b32.xlu0 %v1170, 16
        %v1211 = vpop.permute.xlu0 %1210
        %1216 = vrot.lane.b32.xlu0 %v1140, 20
        %v1217 = vpop.permute.xlu0 %1216
        %1218 = vrot.lane.b32.xlu0 %v1180, 20
        %v1219 = vpop.permute.xlu0 %1218
        %1224 = vrot.lane.b32.xlu0 %v1141, 24
        %v1225 = vpop.permute.xlu0 %1224
        %1226 = vrot.lane.b32.xlu0 %v1177, 24
        %v1227 = vpop.permute.xlu0 %1226
        %1232 = vrot.lane.b32.xlu0 %v1142, 28
        %v1233 = vpop.permute.xlu0 %1232
        %1234 = vrot.lane.b32.xlu0 %v1181, 28
        %v1235 = vpop.permute.xlu0 %1234
        %vm1238 = vcmask 31744
        %v1239 = vsel %vm1238, %v1135, %v1185
        %v1240 = vsel %vm1238, 0.0, %v1187
        %vm1241 = vcmask 64512
        %v1242 = vsel %vm1241, %v1239, %v1193
        %v1243 = vsel %vm1241, %v1240, %v1195
        %vm1244 = vcmask 97280
        %v1245 = vsel %vm1244, %v1242, %v1201
        %v1246 = vsel %vm1244, %v1243, %v1203
        %vm1247 = vcmask 130048
        %v1248 = vsel %vm1247, %v1245, %v1209
        %v1249 = vsel %vm1247, %v1246, %v1211
        %vm1250 = vcmask 162816
        %v1251 = vsel %vm1250, %v1248, %v1217
        %v1252 = vsel %vm1250, %v1249, %v1219
        %vm1253 = vcmask 195584
        %v1254 = vsel %vm1253, %v1251, %v1225
        %v1255 = vsel %vm1253, %v1252, %v1227
        %vm1256 = vcmask 228352
        %v1257 = vsel %vm1256, %v1254, %v1233
        %v1258 = vsel %vm1256, %v1255, %v1235
        %1259 = vxpose.xlu0.b32.start [1/16] %v1086, 128
        %1260 = vxpose.xlu0.b32.cont [2/16] 0.0, 128
        %1261 = vxpose.xlu0.b32.cont [3/16] 0.0, 128
        %1262 = vxpose.xlu0.b32.cont [4/16] 0.0, 128
        %1263 = vxpose.xlu0.b32.cont [5/16] 0.0, 128
        %1264 = vxpose.xlu0.b32.cont [6/16] 0.0, 128
        %1265 = vxpose.xlu0.b32.cont [7/16] 0.0, 128
        %1266 = vxpose.xlu0.b32.cont [8/16] 0.0, 128
        %1267 = vxpose.xlu0.b32.cont [9/16] 0.0, 128
        %1268 = vxpose.xlu0.b32.cont [10/16] 0.0, 128
        %1269 = vxpose.xlu0.b32.cont [11/16] 0.0, 128
        %1270 = vxpose.xlu0.b32.cont [12/16] 0.0, 128
        %1271 = vxpose.xlu0.b32.cont [13/16] 0.0, 128
        %1272 = vxpose.xlu0.b32.cont [14/16] 0.0, 128
        %1273 = vxpose.xlu0.b32.cont [15/16] 0.0, 128
        %1274 = vxpose.xlu0.b32.end [16/16] 0.0, 128
        %v1275 = vpop.trf.xlu0
        %v1276 = vpop.trf.xlu0
        %v1277 = vpop.trf.xlu0
        %v1278 = vpop.trf.xlu0
        %v1279 = vpop.trf.xlu0
        %v1280 = vpop.trf.xlu0
        %v1281 = vpop.trf.xlu0
        %v1282 = vpop.trf.xlu0
        %v1283 = vpop.trf.xlu0
        %v1284 = vpop.trf.xlu0
        %v1285 = vpop.trf.xlu0
        %v1286 = vpop.trf.xlu0
        %v1287 = vpop.trf.xlu0
        %v1288 = vpop.trf.xlu0
        %v1289 = vpop.trf.xlu0
        %v1290 = vpop.trf.xlu0
        %v1299 = vcombine.low %v1058, %v1082
        %v1300 = vcombine.low %v1065, %v1083
        %v1301 = vcombine.low %v1074, %v1084
        %v1302 = vcombine.low %v1081, %v1085
        %v1304 = vsel %vm1241, %v1275, 0
        %v1307 = vsel %vm1241, %v1276, 0
        %v1309 = vsel %vm1241, %v1299, 0
        %v1311 = vsel %vm1241, %v1300, 0
        %v1313 = vsel %vm1241, %v1301, 0
        %v1315 = vsel %vm1241, %v1302, 0
        %1317 = vmatprep.subr.mxu0 0.0
        %1318 = vmatpush1.xpose.msra.mxu0 %v1309
        %1319 = vmatprep.subr.mxu0 0.0
        %1320 = vmatpush1.xpose.msra.mxu0 %v1311
        %1321 = vmatprep.subr.mxu0 0.0
        %1322 = vmatpush1.xpose.msra.mxu0 %v1313
        %1323 = vmatprep.subr.mxu0 0.0
        %1324 = vmatpush1.xpose.msra.mxu0 %v1315
        %1325 = vmatprep.subr.mxu0 0.0
        %1326 = vmatpush1.xpose.msra.mxu0 0.0
        %1327 = vmatprep.subr.mxu0 0.0
        %1328 = vmatpush1.xpose.msra.mxu0 0.0
        %1329 = vmatprep.subr.mxu0 0.0
        %1330 = vmatpush1.xpose.msra.mxu0 0.0
        %1331 = vmatprep.subr.mxu0 0.0
        %1332 = vmatpush1.xpose.msra.mxu0 0.0
        %1333 = vmatprep.subr.mxu0 0.0
        %1334 = vmatpush1.xpose.msra.mxu0 0.0
        %1335 = vmatprep.subr.mxu0 0.0
        %1336 = vmatpush1.xpose.msra.mxu0 0.0
        %1337 = vmatprep.subr.mxu0 0.0
        %1338 = vmatpush1.xpose.msra.mxu0 0.0
        %1339 = vmatprep.subr.mxu0 0.0
        %1340 = vmatpush1.xpose.msra.mxu0 0.0
        %1341 = vmatprep.subr.mxu0 0.0
        %1342 = vmatpush1.xpose.msra.mxu0 0.0
        %1343 = vmatprep.subr.mxu0 0.0
        %1344 = vmatpush1.xpose.msra.mxu0 0.0
        %1345 = vmatprep.subr.mxu0 0.0
        %1346 = vmatpush1.xpose.msra.mxu0 0.0
        %1347 = vmatprep.subr.mxu0 0.0
        %1348 = vmatpush1.xpose.msra.mxu0 0.0
        %1349 = vmatprep.subr.mxu0 0.0
        %1350 = vmatpush1.xpose.msra.mxu0 0.0
        %1351 = vmatprep.subr.mxu0 0.0
        %1352 = vmatpush1.xpose.msra.mxu0 0.0
        %1353 = vmatprep.subr.mxu0 0.0
        %1354 = vmatpush1.xpose.msra.mxu0 0.0
        %1355 = vmatprep.subr.mxu0 0.0
        %1356 = vmatpush1.xpose.msra.mxu0 0.0
        %1357 = vmatprep.subr.mxu0 0.0
        %1358 = vmatpush1.xpose.msra.mxu0 0.0
        %1359 = vmatprep.subr.mxu0 0.0
        %1360 = vmatpush1.xpose.msra.mxu0 0.0
        %1361 = vmatprep.subr.mxu0 0.0
        %1362 = vmatpush1.xpose.msra.mxu0 0.0
        %1363 = vmatprep.subr.mxu0 0.0
        %1364 = vmatpush1.xpose.msra.mxu0 0.0
        %1365 = vmatprep.subr.mxu0 0.0
        %1366 = vmatpush1.xpose.msra.mxu0 0.0
        %1367 = vmatprep.subr.mxu0 0.0
        %1368 = vmatpush1.xpose.msra.mxu0 0.0
        %1369 = vmatprep.subr.mxu0 0.0
        %1370 = vmatpush1.xpose.msra.mxu0 0.0
        %1371 = vmatprep.subr.mxu0 0.0
        %1372 = vmatpush1.xpose.msra.mxu0 0.0
        %1373 = vmatprep.subr.mxu0 0.0
        %1374 = vmatpush1.xpose.msra.mxu0 0.0
        %1375 = vmatprep.subr.mxu0 0.0
        %1376 = vmatpush1.xpose.msra.mxu0 0.0
        %1377 = vmatprep.subr.mxu0 0.0
        %1378 = vmatpush1.xpose.msra.mxu0 0.0
        %1379 = vmatprep.subr.mxu0 0.0
        %1380 = vmatpush1.xpose.msra.mxu0 0.0
        %1381 = vmatprep.mubr.f32.mxu0 0.0
        %1382 = vmatmul.mubr.f32.gmra.mrb[0].mxu0 %v1304
        %v1383 = vpop.f32.mrb[0].mxu0
        %v1384 = vadd.f32 %v1257, %v1383
        %v1385 = vpop.f32.mrb[0].mxu0
        %1386 = vmatprep.mubr.f32.mxu0 0.0
        %1387 = vmatmul.mubr.f32.gmra.mrb[0].mxu0 %v1307
        %v1388 = vpop.f32.mrb[0].mxu0
        %v1389 = vadd.f32 %v1258, %v1388
        %v1390 = vpop.f32.mrb[0].mxu0
        %1391 = vdwg.mxu0
        %1394 = vrot.lane.b32.xlu0 %v1384, 124
        %v1395 = vpop.permute.xlu0 %1394
        %1396 = vrot.lane.b32.xlu0 %v1389, 124
        %v1397 = vpop.permute.xlu0 %1396
        %1400 = vrot.lane.b32.xlu0 %v1384, 120
        %v1401 = vpop.permute.xlu0 %1400
        %1402 = vrot.lane.b32.xlu0 %v1389, 120
        %v1403 = vpop.permute.xlu0 %1402
        %1406 = vrot.lane.b32.xlu0 %v1384, 116
        %v1407 = vpop.permute.xlu0 %1406
        %1408 = vrot.lane.b32.xlu0 %v1389, 116
        %v1409 = vpop.permute.xlu0 %1408
        %1412 = vrot.lane.b32.xlu0 %v1384, 112
        %v1413 = vpop.permute.xlu0 %1412
        %1414 = vrot.lane.b32.xlu0 %v1389, 112
        %v1415 = vpop.permute.xlu0 %1414
        %1418 = vrot.lane.b32.xlu0 %v1384, 108
        %v1419 = vpop.permute.xlu0 %1418
        %1420 = vrot.lane.b32.xlu0 %v1389, 108
        %v1421 = vpop.permute.xlu0 %1420
        %1424 = vrot.lane.b32.xlu0 %v1384, 104
        %v1425 = vpop.permute.xlu0 %1424
        %1426 = vrot.lane.b32.xlu0 %v1389, 104
        %v1427 = vpop.permute.xlu0 %1426
        %1430 = vrot.lane.b32.xlu0 %v1384, 100
        %v1431 = vpop.permute.xlu0 %1430
        %1432 = vrot.lane.b32.xlu0 %v1389, 100
        %v1433 = vpop.permute.xlu0 %1432
        %v1436 = vcombine.low %v1384, %v1401
        %v1437 = vcombine.high %v1384, %v1401
        %v1439 = vunpack.c.l.s4 1983009808
        %v1440 = vunpack.c.0.s8 %v1439
        %v1441 = vlaneseq
        %v1442 = vshrl.u32 %v1441, 7
        %v1443 = vsub.s32 %v1440, %v1442
        %v1444 = vrot.slane %v1436, %v1443
        %v1446 = vunpack.c.l.s4 1983009808
        %v1447 = vunpack.c.0.s8 %v1446
        %v1448 = vlaneseq
        %v1449 = vshrl.u32 %v1448, 7
        %v1450 = vsub.s32 %v1447, %v1449
        %v1451 = vrot.slane %v1437, %v1450
        %v1452 = vcombine.low %v1395, %v1407
        %v1453 = vcombine.high %v1395, %v1407
        %v1455 = vunpack.c.l.s4 1983009808
        %v1456 = vunpack.c.0.s8 %v1455
        %v1457 = vlaneseq
        %v1458 = vshrl.u32 %v1457, 7
        %v1459 = vsub.s32 %v1456, %v1458
        %v1460 = vrot.slane %v1452, %v1459
        %v1462 = vunpack.c.l.s4 1983009808
        %v1463 = vunpack.c.0.s8 %v1462
        %v1464 = vlaneseq
        %v1465 = vshrl.u32 %v1464, 7
        %v1466 = vsub.s32 %v1463, %v1465
        %v1467 = vrot.slane %v1453, %v1466
        %v1468 = vcombine.low %v1413, %v1425
        %v1469 = vcombine.high %v1413, %v1425
        %v1471 = vunpack.c.l.s4 1983009808
        %v1472 = vunpack.c.0.s8 %v1471
        %v1473 = vlaneseq
        %v1474 = vshrl.u32 %v1473, 7
        %v1475 = vsub.s32 %v1472, %v1474
        %v1476 = vrot.slane %v1468, %v1475
        %v1478 = vunpack.c.l.s4 1983009808
        %v1479 = vunpack.c.0.s8 %v1478
        %v1480 = vlaneseq
        %v1481 = vshrl.u32 %v1480, 7
        %v1482 = vsub.s32 %v1479, %v1481
        %v1483 = vrot.slane %v1469, %v1482
        %v1484 = vcombine.low %v1419, %v1431
        %v1485 = vcombine.high %v1419, %v1431
        %v1487 = vunpack.c.l.s4 1983009808
        %v1488 = vunpack.c.0.s8 %v1487
        %v1489 = vlaneseq
        %v1490 = vshrl.u32 %v1489, 7
        %v1491 = vsub.s32 %v1488, %v1490
        %v1492 = vrot.slane %v1484, %v1491
        %v1494 = vunpack.c.l.s4 1983009808
        %v1495 = vunpack.c.0.s8 %v1494
        %v1496 = vlaneseq
        %v1497 = vshrl.u32 %v1496, 7
        %v1498 = vsub.s32 %v1495, %v1497
        %v1499 = vrot.slane %v1485, %v1498
        %v1500 = vcombine.low %v1444, %v1460
        %v1501 = vcombine.high %v1444, %v1460
        %v1503 = vunpack.c.l.s4 1934713408
        %v1504 = vunpack.c.0.s8 %v1503
        %v1505 = vlaneseq
        %v1506 = vshrl.u32 %v1505, 7
        %v1507 = vsub.s32 %v1504, %v1506
        %v1508 = vrot.slane %v1500, %v1507
        %v1510 = vunpack.c.l.s4 1934713408
        %v1511 = vunpack.c.0.s8 %v1510
        %v1512 = vlaneseq
        %v1513 = vshrl.u32 %v1512, 7
        %v1514 = vsub.s32 %v1511, %v1513
        %v1515 = vrot.slane %v1501, %v1514
        %v1516 = vcombine.low %v1451, %v1467
        %v1517 = vcombine.high %v1451, %v1467
        %v1519 = vunpack.c.l.s4 1934713408
        %v1520 = vunpack.c.0.s8 %v1519
        %v1521 = vlaneseq
        %v1522 = vshrl.u32 %v1521, 7
        %v1523 = vsub.s32 %v1520, %v1522
        %v1524 = vrot.slane %v1516, %v1523
        %v1526 = vunpack.c.l.s4 1934713408
        %v1527 = vunpack.c.0.s8 %v1526
        %v1528 = vlaneseq
        %v1529 = vshrl.u32 %v1528, 7
        %v1530 = vsub.s32 %v1527, %v1529
        %v1531 = vrot.slane %v1517, %v1530
        %v1532 = vcombine.low %v1476, %v1492
        %v1533 = vcombine.high %v1476, %v1492
        %v1535 = vunpack.c.l.s4 1934713408
        %v1536 = vunpack.c.0.s8 %v1535
        %v1537 = vlaneseq
        %v1538 = vshrl.u32 %v1537, 7
        %v1539 = vsub.s32 %v1536, %v1538
        %v1540 = vrot.slane %v1532, %v1539
        %v1542 = vunpack.c.l.s4 1934713408
        %v1543 = vunpack.c.0.s8 %v1542
        %v1544 = vlaneseq
        %v1545 = vshrl.u32 %v1544, 7
        %v1546 = vsub.s32 %v1543, %v1545
        %v1547 = vrot.slane %v1533, %v1546
        %v1548 = vcombine.low %v1483, %v1499
        %v1549 = vcombine.high %v1483, %v1499
        %v1551 = vunpack.c.l.s4 1934713408
        %v1552 = vunpack.c.0.s8 %v1551
        %v1553 = vlaneseq
        %v1554 = vshrl.u32 %v1553, 7
        %v1555 = vsub.s32 %v1552, %v1554
        %v1556 = vrot.slane %v1548, %v1555
        %v1558 = vunpack.c.l.s4 1934713408
        %v1559 = vunpack.c.0.s8 %v1558
        %v1560 = vlaneseq
        %v1561 = vshrl.u32 %v1560, 7
        %v1562 = vsub.s32 %v1559, %v1561
        %v1563 = vrot.slane %v1549, %v1562
        %v1564 = vcombine.low %v1508, %v1540
        %v1565 = vcombine.high %v1508, %v1540
        %v1566 = vcombine.low %v1515, %v1547
        %v1567 = vcombine.high %v1515, %v1547
        %v1568 = vcombine.low %v1524, %v1556
        %v1569 = vcombine.high %v1524, %v1556
        %v1570 = vcombine.low %v1531, %v1563
        %v1571 = vcombine.high %v1531, %v1563
        %v1572 = vcombine.low %v1389, %v1403
        %v1574 = vunpack.c.l.s4 1983009808
        %v1575 = vunpack.c.0.s8 %v1574
        %v1576 = vlaneseq
        %v1577 = vshrl.u32 %v1576, 7
        %v1578 = vsub.s32 %v1575, %v1577
        %v1579 = vrot.slane %v1572, %v1578
        %v1580 = vcombine.low %v1397, %v1409
        %v1582 = vunpack.c.l.s4 1983009808
        %v1583 = vunpack.c.0.s8 %v1582
        %v1584 = vlaneseq
        %v1585 = vshrl.u32 %v1584, 7
        %v1586 = vsub.s32 %v1583, %v1585
        %v1587 = vrot.slane %v1580, %v1586
        %v1588 = vcombine.low %v1415, %v1427
        %v1590 = vunpack.c.l.s4 1983009808
        %v1591 = vunpack.c.0.s8 %v1590
        %v1592 = vlaneseq
        %v1593 = vshrl.u32 %v1592, 7
        %v1594 = vsub.s32 %v1591, %v1593
        %v1595 = vrot.slane %v1588, %v1594
        %v1596 = vcombine.low %v1421, %v1433
        %v1598 = vunpack.c.l.s4 1983009808
        %v1599 = vunpack.c.0.s8 %v1598
        %v1600 = vlaneseq
        %v1601 = vshrl.u32 %v1600, 7
        %v1602 = vsub.s32 %v1599, %v1601
        %v1603 = vrot.slane %v1596, %v1602
        %v1604 = vcombine.low %v1579, %v1587
        %v1606 = vunpack.c.l.s4 1934713408
        %v1607 = vunpack.c.0.s8 %v1606
        %v1608 = vlaneseq
        %v1609 = vshrl.u32 %v1608, 7
        %v1610 = vsub.s32 %v1607, %v1609
        %v1611 = vrot.slane %v1604, %v1610
        %v1612 = vcombine.low %v1595, %v1603
        %v1614 = vunpack.c.l.s4 1934713408
        %v1615 = vunpack.c.0.s8 %v1614
        %v1616 = vlaneseq
        %v1617 = vshrl.u32 %v1616, 7
        %v1618 = vsub.s32 %v1615, %v1617
        %v1619 = vrot.slane %v1612, %v1618
        %v1620 = vcombine.low %v1611, %v1619
        %1621 = vxpose.xlu0.b32.start [1/16] %v1564, 128
        %1622 = vxpose.xlu0.b32.cont [2/16] 0.0, 128
        %1623 = vxpose.xlu0.b32.cont [3/16] 0.0, 128
        %1624 = vxpose.xlu0.b32.cont [4/16] 0.0, 128
        %1625 = vxpose.xlu0.b32.cont [5/16] 0.0, 128
        %1626 = vxpose.xlu0.b32.cont [6/16] 0.0, 128
        %1627 = vxpose.xlu0.b32.cont [7/16] 0.0, 128
        %1628 = vxpose.xlu0.b32.cont [8/16] 0.0, 128
        %1629 = vxpose.xlu0.b32.cont [9/16] 0.0, 128
        %1630 = vxpose.xlu0.b32.cont [10/16] 0.0, 128
        %1631 = vxpose.xlu0.b32.cont [11/16] 0.0, 128
        %1632 = vxpose.xlu0.b32.cont [12/16] 0.0, 128
        %1633 = vxpose.xlu0.b32.cont [13/16] 0.0, 128
        %1634 = vxpose.xlu0.b32.cont [14/16] 0.0, 128
        %1635 = vxpose.xlu0.b32.cont [15/16] 0.0, 128
        %1636 = vxpose.xlu0.b32.end [16/16] 0.0, 128
        %v1637 = vpop.trf.xlu0
        %v1638 = vpop.trf.xlu0
        %v1639 = vpop.trf.xlu0
        %v1640 = vpop.trf.xlu0
        %v1641 = vpop.trf.xlu0
        %v1642 = vpop.trf.xlu0
        %v1643 = vpop.trf.xlu0
        %v1644 = vpop.trf.xlu0
        %v1645 = vpop.trf.xlu0
        %v1646 = vpop.trf.xlu0
        %v1647 = vpop.trf.xlu0
        %v1648 = vpop.trf.xlu0
        %v1649 = vpop.trf.xlu0
        %v1650 = vpop.trf.xlu0
        %v1651 = vpop.trf.xlu0
        %v1652 = vpop.trf.xlu0
        %1653 = vxpose.xlu0.b32.start [1/16] %v1565, 128
        %1654 = vxpose.xlu0.b32.cont [2/16] 0.0, 128
        %1655 = vxpose.xlu0.b32.cont [3/16] 0.0, 128
        %1656 = vxpose.xlu0.b32.cont [4/16] 0.0, 128
        %1657 = vxpose.xlu0.b32.cont [5/16] 0.0, 128
        %1658 = vxpose.xlu0.b32.cont [6/16] 0.0, 128
        %1659 = vxpose.xlu0.b32.cont [7/16] 0.0, 128
        %1660 = vxpose.xlu0.b32.cont [8/16] 0.0, 128
        %1661 = vxpose.xlu0.b32.cont [9/16] 0.0, 128
        %1662 = vxpose.xlu0.b32.cont [10/16] 0.0, 128
        %1663 = vxpose.xlu0.b32.cont [11/16] 0.0, 128
        %1664 = vxpose.xlu0.b32.cont [12/16] 0.0, 128
        %1665 = vxpose.xlu0.b32.cont [13/16] 0.0, 128
        %1666 = vxpose.xlu0.b32.cont [14/16] 0.0, 128
        %1667 = vxpose.xlu0.b32.cont [15/16] 0.0, 128
        %1668 = vxpose.xlu0.b32.end [16/16] 0.0, 128
        %v1669 = vpop.trf.xlu0
        %v1670 = vpop.trf.xlu0
        %v1671 = vpop.trf.xlu0
        %v1672 = vpop.trf.xlu0
        %v1673 = vpop.trf.xlu0
        %v1674 = vpop.trf.xlu0
        %v1675 = vpop.trf.xlu0
        %v1676 = vpop.trf.xlu0
        %v1677 = vpop.trf.xlu0
        %v1678 = vpop.trf.xlu0
        %v1679 = vpop.trf.xlu0
        %v1680 = vpop.trf.xlu0
        %v1681 = vpop.trf.xlu0
        %v1682 = vpop.trf.xlu0
        %v1683 = vpop.trf.xlu0
        %v1684 = vpop.trf.xlu0
        %1685 = vxpose.xlu0.b32.start [1/16] %v1566, 128
        %1686 = vxpose.xlu0.b32.cont [2/16] 0.0, 128
        %1687 = vxpose.xlu0.b32.cont [3/16] 0.0, 128
        %1688 = vxpose.xlu0.b32.cont [4/16] 0.0, 128
        %1689 = vxpose.xlu0.b32.cont [5/16] 0.0, 128
        %1690 = vxpose.xlu0.b32.cont [6/16] 0.0, 128
        %1691 = vxpose.xlu0.b32.cont [7/16] 0.0, 128
        %1692 = vxpose.xlu0.b32.cont [8/16] 0.0, 128
        %1693 = vxpose.xlu0.b32.cont [9/16] 0.0, 128
        %1694 = vxpose.xlu0.b32.cont [10/16] 0.0, 128
        %1695 = vxpose.xlu0.b32.cont [11/16] 0.0, 128
        %1696 = vxpose.xlu0.b32.cont [12/16] 0.0, 128
        %1697 = vxpose.xlu0.b32.cont [13/16] 0.0, 128
        %1698 = vxpose.xlu0.b32.cont [14/16] 0.0, 128
        %1699 = vxpose.xlu0.b32.cont [15/16] 0.0, 128
        %1700 = vxpose.xlu0.b32.end [16/16] 0.0, 128
        %v1701 = vpop.trf.xlu0
        %v1702 = vpop.trf.xlu0
        %v1703 = vpop.trf.xlu0
        %v1704 = vpop.trf.xlu0
        %v1705 = vpop.trf.xlu0
        %v1706 = vpop.trf.xlu0
        %v1707 = vpop.trf.xlu0
        %v1708 = vpop.trf.xlu0
        %v1709 = vpop.trf.xlu0
        %v1710 = vpop.trf.xlu0
        %v1711 = vpop.trf.xlu0
        %v1712 = vpop.trf.xlu0
        %v1713 = vpop.trf.xlu0
        %v1714 = vpop.trf.xlu0
        %v1715 = vpop.trf.xlu0
        %v1716 = vpop.trf.xlu0
        %1717 = vxpose.xlu0.b32.start [1/16] %v1567, 128
        %1718 = vxpose.xlu0.b32.cont [2/16] 0.0, 128
        %1719 = vxpose.xlu0.b32.cont [3/16] 0.0, 128
        %1720 = vxpose.xlu0.b32.cont [4/16] 0.0, 128
        %1721 = vxpose.xlu0.b32.cont [5/16] 0.0, 128
        %1722 = vxpose.xlu0.b32.cont [6/16] 0.0, 128
        %1723 = vxpose.xlu0.b32.cont [7/16] 0.0, 128
        %1724 = vxpose.xlu0.b32.cont [8/16] 0.0, 128
        %1725 = vxpose.xlu0.b32.cont [9/16] 0.0, 128
        %1726 = vxpose.xlu0.b32.cont [10/16] 0.0, 128
        %1727 = vxpose.xlu0.b32.cont [11/16] 0.0, 128
        %1728 = vxpose.xlu0.b32.cont [12/16] 0.0, 128
        %1729 = vxpose.xlu0.b32.cont [13/16] 0.0, 128
        %1730 = vxpose.xlu0.b32.cont [14/16] 0.0, 128
        %1731 = vxpose.xlu0.b32.cont [15/16] 0.0, 128
        %1732 = vxpose.xlu0.b32.end [16/16] 0.0, 128
        %v1733 = vpop.trf.xlu0
        %v1734 = vpop.trf.xlu0
        %v1735 = vpop.trf.xlu0
        %v1736 = vpop.trf.xlu0
        %v1737 = vpop.trf.xlu0
        %v1738 = vpop.trf.xlu0
        %v1739 = vpop.trf.xlu0
        %v1740 = vpop.trf.xlu0
        %v1741 = vpop.trf.xlu0
        %v1742 = vpop.trf.xlu0
        %v1743 = vpop.trf.xlu0
        %v1744 = vpop.trf.xlu0
        %v1745 = vpop.trf.xlu0
        %v1746 = vpop.trf.xlu0
        %v1747 = vpop.trf.xlu0
        %v1748 = vpop.trf.xlu0
        %1749 = vxpose.xlu0.b32.start [1/16] %v1568, 128
        %1750 = vxpose.xlu0.b32.cont [2/16] 0.0, 128
        %1751 = vxpose.xlu0.b32.cont [3/16] 0.0, 128
        %1752 = vxpose.xlu0.b32.cont [4/16] 0.0, 128
        %1753 = vxpose.xlu0.b32.cont [5/16] 0.0, 128
        %1754 = vxpose.xlu0.b32.cont [6/16] 0.0, 128
        %1755 = vxpose.xlu0.b32.cont [7/16] 0.0, 128
        %1756 = vxpose.xlu0.b32.cont [8/16] 0.0, 128
        %1757 = vxpose.xlu0.b32.cont [9/16] 0.0, 128
        %1758 = vxpose.xlu0.b32.cont [10/16] 0.0, 128
        %1759 = vxpose.xlu0.b32.cont [11/16] 0.0, 128
        %1760 = vxpose.xlu0.b32.cont [12/16] 0.0, 128
        %1761 = vxpose.xlu0.b32.cont [13/16] 0.0, 128
        %1762 = vxpose.xlu0.b32.cont [14/16] 0.0, 128
        %1763 = vxpose.xlu0.b32.cont [15/16] 0.0, 128
        %1764 = vxpose.xlu0.b32.end [16/16] 0.0, 128
        %v1765 = vpop.trf.xlu0
        %v1766 = vpop.trf.xlu0
        %v1767 = vpop.trf.xlu0
        %v1768 = vpop.trf.xlu0
        %v1769 = vpop.trf.xlu0
        %v1770 = vpop.trf.xlu0
        %v1771 = vpop.trf.xlu0
        %v1772 = vpop.trf.xlu0
        %v1773 = vpop.trf.xlu0
        %v1774 = vpop.trf.xlu0
        %v1775 = vpop.trf.xlu0
        %v1776 = vpop.trf.xlu0
        %v1777 = vpop.trf.xlu0
        %v1778 = vpop.trf.xlu0
        %v1779 = vpop.trf.xlu0
        %v1780 = vpop.trf.xlu0
        %1781 = vxpose.xlu0.b32.start [1/16] %v1569, 128
        %1782 = vxpose.xlu0.b32.cont [2/16] 0.0, 128
        %1783 = vxpose.xlu0.b32.cont [3/16] 0.0, 128
        %1784 = vxpose.xlu0.b32.cont [4/16] 0.0, 128
        %1785 = vxpose.xlu0.b32.cont [5/16] 0.0, 128
        %1786 = vxpose.xlu0.b32.cont [6/16] 0.0, 128
        %1787 = vxpose.xlu0.b32.cont [7/16] 0.0, 128
        %1788 = vxpose.xlu0.b32.cont [8/16] 0.0, 128
        %1789 = vxpose.xlu0.b32.cont [9/16] 0.0, 128
        %1790 = vxpose.xlu0.b32.cont [10/16] 0.0, 128
        %1791 = vxpose.xlu0.b32.cont [11/16] 0.0, 128
        %1792 = vxpose.xlu0.b32.cont [12/16] 0.0, 128
        %1793 = vxpose.xlu0.b32.cont [13/16] 0.0, 128
        %1794 = vxpose.xlu0.b32.cont [14/16] 0.0, 128
        %1795 = vxpose.xlu0.b32.cont [15/16] 0.0, 128
        %1796 = vxpose.xlu0.b32.end [16/16] 0.0, 128
        %v1797 = vpop.trf.xlu0
        %v1798 = vpop.trf.xlu0
        %v1799 = vpop.trf.xlu0
        %v1800 = vpop.trf.xlu0
        %v1801 = vpop.trf.xlu0
        %v1802 = vpop.trf.xlu0
        %v1803 = vpop.trf.xlu0
        %v1804 = vpop.trf.xlu0
        %v1805 = vpop.trf.xlu0
        %v1806 = vpop.trf.xlu0
        %v1807 = vpop.trf.xlu0
        %v1808 = vpop.trf.xlu0
        %v1809 = vpop.trf.xlu0
        %v1810 = vpop.trf.xlu0
        %v1811 = vpop.trf.xlu0
        %v1812 = vpop.trf.xlu0
        %1813 = vxpose.xlu0.b32.start [1/16] %v1570, 128
        %1814 = vxpose.xlu0.b32.cont [2/16] 0.0, 128
        %1815 = vxpose.xlu0.b32.cont [3/16] 0.0, 128
        %1816 = vxpose.xlu0.b32.cont [4/16] 0.0, 128
        %1817 = vxpose.xlu0.b32.cont [5/16] 0.0, 128
        %1818 = vxpose.xlu0.b32.cont [6/16] 0.0, 128
        %1819 = vxpose.xlu0.b32.cont [7/16] 0.0, 128
        %1820 = vxpose.xlu0.b32.cont [8/16] 0.0, 128
        %1821 = vxpose.xlu0.b32.cont [9/16] 0.0, 128
        %1822 = vxpose.xlu0.b32.cont [10/16] 0.0, 128
        %1823 = vxpose.xlu0.b32.cont [11/16] 0.0, 128
        %1824 = vxpose.xlu0.b32.cont [12/16] 0.0, 128
        %1825 = vxpose.xlu0.b32.cont [13/16] 0.0, 128
        %1826 = vxpose.xlu0.b32.cont [14/16] 0.0, 128
        %1827 = vxpose.xlu0.b32.cont [15/16] 0.0, 128
        %1828 = vxpose.xlu0.b32.end [16/16] 0.0, 128
        %v1829 = vpop.trf.xlu0
        %v1830 = vpop.trf.xlu0
        %v1831 = vpop.trf.xlu0
        %v1832 = vpop.trf.xlu0
        %v1833 = vpop.trf.xlu0
        %v1834 = vpop.trf.xlu0
        %v1835 = vpop.trf.xlu0
        %v1836 = vpop.trf.xlu0
        %v1837 = vpop.trf.xlu0
        %v1838 = vpop.trf.xlu0
        %v1839 = vpop.trf.xlu0
        %v1840 = vpop.trf.xlu0
        %v1841 = vpop.trf.xlu0
        %v1842 = vpop.trf.xlu0
        %v1843 = vpop.trf.xlu0
        %v1844 = vpop.trf.xlu0
        %1845 = vxpose.xlu0.b32.start [1/16] %v1571, 128
        %1846 = vxpose.xlu0.b32.cont [2/16] 0.0, 128
        %1847 = vxpose.xlu0.b32.cont [3/16] 0.0, 128
        %1848 = vxpose.xlu0.b32.cont [4/16] 0.0, 128
        %1849 = vxpose.xlu0.b32.cont [5/16] 0.0, 128
        %1850 = vxpose.xlu0.b32.cont [6/16] 0.0, 128
        %1851 = vxpose.xlu0.b32.cont [7/16] 0.0, 128
        %1852 = vxpose.xlu0.b32.cont [8/16] 0.0, 128
        %1853 = vxpose.xlu0.b32.cont [9/16] 0.0, 128
        %1854 = vxpose.xlu0.b32.cont [10/16] 0.0, 128
        %1855 = vxpose.xlu0.b32.cont [11/16] 0.0, 128
        %1856 = vxpose.xlu0.b32.cont [12/16] 0.0, 128
        %1857 = vxpose.xlu0.b32.cont [13/16] 0.0, 128
        %1858 = vxpose.xlu0.b32.cont [14/16] 0.0, 128
        %1859 = vxpose.xlu0.b32.cont [15/16] 0.0, 128
        %1860 = vxpose.xlu0.b32.end [16/16] 0.0, 128
        %v1861 = vpop.trf.xlu0
        %v1862 = vpop.trf.xlu0
        %v1863 = vpop.trf.xlu0
        %v1864 = vpop.trf.xlu0
        %v1865 = vpop.trf.xlu0
        %v1866 = vpop.trf.xlu0
        %v1867 = vpop.trf.xlu0
        %v1868 = vpop.trf.xlu0
        %v1869 = vpop.trf.xlu0
        %v1870 = vpop.trf.xlu0
        %v1871 = vpop.trf.xlu0
        %v1872 = vpop.trf.xlu0
        %v1873 = vpop.trf.xlu0
        %v1874 = vpop.trf.xlu0
        %v1875 = vpop.trf.xlu0
        %v1876 = vpop.trf.xlu0
        %1877 = vxpose.xlu0.b32.start [1/16] %v1620, 128
        %1878 = vxpose.xlu0.b32.cont [2/16] 0.0, 128
        %1879 = vxpose.xlu0.b32.cont [3/16] 0.0, 128
        %1880 = vxpose.xlu0.b32.cont [4/16] 0.0, 128
        %1881 = vxpose.xlu0.b32.cont [5/16] 0.0, 128
        %1882 = vxpose.xlu0.b32.cont [6/16] 0.0, 128
        %1883 = vxpose.xlu0.b32.cont [7/16] 0.0, 128
        %1884 = vxpose.xlu0.b32.cont [8/16] 0.0, 128
        %1885 = vxpose.xlu0.b32.cont [9/16] 0.0, 128
        %1886 = vxpose.xlu0.b32.cont [10/16] 0.0, 128
        %1887 = vxpose.xlu0.b32.cont [11/16] 0.0, 128
        %1888 = vxpose.xlu0.b32.cont [12/16] 0.0, 128
        %1889 = vxpose.xlu0.b32.cont [13/16] 0.0, 128
        %1890 = vxpose.xlu0.b32.cont [14/16] 0.0, 128
        %1891 = vxpose.xlu0.b32.cont [15/16] 0.0, 128
        %1892 = vxpose.xlu0.b32.end [16/16] 0.0, 128
        %v1893 = vpop.trf.xlu0
        %v1894 = vpop.trf.xlu0
        %v1895 = vpop.trf.xlu0
        %v1896 = vpop.trf.xlu0
        %v1897 = vpop.trf.xlu0
        %v1898 = vpop.trf.xlu0
        %v1899 = vpop.trf.xlu0
        %v1900 = vpop.trf.xlu0
        %v1901 = vpop.trf.xlu0
        %v1902 = vpop.trf.xlu0
        %v1903 = vpop.trf.xlu0
        %v1904 = vpop.trf.xlu0
        %v1905 = vpop.trf.xlu0
        %v1906 = vpop.trf.xlu0
        %v1907 = vpop.trf.xlu0
        %v1908 = vpop.trf.xlu0
        %v1909 = vcombine.low %v1637, %v1701
        %v1911 = vunpack.c.l.s4 1983009808
        %v1912 = vunpack.c.0.s8 %v1911
        %v1913 = vlaneseq
        %v1914 = vshrl.u32 %v1913, 7
        %v1915 = vsub.s32 %v1912, %v1914
        %v1916 = vrot.slane %v1909, %v1915
        %v1917 = vcombine.low %v1669, %v1733
        %v1919 = vunpack.c.l.s4 1983009808
        %v1920 = vunpack.c.0.s8 %v1919
        %v1921 = vlaneseq
        %v1922 = vshrl.u32 %v1921, 7
        %v1923 = vsub.s32 %v1920, %v1922
        %v1924 = vrot.slane %v1917, %v1923
        %v1925 = vcombine.low %v1765, %v1829
        %v1927 = vunpack.c.l.s4 1983009808
        %v1928 = vunpack.c.0.s8 %v1927
        %v1929 = vlaneseq
        %v1930 = vshrl.u32 %v1929, 7
        %v1931 = vsub.s32 %v1928, %v1930
        %v1932 = vrot.slane %v1925, %v1931
        %v1933 = vcombine.low %v1797, %v1861
        %v1935 = vunpack.c.l.s4 1983009808
        %v1936 = vunpack.c.0.s8 %v1935
        %v1937 = vlaneseq
        %v1938 = vshrl.u32 %v1937, 7
        %v1939 = vsub.s32 %v1936, %v1938
        %v1940 = vrot.slane %v1933, %v1939
        %v1941 = vcombine.low %v1916, %v1924
        %v1942 = vcombine.high %v1916, %v1924
        %v1944 = vunpack.c.l.s4 1934713408
        %v1945 = vunpack.c.0.s8 %v1944
        %v1946 = vlaneseq
        %v1947 = vshrl.u32 %v1946, 7
        %v1948 = vsub.s32 %v1945, %v1947
        %v1949 = vrot.slane %v1941, %v1948
        %v1951 = vunpack.c.l.s4 1934713408
        %v1952 = vunpack.c.0.s8 %v1951
        %v1953 = vlaneseq
        %v1954 = vshrl.u32 %v1953, 7
        %v1955 = vsub.s32 %v1952, %v1954
        %v1956 = vrot.slane %v1942, %v1955
        %v1957 = vcombine.low %v1932, %v1940
        %v1958 = vcombine.high %v1932, %v1940
        %v1960 = vunpack.c.l.s4 1934713408
        %v1961 = vunpack.c.0.s8 %v1960
        %v1962 = vlaneseq
        %v1963 = vshrl.u32 %v1962, 7
        %v1964 = vsub.s32 %v1961, %v1963
        %v1965 = vrot.slane %v1957, %v1964
        %v1967 = vunpack.c.l.s4 1934713408
        %v1968 = vunpack.c.0.s8 %v1967
        %v1969 = vlaneseq
        %v1970 = vshrl.u32 %v1969, 7
        %v1971 = vsub.s32 %v1968, %v1970
        %v1972 = vrot.slane %v1958, %v1971
        %v1973 = vcombine.low %v1949, %v1965
        %v1974 = vcombine.high %v1949, %v1965
        %v1975 = vcombine.low %v1956, %v1972
        %v1976 = vcombine.high %v1956, %v1972
        %v1978 = vunpack.c.l.s4 1983009808
        %v1979 = vunpack.c.0.s8 %v1978
        %v1980 = vlaneseq
        %v1981 = vshrl.u32 %v1980, 7
        %v1982 = vsub.s32 %v1979, %v1981
        %v1983 = vrot.slane %v1893, %v1982
        %v1984 = vcombine.high %v1983, 0.0
        %v1986 = vunpack.c.l.s4 1934713408
        %v1987 = vunpack.c.0.s8 %v1986
        %v1988 = vlaneseq
        %v1989 = vshrl.u32 %v1988, 7
        %v1990 = vsub.s32 %v1987, %v1989
        %v1991 = vrot.slane %v1983, %v1990
        %v1993 = vunpack.c.l.s4 1934713408
        %v1994 = vunpack.c.0.s8 %v1993
        %v1995 = vlaneseq
        %v1996 = vshrl.u32 %v1995, 7
        %v1997 = vsub.s32 %v1994, %v1996
        %v1998 = vrot.slane %v1984, %v1997
        %v1999 = vcombine.high %v1991, 0.0
        %v2000 = vcombine.high %v1998, 0.0
        %2001 = vxpose.xlu0.b32.start [1/16] %v1973, 128
        %2002 = vxpose.xlu0.b32.cont [2/16] %v1991, 128
        %2003 = vxpose.xlu0.b32.cont [3/16] 0.0, 128
        %2004 = vxpose.xlu0.b32.cont [4/16] 0.0, 128
        %2005 = vxpose.xlu0.b32.cont [5/16] 0.0, 128
        %2006 = vxpose.xlu0.b32.cont [6/16] 0.0, 128
        %2007 = vxpose.xlu0.b32.cont [7/16] 0.0, 128
        %2008 = vxpose.xlu0.b32.cont [8/16] 0.0, 128
        %2009 = vxpose.xlu0.b32.cont [9/16] 0.0, 128
        %2010 = vxpose.xlu0.b32.cont [10/16] 0.0, 128
        %2011 = vxpose.xlu0.b32.cont [11/16] 0.0, 128
        %2012 = vxpose.xlu0.b32.cont [12/16] 0.0, 128
        %2013 = vxpose.xlu0.b32.cont [13/16] 0.0, 128
        %2014 = vxpose.xlu0.b32.cont [14/16] 0.0, 128
        %2015 = vxpose.xlu0.b32.cont [15/16] 0.0, 128
        %2016 = vxpose.xlu0.b32.end [16/16] 0.0, 128
        %v2017 = vpop.trf.xlu0
        %v2018 = vpop.trf.xlu0
        %v2019 = vpop.trf.xlu0
        %v2020 = vpop.trf.xlu0
        %v2021 = vpop.trf.xlu0
        %v2022 = vpop.trf.xlu0
        %v2023 = vpop.trf.xlu0
        %v2024 = vpop.trf.xlu0
        %v2025 = vpop.trf.xlu0
        %v2026 = vpop.trf.xlu0
        %v2027 = vpop.trf.xlu0
        %v2028 = vpop.trf.xlu0
        %v2029 = vpop.trf.xlu0
        %v2030 = vpop.trf.xlu0
        %v2031 = vpop.trf.xlu0
        %v2032 = vpop.trf.xlu0
        %2033 = vxpose.xlu0.b32.start [1/16] %v1974, 128
        %2034 = vxpose.xlu0.b32.cont [2/16] %v1999, 128
        %2035 = vxpose.xlu0.b32.cont [3/16] 0.0, 128
        %2036 = vxpose.xlu0.b32.cont [4/16] 0.0, 128
        %2037 = vxpose.xlu0.b32.cont [5/16] 0.0, 128
        %2038 = vxpose.xlu0.b32.cont [6/16] 0.0, 128
        %2039 = vxpose.xlu0.b32.cont [7/16] 0.0, 128
        %2040 = vxpose.xlu0.b32.cont [8/16] 0.0, 128
        %2041 = vxpose.xlu0.b32.cont [9/16] 0.0, 128
        %2042 = vxpose.xlu0.b32.cont [10/16] 0.0, 128
        %2043 = vxpose.xlu0.b32.cont [11/16] 0.0, 128
        %2044 = vxpose.xlu0.b32.cont [12/16] 0.0, 128
        %2045 = vxpose.xlu0.b32.cont [13/16] 0.0, 128
        %2046 = vxpose.xlu0.b32.cont [14/16] 0.0, 128
        %2047 = vxpose.xlu0.b32.cont [15/16] 0.0, 128
        %2048 = vxpose.xlu0.b32.end [16/16] 0.0, 128
        %v2049 = vpop.trf.xlu0
        %v2050 = vpop.trf.xlu0
        %v2051 = vpop.trf.xlu0
        %v2052 = vpop.trf.xlu0
        %v2053 = vpop.trf.xlu0
        %v2054 = vpop.trf.xlu0
        %v2055 = vpop.trf.xlu0
        %v2056 = vpop.trf.xlu0
        %v2057 = vpop.trf.xlu0
        %v2058 = vpop.trf.xlu0
        %v2059 = vpop.trf.xlu0
        %v2060 = vpop.trf.xlu0
        %v2061 = vpop.trf.xlu0
        %v2062 = vpop.trf.xlu0
        %v2063 = vpop.trf.xlu0
        %v2064 = vpop.trf.xlu0
        %2065 = vxpose.xlu0.b32.start [1/16] %v1975, 128
        %2066 = vxpose.xlu0.b32.cont [2/16] %v1998, 128
        %2067 = vxpose.xlu0.b32.cont [3/16] 0.0, 128
        %2068 = vxpose.xlu0.b32.cont [4/16] 0.0, 128
        %2069 = vxpose.xlu0.b32.cont [5/16] 0.0, 128
        %2070 = vxpose.xlu0.b32.cont [6/16] 0.0, 128
        %2071 = vxpose.xlu0.b32.cont [7/16] 0.0, 128
        %2072 = vxpose.xlu0.b32.cont [8/16] 0.0, 128
        %2073 = vxpose.xlu0.b32.cont [9/16] 0.0, 128
        %2074 = vxpose.xlu0.b32.cont [10/16] 0.0, 128
        %2075 = vxpose.xlu0.b32.cont [11/16] 0.0, 128
        %2076 = vxpose.xlu0.b32.cont [12/16] 0.0, 128
        %2077 = vxpose.xlu0.b32.cont [13/16] 0.0, 128
        %2078 = vxpose.xlu0.b32.cont [14/16] 0.0, 128
        %2079 = vxpose.xlu0.b32.cont [15/16] 0.0, 128
        %2080 = vxpose.xlu0.b32.end [16/16] 0.0, 128
        %v2081 = vpop.trf.xlu0
        %v2082 = vpop.trf.xlu0
        %v2083 = vpop.trf.xlu0
        %v2084 = vpop.trf.xlu0
        %v2085 = vpop.trf.xlu0
        %v2086 = vpop.trf.xlu0
        %v2087 = vpop.trf.xlu0
        %v2088 = vpop.trf.xlu0
        %v2089 = vpop.trf.xlu0
        %v2090 = vpop.trf.xlu0
        %v2091 = vpop.trf.xlu0
        %v2092 = vpop.trf.xlu0
        %v2093 = vpop.trf.xlu0
        %v2094 = vpop.trf.xlu0
        %v2095 = vpop.trf.xlu0
        %v2096 = vpop.trf.xlu0
        %2097 = vxpose.xlu0.b32.start [1/16] %v1976, 128
        %2098 = vxpose.xlu0.b32.cont [2/16] %v2000, 128
        %2099 = vxpose.xlu0.b32.cont [3/16] 0.0, 128
        %2100 = vxpose.xlu0.b32.cont [4/16] 0.0, 128
        %2101 = vxpose.xlu0.b32.cont [5/16] 0.0, 128
        %2102 = vxpose.xlu0.b32.cont [6/16] 0.0, 128
        %2103 = vxpose.xlu0.b32.cont [7/16] 0.0, 128
        %2104 = vxpose.xlu0.b32.cont [8/16] 0.0, 128
        %2105 = vxpose.xlu0.b32.cont [9/16] 0.0, 128
        %2106 = vxpose.xlu0.b32.cont [10/16] 0.0, 128
        %2107 = vxpose.xlu0.b32.cont [11/16] 0.0, 128
        %2108 = vxpose.xlu0.b32.cont [12/16] 0.0, 128
        %2109 = vxpose.xlu0.b32.cont [13/16] 0.0, 128
        %2110 = vxpose.xlu0.b32.cont [14/16] 0.0, 128
        %2111 = vxpose.xlu0.b32.cont [15/16] 0.0, 128
        %2112 = vxpose.xlu0.b32.end [16/16] 0.0, 128
        %v2113 = vpop.trf.xlu0
        %v2114 = vpop.trf.xlu0
        %v2115 = vpop.trf.xlu0
        %v2116 = vpop.trf.xlu0
        %v2117 = vpop.trf.xlu0
        %v2118 = vpop.trf.xlu0
        %v2119 = vpop.trf.xlu0
        %v2120 = vpop.trf.xlu0
        %v2121 = vpop.trf.xlu0
        %v2122 = vpop.trf.xlu0
        %v2123 = vpop.trf.xlu0
        %v2124 = vpop.trf.xlu0
        %v2125 = vpop.trf.xlu0
        %v2126 = vpop.trf.xlu0
        %v2127 = vpop.trf.xlu0
        %v2128 = vpop.trf.xlu0
        %v2129 = vlaneseq
        %v2130 = vshrl.u32 %v2129, 7
        %v2131 = vstv %s909
        %v2132 = vadd.s32 %v2131, %v2130
        %v2133 = vlaneseq
        %v2134 = vand.u32 %v2133, 127
        %v2135 = vsub.s32 %v2134, %v2132
        %vm2136 = vcmp.gt.s32.totalorder %v2135, 4294967292
        %v2137 = vsel %vm2136, %v2135, 4294967292
        %vm2138 = vcmp.lt.s32.totalorder %v2137, 4
        %v2139 = vsel %vm2138, %v2137, 4
        %v2140 = vadd.s32 %v2139, 4
        %vm2141 = vcmp.eq.s32.totalorder %v2140, 0
        %v2142 = vsel %vm2141, 1, 0
        %vm2143 = vcmp.eq.s32.totalorder %v2142, 1
        %2145 = vset.pattern.permute.xlu0 0
        %2146 = vperm.xlu0 %2145, %v2017
        %v2147 = vpop.permute.xlu0 %2146
        %2150 = vset.pattern.permute.xlu0 0
        %2151 = vperm.xlu0 %2150, %v2049
        %v2152 = vpop.permute.xlu0 %2151
        %2155 = vset.pattern.permute.xlu0 0
        %2156 = vperm.xlu0 %2155, %v2081
        %v2157 = vpop.permute.xlu0 %2156
        %2160 = vset.pattern.permute.xlu0 0
        %2161 = vperm.xlu0 %2160, %v2113
        %v2162 = vpop.permute.xlu0 %2161
        %v2164 = vsel %vm2143, %v2147, 0.0
        %v2165 = vsel %vm2143, %v2152, 0.0
        %v2166 = vsel %vm2143, %v2157, 0.0
        %v2167 = vsel %vm2143, %v2162, 0.0
        %v2168 = vsel %vm1241, %v1007, 0
        %2170 = vmatprep.subr.mxu0 0.0
        %2171 = vmatpush1.msra.mxu0 %v910
        %2172 = vmatprep.subr.mxu0 0.0
        %2173 = vmatpush1.msra.mxu0 0.0
        %2174 = vmatprep.subr.mxu0 0.0
        %2175 = vmatpush1.msra.mxu0 0.0
        %2176 = vmatprep.subr.mxu0 0.0
        %2177 = vmatpush1.msra.mxu0 0.0
        %2178 = vmatprep.subr.mxu0 0.0
        %2179 = vmatpush1.msra.mxu0 0.0
        %2180 = vmatprep.subr.mxu0 0.0
        %2181 = vmatpush1.msra.mxu0 0.0
        %2182 = vmatprep.subr.mxu0 0.0
        %2183 = vmatpush1.msra.mxu0 0.0
        %2184 = vmatprep.subr.mxu0 0.0
        %2185 = vmatpush1.msra.mxu0 0.0
        %2186 = vmatprep.subr.mxu0 0.0
        %2187 = vmatpush1.msra.mxu0 0.0
        %2188 = vmatprep.subr.mxu0 0.0
        %2189 = vmatpush1.msra.mxu0 0.0
        %2190 = vmatprep.subr.mxu0 0.0
        %2191 = vmatpush1.msra.mxu0 0.0
        %2192 = vmatprep.subr.mxu0 0.0
        %2193 = vmatpush1.msra.mxu0 0.0
        %2194 = vmatprep.subr.mxu0 0.0
        %2195 = vmatpush1.msra.mxu0 0.0
        %2196 = vmatprep.subr.mxu0 0.0
        %2197 = vmatpush1.msra.mxu0 0.0
        %2198 = vmatprep.subr.mxu0 0.0
        %2199 = vmatpush1.msra.mxu0 0.0
        %2200 = vmatprep.subr.mxu0 0.0
        %2201 = vmatpush1.msra.mxu0 0.0
        %2202 = vmatprep.subr.mxu0 0.0
        %2203 = vmatpush1.msra.mxu0 0.0
        %2204 = vmatprep.subr.mxu0 0.0
        %2205 = vmatpush1.msra.mxu0 0.0
        %2206 = vmatprep.subr.mxu0 0.0
        %2207 = vmatpush1.msra.mxu0 0.0
        %2208 = vmatprep.subr.mxu0 0.0
        %2209 = vmatpush1.msra.mxu0 0.0
        %2210 = vmatprep.subr.mxu0 0.0
        %2211 = vmatpush1.msra.mxu0 0.0
        %2212 = vmatprep.subr.mxu0 0.0
        %2213 = vmatpush1.msra.mxu0 0.0
        %2214 = vmatprep.subr.mxu0 0.0
        %2215 = vmatpush1.msra.mxu0 0.0
        %2216 = vmatprep.subr.mxu0 0.0
        %2217 = vmatpush1.msra.mxu0 0.0
        %2218 = vmatprep.subr.mxu0 0.0
        %2219 = vmatpush1.msra.mxu0 0.0
        %2220 = vmatprep.subr.mxu0 0.0
        %2221 = vmatpush1.msra.mxu0 0.0
        %2222 = vmatprep.subr.mxu0 0.0
        %2223 = vmatpush1.msra.mxu0 0.0
        %2224 = vmatprep.subr.mxu0 0.0
        %2225 = vmatpush1.msra.mxu0 0.0
        %2226 = vmatprep.subr.mxu0 0.0
        %2227 = vmatpush1.msra.mxu0 0.0
        %2228 = vmatprep.subr.mxu0 0.0
        %2229 = vmatpush1.msra.mxu0 0.0
        %2230 = vmatprep.subr.mxu0 0.0
        %2231 = vmatpush1.msra.mxu0 0.0
        %2232 = vmatprep.subr.mxu0 0.0
        %2233 = vmatpush1.msra.mxu0 0.0
        %2234 = vmatprep.mubr.f32.mxu0 0.0
        %2235 = vmatmul.mubr.f32.gmra.mrb[0].mxu0 %v2168
        %v2236 = vpop.f32.mrb[0].mxu0
        %v2237 = vadd.f32 %v2164, %v2236
        %v2238 = vpop.f32.mrb[0].mxu0
        %2239 = vdwg.mxu0
        %v2240 = vsel %vm1241, %v1010, 0
        %2242 = vmatprep.subr.mxu0 0.0
        %2243 = vmatpush1.msra.mxu0 %v911
        %2244 = vmatprep.subr.mxu0 0.0
        %2245 = vmatpush1.msra.mxu0 0.0
        %2246 = vmatprep.subr.mxu0 0.0
        %2247 = vmatpush1.msra.mxu0 0.0
        %2248 = vmatprep.subr.mxu0 0.0
        %2249 = vmatpush1.msra.mxu0 0.0
        %2250 = vmatprep.subr.mxu0 0.0
        %2251 = vmatpush1.msra.mxu0 0.0
        %2252 = vmatprep.subr.mxu0 0.0
        %2253 = vmatpush1.msra.mxu0 0.0
        %2254 = vmatprep.subr.mxu0 0.0
        %2255 = vmatpush1.msra.mxu0 0.0
        %2256 = vmatprep.subr.mxu0 0.0
        %2257 = vmatpush1.msra.mxu0 0.0
        %2258 = vmatprep.subr.mxu0 0.0
        %2259 = vmatpush1.msra.mxu0 0.0
        %2260 = vmatprep.subr.mxu0 0.0
        %2261 = vmatpush1.msra.mxu0 0.0
        %2262 = vmatprep.subr.mxu0 0.0
        %2263 = vmatpush1.msra.mxu0 0.0
        %2264 = vmatprep.subr.mxu0 0.0
        %2265 = vmatpush1.msra.mxu0 0.0
        %2266 = vmatprep.subr.mxu0 0.0
        %2267 = vmatpush1.msra.mxu0 0.0
        %2268 = vmatprep.subr.mxu0 0.0
        %2269 = vmatpush1.msra.mxu0 0.0
        %2270 = vmatprep.subr.mxu0 0.0
        %2271 = vmatpush1.msra.mxu0 0.0
        %2272 = vmatprep.subr.mxu0 0.0
        %2273 = vmatpush1.msra.mxu0 0.0
        %2274 = vmatprep.subr.mxu0 0.0
        %2275 = vmatpush1.msra.mxu0 0.0
        %2276 = vmatprep.subr.mxu0 0.0
        %2277 = vmatpush1.msra.mxu0 0.0
        %2278 = vmatprep.subr.mxu0 0.0
        %2279 = vmatpush1.msra.mxu0 0.0
        %2280 = vmatprep.subr.mxu0 0.0
        %2281 = vmatpush1.msra.mxu0 0.0
        %2282 = vmatprep.subr.mxu0 0.0
        %2283 = vmatpush1.msra.mxu0 0.0
        %2284 = vmatprep.subr.mxu0 0.0
        %2285 = vmatpush1.msra.mxu0 0.0
        %2286 = vmatprep.subr.mxu0 0.0
        %2287 = vmatpush1.msra.mxu0 0.0
        %2288 = vmatprep.subr.mxu0 0.0
        %2289 = vmatpush1.msra.mxu0 0.0
        %2290 = vmatprep.subr.mxu0 0.0
        %2291 = vmatpush1.msra.mxu0 0.0
        %2292 = vmatprep.subr.mxu0 0.0
        %2293 = vmatpush1.msra.mxu0 0.0
        %2294 = vmatprep.subr.mxu0 0.0
        %2295 = vmatpush1.msra.mxu0 0.0
        %2296 = vmatprep.subr.mxu0 0.0
        %2297 = vmatpush1.msra.mxu0 0.0
        %2298 = vmatprep.subr.mxu0 0.0
        %2299 = vmatpush1.msra.mxu0 0.0
        %2300 = vmatprep.subr.mxu0 0.0
        %2301 = vmatpush1.msra.mxu0 0.0
        %2302 = vmatprep.subr.mxu0 0.0
        %2303 = vmatpush1.msra.mxu0 0.0
        %2304 = vmatprep.subr.mxu0 0.0
        %2305 = vmatpush1.msra.mxu0 0.0
        %2306 = vmatprep.mubr.f32.mxu0 0.0
        %2307 = vmatmul.mubr.f32.gmra.mrb[0].mxu0 %v2240
        %v2308 = vpop.f32.mrb[0].mxu0
        %v2309 = vadd.f32 %v2165, %v2308
        %v2310 = vpop.f32.mrb[0].mxu0
        %2311 = vdwg.mxu0
        %v2312 = vsel %vm1241, %v1013, 0
        %2314 = vmatprep.subr.mxu0 0.0
        %2315 = vmatpush1.msra.mxu0 %v912
        %2316 = vmatprep.subr.mxu0 0.0
        %2317 = vmatpush1.msra.mxu0 0.0
        %2318 = vmatprep.subr.mxu0 0.0
        %2319 = vmatpush1.msra.mxu0 0.0
        %2320 = vmatprep.subr.mxu0 0.0
        %2321 = vmatpush1.msra.mxu0 0.0
        %2322 = vmatprep.subr.mxu0 0.0
        %2323 = vmatpush1.msra.mxu0 0.0
        %2324 = vmatprep.subr.mxu0 0.0
        %2325 = vmatpush1.msra.mxu0 0.0
        %2326 = vmatprep.subr.mxu0 0.0
        %2327 = vmatpush1.msra.mxu0 0.0
        %2328 = vmatprep.subr.mxu0 0.0
        %2329 = vmatpush1.msra.mxu0 0.0
        %2330 = vmatprep.subr.mxu0 0.0
        %2331 = vmatpush1.msra.mxu0 0.0
        %2332 = vmatprep.subr.mxu0 0.0
        %2333 = vmatpush1.msra.mxu0 0.0
        %2334 = vmatprep.subr.mxu0 0.0
        %2335 = vmatpush1.msra.mxu0 0.0
        %2336 = vmatprep.subr.mxu0 0.0
        %2337 = vmatpush1.msra.mxu0 0.0
        %2338 = vmatprep.subr.mxu0 0.0
        %2339 = vmatpush1.msra.mxu0 0.0
        %2340 = vmatprep.subr.mxu0 0.0
        %2341 = vmatpush1.msra.mxu0 0.0
        %2342 = vmatprep.subr.mxu0 0.0
        %2343 = vmatpush1.msra.mxu0 0.0
        %2344 = vmatprep.subr.mxu0 0.0
        %2345 = vmatpush1.msra.mxu0 0.0
        %2346 = vmatprep.subr.mxu0 0.0
        %2347 = vmatpush1.msra.mxu0 0.0
        %2348 = vmatprep.subr.mxu0 0.0
        %2349 = vmatpush1.msra.mxu0 0.0
        %2350 = vmatprep.subr.mxu0 0.0
        %2351 = vmatpush1.msra.mxu0 0.0
        %2352 = vmatprep.subr.mxu0 0.0
        %2353 = vmatpush1.msra.mxu0 0.0
        %2354 = vmatprep.subr.mxu0 0.0
        %2355 = vmatpush1.msra.mxu0 0.0
        %2356 = vmatprep.subr.mxu0 0.0
        %2357 = vmatpush1.msra.mxu0 0.0
        %2358 = vmatprep.subr.mxu0 0.0
        %2359 = vmatpush1.msra.mxu0 0.0
        %2360 = vmatprep.subr.mxu0 0.0
        %2361 = vmatpush1.msra.mxu0 0.0
        %2362 = vmatprep.subr.mxu0 0.0
        %2363 = vmatpush1.msra.mxu0 0.0
        %2364 = vmatprep.subr.mxu0 0.0
        %2365 = vmatpush1.msra.mxu0 0.0
        %2366 = vmatprep.subr.mxu0 0.0
        %2367 = vmatpush1.msra.mxu0 0.0
        %2368 = vmatprep.subr.mxu0 0.0
        %2369 = vmatpush1.msra.mxu0 0.0
        %2370 = vmatprep.subr.mxu0 0.0
        %2371 = vmatpush1.msra.mxu0 0.0
        %2372 = vmatprep.subr.mxu0 0.0
        %2373 = vmatpush1.msra.mxu0 0.0
        %2374 = vmatprep.subr.mxu0 0.0
        %2375 = vmatpush1.msra.mxu0 0.0
        %2376 = vmatprep.subr.mxu0 0.0
        %2377 = vmatpush1.msra.mxu0 0.0
        %2378 = vmatprep.mubr.f32.mxu0 0.0
        %2379 = vmatmul.mubr.f32.gmra.mrb[0].mxu0 %v2312
        %v2380 = vpop.f32.mrb[0].mxu0
        %v2381 = vadd.f32 %v2166, %v2380
        %v2382 = vpop.f32.mrb[0].mxu0
        %2383 = vdwg.mxu0
        %v2384 = vsel %vm1241, %v1016, 0
        %2386 = vmatprep.subr.mxu0 0.0
        %2387 = vmatpush1.msra.mxu0 %v913
        %2388 = vmatprep.subr.mxu0 0.0
        %2389 = vmatpush1.msra.mxu0 0.0
        %2390 = vmatprep.subr.mxu0 0.0
        %2391 = vmatpush1.msra.mxu0 0.0
        %2392 = vmatprep.subr.mxu0 0.0
        %2393 = vmatpush1.msra.mxu0 0.0
        %2394 = vmatprep.subr.mxu0 0.0
        %2395 = vmatpush1.msra.mxu0 0.0
        %2396 = vmatprep.subr.mxu0 0.0
        %2397 = vmatpush1.msra.mxu0 0.0
        %2398 = vmatprep.subr.mxu0 0.0
        %2399 = vmatpush1.msra.mxu0 0.0
        %2400 = vmatprep.subr.mxu0 0.0
        %2401 = vmatpush1.msra.mxu0 0.0
        %2402 = vmatprep.subr.mxu0 0.0
        %2403 = vmatpush1.msra.mxu0 0.0
        %2404 = vmatprep.subr.mxu0 0.0
        %2405 = vmatpush1.msra.mxu0 0.0
        %2406 = vmatprep.subr.mxu0 0.0
        %2407 = vmatpush1.msra.mxu0 0.0
        %2408 = vmatprep.subr.mxu0 0.0
        %2409 = vmatpush1.msra.mxu0 0.0
        %2410 = vmatprep.subr.mxu0 0.0
        %2411 = vmatpush1.msra.mxu0 0.0
        %2412 = vmatprep.subr.mxu0 0.0
        %2413 = vmatpush1.msra.mxu0 0.0
        %2414 = vmatprep.subr.mxu0 0.0
        %2415 = vmatpush1.msra.mxu0 0.0
        %2416 = vmatprep.subr.mxu0 0.0
        %2417 = vmatpush1.msra.mxu0 0.0
        %2418 = vmatprep.subr.mxu0 0.0
        %2419 = vmatpush1.msra.mxu0 0.0
        %2420 = vmatprep.subr.mxu0 0.0
        %2421 = vmatpush1.msra.mxu0 0.0
        %2422 = vmatprep.subr.mxu0 0.0
        %2423 = vmatpush1.msra.mxu0 0.0
        %2424 = vmatprep.subr.mxu0 0.0
        %2425 = vmatpush1.msra.mxu0 0.0
        %2426 = vmatprep.subr.mxu0 0.0
        %2427 = vmatpush1.msra.mxu0 0.0
        %2428 = vmatprep.subr.mxu0 0.0
        %2429 = vmatpush1.msra.mxu0 0.0
        %2430 = vmatprep.subr.mxu0 0.0
        %2431 = vmatpush1.msra.mxu0 0.0
        %2432 = vmatprep.subr.mxu0 0.0
        %2433 = vmatpush1.msra.mxu0 0.0
        %2434 = vmatprep.subr.mxu0 0.0
        %2435 = vmatpush1.msra.mxu0 0.0
        %2436 = vmatprep.subr.mxu0 0.0
        %2437 = vmatpush1.msra.mxu0 0.0
        %2438 = vmatprep.subr.mxu0 0.0
        %2439 = vmatpush1.msra.mxu0 0.0
        %2440 = vmatprep.subr.mxu0 0.0
        %2441 = vmatpush1.msra.mxu0 0.0
        %2442 = vmatprep.subr.mxu0 0.0
        %2443 = vmatpush1.msra.mxu0 0.0
        %2444 = vmatprep.subr.mxu0 0.0
        %2445 = vmatpush1.msra.mxu0 0.0
        %2446 = vmatprep.subr.mxu0 0.0
        %2447 = vmatpush1.msra.mxu0 0.0
        %2448 = vmatprep.subr.mxu0 0.0
        %2449 = vmatpush1.msra.mxu0 0.0
        %2450 = vmatprep.mubr.f32.mxu0 0.0
        %2451 = vmatmul.mubr.f32.gmra.mrb[0].mxu0 %v2384
        %v2452 = vpop.f32.mrb[0].mxu0
        %v2453 = vadd.f32 %v2167, %v2452
        %v2454 = vpop.f32.mrb[0].mxu0
        %2455 = vdwg.mxu0
        %vm2456 = vcmp.eq.s32.totalorder %v2140, 1
        %v2457 = vsel %vm2456, 1, 0
        %vm2458 = vcmp.eq.s32.totalorder %v2457, 1
        %2459 = vset.pattern.permute.xlu0 1
        %2460 = vperm.xlu0 %2459, %v2017
        %v2461 = vpop.permute.xlu0 %2460
        %2463 = vset.pattern.permute.xlu0 1
        %2464 = vperm.xlu0 %2463, %v2049
        %v2465 = vpop.permute.xlu0 %2464
        %2467 = vset.pattern.permute.xlu0 1
        %2468 = vperm.xlu0 %2467, %v2081
        %v2469 = vpop.permute.xlu0 %2468
        %2471 = vset.pattern.permute.xlu0 1
        %2472 = vperm.xlu0 %2471, %v2113
        %v2473 = vpop.permute.xlu0 %2472
        %v2475 = vsel %vm2458, %v2461, 0.0
        %v2476 = vsel %vm2458, %v2465, 0.0
        %v2477 = vsel %vm2458, %v2469, 0.0
        %v2478 = vsel %vm2458, %v2473, 0.0
        %v2479 = vadd.f32 %v2237, %v2475
        %v2480 = vadd.f32 %v2309, %v2476
        %v2481 = vadd.f32 %v2381, %v2477
        %v2482 = vadd.f32 %v2453, %v2478
        %vm2483 = vcmp.eq.s32.totalorder %v2140, 2
        %v2484 = vsel %vm2483, 1, 0
        %vm2485 = vcmp.eq.s32.totalorder %v2484, 1
        %2486 = vset.pattern.permute.xlu0 2
        %2487 = vperm.xlu0 %2486, %v2017
        %v2488 = vpop.permute.xlu0 %2487
        %2490 = vset.pattern.permute.xlu0 2
        %2491 = vperm.xlu0 %2490, %v2049
        %v2492 = vpop.permute.xlu0 %2491
        %2494 = vset.pattern.permute.xlu0 2
        %2495 = vperm.xlu0 %2494, %v2081
        %v2496 = vpop.permute.xlu0 %2495
        %2498 = vset.pattern.permute.xlu0 2
        %2499 = vperm.xlu0 %2498, %v2113
        %v2500 = vpop.permute.xlu0 %2499
        %v2502 = vsel %vm2485, %v2488, 0.0
        %v2503 = vsel %vm2485, %v2492, 0.0
        %v2504 = vsel %vm2485, %v2496, 0.0
        %v2505 = vsel %vm2485, %v2500, 0.0
        %v2506 = vadd.f32 %v2479, %v2502
        %v2507 = vadd.f32 %v2480, %v2503
        %v2508 = vadd.f32 %v2481, %v2504
        %v2509 = vadd.f32 %v2482, %v2505
        %vm2510 = vcmp.eq.s32.totalorder %v2140, 3
        %v2511 = vsel %vm2510, 1, 0
        %vm2512 = vcmp.eq.s32.totalorder %v2511, 1
        %2513 = vset.pattern.permute.xlu0 3
        %2514 = vperm.xlu0 %2513, %v2017
        %v2515 = vpop.permute.xlu0 %2514
        %2517 = vset.pattern.permute.xlu0 3
        %2518 = vperm.xlu0 %2517, %v2049
        %v2519 = vpop.permute.xlu0 %2518
        %2521 = vset.pattern.permute.xlu0 3
        %2522 = vperm.xlu0 %2521, %v2081
        %v2523 = vpop.permute.xlu0 %2522
        %2525 = vset.pattern.permute.xlu0 3
        %2526 = vperm.xlu0 %2525, %v2113
        %v2527 = vpop.permute.xlu0 %2526
        %v2529 = vsel %vm2512, %v2515, 0.0
        %v2530 = vsel %vm2512, %v2519, 0.0
        %v2531 = vsel %vm2512, %v2523, 0.0
        %v2532 = vsel %vm2512, %v2527, 0.0
        %v2533 = vadd.f32 %v2506, %v2529
        %v2534 = vadd.f32 %v2507, %v2530
        %v2535 = vadd.f32 %v2508, %v2531
        %v2536 = vadd.f32 %v2509, %v2532
        %vm2537 = vcmp.eq.s32.totalorder %v2140, 4
        %v2538 = vsel %vm2537, 1, 0
        %vm2539 = vcmp.eq.s32.totalorder %v2538, 1
        %2540 = vset.pattern.permute.xlu0 4
        %2541 = vperm.xlu0 %2540, %v2017
        %v2542 = vpop.permute.xlu0 %2541
        %2544 = vset.pattern.permute.xlu0 4
        %2545 = vperm.xlu0 %2544, %v2049
        %v2546 = vpop.permute.xlu0 %2545
        %2548 = vset.pattern.permute.xlu0 4
        %2549 = vperm.xlu0 %2548, %v2081
        %v2550 = vpop.permute.xlu0 %2549
        %2552 = vset.pattern.permute.xlu0 4
        %2553 = vperm.xlu0 %2552, %v2113
        %v2554 = vpop.permute.xlu0 %2553
        %v2556 = vsel %vm2539, %v2542, 0.0
        %v2557 = vsel %vm2539, %v2546, 0.0
        %v2558 = vsel %vm2539, %v2550, 0.0
        %v2559 = vsel %vm2539, %v2554, 0.0
        %v2560 = vadd.f32 %v2533, %v2556
        %v2561 = vadd.f32 %v2534, %v2557
        %v2562 = vadd.f32 %v2535, %v2558
        %v2563 = vadd.f32 %v2536, %v2559
        %vm2564 = vcmp.le.s32.totalorder %v2135, 0
        %v2565 = vsel %vm2564, 0.0, -1e+30
        %v2566 = vadd.f32 %v2560, %v2565
        %v2567 = vadd.f32 %v2561, %v2565
        %v2568 = vadd.f32 %v2562, %v2565
        %v2569 = vadd.f32 %v2563, %v2565
        %v2570 = vsel %vm1247, %v2566, -inf
        %2571 = vmax.xlane.f32.xlu0 %v2570
        %v2572 = vpop.xlane.xlu0 %2571
        %v2573 = vsel %vm1247, %v2567, -inf
        %2574 = vmax.xlane.f32.xlu0 %v2573
        %v2575 = vpop.xlane.xlu0 %2574
        %v2576 = vsel %vm1247, %v2568, -inf
        %2577 = vmax.xlane.f32.xlu0 %v2576
        %v2578 = vpop.xlane.xlu0 %2577
        %v2579 = vsel %vm1247, %v2569, -inf
        %2580 = vmax.xlane.f32.xlu0 %v2579
        %v2581 = vpop.xlane.xlu0 %2580
        %v2582 = vsub.f32 %v2566, %v2572
        %v2583 = vsub.f32 %v2567, %v2575
        %v2584 = vsub.f32 %v2568, %v2578
        %v2585 = vsub.f32 %v2569, %v2581
        %v2586 = vmul.f32 %v2582, 1.442695
        %v2587 = vpow.pop %v2586
        %v2588 = vmul.f32 %v2583, 1.442695
        %v2589 = vpow.pop %v2588
        %v2590 = vmul.f32 %v2584, 1.442695
        %v2591 = vpow.pop %v2590
        %v2592 = vmul.f32 %v2585, 1.442695
        %v2593 = vpow.pop %v2592
        %v2594 = vsel %vm1247, %v2587, 0.0
        %2595 = vadd.xlane.f32.xlu0 %v2594
        %v2596 = vpop.xlane.xlu0 %2595
        %v2597 = vsel %vm1247, %v2589, 0.0
        %2598 = vadd.xlane.f32.xlu0 %v2597
        %v2599 = vpop.xlane.xlu0 %2598
        %v2600 = vsel %vm1247, %v2591, 0.0
        %2601 = vadd.xlane.f32.xlu0 %v2600
        %v2602 = vpop.xlane.xlu0 %2601
        %v2603 = vsel %vm1247, %v2593, 0.0
        %2604 = vadd.xlane.f32.xlu0 %v2603
        %v2605 = vpop.xlane.xlu0 %2604
        %v2606 = vrcp.pop %v2596
        %v2607 = vrcp.pop %v2599
        %v2608 = vrcp.pop %v2602
        %v2609 = vrcp.pop %v2605
        %v2610 = vmul.f32 %v2587, %v2606
        %v2611 = vmul.f32 %v2589, %v2607
        %v2612 = vmul.f32 %v2591, %v2608
        %v2613 = vmul.f32 %v2593, %v2609
        %2614 = vxpose.xlu0.b32.start [1/16] %v914, 128
        %2615 = vxpose.xlu0.b32.cont [2/16] %v915, 128
        %2616 = vxpose.xlu0.b32.cont [3/16] 0.0, 128
        %2617 = vxpose.xlu0.b32.cont [4/16] 0.0, 128
        %2618 = vxpose.xlu0.b32.cont [5/16] 0.0, 128
        %2619 = vxpose.xlu0.b32.cont [6/16] 0.0, 128
        %2620 = vxpose.xlu0.b32.cont [7/16] 0.0, 128
        %2621 = vxpose.xlu0.b32.cont [8/16] 0.0, 128
        %2622 = vxpose.xlu0.b32.cont [9/16] 0.0, 128
        %2623 = vxpose.xlu0.b32.cont [10/16] 0.0, 128
        %2624 = vxpose.xlu0.b32.cont [11/16] 0.0, 128
        %2625 = vxpose.xlu0.b32.cont [12/16] 0.0, 128
        %2626 = vxpose.xlu0.b32.cont [13/16] 0.0, 128
        %2627 = vxpose.xlu0.b32.cont [14/16] 0.0, 128
        %2628 = vxpose.xlu0.b32.cont [15/16] 0.0, 128
        %2629 = vxpose.xlu0.b32.end [16/16] 0.0, 128
        %v2630 = vpop.trf.xlu0
        %v2631 = vpop.trf.xlu0
        %v2632 = vpop.trf.xlu0
        %v2633 = vpop.trf.xlu0
        %v2634 = vpop.trf.xlu0
        %v2635 = vpop.trf.xlu0
        %v2636 = vpop.trf.xlu0
        %v2637 = vpop.trf.xlu0
        %v2638 = vpop.trf.xlu0
        %v2639 = vpop.trf.xlu0
        %v2640 = vpop.trf.xlu0
        %v2641 = vpop.trf.xlu0
        %v2642 = vpop.trf.xlu0
        %v2643 = vpop.trf.xlu0
        %v2644 = vpop.trf.xlu0
        %v2645 = vpop.trf.xlu0
        %v2647 = vsel %vm1247, %v2630, 0
        %v2650 = vsel %vm1247, %v2610, 0
        %2652 = vmatprep.subr.mxu0 0.0
        %2653 = vmatpush1.xpose.msra.mxu0 %v2650
        %2654 = vmatprep.subr.mxu0 0.0
        %2655 = vmatpush1.xpose.msra.mxu0 0.0
        %2656 = vmatprep.subr.mxu0 0.0
        %2657 = vmatpush1.xpose.msra.mxu0 0.0
        %2658 = vmatprep.subr.mxu0 0.0
        %2659 = vmatpush1.xpose.msra.mxu0 0.0
        %2660 = vmatprep.subr.mxu0 0.0
        %2661 = vmatpush1.xpose.msra.mxu0 0.0
        %2662 = vmatprep.subr.mxu0 0.0
        %2663 = vmatpush1.xpose.msra.mxu0 0.0
        %2664 = vmatprep.subr.mxu0 0.0
        %2665 = vmatpush1.xpose.msra.mxu0 0.0
        %2666 = vmatprep.subr.mxu0 0.0
        %2667 = vmatpush1.xpose.msra.mxu0 0.0
        %2668 = vmatprep.subr.mxu0 0.0
        %2669 = vmatpush1.xpose.msra.mxu0 0.0
        %2670 = vmatprep.subr.mxu0 0.0
        %2671 = vmatpush1.xpose.msra.mxu0 0.0
        %2672 = vmatprep.subr.mxu0 0.0
        %2673 = vmatpush1.xpose.msra.mxu0 0.0
        %2674 = vmatprep.subr.mxu0 0.0
        %2675 = vmatpush1.xpose.msra.mxu0 0.0
        %2676 = vmatprep.subr.mxu0 0.0
        %2677 = vmatpush1.xpose.msra.mxu0 0.0
        %2678 = vmatprep.subr.mxu0 0.0
        %2679 = vmatpush1.xpose.msra.mxu0 0.0
        %2680 = vmatprep.subr.mxu0 0.0
        %2681 = vmatpush1.xpose.msra.mxu0 0.0
        %2682 = vmatprep.subr.mxu0 0.0
        %2683 = vmatpush1.xpose.msra.mxu0 0.0
        %2684 = vmatprep.subr.mxu0 0.0
        %2685 = vmatpush1.xpose.msra.mxu0 0.0
        %2686 = vmatprep.subr.mxu0 0.0
        %2687 = vmatpush1.xpose.msra.mxu0 0.0
        %2688 = vmatprep.subr.mxu0 0.0
        %2689 = vmatpush1.xpose.msra.mxu0 0.0
        %2690 = vmatprep.subr.mxu0 0.0
        %2691 = vmatpush1.xpose.msra.mxu0 0.0
        %2692 = vmatprep.subr.mxu0 0.0
        %2693 = vmatpush1.xpose.msra.mxu0 0.0
        %2694 = vmatprep.subr.mxu0 0.0
        %2695 = vmatpush1.xpose.msra.mxu0 0.0
        %2696 = vmatprep.subr.mxu0 0.0
        %2697 = vmatpush1.xpose.msra.mxu0 0.0
        %2698 = vmatprep.subr.mxu0 0.0
        %2699 = vmatpush1.xpose.msra.mxu0 0.0
        %2700 = vmatprep.subr.mxu0 0.0
        %2701 = vmatpush1.xpose.msra.mxu0 0.0
        %2702 = vmatprep.subr.mxu0 0.0
        %2703 = vmatpush1.xpose.msra.mxu0 0.0
        %2704 = vmatprep.subr.mxu0 0.0
        %2705 = vmatpush1.xpose.msra.mxu0 0.0
        %2706 = vmatprep.subr.mxu0 0.0
        %2707 = vmatpush1.xpose.msra.mxu0 0.0
        %2708 = vmatprep.subr.mxu0 0.0
        %2709 = vmatpush1.xpose.msra.mxu0 0.0
        %2710 = vmatprep.subr.mxu0 0.0
        %2711 = vmatpush1.xpose.msra.mxu0 0.0
        %2712 = vmatprep.subr.mxu0 0.0
        %2713 = vmatpush1.xpose.msra.mxu0 0.0
        %2714 = vmatprep.subr.mxu0 0.0
        %2715 = vmatpush1.xpose.msra.mxu0 0.0
        %2716 = vmatprep.mubr.f32.mxu0 0.0
        %2717 = vmatmul.mubr.f32.gmra.mrb[0].mxu0 %v2647
        %v2718 = vpop.f32.mrb[0].mxu0
        %v2719 = vadd.f32 0.0, %v2718
        %v2720 = vpop.f32.mrb[0].mxu0
        %2721 = vdwg.mxu0
        %2722 = vxpose.xlu0.b32.start [1/16] %v916, 128
        %2723 = vxpose.xlu0.b32.cont [2/16] %v917, 128
        %2724 = vxpose.xlu0.b32.cont [3/16] 0.0, 128
        %2725 = vxpose.xlu0.b32.cont [4/16] 0.0, 128
        %2726 = vxpose.xlu0.b32.cont [5/16] 0.0, 128
        %2727 = vxpose.xlu0.b32.cont [6/16] 0.0, 128
        %2728 = vxpose.xlu0.b32.cont [7/16] 0.0, 128
        %2729 = vxpose.xlu0.b32.cont [8/16] 0.0, 128
        %2730 = vxpose.xlu0.b32.cont [9/16] 0.0, 128
        %2731 = vxpose.xlu0.b32.cont [10/16] 0.0, 128
        %2732 = vxpose.xlu0.b32.cont [11/16] 0.0, 128
        %2733 = vxpose.xlu0.b32.cont [12/16] 0.0, 128
        %2734 = vxpose.xlu0.b32.cont [13/16] 0.0, 128
        %2735 = vxpose.xlu0.b32.cont [14/16] 0.0, 128
        %2736 = vxpose.xlu0.b32.cont [15/16] 0.0, 128
        %2737 = vxpose.xlu0.b32.end [16/16] 0.0, 128
        %v2738 = vpop.trf.xlu0
        %v2739 = vpop.trf.xlu0
        %v2740 = vpop.trf.xlu0
        %v2741 = vpop.trf.xlu0
        %v2742 = vpop.trf.xlu0
        %v2743 = vpop.trf.xlu0
        %v2744 = vpop.trf.xlu0
        %v2745 = vpop.trf.xlu0
        %v2746 = vpop.trf.xlu0
        %v2747 = vpop.trf.xlu0
        %v2748 = vpop.trf.xlu0
        %v2749 = vpop.trf.xlu0
        %v2750 = vpop.trf.xlu0
        %v2751 = vpop.trf.xlu0
        %v2752 = vpop.trf.xlu0
        %v2753 = vpop.trf.xlu0
        %v2755 = vsel %vm1247, %v2738, 0
        %v2758 = vsel %vm1247, %v2611, 0
        %2760 = vmatprep.subr.mxu0 0.0
        %2761 = vmatpush1.xpose.msra.mxu0 %v2758
        %2762 = vmatprep.subr.mxu0 0.0
        %2763 = vmatpush1.xpose.msra.mxu0 0.0
        %2764 = vmatprep.subr.mxu0 0.0
        %2765 = vmatpush1.xpose.msra.mxu0 0.0
        %2766 = vmatprep.subr.mxu0 0.0
        %2767 = vmatpush1.xpose.msra.mxu0 0.0
        %2768 = vmatprep.subr.mxu0 0.0
        %2769 = vmatpush1.xpose.msra.mxu0 0.0
        %2770 = vmatprep.subr.mxu0 0.0
        %2771 = vmatpush1.xpose.msra.mxu0 0.0
        %2772 = vmatprep.subr.mxu0 0.0
        %2773 = vmatpush1.xpose.msra.mxu0 0.0
        %2774 = vmatprep.subr.mxu0 0.0
        %2775 = vmatpush1.xpose.msra.mxu0 0.0
        %2776 = vmatprep.subr.mxu0 0.0
        %2777 = vmatpush1.xpose.msra.mxu0 0.0
        %2778 = vmatprep.subr.mxu0 0.0
        %2779 = vmatpush1.xpose.msra.mxu0 0.0
        %2780 = vmatprep.subr.mxu0 0.0
        %2781 = vmatpush1.xpose.msra.mxu0 0.0
        %2782 = vmatprep.subr.mxu0 0.0
        %2783 = vmatpush1.xpose.msra.mxu0 0.0
        %2784 = vmatprep.subr.mxu0 0.0
        %2785 = vmatpush1.xpose.msra.mxu0 0.0
        %2786 = vmatprep.subr.mxu0 0.0
        %2787 = vmatpush1.xpose.msra.mxu0 0.0
        %2788 = vmatprep.subr.mxu0 0.0
        %2789 = vmatpush1.xpose.msra.mxu0 0.0
        %2790 = vmatprep.subr.mxu0 0.0
        %2791 = vmatpush1.xpose.msra.mxu0 0.0
        %2792 = vmatprep.subr.mxu0 0.0
        %2793 = vmatpush1.xpose.msra.mxu0 0.0
        %2794 = vmatprep.subr.mxu0 0.0
        %2795 = vmatpush1.xpose.msra.mxu0 0.0
        %2796 = vmatprep.subr.mxu0 0.0
        %2797 = vmatpush1.xpose.msra.mxu0 0.0
        %2798 = vmatprep.subr.mxu0 0.0
        %2799 = vmatpush1.xpose.msra.mxu0 0.0
        %2800 = vmatprep.subr.mxu0 0.0
        %2801 = vmatpush1.xpose.msra.mxu0 0.0
        %2802 = vmatprep.subr.mxu0 0.0
        %2803 = vmatpush1.xpose.msra.mxu0 0.0
        %2804 = vmatprep.subr.mxu0 0.0
        %2805 = vmatpush1.xpose.msra.mxu0 0.0
        %2806 = vmatprep.subr.mxu0 0.0
        %2807 = vmatpush1.xpose.msra.mxu0 0.0
        %2808 = vmatprep.subr.mxu0 0.0
        %2809 = vmatpush1.xpose.msra.mxu0 0.0
        %2810 = vmatprep.subr.mxu0 0.0
        %2811 = vmatpush1.xpose.msra.mxu0 0.0
        %2812 = vmatprep.subr.mxu0 0.0
        %2813 = vmatpush1.xpose.msra.mxu0 0.0
        %2814 = vmatprep.subr.mxu0 0.0
        %2815 = vmatpush1.xpose.msra.mxu0 0.0
        %2816 = vmatprep.subr.mxu0 0.0
        %2817 = vmatpush1.xpose.msra.mxu0 0.0
        %2818 = vmatprep.subr.mxu0 0.0
        %2819 = vmatpush1.xpose.msra.mxu0 0.0
        %2820 = vmatprep.subr.mxu0 0.0
        %2821 = vmatpush1.xpose.msra.mxu0 0.0
        %2822 = vmatprep.subr.mxu0 0.0
        %2823 = vmatpush1.xpose.msra.mxu0 0.0
        %2824 = vmatprep.mubr.f32.mxu0 0.0
        %2825 = vmatmul.mubr.f32.gmra.mrb[0].mxu0 %v2755
        %v2826 = vpop.f32.mrb[0].mxu0
        %v2827 = vadd.f32 0.0, %v2826
        %v2828 = vpop.f32.mrb[0].mxu0
        %2829 = vdwg.mxu0
        %2830 = vxpose.xlu0.b32.start [1/16] %v918, 128
        %2831 = vxpose.xlu0.b32.cont [2/16] %v919, 128
        %2832 = vxpose.xlu0.b32.cont [3/16] 0.0, 128
        %2833 = vxpose.xlu0.b32.cont [4/16] 0.0, 128
        %2834 = vxpose.xlu0.b32.cont [5/16] 0.0, 128
        %2835 = vxpose.xlu0.b32.cont [6/16] 0.0, 128
        %2836 = vxpose.xlu0.b32.cont [7/16] 0.0, 128
        %2837 = vxpose.xlu0.b32.cont [8/16] 0.0, 128
        %2838 = vxpose.xlu0.b32.cont [9/16] 0.0, 128
        %2839 = vxpose.xlu0.b32.cont [10/16] 0.0, 128
        %2840 = vxpose.xlu0.b32.cont [11/16] 0.0, 128
        %2841 = vxpose.xlu0.b32.cont [12/16] 0.0, 128
        %2842 = vxpose.xlu0.b32.cont [13/16] 0.0, 128
        %2843 = vxpose.xlu0.b32.cont [14/16] 0.0, 128
        %2844 = vxpose.xlu0.b32.cont [15/16] 0.0, 128
        %2845 = vxpose.xlu0.b32.end [16/16] 0.0, 128
        %v2846 = vpop.trf.xlu0
        %v2847 = vpop.trf.xlu0
        %v2848 = vpop.trf.xlu0
        %v2849 = vpop.trf.xlu0
        %v2850 = vpop.trf.xlu0
        %v2851 = vpop.trf.xlu0
        %v2852 = vpop.trf.xlu0
        %v2853 = vpop.trf.xlu0
        %v2854 = vpop.trf.xlu0
        %v2855 = vpop.trf.xlu0
        %v2856 = vpop.trf.xlu0
        %v2857 = vpop.trf.xlu0
        %v2858 = vpop.trf.xlu0
        %v2859 = vpop.trf.xlu0
        %v2860 = vpop.trf.xlu0
        %v2861 = vpop.trf.xlu0
        %v2863 = vsel %vm1247, %v2846, 0
        %v2866 = vsel %vm1247, %v2612, 0
        %2868 = vmatprep.subr.mxu0 0.0
        %2869 = vmatpush1.xpose.msra.mxu0 %v2866
        %2870 = vmatprep.subr.mxu0 0.0
        %2871 = vmatpush1.xpose.msra.mxu0 0.0
        %2872 = vmatprep.subr.mxu0 0.0
        %2873 = vmatpush1.xpose.msra.mxu0 0.0
        %2874 = vmatprep.subr.mxu0 0.0
        %2875 = vmatpush1.xpose.msra.mxu0 0.0
        %2876 = vmatprep.subr.mxu0 0.0
        %2877 = vmatpush1.xpose.msra.mxu0 0.0
        %2878 = vmatprep.subr.mxu0 0.0
        %2879 = vmatpush1.xpose.msra.mxu0 0.0
        %2880 = vmatprep.subr.mxu0 0.0
        %2881 = vmatpush1.xpose.msra.mxu0 0.0
        %2882 = vmatprep.subr.mxu0 0.0
        %2883 = vmatpush1.xpose.msra.mxu0 0.0
        %2884 = vmatprep.subr.mxu0 0.0
        %2885 = vmatpush1.xpose.msra.mxu0 0.0
        %2886 = vmatprep.subr.mxu0 0.0
        %2887 = vmatpush1.xpose.msra.mxu0 0.0
        %2888 = vmatprep.subr.mxu0 0.0
        %2889 = vmatpush1.xpose.msra.mxu0 0.0
        %2890 = vmatprep.subr.mxu0 0.0
        %2891 = vmatpush1.xpose.msra.mxu0 0.0
        %2892 = vmatprep.subr.mxu0 0.0
        %2893 = vmatpush1.xpose.msra.mxu0 0.0
        %2894 = vmatprep.subr.mxu0 0.0
        %2895 = vmatpush1.xpose.msra.mxu0 0.0
        %2896 = vmatprep.subr.mxu0 0.0
        %2897 = vmatpush1.xpose.msra.mxu0 0.0
        %2898 = vmatprep.subr.mxu0 0.0
        %2899 = vmatpush1.xpose.msra.mxu0 0.0
        %2900 = vmatprep.subr.mxu0 0.0
        %2901 = vmatpush1.xpose.msra.mxu0 0.0
        %2902 = vmatprep.subr.mxu0 0.0
        %2903 = vmatpush1.xpose.msra.mxu0 0.0
        %2904 = vmatprep.subr.mxu0 0.0
        %2905 = vmatpush1.xpose.msra.mxu0 0.0
        %2906 = vmatprep.subr.mxu0 0.0
        %2907 = vmatpush1.xpose.msra.mxu0 0.0
        %2908 = vmatprep.subr.mxu0 0.0
        %2909 = vmatpush1.xpose.msra.mxu0 0.0
        %2910 = vmatprep.subr.mxu0 0.0
        %2911 = vmatpush1.xpose.msra.mxu0 0.0
        %2912 = vmatprep.subr.mxu0 0.0
        %2913 = vmatpush1.xpose.msra.mxu0 0.0
        %2914 = vmatprep.subr.mxu0 0.0
        %2915 = vmatpush1.xpose.msra.mxu0 0.0
        %2916 = vmatprep.subr.mxu0 0.0
        %2917 = vmatpush1.xpose.msra.mxu0 0.0
        %2918 = vmatprep.subr.mxu0 0.0
        %2919 = vmatpush1.xpose.msra.mxu0 0.0
        %2920 = vmatprep.subr.mxu0 0.0
        %2921 = vmatpush1.xpose.msra.mxu0 0.0
        %2922 = vmatprep.subr.mxu0 0.0
        %2923 = vmatpush1.xpose.msra.mxu0 0.0
        %2924 = vmatprep.subr.mxu0 0.0
        %2925 = vmatpush1.xpose.msra.mxu0 0.0
        %2926 = vmatprep.subr.mxu0 0.0
        %2927 = vmatpush1.xpose.msra.mxu0 0.0
        %2928 = vmatprep.subr.mxu0 0.0
        %2929 = vmatpush1.xpose.msra.mxu0 0.0
        %2930 = vmatprep.subr.mxu0 0.0
        %2931 = vmatpush1.xpose.msra.mxu0 0.0
        %2932 = vmatprep.mubr.f32.mxu0 0.0
        %2933 = vmatmul.mubr.f32.gmra.mrb[0].mxu0 %v2863
        %v2934 = vpop.f32.mrb[0].mxu0
        %v2935 = vadd.f32 0.0, %v2934
        %v2936 = vpop.f32.mrb[0].mxu0
        %2937 = vdwg.mxu0
        %2938 = vxpose.xlu0.b32.start [1/16] %v920, 128
        %2939 = vxpose.xlu0.b32.cont [2/16] %v921, 128
        %2940 = vxpose.xlu0.b32.cont [3/16] 0.0, 128
        %2941 = vxpose.xlu0.b32.cont [4/16] 0.0, 128
        %2942 = vxpose.xlu0.b32.cont [5/16] 0.0, 128
        %2943 = vxpose.xlu0.b32.cont [6/16] 0.0, 128
        %2944 = vxpose.xlu0.b32.cont [7/16] 0.0, 128
        %2945 = vxpose.xlu0.b32.cont [8/16] 0.0, 128
        %2946 = vxpose.xlu0.b32.cont [9/16] 0.0, 128
        %2947 = vxpose.xlu0.b32.cont [10/16] 0.0, 128
        %2948 = vxpose.xlu0.b32.cont [11/16] 0.0, 128
        %2949 = vxpose.xlu0.b32.cont [12/16] 0.0, 128
        %2950 = vxpose.xlu0.b32.cont [13/16] 0.0, 128
        %2951 = vxpose.xlu0.b32.cont [14/16] 0.0, 128
        %2952 = vxpose.xlu0.b32.cont [15/16] 0.0, 128
        %2953 = vxpose.xlu0.b32.end [16/16] 0.0, 128
        %v2954 = vpop.trf.xlu0
        %v2955 = vpop.trf.xlu0
        %v2956 = vpop.trf.xlu0
        %v2957 = vpop.trf.xlu0
        %v2958 = vpop.trf.xlu0
        %v2959 = vpop.trf.xlu0
        %v2960 = vpop.trf.xlu0
        %v2961 = vpop.trf.xlu0
        %v2962 = vpop.trf.xlu0
        %v2963 = vpop.trf.xlu0
        %v2964 = vpop.trf.xlu0
        %v2965 = vpop.trf.xlu0
        %v2966 = vpop.trf.xlu0
        %v2967 = vpop.trf.xlu0
        %v2968 = vpop.trf.xlu0
        %v2969 = vpop.trf.xlu0
        %v2971 = vsel %vm1247, %v2954, 0
        %v2974 = vsel %vm1247, %v2613, 0
        %2976 = vmatprep.subr.mxu0 0.0
        %2977 = vmatpush1.xpose.msra.mxu0 %v2974
        %2978 = vmatprep.subr.mxu0 0.0
        %2979 = vmatpush1.xpose.msra.mxu0 0.0
        %2980 = vmatprep.subr.mxu0 0.0
        %2981 = vmatpush1.xpose.msra.mxu0 0.0
        %2982 = vmatprep.subr.mxu0 0.0
        %2983 = vmatpush1.xpose.msra.mxu0 0.0
        %2984 = vmatprep.subr.mxu0 0.0
        %2985 = vmatpush1.xpose.msra.mxu0 0.0
        %2986 = vmatprep.subr.mxu0 0.0
        %2987 = vmatpush1.xpose.msra.mxu0 0.0
        %2988 = vmatprep.subr.mxu0 0.0
        %2989 = vmatpush1.xpose.msra.mxu0 0.0
        %2990 = vmatprep.subr.mxu0 0.0
        %2991 = vmatpush1.xpose.msra.mxu0 0.0
        %2992 = vmatprep.subr.mxu0 0.0
        %2993 = vmatpush1.xpose.msra.mxu0 0.0
        %2994 = vmatprep.subr.mxu0 0.0
        %2995 = vmatpush1.xpose.msra.mxu0 0.0
        %2996 = vmatprep.subr.mxu0 0.0
        %2997 = vmatpush1.xpose.msra.mxu0 0.0
        %2998 = vmatprep.subr.mxu0 0.0
        %2999 = vmatpush1.xpose.msra.mxu0 0.0
        %3000 = vmatprep.subr.mxu0 0.0
        %3001 = vmatpush1.xpose.msra.mxu0 0.0
        %3002 = vmatprep.subr.mxu0 0.0
        %3003 = vmatpush1.xpose.msra.mxu0 0.0
        %3004 = vmatprep.subr.mxu0 0.0
        %3005 = vmatpush1.xpose.msra.mxu0 0.0
        %3006 = vmatprep.subr.mxu0 0.0
        %3007 = vmatpush1.xpose.msra.mxu0 0.0
        %3008 = vmatprep.subr.mxu0 0.0
        %3009 = vmatpush1.xpose.msra.mxu0 0.0
        %3010 = vmatprep.subr.mxu0 0.0
        %3011 = vmatpush1.xpose.msra.mxu0 0.0
        %3012 = vmatprep.subr.mxu0 0.0
        %3013 = vmatpush1.xpose.msra.mxu0 0.0
        %3014 = vmatprep.subr.mxu0 0.0
        %3015 = vmatpush1.xpose.msra.mxu0 0.0
        %3016 = vmatprep.subr.mxu0 0.0
        %3017 = vmatpush1.xpose.msra.mxu0 0.0
        %3018 = vmatprep.subr.mxu0 0.0
        %3019 = vmatpush1.xpose.msra.mxu0 0.0
        %3020 = vmatprep.subr.mxu0 0.0
        %3021 = vmatpush1.xpose.msra.mxu0 0.0
        %3022 = vmatprep.subr.mxu0 0.0
        %3023 = vmatpush1.xpose.msra.mxu0 0.0
        %3024 = vmatprep.subr.mxu0 0.0
        %3025 = vmatpush1.xpose.msra.mxu0 0.0
        %3026 = vmatprep.subr.mxu0 0.0
        %3027 = vmatpush1.xpose.msra.mxu0 0.0
        %3028 = vmatprep.subr.mxu0 0.0
        %3029 = vmatpush1.xpose.msra.mxu0 0.0
        %3030 = vmatprep.subr.mxu0 0.0
        %3031 = vmatpush1.xpose.msra.mxu0 0.0
        %3032 = vmatprep.subr.mxu0 0.0
        %3033 = vmatpush1.xpose.msra.mxu0 0.0
        %3034 = vmatprep.subr.mxu0 0.0
        %3035 = vmatpush1.xpose.msra.mxu0 0.0
        %3036 = vmatprep.subr.mxu0 0.0
        %3037 = vmatpush1.xpose.msra.mxu0 0.0
        %3038 = vmatprep.subr.mxu0 0.0
        %3039 = vmatpush1.xpose.msra.mxu0 0.0
        %3040 = vmatprep.mubr.f32.mxu0 0.0
        %3041 = vmatmul.mubr.f32.gmra.mrb[0].mxu0 %v2971
        %v3042 = vpop.f32.mrb[0].mxu0
        %v3043 = vadd.f32 0.0, %v3042
        %v3044 = vpop.f32.mrb[0].mxu0
        %3045 = vdwg.mxu0
        %3046 = vxpose.xlu0.b32.start [1/16] %v2719, 128
        %3047 = vxpose.xlu0.b32.cont [2/16] 0.0, 128
        %3048 = vxpose.xlu0.b32.cont [3/16] 0.0, 128
        %3049 = vxpose.xlu0.b32.cont [4/16] 0.0, 128
        %3050 = vxpose.xlu0.b32.cont [5/16] 0.0, 128
        %3051 = vxpose.xlu0.b32.cont [6/16] 0.0, 128
        %3052 = vxpose.xlu0.b32.cont [7/16] 0.0, 128
        %3053 = vxpose.xlu0.b32.cont [8/16] 0.0, 128
        %3054 = vxpose.xlu0.b32.cont [9/16] 0.0, 128
        %3055 = vxpose.xlu0.b32.cont [10/16] 0.0, 128
        %3056 = vxpose.xlu0.b32.cont [11/16] 0.0, 128
        %3057 = vxpose.xlu0.b32.cont [12/16] 0.0, 128
        %3058 = vxpose.xlu0.b32.cont [13/16] 0.0, 128
        %3059 = vxpose.xlu0.b32.cont [14/16] 0.0, 128
        %3060 = vxpose.xlu0.b32.cont [15/16] 0.0, 128
        %3061 = vxpose.xlu0.b32.end [16/16] 0.0, 128
        %v3062 = vpop.trf.xlu0
        %v3063 = vpop.trf.xlu0
        %v3064 = vpop.trf.xlu0
        %v3065 = vpop.trf.xlu0
        %v3066 = vpop.trf.xlu0
        %v3067 = vpop.trf.xlu0
        %v3068 = vpop.trf.xlu0
        %v3069 = vpop.trf.xlu0
        %v3070 = vpop.trf.xlu0
        %v3071 = vpop.trf.xlu0
        %v3072 = vpop.trf.xlu0
        %v3073 = vpop.trf.xlu0
        %v3074 = vpop.trf.xlu0
        %v3075 = vpop.trf.xlu0
        %v3076 = vpop.trf.xlu0
        %v3077 = vpop.trf.xlu0
        %3078 = vxpose.xlu0.b32.start [1/16] %v2827, 128
        %3079 = vxpose.xlu0.b32.cont [2/16] 0.0, 128
        %3080 = vxpose.xlu0.b32.cont [3/16] 0.0, 128
        %3081 = vxpose.xlu0.b32.cont [4/16] 0.0, 128
        %3082 = vxpose.xlu0.b32.cont [5/16] 0.0, 128
        %3083 = vxpose.xlu0.b32.cont [6/16] 0.0, 128
        %3084 = vxpose.xlu0.b32.cont [7/16] 0.0, 128
        %3085 = vxpose.xlu0.b32.cont [8/16] 0.0, 128
        %3086 = vxpose.xlu0.b32.cont [9/16] 0.0, 128
        %3087 = vxpose.xlu0.b32.cont [10/16] 0.0, 128
        %3088 = vxpose.xlu0.b32.cont [11/16] 0.0, 128
        %3089 = vxpose.xlu0.b32.cont [12/16] 0.0, 128
        %3090 = vxpose.xlu0.b32.cont [13/16] 0.0, 128
        %3091 = vxpose.xlu0.b32.cont [14/16] 0.0, 128
        %3092 = vxpose.xlu0.b32.cont [15/16] 0.0, 128
        %3093 = vxpose.xlu0.b32.end [16/16] 0.0, 128
        %v3094 = vpop.trf.xlu0
        %v3095 = vpop.trf.xlu0
        %v3096 = vpop.trf.xlu0
        %v3097 = vpop.trf.xlu0
        %v3098 = vpop.trf.xlu0
        %v3099 = vpop.trf.xlu0
        %v3100 = vpop.trf.xlu0
        %v3101 = vpop.trf.xlu0
        %v3102 = vpop.trf.xlu0
        %v3103 = vpop.trf.xlu0
        %v3104 = vpop.trf.xlu0
        %v3105 = vpop.trf.xlu0
        %v3106 = vpop.trf.xlu0
        %v3107 = vpop.trf.xlu0
        %v3108 = vpop.trf.xlu0
        %v3109 = vpop.trf.xlu0
        %3110 = vxpose.xlu0.b32.start [1/16] %v2935, 128
        %3111 = vxpose.xlu0.b32.cont [2/16] 0.0, 128
        %3112 = vxpose.xlu0.b32.cont [3/16] 0.0, 128
        %3113 = vxpose.xlu0.b32.cont [4/16] 0.0, 128
        %3114 = vxpose.xlu0.b32.cont [5/16] 0.0, 128
        %3115 = vxpose.xlu0.b32.cont [6/16] 0.0, 128
        %3116 = vxpose.xlu0.b32.cont [7/16] 0.0, 128
        %3117 = vxpose.xlu0.b32.cont [8/16] 0.0, 128
        %3118 = vxpose.xlu0.b32.cont [9/16] 0.0, 128
        %3119 = vxpose.xlu0.b32.cont [10/16] 0.0, 128
        %3120 = vxpose.xlu0.b32.cont [11/16] 0.0, 128
        %3121 = vxpose.xlu0.b32.cont [12/16] 0.0, 128
        %3122 = vxpose.xlu0.b32.cont [13/16] 0.0, 128
        %3123 = vxpose.xlu0.b32.cont [14/16] 0.0, 128
        %3124 = vxpose.xlu0.b32.cont [15/16] 0.0, 128
        %3125 = vxpose.xlu0.b32.end [16/16] 0.0, 128
        %v3126 = vpop.trf.xlu0
        %v3127 = vpop.trf.xlu0
        %v3128 = vpop.trf.xlu0
        %v3129 = vpop.trf.xlu0
        %v3130 = vpop.trf.xlu0
        %v3131 = vpop.trf.xlu0
        %v3132 = vpop.trf.xlu0
        %v3133 = vpop.trf.xlu0
        %v3134 = vpop.trf.xlu0
        %v3135 = vpop.trf.xlu0
        %v3136 = vpop.trf.xlu0
        %v3137 = vpop.trf.xlu0
        %v3138 = vpop.trf.xlu0
        %v3139 = vpop.trf.xlu0
        %v3140 = vpop.trf.xlu0
        %v3141 = vpop.trf.xlu0
        %3142 = vxpose.xlu0.b32.start [1/16] %v3043, 128
        %3143 = vxpose.xlu0.b32.cont [2/16] 0.0, 128
        %3144 = vxpose.xlu0.b32.cont [3/16] 0.0, 128
        %3145 = vxpose.xlu0.b32.cont [4/16] 0.0, 128
        %3146 = vxpose.xlu0.b32.cont [5/16] 0.0, 128
        %3147 = vxpose.xlu0.b32.cont [6/16] 0.0, 128
        %3148 = vxpose.xlu0.b32.cont [7/16] 0.0, 128
        %3149 = vxpose.xlu0.b32.cont [8/16] 0.0, 128
        %3150 = vxpose.xlu0.b32.cont [9/16] 0.0, 128
        %3151 = vxpose.xlu0.b32.cont [10/16] 0.0, 128
        %3152 = vxpose.xlu0.b32.cont [11/16] 0.0, 128
        %3153 = vxpose.xlu0.b32.cont [12/16] 0.0, 128
        %3154 = vxpose.xlu0.b32.cont [13/16] 0.0, 128
        %3155 = vxpose.xlu0.b32.cont [14/16] 0.0, 128
        %3156 = vxpose.xlu0.b32.cont [15/16] 0.0, 128
        %3157 = vxpose.xlu0.b32.end [16/16] 0.0, 128
        %v3158 = vpop.trf.xlu0
        %v3159 = vpop.trf.xlu0
        %v3160 = vpop.trf.xlu0
        %v3161 = vpop.trf.xlu0
        %v3162 = vpop.trf.xlu0
        %v3163 = vpop.trf.xlu0
        %v3164 = vpop.trf.xlu0
        %v3165 = vpop.trf.xlu0
        %v3166 = vpop.trf.xlu0
        %v3167 = vpop.trf.xlu0
        %v3168 = vpop.trf.xlu0
        %v3169 = vpop.trf.xlu0
        %v3170 = vpop.trf.xlu0
        %v3171 = vpop.trf.xlu0
        %v3172 = vpop.trf.xlu0
        %v3173 = vpop.trf.xlu0
        %v3174 = vcombine.low %v3062, %v3126
        %v3175 = vcombine.high %v3062, %v3126
        %v3177 = vunpack.c.l.s4 1983009808
        %v3178 = vunpack.c.0.s8 %v3177
        %v3179 = vlaneseq
        %v3180 = vshrl.u32 %v3179, 7
        %v3181 = vsub.s32 %v3178, %v3180
        %v3182 = vrot.slane %v3174, %v3181
        %v3184 = vunpack.c.l.s4 1983009808
        %v3185 = vunpack.c.0.s8 %v3184
        %v3186 = vlaneseq
        %v3187 = vshrl.u32 %v3186, 7
        %v3188 = vsub.s32 %v3185, %v3187
        %v3189 = vrot.slane %v3175, %v3188
        %v3190 = vcombine.low %v3094, %v3158
        %v3191 = vcombine.high %v3094, %v3158
        %v3193 = vunpack.c.l.s4 1983009808
        %v3194 = vunpack.c.0.s8 %v3193
        %v3195 = vlaneseq
        %v3196 = vshrl.u32 %v3195, 7
        %v3197 = vsub.s32 %v3194, %v3196
        %v3198 = vrot.slane %v3190, %v3197
        %v3200 = vunpack.c.l.s4 1983009808
        %v3201 = vunpack.c.0.s8 %v3200
        %v3202 = vlaneseq
        %v3203 = vshrl.u32 %v3202, 7
        %v3204 = vsub.s32 %v3201, %v3203
        %v3205 = vrot.slane %v3191, %v3204
        %v3206 = vcombine.low %v3182, %v3198
        %v3207 = vcombine.high %v3182, %v3198
        %v3209 = vunpack.c.l.s4 1934713408
        %v3210 = vunpack.c.0.s8 %v3209
        %v3211 = vlaneseq
        %v3212 = vshrl.u32 %v3211, 7
        %v3213 = vsub.s32 %v3210, %v3212
        %v3214 = vrot.slane %v3206, %v3213
        %v3216 = vunpack.c.l.s4 1934713408
        %v3217 = vunpack.c.0.s8 %v3216
        %v3218 = vlaneseq
        %v3219 = vshrl.u32 %v3218, 7
        %v3220 = vsub.s32 %v3217, %v3219
        %v3221 = vrot.slane %v3207, %v3220
        %v3222 = vcombine.low %v3189, %v3205
        %v3223 = vcombine.high %v3189, %v3205
        %v3225 = vunpack.c.l.s4 1934713408
        %v3226 = vunpack.c.0.s8 %v3225
        %v3227 = vlaneseq
        %v3228 = vshrl.u32 %v3227, 7
        %v3229 = vsub.s32 %v3226, %v3228
        %v3230 = vrot.slane %v3222, %v3229
        %v3232 = vunpack.c.l.s4 1934713408
        %v3233 = vunpack.c.0.s8 %v3232
        %v3234 = vlaneseq
        %v3235 = vshrl.u32 %v3234, 7
        %v3236 = vsub.s32 %v3233, %v3235
        %v3237 = vrot.slane %v3223, %v3236
        %v3238 = vcombine.high %v3214, 0.0
        %v3239 = vcombine.high %v3221, 0.0
        %v3240 = vcombine.high %v3230, 0.0
        %v3241 = vcombine.high %v3237, 0.0
        %v3242 = vcombine.low %v3214, %v3221
        %v3244 = vunpack.c.l.s4 1983009808
        %v3245 = vunpack.c.0.s8 %v3244
        %v3246 = vlaneseq
        %v3247 = vshrl.u32 %v3246, 7
        %v3248 = vsub.s32 %v3245, %v3247
        %v3249 = vrot.slane %v3242, %v3248
        %v3250 = vcombine.low %v3238, %v3239
        %v3252 = vunpack.c.l.s4 1983009808
        %v3253 = vunpack.c.0.s8 %v3252
        %v3254 = vlaneseq
        %v3255 = vshrl.u32 %v3254, 7
        %v3256 = vsub.s32 %v3253, %v3255
        %v3257 = vrot.slane %v3250, %v3256
        %v3258 = vcombine.low %v3230, %v3237
        %v3260 = vunpack.c.l.s4 1983009808
        %v3261 = vunpack.c.0.s8 %v3260
        %v3262 = vlaneseq
        %v3263 = vshrl.u32 %v3262, 7
        %v3264 = vsub.s32 %v3261, %v3263
        %v3265 = vrot.slane %v3258, %v3264
        %v3266 = vcombine.low %v3240, %v3241
        %v3268 = vunpack.c.l.s4 1983009808
        %v3269 = vunpack.c.0.s8 %v3268
        %v3270 = vlaneseq
        %v3271 = vshrl.u32 %v3270, 7
        %v3272 = vsub.s32 %v3269, %v3271
        %v3273 = vrot.slane %v3266, %v3272
        %v3274 = vcombine.low %v3249, %v3257
        %v3275 = vcombine.high %v3249, %v3257
        %v3277 = vunpack.c.l.s4 1934713408
        %v3278 = vunpack.c.0.s8 %v3277
        %v3279 = vlaneseq
        %v3280 = vshrl.u32 %v3279, 7
        %v3281 = vsub.s32 %v3278, %v3280
        %v3282 = vrot.slane %v3274, %v3281
        %v3284 = vunpack.c.l.s4 1934713408
        %v3285 = vunpack.c.0.s8 %v3284
        %v3286 = vlaneseq
        %v3287 = vshrl.u32 %v3286, 7
        %v3288 = vsub.s32 %v3285, %v3287
        %v3289 = vrot.slane %v3275, %v3288
        %v3290 = vcombine.low %v3265, %v3273
        %v3291 = vcombine.high %v3265, %v3273
        %v3293 = vunpack.c.l.s4 1934713408
        %v3294 = vunpack.c.0.s8 %v3293
        %v3295 = vlaneseq
        %v3296 = vshrl.u32 %v3295, 7
        %v3297 = vsub.s32 %v3294, %v3296
        %v3298 = vrot.slane %v3290, %v3297
        %v3300 = vunpack.c.l.s4 1934713408
        %v3301 = vunpack.c.0.s8 %v3300
        %v3302 = vlaneseq
        %v3303 = vshrl.u32 %v3302, 7
        %v3304 = vsub.s32 %v3301, %v3303
        %v3305 = vrot.slane %v3291, %v3304
        %v3306 = vcombine.low %v3282, %v3298
        %v3307 = vcombine.high %v3282, %v3298
        %v3308 = vcombine.low %v3289, %v3305
        %v3309 = vcombine.high %v3289, %v3305
        %3311 = vrot.lane.b32.xlu0 %v3307, 8
        %v3312 = vpop.permute.xlu0 %3311
        %3315 = vrot.lane.b32.xlu0 %v3308, 16
        %v3316 = vpop.permute.xlu0 %3315
        %3319 = vrot.lane.b32.xlu0 %v3309, 24
        %v3320 = vpop.permute.xlu0 %3319
        %v3322 = vsel %vm1241, %v3306, %v3312
        %v3323 = vsel %vm1247, %v3322, %v3316
        %v3324 = vsel %vm1253, %v3323, %v3320
        %v3325 = vld [vmem:[%s7] sm:$0xff]
        %v3326 = vld [vmem:[%s7 + $0x8] sm:$0xff]
        %v3327 = vld [vmem:[%s7 + $0x10] sm:$0xff]
        %v3328 = vld [vmem:[%s7 + $0x18] sm:$0xff]
        %v3329 = vld [vmem:[%s8] sm:$0x1]
        %v3331 = vlaneseq
        %v3332 = vshrl.u32 %v3331, 7
        %v3333 = vsub.s32 0, %v3332
        %v3334 = vrot.slane %v3329, %v3333
        %v3337 = vsel %vm933, %v3324, 0
        %3339 = vmatprep.subr.mxu0 0.0
        %3340 = vmatpush1.msra.mxu0 %v3325
        %3341 = vmatprep.subr.mxu0 0.0
        %3342 = vmatpush1.msra.mxu0 %v3326
        %3343 = vmatprep.subr.mxu0 0.0
        %3344 = vmatpush1.msra.mxu0 %v3327
        %3345 = vmatprep.subr.mxu0 0.0
        %3346 = vmatpush1.msra.mxu0 %v3328
        %3347 = vmatprep.subr.mxu0 0.0
        %3348 = vmatpush1.msra.mxu0 0.0
        %3349 = vmatprep.subr.mxu0 0.0
        %3350 = vmatpush1.msra.mxu0 0.0
        %3351 = vmatprep.subr.mxu0 0.0
        %3352 = vmatpush1.msra.mxu0 0.0
        %3353 = vmatprep.subr.mxu0 0.0
        %3354 = vmatpush1.msra.mxu0 0.0
        %3355 = vmatprep.subr.mxu0 0.0
        %3356 = vmatpush1.msra.mxu0 0.0
        %3357 = vmatprep.subr.mxu0 0.0
        %3358 = vmatpush1.msra.mxu0 0.0
        %3359 = vmatprep.subr.mxu0 0.0
        %3360 = vmatpush1.msra.mxu0 0.0
        %3361 = vmatprep.subr.mxu0 0.0
        %3362 = vmatpush1.msra.mxu0 0.0
        %3363 = vmatprep.subr.mxu0 0.0
        %3364 = vmatpush1.msra.mxu0 0.0
        %3365 = vmatprep.subr.mxu0 0.0
        %3366 = vmatpush1.msra.mxu0 0.0
        %3367 = vmatprep.subr.mxu0 0.0
        %3368 = vmatpush1.msra.mxu0 0.0
        %3369 = vmatprep.subr.mxu0 0.0
        %3370 = vmatpush1.msra.mxu0 0.0
        %3371 = vmatprep.subr.mxu0 0.0
        %3372 = vmatpush1.msra.mxu0 0.0
        %3373 = vmatprep.subr.mxu0 0.0
        %3374 = vmatpush1.msra.mxu0 0.0
        %3375 = vmatprep.subr.mxu0 0.0
        %3376 = vmatpush1.msra.mxu0 0.0
        %3377 = vmatprep.subr.mxu0 0.0
        %3378 = vmatpush1.msra.mxu0 0.0
        %3379 = vmatprep.subr.mxu0 0.0
        %3380 = vmatpush1.msra.mxu0 0.0
        %3381 = vmatprep.subr.mxu0 0.0
        %3382 = vmatpush1.msra.mxu0 0.0
        %3383 = vmatprep.subr.mxu0 0.0
        %3384 = vmatpush1.msra.mxu0 0.0
        %3385 = vmatprep.subr.mxu0 0.0
        %3386 = vmatpush1.msra.mxu0 0.0
        %3387 = vmatprep.subr.mxu0 0.0
        %3388 = vmatpush1.msra.mxu0 0.0
        %3389 = vmatprep.subr.mxu0 0.0
        %3390 = vmatpush1.msra.mxu0 0.0
        %3391 = vmatprep.subr.mxu0 0.0
        %3392 = vmatpush1.msra.mxu0 0.0
        %3393 = vmatprep.subr.mxu0 0.0
        %3394 = vmatpush1.msra.mxu0 0.0
        %3395 = vmatprep.subr.mxu0 0.0
        %3396 = vmatpush1.msra.mxu0 0.0
        %3397 = vmatprep.subr.mxu0 0.0
        %3398 = vmatpush1.msra.mxu0 0.0
        %3399 = vmatprep.subr.mxu0 0.0
        %3400 = vmatpush1.msra.mxu0 0.0
        %3401 = vmatprep.subr.mxu0 0.0
        %3402 = vmatpush1.msra.mxu0 0.0
        %3403 = vmatprep.mubr.f32.mxu0 0.0
        %3404 = vmatmul.mubr.f32.gmra.mrb[0].mxu0 %v3337
        %v3405 = vpop.f32.mrb[0].mxu0
        %v3406 = vadd.f32 %v3334, %v3405
        %v3407 = vpop.f32.mrb[0].mxu0
        %3408 = vdwg.mxu0
        %v3409 = vadd.f32 %v908, %v3406
        %v3410 = vld [vmem:[%s10] sm:$0x1]
        %v3411 = vld [vmem:[%s11] sm:$0x1]
        %v3412 = vsel %vm933, %v3409, 0.0
        %3413 = vadd.xlane.f32.xlu0 %v3412
        %v3414 = vpop.xlane.xlu0 %3413
        %v3415 = vrcp.pop 32.0
        %v3416 = vmul.f32 %v3414, %v3415
        %v3417 = vsub.f32 %v3409, %v3416
        %v3418 = vmul.f32 %v3417, %v3417
        %v3419 = vsel %vm933, %v3418, 0.0
        %3420 = vadd.xlane.f32.xlu0 %v3419
        %v3421 = vpop.xlane.xlu0 %3420
        %v3422 = vmul.f32 %v3421, %v3415
        %v3423 = vadd.f32 %v3422, 1e-05
        %v3424 = vrsqrt.pop %v3423
        %v3425 = vmul.f32 %v3417, %v3424
        %v3427 = vlaneseq
        %v3428 = vshrl.u32 %v3427, 7
        %v3429 = vsub.s32 0, %v3428
        %v3430 = vrot.slane %v3410, %v3429
        %v3432 = vmul.f32 %v3425, %v3430
        %v3434 = vlaneseq
        %v3435 = vshrl.u32 %v3434, 7
        %v3436 = vsub.s32 0, %v3435
        %v3437 = vrot.slane %v3411, %v3436
        %v3439 = vadd.f32 %v3432, %v3437
        %v3440 = vld [vmem:[%s902] sm:$0xff]
        %v3441 = vld [vmem:[%s902 + $0x8] sm:$0xff]
        %v3442 = vld [vmem:[%s902 + $0x10] sm:$0xff]
        %v3443 = vld [vmem:[%s902 + $0x18] sm:$0xff]
        %v3444 = vld [vmem:[%s907] sm:$0xff]
        %v3445 = vld [vmem:[%s907 + $0x8] sm:$0xff]
        %v3446 = vld [vmem:[%s907 + $0x10] sm:$0xff]
        %v3447 = vld [vmem:[%s907 + $0x18] sm:$0xff]
        %v3448 = vld [vmem:[%s907 + $0x20] sm:$0xff]
        %v3449 = vld [vmem:[%s907 + $0x28] sm:$0xff]
        %v3450 = vld [vmem:[%s907 + $0x30] sm:$0xff]
        %v3451 = vld [vmem:[%s907 + $0x38] sm:$0xff]
        %v3452 = vld [vmem:[%s907 + $0x40] sm:$0xff]
        %v3453 = vld [vmem:[%s907 + $0x48] sm:$0xff]
        %v3454 = vld [vmem:[%s907 + $0x50] sm:$0xff]
        %v3455 = vld [vmem:[%s907 + $0x58] sm:$0xff]
        %v3456 = vld [vmem:[%s907 + $0x60] sm:$0xff]
        %v3457 = vld [vmem:[%s907 + $0x68] sm:$0xff]
        %v3458 = vld [vmem:[%s907 + $0x70] sm:$0xff]
        %v3459 = vld [vmem:[%s907 + $0x78] sm:$0xff]
        %v3460 = vld [vmem:[%s907 + $0x80] sm:$0xff]
        %v3461 = vld [vmem:[%s907 + $0x88] sm:$0xff]
        %v3462 = vld [vmem:[%s907 + $0x90] sm:$0xff]
        %v3463 = vld [vmem:[%s907 + $0x98] sm:$0xff]
        %v3464 = vld [vmem:[%s907 + $0xa0] sm:$0xff]
        %v3465 = vld [vmem:[%s907 + $0xa8] sm:$0xff]
        %v3466 = vld [vmem:[%s907 + $0xb0] sm:$0xff]
        %v3467 = vld [vmem:[%s907 + $0xb8] sm:$0xff]
        %v3468 = vld [vmem:[%s907 + $0xc0] sm:$0xff]
        %v3469 = vld [vmem:[%s907 + $0xc8] sm:$0xff]
        %v3470 = vld [vmem:[%s907 + $0xd0] sm:$0xff]
        %v3471 = vld [vmem:[%s907 + $0xd8] sm:$0xff]
        %v3472 = vld [vmem:[%s907 + $0xe0] sm:$0xff]
        %v3473 = vld [vmem:[%s907 + $0xe8] sm:$0xff]
        %v3474 = vld [vmem:[%s907 + $0xf0] sm:$0xff]
        %v3475 = vld [vmem:[%s907 + $0xf8] sm:$0xff]
        %v3476 = vld [vmem:[%s907 + $0x100] sm:$0xff]
        %v3477 = vld [vmem:[%s907 + $0x108] sm:$0xff]
        %v3478 = vld [vmem:[%s907 + $0x110] sm:$0xff]
        %v3479 = vld [vmem:[%s907 + $0x118] sm:$0xff]
        %v3480 = vld [vmem:[%s907 + $0x120] sm:$0xff]
        %v3481 = vld [vmem:[%s907 + $0x128] sm:$0xff]
        %v3482 = vld [vmem:[%s907 + $0x130] sm:$0xff]
        %v3483 = vld [vmem:[%s907 + $0x138] sm:$0xff]
        %v3484 = vld [vmem:[%s907 + $0x140] sm:$0xff]
        %v3485 = vld [vmem:[%s907 + $0x148] sm:$0xff]
        %v3486 = vld [vmem:[%s907 + $0x150] sm:$0xff]
        %v3487 = vld [vmem:[%s907 + $0x158] sm:$0xff]
        %v3488 = vld [vmem:[%s907 + $0x160] sm:$0xff]
        %v3489 = vld [vmem:[%s907 + $0x168] sm:$0xff]
        %v3490 = vld [vmem:[%s907 + $0x170] sm:$0xff]
        %v3491 = vld [vmem:[%s907 + $0x178] sm:$0xff]
        %v3492 = vld [vmem:[%s907 + $0x180] sm:$0xff]
        %v3493 = vld [vmem:[%s907 + $0x188] sm:$0xff]
        %v3494 = vld [vmem:[%s907 + $0x190] sm:$0xff]
        %v3495 = vld [vmem:[%s907 + $0x198] sm:$0xff]
        %v3496 = vld [vmem:[%s907 + $0x1a0] sm:$0xff]
        %v3497 = vld [vmem:[%s907 + $0x1a8] sm:$0xff]
        %v3498 = vld [vmem:[%s907 + $0x1b0] sm:$0xff]
        %v3499 = vld [vmem:[%s907 + $0x1b8] sm:$0xff]
        %v3500 = vld [vmem:[%s907 + $0x1c0] sm:$0xff]
        %v3501 = vld [vmem:[%s907 + $0x1c8] sm:$0xff]
        %v3502 = vld [vmem:[%s907 + $0x1d0] sm:$0xff]
        %v3503 = vld [vmem:[%s907 + $0x1d8] sm:$0xff]
        %v3504 = vld [vmem:[%s907 + $0x1e0] sm:$0xff]
        %v3505 = vld [vmem:[%s907 + $0x1e8] sm:$0xff]
        %v3506 = vld [vmem:[%s907 + $0x1f0] sm:$0xff]
        %v3507 = vld [vmem:[%s907 + $0x1f8] sm:$0xff]
        %v3508 = vld [vmem:[%s12] sm:$0xff]
        %v3509 = vld [vmem:[%s12 + $0x8] sm:$0xff]
        %v3510 = vld [vmem:[%s12 + $0x10] sm:$0xff]
        %v3511 = vld [vmem:[%s12 + $0x18] sm:$0xff]
        %v3512 = vld [vmem:[%s13] sm:$0x1]
        %v3514 = vlaneseq
        %v3515 = vshrl.u32 %v3514, 7
        %v3516 = vsub.s32 0, %v3515
        %v3517 = vrot.slane %v3512, %v3516
        %v3520 = vsel %vm933, %v3439, 0
        %3522 = vmatprep.subr.mxu0 0.0
        %3523 = vmatpush1.msra.mxu0 %v3508
        %3524 = vmatprep.subr.mxu0 0.0
        %3525 = vmatpush1.msra.mxu0 %v3509
        %3526 = vmatprep.subr.mxu0 0.0
        %3527 = vmatpush1.msra.mxu0 %v3510
        %3528 = vmatprep.subr.mxu0 0.0
        %3529 = vmatpush1.msra.mxu0 %v3511
        %3530 = vmatprep.subr.mxu0 0.0
        %3531 = vmatpush1.msra.mxu0 0.0
        %3532 = vmatprep.subr.mxu0 0.0
        %3533 = vmatpush1.msra.mxu0 0.0
        %3534 = vmatprep.subr.mxu0 0.0
        %3535 = vmatpush1.msra.mxu0 0.0
        %3536 = vmatprep.subr.mxu0 0.0
        %3537 = vmatpush1.msra.mxu0 0.0
        %3538 = vmatprep.subr.mxu0 0.0
        %3539 = vmatpush1.msra.mxu0 0.0
        %3540 = vmatprep.subr.mxu0 0.0
        %3541 = vmatpush1.msra.mxu0 0.0
        %3542 = vmatprep.subr.mxu0 0.0
        %3543 = vmatpush1.msra.mxu0 0.0
        %3544 = vmatprep.subr.mxu0 0.0
        %3545 = vmatpush1.msra.mxu0 0.0
        %3546 = vmatprep.subr.mxu0 0.0
        %3547 = vmatpush1.msra.mxu0 0.0
        %3548 = vmatprep.subr.mxu0 0.0
        %3549 = vmatpush1.msra.mxu0 0.0
        %3550 = vmatprep.subr.mxu0 0.0
        %3551 = vmatpush1.msra.mxu0 0.0
        %3552 = vmatprep.subr.mxu0 0.0
        %3553 = vmatpush1.msra.mxu0 0.0
        %3554 = vmatprep.subr.mxu0 0.0
        %3555 = vmatpush1.msra.mxu0 0.0
        %3556 = vmatprep.subr.mxu0 0.0
        %3557 = vmatpush1.msra.mxu0 0.0
        %3558 = vmatprep.subr.mxu0 0.0
        %3559 = vmatpush1.msra.mxu0 0.0
        %3560 = vmatprep.subr.mxu0 0.0
        %3561 = vmatpush1.msra.mxu0 0.0
        %3562 = vmatprep.subr.mxu0 0.0
        %3563 = vmatpush1.msra.mxu0 0.0
        %3564 = vmatprep.subr.mxu0 0.0
        %3565 = vmatpush1.msra.mxu0 0.0
        %3566 = vmatprep.subr.mxu0 0.0
        %3567 = vmatpush1.msra.mxu0 0.0
        %3568 = vmatprep.subr.mxu0 0.0
        %3569 = vmatpush1.msra.mxu0 0.0
        %3570 = vmatprep.subr.mxu0 0.0
        %3571 = vmatpush1.msra.mxu0 0.0
        %3572 = vmatprep.subr.mxu0 0.0
        %3573 = vmatpush1.msra.mxu0 0.0
        %3574 = vmatprep.subr.mxu0 0.0
        %3575 = vmatpush1.msra.mxu0 0.0
        %3576 = vmatprep.subr.mxu0 0.0
        %3577 = vmatpush1.msra.mxu0 0.0
        %3578 = vmatprep.subr.mxu0 0.0
        %3579 = vmatpush1.msra.mxu0 0.0
        %3580 = vmatprep.subr.mxu0 0.0
        %3581 = vmatpush1.msra.mxu0 0.0
        %3582 = vmatprep.subr.mxu0 0.0
        %3583 = vmatpush1.msra.mxu0 0.0
        %3584 = vmatprep.subr.mxu0 0.0
        %3585 = vmatpush1.msra.mxu0 0.0
        %3586 = vmatprep.mubr.f32.mxu0 0.0
        %3587 = vmatmul.mubr.f32.gmra.mrb[0].mxu0 %v3520
        %v3588 = vpop.f32.mrb[0].mxu0
        %v3589 = vadd.f32 %v3517, %v3588
        %v3590 = vpop.f32.mrb[0].mxu0
        %3591 = vdwg.mxu0
        %v3592 = vmul.f32 %v3589, 0.35355338
        %3594 = vrot.lane.b32.xlu0 %v3592, 120
        %v3595 = vpop.permute.xlu0 %3594
        %3597 = vrot.lane.b32.xlu0 %v3592, 112
        %v3598 = vpop.permute.xlu0 %3597
        %3600 = vrot.lane.b32.xlu0 %v3592, 104
        %v3601 = vpop.permute.xlu0 %3600
        %v3603 = vcombine.low %v3592, %v3598
        %v3604 = vcombine.high %v3592, %v3598
        %v3606 = vunpack.c.l.s4 1983009808
        %v3607 = vunpack.c.0.s8 %v3606
        %v3608 = vlaneseq
        %v3609 = vshrl.u32 %v3608, 7
        %v3610 = vsub.s32 %v3607, %v3609
        %v3611 = vrot.slane %v3603, %v3610
        %v3613 = vunpack.c.l.s4 1983009808
        %v3614 = vunpack.c.0.s8 %v3613
        %v3615 = vlaneseq
        %v3616 = vshrl.u32 %v3615, 7
        %v3617 = vsub.s32 %v3614, %v3616
        %v3618 = vrot.slane %v3604, %v3617
        %v3619 = vcombine.low %v3595, %v3601
        %v3620 = vcombine.high %v3595, %v3601
        %v3622 = vunpack.c.l.s4 1983009808
        %v3623 = vunpack.c.0.s8 %v3622
        %v3624 = vlaneseq
        %v3625 = vshrl.u32 %v3624, 7
        %v3626 = vsub.s32 %v3623, %v3625
        %v3627 = vrot.slane %v3619, %v3626
        %v3629 = vunpack.c.l.s4 1983009808
        %v3630 = vunpack.c.0.s8 %v3629
        %v3631 = vlaneseq
        %v3632 = vshrl.u32 %v3631, 7
        %v3633 = vsub.s32 %v3630, %v3632
        %v3634 = vrot.slane %v3620, %v3633
        %v3635 = vcombine.low %v3611, %v3627
        %v3636 = vcombine.high %v3611, %v3627
        %v3638 = vunpack.c.l.s4 1934713408
        %v3639 = vunpack.c.0.s8 %v3638
        %v3640 = vlaneseq
        %v3641 = vshrl.u32 %v3640, 7
        %v3642 = vsub.s32 %v3639, %v3641
        %v3643 = vrot.slane %v3635, %v3642
        %v3645 = vunpack.c.l.s4 1934713408
        %v3646 = vunpack.c.0.s8 %v3645
        %v3647 = vlaneseq
        %v3648 = vshrl.u32 %v3647, 7
        %v3649 = vsub.s32 %v3646, %v3648
        %v3650 = vrot.slane %v3636, %v3649
        %v3651 = vcombine.low %v3618, %v3634
        %v3652 = vcombine.high %v3618, %v3634
        %v3654 = vunpack.c.l.s4 1934713408
        %v3655 = vunpack.c.0.s8 %v3654
        %v3656 = vlaneseq
        %v3657 = vshrl.u32 %v3656, 7
        %v3658 = vsub.s32 %v3655, %v3657
        %v3659 = vrot.slane %v3651, %v3658
        %v3661 = vunpack.c.l.s4 1934713408
        %v3662 = vunpack.c.0.s8 %v3661
        %v3663 = vlaneseq
        %v3664 = vshrl.u32 %v3663, 7
        %v3665 = vsub.s32 %v3662, %v3664
        %v3666 = vrot.slane %v3652, %v3665
        %v3667 = vcombine.high %v3643, 0.0
        %v3668 = vcombine.high %v3650, 0.0
        %v3669 = vcombine.high %v3659, 0.0
        %v3670 = vcombine.high %v3666, 0.0
        %v3671 = vld [vmem:[%s16] sm:$0xff]
        %3672 = vxpose.xlu0.b32.start [1/16] %v3671, 128
        %3673 = vxpose.xlu0.b32.cont [2/16] 0.0, 128
        %3674 = vxpose.xlu0.b32.cont [3/16] 0.0, 128
        %3675 = vxpose.xlu0.b32.cont [4/16] 0.0, 128
        %3676 = vxpose.xlu0.b32.cont [5/16] 0.0, 128
        %3677 = vxpose.xlu0.b32.cont [6/16] 0.0, 128
        %3678 = vxpose.xlu0.b32.cont [7/16] 0.0, 128
        %3679 = vxpose.xlu0.b32.cont [8/16] 0.0, 128
        %3680 = vxpose.xlu0.b32.cont [9/16] 0.0, 128
        %3681 = vxpose.xlu0.b32.cont [10/16] 0.0, 128
        %3682 = vxpose.xlu0.b32.cont [11/16] 0.0, 128
        %3683 = vxpose.xlu0.b32.cont [12/16] 0.0, 128
        %3684 = vxpose.xlu0.b32.cont [13/16] 0.0, 128
        %3685 = vxpose.xlu0.b32.cont [14/16] 0.0, 128
        %3686 = vxpose.xlu0.b32.cont [15/16] 0.0, 128
        %3687 = vxpose.xlu0.b32.end [16/16] 0.0, 128
        %v3688 = vpop.trf.xlu0
        %v3689 = vpop.trf.xlu0
        %v3690 = vpop.trf.xlu0
        %v3691 = vpop.trf.xlu0
        %v3692 = vpop.trf.xlu0
        %v3693 = vpop.trf.xlu0
        %v3694 = vpop.trf.xlu0
        %v3695 = vpop.trf.xlu0
        %v3696 = vpop.trf.xlu0
        %v3697 = vpop.trf.xlu0
        %v3698 = vpop.trf.xlu0
        %v3699 = vpop.trf.xlu0
        %v3700 = vpop.trf.xlu0
        %v3701 = vpop.trf.xlu0
        %v3702 = vpop.trf.xlu0
        %v3703 = vpop.trf.xlu0
        %v3712 = vcombine.low %v3643, %v3667
        %v3713 = vcombine.low %v3650, %v3668
        %v3714 = vcombine.low %v3659, %v3669
        %v3715 = vcombine.low %v3666, %v3670
        %v3717 = vsel %vm1241, %v3688, 0
        %v3720 = vsel %vm1241, %v3689, 0
        %v3722 = vsel %vm1241, %v3712, 0
        %v3724 = vsel %vm1241, %v3713, 0
        %v3726 = vsel %vm1241, %v3714, 0
        %v3728 = vsel %vm1241, %v3715, 0
        %3730 = vmatprep.subr.mxu0 0.0
        %3731 = vmatpush1.xpose.msra.mxu0 %v3722
        %3732 = vmatprep.subr.mxu0 0.0
        %3733 = vmatpush1.xpose.msra.mxu0 %v3724
        %3734 = vmatprep.subr.mxu0 0.0
        %3735 = vmatpush1.xpose.msra.mxu0 %v3726
        %3736 = vmatprep.subr.mxu0 0.0
        %3737 = vmatpush1.xpose.msra.mxu0 %v3728
        %3738 = vmatprep.subr.mxu0 0.0
        %3739 = vmatpush1.xpose.msra.mxu0 0.0
        %3740 = vmatprep.subr.mxu0 0.0
        %3741 = vmatpush1.xpose.msra.mxu0 0.0
        %3742 = vmatprep.subr.mxu0 0.0
        %3743 = vmatpush1.xpose.msra.mxu0 0.0
        %3744 = vmatprep.subr.mxu0 0.0
        %3745 = vmatpush1.xpose.msra.mxu0 0.0
        %3746 = vmatprep.subr.mxu0 0.0
        %3747 = vmatpush1.xpose.msra.mxu0 0.0
        %3748 = vmatprep.subr.mxu0 0.0
        %3749 = vmatpush1.xpose.msra.mxu0 0.0
        %3750 = vmatprep.subr.mxu0 0.0
        %3751 = vmatpush1.xpose.msra.mxu0 0.0
        %3752 = vmatprep.subr.mxu0 0.0
        %3753 = vmatpush1.xpose.msra.mxu0 0.0
        %3754 = vmatprep.subr.mxu0 0.0
        %3755 = vmatpush1.xpose.msra.mxu0 0.0
        %3756 = vmatprep.subr.mxu0 0.0
        %3757 = vmatpush1.xpose.msra.mxu0 0.0
        %3758 = vmatprep.subr.mxu0 0.0
        %3759 = vmatpush1.xpose.msra.mxu0 0.0
        %3760 = vmatprep.subr.mxu0 0.0
        %3761 = vmatpush1.xpose.msra.mxu0 0.0
        %3762 = vmatprep.subr.mxu0 0.0
        %3763 = vmatpush1.xpose.msra.mxu0 0.0
        %3764 = vmatprep.subr.mxu0 0.0
        %3765 = vmatpush1.xpose.msra.mxu0 0.0
        %3766 = vmatprep.subr.mxu0 0.0
        %3767 = vmatpush1.xpose.msra.mxu0 0.0
        %3768 = vmatprep.subr.mxu0 0.0
        %3769 = vmatpush1.xpose.msra.mxu0 0.0
        %3770 = vmatprep.subr.mxu0 0.0
        %3771 = vmatpush1.xpose.msra.mxu0 0.0
        %3772 = vmatprep.subr.mxu0 0.0
        %3773 = vmatpush1.xpose.msra.mxu0 0.0
        %3774 = vmatprep.subr.mxu0 0.0
        %3775 = vmatpush1.xpose.msra.mxu0 0.0
        %3776 = vmatprep.subr.mxu0 0.0
        %3777 = vmatpush1.xpose.msra.mxu0 0.0
        %3778 = vmatprep.subr.mxu0 0.0
        %3779 = vmatpush1.xpose.msra.mxu0 0.0
        %3780 = vmatprep.subr.mxu0 0.0
        %3781 = vmatpush1.xpose.msra.mxu0 0.0
        %3782 = vmatprep.subr.mxu0 0.0
        %3783 = vmatpush1.xpose.msra.mxu0 0.0
        %3784 = vmatprep.subr.mxu0 0.0
        %3785 = vmatpush1.xpose.msra.mxu0 0.0
        %3786 = vmatprep.subr.mxu0 0.0
        %3787 = vmatpush1.xpose.msra.mxu0 0.0
        %3788 = vmatprep.subr.mxu0 0.0
        %3789 = vmatpush1.xpose.msra.mxu0 0.0
        %3790 = vmatprep.subr.mxu0 0.0
        %3791 = vmatpush1.xpose.msra.mxu0 0.0
        %3792 = vmatprep.subr.mxu0 0.0
        %3793 = vmatpush1.xpose.msra.mxu0 0.0
        %3794 = vmatprep.mubr.f32.mxu0 0.0
        %3795 = vmatmul.mubr.f32.gmra.mrb[0].mxu0 %v3717
        %v3796 = vpop.f32.mrb[0].mxu0
        %v3797 = vadd.f32 %v1257, %v3796
        %v3798 = vpop.f32.mrb[0].mxu0
        %3799 = vmatprep.mubr.f32.mxu0 0.0
        %3800 = vmatmul.mubr.f32.gmra.mrb[0].mxu0 %v3720
        %v3801 = vpop.f32.mrb[0].mxu0
        %v3802 = vadd.f32 %v1258, %v3801
        %v3803 = vpop.f32.mrb[0].mxu0
        %3804 = vdwg.mxu0
        %3807 = vrot.lane.b32.xlu0 %v3797, 124
        %v3808 = vpop.permute.xlu0 %3807
        %3809 = vrot.lane.b32.xlu0 %v3802, 124
        %v3810 = vpop.permute.xlu0 %3809
        %3813 = vrot.lane.b32.xlu0 %v3797, 120
        %v3814 = vpop.permute.xlu0 %3813
        %3815 = vrot.lane.b32.xlu0 %v3802, 120
        %v3816 = vpop.permute.xlu0 %3815
        %3819 = vrot.lane.b32.xlu0 %v3797, 116
        %v3820 = vpop.permute.xlu0 %3819
        %3821 = vrot.lane.b32.xlu0 %v3802, 116
        %v3822 = vpop.permute.xlu0 %3821
        %3825 = vrot.lane.b32.xlu0 %v3797, 112
        %v3826 = vpop.permute.xlu0 %3825
        %3827 = vrot.lane.b32.xlu0 %v3802, 112
        %v3828 = vpop.permute.xlu0 %3827
        %3831 = vrot.lane.b32.xlu0 %v3797, 108
        %v3832 = vpop.permute.xlu0 %3831
        %3833 = vrot.lane.b32.xlu0 %v3802, 108
        %v3834 = vpop.permute.xlu0 %3833
        %3837 = vrot.lane.b32.xlu0 %v3797, 104
        %v3838 = vpop.permute.xlu0 %3837
        %3839 = vrot.lane.b32.xlu0 %v3802, 104
        %v3840 = vpop.permute.xlu0 %3839
        %3843 = vrot.lane.b32.xlu0 %v3797, 100
        %v3844 = vpop.permute.xlu0 %3843
        %3845 = vrot.lane.b32.xlu0 %v3802, 100
        %v3846 = vpop.permute.xlu0 %3845
        %v3849 = vcombine.low %v3797, %v3814
        %v3850 = vcombine.high %v3797, %v3814
        %v3852 = vunpack.c.l.s4 1983009808
        %v3853 = vunpack.c.0.s8 %v3852
        %v3854 = vlaneseq
        %v3855 = vshrl.u32 %v3854, 7
        %v3856 = vsub.s32 %v3853, %v3855
        %v3857 = vrot.slane %v3849, %v3856
        %v3859 = vunpack.c.l.s4 1983009808
        %v3860 = vunpack.c.0.s8 %v3859
        %v3861 = vlaneseq
        %v3862 = vshrl.u32 %v3861, 7
        %v3863 = vsub.s32 %v3860, %v3862
        %v3864 = vrot.slane %v3850, %v3863
        %v3865 = vcombine.low %v3808, %v3820
        %v3866 = vcombine.high %v3808, %v3820
        %v3868 = vunpack.c.l.s4 1983009808
        %v3869 = vunpack.c.0.s8 %v3868
        %v3870 = vlaneseq
        %v3871 = vshrl.u32 %v3870, 7
        %v3872 = vsub.s32 %v3869, %v3871
        %v3873 = vrot.slane %v3865, %v3872
        %v3875 = vunpack.c.l.s4 1983009808
        %v3876 = vunpack.c.0.s8 %v3875
        %v3877 = vlaneseq
        %v3878 = vshrl.u32 %v3877, 7
        %v3879 = vsub.s32 %v3876, %v3878
        %v3880 = vrot.slane %v3866, %v3879
        %v3881 = vcombine.low %v3826, %v3838
        %v3882 = vcombine.high %v3826, %v3838
        %v3884 = vunpack.c.l.s4 1983009808
        %v3885 = vunpack.c.0.s8 %v3884
        %v3886 = vlaneseq
        %v3887 = vshrl.u32 %v3886, 7
        %v3888 = vsub.s32 %v3885, %v3887
        %v3889 = vrot.slane %v3881, %v3888
        %v3891 = vunpack.c.l.s4 1983009808
        %v3892 = vunpack.c.0.s8 %v3891
        %v3893 = vlaneseq
        %v3894 = vshrl.u32 %v3893, 7
        %v3895 = vsub.s32 %v3892, %v3894
        %v3896 = vrot.slane %v3882, %v3895
        %v3897 = vcombine.low %v3832, %v3844
        %v3898 = vcombine.high %v3832, %v3844
        %v3900 = vunpack.c.l.s4 1983009808
        %v3901 = vunpack.c.0.s8 %v3900
        %v3902 = vlaneseq
        %v3903 = vshrl.u32 %v3902, 7
        %v3904 = vsub.s32 %v3901, %v3903
        %v3905 = vrot.slane %v3897, %v3904
        %v3907 = vunpack.c.l.s4 1983009808
        %v3908 = vunpack.c.0.s8 %v3907
        %v3909 = vlaneseq
        %v3910 = vshrl.u32 %v3909, 7
        %v3911 = vsub.s32 %v3908, %v3910
        %v3912 = vrot.slane %v3898, %v3911
        %v3913 = vcombine.low %v3857, %v3873
        %v3914 = vcombine.high %v3857, %v3873
        %v3916 = vunpack.c.l.s4 1934713408
        %v3917 = vunpack.c.0.s8 %v3916
        %v3918 = vlaneseq
        %v3919 = vshrl.u32 %v3918, 7
        %v3920 = vsub.s32 %v3917, %v3919
        %v3921 = vrot.slane %v3913, %v3920
        %v3923 = vunpack.c.l.s4 1934713408
        %v3924 = vunpack.c.0.s8 %v3923
        %v3925 = vlaneseq
        %v3926 = vshrl.u32 %v3925, 7
        %v3927 = vsub.s32 %v3924, %v3926
        %v3928 = vrot.slane %v3914, %v3927
        %v3929 = vcombine.low %v3864, %v3880
        %v3930 = vcombine.high %v3864, %v3880
        %v3932 = vunpack.c.l.s4 1934713408
        %v3933 = vunpack.c.0.s8 %v3932
        %v3934 = vlaneseq
        %v3935 = vshrl.u32 %v3934, 7
        %v3936 = vsub.s32 %v3933, %v3935
        %v3937 = vrot.slane %v3929, %v3936
        %v3939 = vunpack.c.l.s4 1934713408
        %v3940 = vunpack.c.0.s8 %v3939
        %v3941 = vlaneseq
        %v3942 = vshrl.u32 %v3941, 7
        %v3943 = vsub.s32 %v3940, %v3942
        %v3944 = vrot.slane %v3930, %v3943
        %v3945 = vcombine.low %v3889, %v3905
        %v3946 = vcombine.high %v3889, %v3905
        %v3948 = vunpack.c.l.s4 1934713408
        %v3949 = vunpack.c.0.s8 %v3948
        %v3950 = vlaneseq
        %v3951 = vshrl.u32 %v3950, 7
        %v3952 = vsub.s32 %v3949, %v3951
        %v3953 = vrot.slane %v3945, %v3952
        %v3955 = vunpack.c.l.s4 1934713408
        %v3956 = vunpack.c.0.s8 %v3955
        %v3957 = vlaneseq
        %v3958 = vshrl.u32 %v3957, 7
        %v3959 = vsub.s32 %v3956, %v3958
        %v3960 = vrot.slane %v3946, %v3959
        %v3961 = vcombine.low %v3896, %v3912
        %v3962 = vcombine.high %v3896, %v3912
        %v3964 = vunpack.c.l.s4 1934713408
        %v3965 = vunpack.c.0.s8 %v3964
        %v3966 = vlaneseq
        %v3967 = vshrl.u32 %v3966, 7
        %v3968 = vsub.s32 %v3965, %v3967
        %v3969 = vrot.slane %v3961, %v3968
        %v3971 = vunpack.c.l.s4 1934713408
        %v3972 = vunpack.c.0.s8 %v3971
        %v3973 = vlaneseq
        %v3974 = vshrl.u32 %v3973, 7
        %v3975 = vsub.s32 %v3972, %v3974
        %v3976 = vrot.slane %v3962, %v3975
        %v3977 = vcombine.low %v3921, %v3953
        %v3978 = vcombine.high %v3921, %v3953
        %v3979 = vcombine.low %v3928, %v3960
        %v3980 = vcombine.high %v3928, %v3960
        %v3981 = vcombine.low %v3937, %v3969
        %v3982 = vcombine.high %v3937, %v3969
        %v3983 = vcombine.low %v3944, %v3976
        %v3984 = vcombine.high %v3944, %v3976
        %v3985 = vcombine.low %v3802, %v3816
        %v3987 = vunpack.c.l.s4 1983009808
        %v3988 = vunpack.c.0.s8 %v3987
        %v3989 = vlaneseq
        %v3990 = vshrl.u32 %v3989, 7
        %v3991 = vsub.s32 %v3988, %v3990
        %v3992 = vrot.slane %v3985, %v3991
        %v3993 = vcombine.low %v3810, %v3822
        %v3995 = vunpack.c.l.s4 1983009808
        %v3996 = vunpack.c.0.s8 %v3995
        %v3997 = vlaneseq
        %v3998 = vshrl.u32 %v3997, 7
        %v3999 = vsub.s32 %v3996, %v3998
        %v4000 = vrot.slane %v3993, %v3999
        %v4001 = vcombine.low %v3828, %v3840
        %v4003 = vunpack.c.l.s4 1983009808
        %v4004 = vunpack.c.0.s8 %v4003
        %v4005 = vlaneseq
        %v4006 = vshrl.u32 %v4005, 7
        %v4007 = vsub.s32 %v4004, %v4006
        %v4008 = vrot.slane %v4001, %v4007
        %v4009 = vcombine.low %v3834, %v3846
        %v4011 = vunpack.c.l.s4 1983009808
        %v4012 = vunpack.c.0.s8 %v4011
        %v4013 = vlaneseq
        %v4014 = vshrl.u32 %v4013, 7
        %v4015 = vsub.s32 %v4012, %v4014
        %v4016 = vrot.slane %v4009, %v4015
        %v4017 = vcombine.low %v3992, %v4000
        %v4019 = vunpack.c.l.s4 1934713408
        %v4020 = vunpack.c.0.s8 %v4019
        %v4021 = vlaneseq
        %v4022 = vshrl.u32 %v4021, 7
        %v4023 = vsub.s32 %v4020, %v4022
        %v4024 = vrot.slane %v4017, %v4023
        %v4025 = vcombine.low %v4008, %v4016
        %v4027 = vunpack.c.l.s4 1934713408
        %v4028 = vunpack.c.0.s8 %v4027
        %v4029 = vlaneseq
        %v4030 = vshrl.u32 %v4029, 7
        %v4031 = vsub.s32 %v4028, %v4030
        %v4032 = vrot.slane %v4025, %v4031
        %v4033 = vcombine.low %v4024, %v4032
        %4034 = vxpose.xlu0.b32.start [1/16] %v3977, 128
        %4035 = vxpose.xlu0.b32.cont [2/16] 0.0, 128
        %4036 = vxpose.xlu0.b32.cont [3/16] 0.0, 128
        %4037 = vxpose.xlu0.b32.cont [4/16] 0.0, 128
        %4038 = vxpose.xlu0.b32.cont [5/16] 0.0, 128
        %4039 = vxpose.xlu0.b32.cont [6/16] 0.0, 128
        %4040 = vxpose.xlu0.b32.cont [7/16] 0.0, 128
        %4041 = vxpose.xlu0.b32.cont [8/16] 0.0, 128
        %4042 = vxpose.xlu0.b32.cont [9/16] 0.0, 128
        %4043 = vxpose.xlu0.b32.cont [10/16] 0.0, 128
        %4044 = vxpose.xlu0.b32.cont [11/16] 0.0, 128
        %4045 = vxpose.xlu0.b32.cont [12/16] 0.0, 128
        %4046 = vxpose.xlu0.b32.cont [13/16] 0.0, 128
        %4047 = vxpose.xlu0.b32.cont [14/16] 0.0, 128
        %4048 = vxpose.xlu0.b32.cont [15/16] 0.0, 128
        %4049 = vxpose.xlu0.b32.end [16/16] 0.0, 128
        %v4050 = vpop.trf.xlu0
        %v4051 = vpop.trf.xlu0
        %v4052 = vpop.trf.xlu0
        %v4053 = vpop.trf.xlu0
        %v4054 = vpop.trf.xlu0
        %v4055 = vpop.trf.xlu0
        %v4056 = vpop.trf.xlu0
        %v4057 = vpop.trf.xlu0
        %v4058 = vpop.trf.xlu0
        %v4059 = vpop.trf.xlu0
        %v4060 = vpop.trf.xlu0
        %v4061 = vpop.trf.xlu0
        %v4062 = vpop.trf.xlu0
        %v4063 = vpop.trf.xlu0
        %v4064 = vpop.trf.xlu0
        %v4065 = vpop.trf.xlu0
        %4066 = vxpose.xlu0.b32.start [1/16] %v3978, 128
        %4067 = vxpose.xlu0.b32.cont [2/16] 0.0, 128
        %4068 = vxpose.xlu0.b32.cont [3/16] 0.0, 128
        %4069 = vxpose.xlu0.b32.cont [4/16] 0.0, 128
        %4070 = vxpose.xlu0.b32.cont [5/16] 0.0, 128
        %4071 = vxpose.xlu0.b32.cont [6/16] 0.0, 128
        %4072 = vxpose.xlu0.b32.cont [7/16] 0.0, 128
        %4073 = vxpose.xlu0.b32.cont [8/16] 0.0, 128
        %4074 = vxpose.xlu0.b32.cont [9/16] 0.0, 128
        %4075 = vxpose.xlu0.b32.cont [10/16] 0.0, 128
        %4076 = vxpose.xlu0.b32.cont [11/16] 0.0, 128
        %4077 = vxpose.xlu0.b32.cont [12/16] 0.0, 128
        %4078 = vxpose.xlu0.b32.cont [13/16] 0.0, 128
        %4079 = vxpose.xlu0.b32.cont [14/16] 0.0, 128
        %4080 = vxpose.xlu0.b32.cont [15/16] 0.0, 128
        %4081 = vxpose.xlu0.b32.end [16/16] 0.0, 128
        %v4082 = vpop.trf.xlu0
        %v4083 = vpop.trf.xlu0
        %v4084 = vpop.trf.xlu0
        %v4085 = vpop.trf.xlu0
        %v4086 = vpop.trf.xlu0
        %v4087 = vpop.trf.xlu0
        %v4088 = vpop.trf.xlu0
        %v4089 = vpop.trf.xlu0
        %v4090 = vpop.trf.xlu0
        %v4091 = vpop.trf.xlu0
        %v4092 = vpop.trf.xlu0
        %v4093 = vpop.trf.xlu0
        %v4094 = vpop.trf.xlu0
        %v4095 = vpop.trf.xlu0
        %v4096 = vpop.trf.xlu0
        %v4097 = vpop.trf.xlu0
        %4098 = vxpose.xlu0.b32.start [1/16] %v3979, 128
        %4099 = vxpose.xlu0.b32.cont [2/16] 0.0, 128
        %4100 = vxpose.xlu0.b32.cont [3/16] 0.0, 128
        %4101 = vxpose.xlu0.b32.cont [4/16] 0.0, 128
        %4102 = vxpose.xlu0.b32.cont [5/16] 0.0, 128
        %4103 = vxpose.xlu0.b32.cont [6/16] 0.0, 128
        %4104 = vxpose.xlu0.b32.cont [7/16] 0.0, 128
        %4105 = vxpose.xlu0.b32.cont [8/16] 0.0, 128
        %4106 = vxpose.xlu0.b32.cont [9/16] 0.0, 128
        %4107 = vxpose.xlu0.b32.cont [10/16] 0.0, 128
        %4108 = vxpose.xlu0.b32.cont [11/16] 0.0, 128
        %4109 = vxpose.xlu0.b32.cont [12/16] 0.0, 128
        %4110 = vxpose.xlu0.b32.cont [13/16] 0.0, 128
        %4111 = vxpose.xlu0.b32.cont [14/16] 0.0, 128
        %4112 = vxpose.xlu0.b32.cont [15/16] 0.0, 128
        %4113 = vxpose.xlu0.b32.end [16/16] 0.0, 128
        %v4114 = vpop.trf.xlu0
        %v4115 = vpop.trf.xlu0
        %v4116 = vpop.trf.xlu0
        %v4117 = vpop.trf.xlu0
        %v4118 = vpop.trf.xlu0
        %v4119 = vpop.trf.xlu0
        %v4120 = vpop.trf.xlu0
        %v4121 = vpop.trf.xlu0
        %v4122 = vpop.trf.xlu0
        %v4123 = vpop.trf.xlu0
        %v4124 = vpop.trf.xlu0
        %v4125 = vpop.trf.xlu0
        %v4126 = vpop.trf.xlu0
        %v4127 = vpop.trf.xlu0
        %v4128 = vpop.trf.xlu0
        %v4129 = vpop.trf.xlu0
        %4130 = vxpose.xlu0.b32.start [1/16] %v3980, 128
        %4131 = vxpose.xlu0.b32.cont [2/16] 0.0, 128
        %4132 = vxpose.xlu0.b32.cont [3/16] 0.0, 128
        %4133 = vxpose.xlu0.b32.cont [4/16] 0.0, 128
        %4134 = vxpose.xlu0.b32.cont [5/16] 0.0, 128
        %4135 = vxpose.xlu0.b32.cont [6/16] 0.0, 128
        %4136 = vxpose.xlu0.b32.cont [7/16] 0.0, 128
        %4137 = vxpose.xlu0.b32.cont [8/16] 0.0, 128
        %4138 = vxpose.xlu0.b32.cont [9/16] 0.0, 128
        %4139 = vxpose.xlu0.b32.cont [10/16] 0.0, 128
        %4140 = vxpose.xlu0.b32.cont [11/16] 0.0, 128
        %4141 = vxpose.xlu0.b32.cont [12/16] 0.0, 128
        %4142 = vxpose.xlu0.b32.cont [13/16] 0.0, 128
        %4143 = vxpose.xlu0.b32.cont [14/16] 0.0, 128
        %4144 = vxpose.xlu0.b32.cont [15/16] 0.0, 128
        %4145 = vxpose.xlu0.b32.end [16/16] 0.0, 128
        %v4146 = vpop.trf.xlu0
        %v4147 = vpop.trf.xlu0
        %v4148 = vpop.trf.xlu0
        %v4149 = vpop.trf.xlu0
        %v4150 = vpop.trf.xlu0
        %v4151 = vpop.trf.xlu0
        %v4152 = vpop.trf.xlu0
        %v4153 = vpop.trf.xlu0
        %v4154 = vpop.trf.xlu0
        %v4155 = vpop.trf.xlu0
        %v4156 = vpop.trf.xlu0
        %v4157 = vpop.trf.xlu0
        %v4158 = vpop.trf.xlu0
        %v4159 = vpop.trf.xlu0
        %v4160 = vpop.trf.xlu0
        %v4161 = vpop.trf.xlu0
        %4162 = vxpose.xlu0.b32.start [1/16] %v3981, 128
        %4163 = vxpose.xlu0.b32.cont [2/16] 0.0, 128
        %4164 = vxpose.xlu0.b32.cont [3/16] 0.0, 128
        %4165 = vxpose.xlu0.b32.cont [4/16] 0.0, 128
        %4166 = vxpose.xlu0.b32.cont [5/16] 0.0, 128
        %4167 = vxpose.xlu0.b32.cont [6/16] 0.0, 128
        %4168 = vxpose.xlu0.b32.cont [7/16] 0.0, 128
        %4169 = vxpose.xlu0.b32.cont [8/16] 0.0, 128
        %4170 = vxpose.xlu0.b32.cont [9/16] 0.0, 128
        %4171 = vxpose.xlu0.b32.cont [10/16] 0.0, 128
        %4172 = vxpose.xlu0.b32.cont [11/16] 0.0, 128
        %4173 = vxpose.xlu0.b32.cont [12/16] 0.0, 128
        %4174 = vxpose.xlu0.b32.cont [13/16] 0.0, 128
        %4175 = vxpose.xlu0.b32.cont [14/16] 0.0, 128
        %4176 = vxpose.xlu0.b32.cont [15/16] 0.0, 128
        %4177 = vxpose.xlu0.b32.end [16/16] 0.0, 128
        %v4178 = vpop.trf.xlu0
        %v4179 = vpop.trf.xlu0
        %v4180 = vpop.trf.xlu0
        %v4181 = vpop.trf.xlu0
        %v4182 = vpop.trf.xlu0
        %v4183 = vpop.trf.xlu0
        %v4184 = vpop.trf.xlu0
        %v4185 = vpop.trf.xlu0
        %v4186 = vpop.trf.xlu0
        %v4187 = vpop.trf.xlu0
        %v4188 = vpop.trf.xlu0
        %v4189 = vpop.trf.xlu0
        %v4190 = vpop.trf.xlu0
        %v4191 = vpop.trf.xlu0
        %v4192 = vpop.trf.xlu0
        %v4193 = vpop.trf.xlu0
        %4194 = vxpose.xlu0.b32.start [1/16] %v3982, 128
        %4195 = vxpose.xlu0.b32.cont [2/16] 0.0, 128
        %4196 = vxpose.xlu0.b32.cont [3/16] 0.0, 128
        %4197 = vxpose.xlu0.b32.cont [4/16] 0.0, 128
        %4198 = vxpose.xlu0.b32.cont [5/16] 0.0, 128
        %4199 = vxpose.xlu0.b32.cont [6/16] 0.0, 128
        %4200 = vxpose.xlu0.b32.cont [7/16] 0.0, 128
        %4201 = vxpose.xlu0.b32.cont [8/16] 0.0, 128
        %4202 = vxpose.xlu0.b32.cont [9/16] 0.0, 128
        %4203 = vxpose.xlu0.b32.cont [10/16] 0.0, 128
        %4204 = vxpose.xlu0.b32.cont [11/16] 0.0, 128
        %4205 = vxpose.xlu0.b32.cont [12/16] 0.0, 128
        %4206 = vxpose.xlu0.b32.cont [13/16] 0.0, 128
        %4207 = vxpose.xlu0.b32.cont [14/16] 0.0, 128
        %4208 = vxpose.xlu0.b32.cont [15/16] 0.0, 128
        %4209 = vxpose.xlu0.b32.end [16/16] 0.0, 128
        %v4210 = vpop.trf.xlu0
        %v4211 = vpop.trf.xlu0
        %v4212 = vpop.trf.xlu0
        %v4213 = vpop.trf.xlu0
        %v4214 = vpop.trf.xlu0
        %v4215 = vpop.trf.xlu0
        %v4216 = vpop.trf.xlu0
        %v4217 = vpop.trf.xlu0
        %v4218 = vpop.trf.xlu0
        %v4219 = vpop.trf.xlu0
        %v4220 = vpop.trf.xlu0
        %v4221 = vpop.trf.xlu0
        %v4222 = vpop.trf.xlu0
        %v4223 = vpop.trf.xlu0
        %v4224 = vpop.trf.xlu0
        %v4225 = vpop.trf.xlu0
        %4226 = vxpose.xlu0.b32.start [1/16] %v3983, 128
        %4227 = vxpose.xlu0.b32.cont [2/16] 0.0, 128
        %4228 = vxpose.xlu0.b32.cont [3/16] 0.0, 128
        %4229 = vxpose.xlu0.b32.cont [4/16] 0.0, 128
        %4230 = vxpose.xlu0.b32.cont [5/16] 0.0, 128
        %4231 = vxpose.xlu0.b32.cont [6/16] 0.0, 128
        %4232 = vxpose.xlu0.b32.cont [7/16] 0.0, 128
        %4233 = vxpose.xlu0.b32.cont [8/16] 0.0, 128
        %4234 = vxpose.xlu0.b32.cont [9/16] 0.0, 128
        %4235 = vxpose.xlu0.b32.cont [10/16] 0.0, 128
        %4236 = vxpose.xlu0.b32.cont [11/16] 0.0, 128
        %4237 = vxpose.xlu0.b32.cont [12/16] 0.0, 128
        %4238 = vxpose.xlu0.b32.cont [13/16] 0.0, 128
        %4239 = vxpose.xlu0.b32.cont [14/16] 0.0, 128
        %4240 = vxpose.xlu0.b32.cont [15/16] 0.0, 128
        %4241 = vxpose.xlu0.b32.end [16/16] 0.0, 128
        %v4242 = vpop.trf.xlu0
        %v4243 = vpop.trf.xlu0
        %v4244 = vpop.trf.xlu0
        %v4245 = vpop.trf.xlu0
        %v4246 = vpop.trf.xlu0
        %v4247 = vpop.trf.xlu0
        %v4248 = vpop.trf.xlu0
        %v4249 = vpop.trf.xlu0
        %v4250 = vpop.trf.xlu0
        %v4251 = vpop.trf.xlu0
        %v4252 = vpop.trf.xlu0
        %v4253 = vpop.trf.xlu0
        %v4254 = vpop.trf.xlu0
        %v4255 = vpop.trf.xlu0
        %v4256 = vpop.trf.xlu0
        %v4257 = vpop.trf.xlu0
        %4258 = vxpose.xlu0.b32.start [1/16] %v3984, 128
        %4259 = vxpose.xlu0.b32.cont [2/16] 0.0, 128
        %4260 = vxpose.xlu0.b32.cont [3/16] 0.0, 128
        %4261 = vxpose.xlu0.b32.cont [4/16] 0.0, 128
        %4262 = vxpose.xlu0.b32.cont [5/16] 0.0, 128
        %4263 = vxpose.xlu0.b32.cont [6/16] 0.0, 128
        %4264 = vxpose.xlu0.b32.cont [7/16] 0.0, 128
        %4265 = vxpose.xlu0.b32.cont [8/16] 0.0, 128
        %4266 = vxpose.xlu0.b32.cont [9/16] 0.0, 128
        %4267 = vxpose.xlu0.b32.cont [10/16] 0.0, 128
        %4268 = vxpose.xlu0.b32.cont [11/16] 0.0, 128
        %4269 = vxpose.xlu0.b32.cont [12/16] 0.0, 128
        %4270 = vxpose.xlu0.b32.cont [13/16] 0.0, 128
        %4271 = vxpose.xlu0.b32.cont [14/16] 0.0, 128
        %4272 = vxpose.xlu0.b32.cont [15/16] 0.0, 128
        %4273 = vxpose.xlu0.b32.end [16/16] 0.0, 128
        %v4274 = vpop.trf.xlu0
        %v4275 = vpop.trf.xlu0
        %v4276 = vpop.trf.xlu0
        %v4277 = vpop.trf.xlu0
        %v4278 = vpop.trf.xlu0
        %v4279 = vpop.trf.xlu0
        %v4280 = vpop.trf.xlu0
        %v4281 = vpop.trf.xlu0
        %v4282 = vpop.trf.xlu0
        %v4283 = vpop.trf.xlu0
        %v4284 = vpop.trf.xlu0
        %v4285 = vpop.trf.xlu0
        %v4286 = vpop.trf.xlu0
        %v4287 = vpop.trf.xlu0
        %v4288 = vpop.trf.xlu0
        %v4289 = vpop.trf.xlu0
        %4290 = vxpose.xlu0.b32.start [1/16] %v4033, 128
        %4291 = vxpose.xlu0.b32.cont [2/16] 0.0, 128
        %4292 = vxpose.xlu0.b32.cont [3/16] 0.0, 128
        %4293 = vxpose.xlu0.b32.cont [4/16] 0.0, 128
        %4294 = vxpose.xlu0.b32.cont [5/16] 0.0, 128
        %4295 = vxpose.xlu0.b32.cont [6/16] 0.0, 128
        %4296 = vxpose.xlu0.b32.cont [7/16] 0.0, 128
        %4297 = vxpose.xlu0.b32.cont [8/16] 0.0, 128
        %4298 = vxpose.xlu0.b32.cont [9/16] 0.0, 128
        %4299 = vxpose.xlu0.b32.cont [10/16] 0.0, 128
        %4300 = vxpose.xlu0.b32.cont [11/16] 0.0, 128
        %4301 = vxpose.xlu0.b32.cont [12/16] 0.0, 128
        %4302 = vxpose.xlu0.b32.cont [13/16] 0.0, 128
        %4303 = vxpose.xlu0.b32.cont [14/16] 0.0, 128
        %4304 = vxpose.xlu0.b32.cont [15/16] 0.0, 128
        %4305 = vxpose.xlu0.b32.end [16/16] 0.0, 128
        %v4306 = vpop.trf.xlu0
        %v4307 = vpop.trf.xlu0
        %v4308 = vpop.trf.xlu0
        %v4309 = vpop.trf.xlu0
        %v4310 = vpop.trf.xlu0
        %v4311 = vpop.trf.xlu0
        %v4312 = vpop.trf.xlu0
        %v4313 = vpop.trf.xlu0
        %v4314 = vpop.trf.xlu0
        %v4315 = vpop.trf.xlu0
        %v4316 = vpop.trf.xlu0
        %v4317 = vpop.trf.xlu0
        %v4318 = vpop.trf.xlu0
        %v4319 = vpop.trf.xlu0
        %v4320 = vpop.trf.xlu0
        %v4321 = vpop.trf.xlu0
        %v4322 = vcombine.low %v4050, %v4114
        %v4324 = vunpack.c.l.s4 1983009808
        %v4325 = vunpack.c.0.s8 %v4324
        %v4326 = vlaneseq
        %v4327 = vshrl.u32 %v4326, 7
        %v4328 = vsub.s32 %v4325, %v4327
        %v4329 = vrot.slane %v4322, %v4328
        %v4330 = vcombine.low %v4082, %v4146
        %v4332 = vunpack.c.l.s4 1983009808
        %v4333 = vunpack.c.0.s8 %v4332
        %v4334 = vlaneseq
        %v4335 = vshrl.u32 %v4334, 7
        %v4336 = vsub.s32 %v4333, %v4335
        %v4337 = vrot.slane %v4330, %v4336
        %v4338 = vcombine.low %v4178, %v4242
        %v4340 = vunpack.c.l.s4 1983009808
        %v4341 = vunpack.c.0.s8 %v4340
        %v4342 = vlaneseq
        %v4343 = vshrl.u32 %v4342, 7
        %v4344 = vsub.s32 %v4341, %v4343
        %v4345 = vrot.slane %v4338, %v4344
        %v4346 = vcombine.low %v4210, %v4274
        %v4348 = vunpack.c.l.s4 1983009808
        %v4349 = vunpack.c.0.s8 %v4348
        %v4350 = vlaneseq
        %v4351 = vshrl.u32 %v4350, 7
        %v4352 = vsub.s32 %v4349, %v4351
        %v4353 = vrot.slane %v4346, %v4352
        %v4354 = vcombine.low %v4329, %v4337
        %v4355 = vcombine.high %v4329, %v4337
        %v4357 = vunpack.c.l.s4 1934713408
        %v4358 = vunpack.c.0.s8 %v4357
        %v4359 = vlaneseq
        %v4360 = vshrl.u32 %v4359, 7
        %v4361 = vsub.s32 %v4358, %v4360
        %v4362 = vrot.slane %v4354, %v4361
        %v4364 = vunpack.c.l.s4 1934713408
        %v4365 = vunpack.c.0.s8 %v4364
        %v4366 = vlaneseq
        %v4367 = vshrl.u32 %v4366, 7
        %v4368 = vsub.s32 %v4365, %v4367
        %v4369 = vrot.slane %v4355, %v4368
        %v4370 = vcombine.low %v4345, %v4353
        %v4371 = vcombine.high %v4345, %v4353
        %v4373 = vunpack.c.l.s4 1934713408
        %v4374 = vunpack.c.0.s8 %v4373
        %v4375 = vlaneseq
        %v4376 = vshrl.u32 %v4375, 7
        %v4377 = vsub.s32 %v4374, %v4376
        %v4378 = vrot.slane %v4370, %v4377
        %v4380 = vunpack.c.l.s4 1934713408
        %v4381 = vunpack.c.0.s8 %v4380
        %v4382 = vlaneseq
        %v4383 = vshrl.u32 %v4382, 7
        %v4384 = vsub.s32 %v4381, %v4383
        %v4385 = vrot.slane %v4371, %v4384
        %v4386 = vcombine.low %v4362, %v4378
        %v4387 = vcombine.high %v4362, %v4378
        %v4388 = vcombine.low %v4369, %v4385
        %v4389 = vcombine.high %v4369, %v4385
        %v4391 = vunpack.c.l.s4 1983009808
        %v4392 = vunpack.c.0.s8 %v4391
        %v4393 = vlaneseq
        %v4394 = vshrl.u32 %v4393, 7
        %v4395 = vsub.s32 %v4392, %v4394
        %v4396 = vrot.slane %v4306, %v4395
        %v4397 = vcombine.high %v4396, 0.0
        %v4399 = vunpack.c.l.s4 1934713408
        %v4400 = vunpack.c.0.s8 %v4399
        %v4401 = vlaneseq
        %v4402 = vshrl.u32 %v4401, 7
        %v4403 = vsub.s32 %v4400, %v4402
        %v4404 = vrot.slane %v4396, %v4403
        %v4406 = vunpack.c.l.s4 1934713408
        %v4407 = vunpack.c.0.s8 %v4406
        %v4408 = vlaneseq
        %v4409 = vshrl.u32 %v4408, 7
        %v4410 = vsub.s32 %v4407, %v4409
        %v4411 = vrot.slane %v4397, %v4410
        %v4412 = vcombine.high %v4404, 0.0
        %v4413 = vcombine.high %v4411, 0.0
        %4414 = vxpose.xlu0.b32.start [1/16] %v4386, 128
        %4415 = vxpose.xlu0.b32.cont [2/16] %v4404, 128
        %4416 = vxpose.xlu0.b32.cont [3/16] 0.0, 128
        %4417 = vxpose.xlu0.b32.cont [4/16] 0.0, 128
        %4418 = vxpose.xlu0.b32.cont [5/16] 0.0, 128
        %4419 = vxpose.xlu0.b32.cont [6/16] 0.0, 128
        %4420 = vxpose.xlu0.b32.cont [7/16] 0.0, 128
        %4421 = vxpose.xlu0.b32.cont [8/16] 0.0, 128
        %4422 = vxpose.xlu0.b32.cont [9/16] 0.0, 128
        %4423 = vxpose.xlu0.b32.cont [10/16] 0.0, 128
        %4424 = vxpose.xlu0.b32.cont [11/16] 0.0, 128
        %4425 = vxpose.xlu0.b32.cont [12/16] 0.0, 128
        %4426 = vxpose.xlu0.b32.cont [13/16] 0.0, 128
        %4427 = vxpose.xlu0.b32.cont [14/16] 0.0, 128
        %4428 = vxpose.xlu0.b32.cont [15/16] 0.0, 128
        %4429 = vxpose.xlu0.b32.end [16/16] 0.0, 128
        %v4430 = vpop.trf.xlu0
        %v4431 = vpop.trf.xlu0
        %v4432 = vpop.trf.xlu0
        %v4433 = vpop.trf.xlu0
        %v4434 = vpop.trf.xlu0
        %v4435 = vpop.trf.xlu0
        %v4436 = vpop.trf.xlu0
        %v4437 = vpop.trf.xlu0
        %v4438 = vpop.trf.xlu0
        %v4439 = vpop.trf.xlu0
        %v4440 = vpop.trf.xlu0
        %v4441 = vpop.trf.xlu0
        %v4442 = vpop.trf.xlu0
        %v4443 = vpop.trf.xlu0
        %v4444 = vpop.trf.xlu0
        %v4445 = vpop.trf.xlu0
        %4446 = vxpose.xlu0.b32.start [1/16] %v4387, 128
        %4447 = vxpose.xlu0.b32.cont [2/16] %v4412, 128
        %4448 = vxpose.xlu0.b32.cont [3/16] 0.0, 128
        %4449 = vxpose.xlu0.b32.cont [4/16] 0.0, 128
        %4450 = vxpose.xlu0.b32.cont [5/16] 0.0, 128
        %4451 = vxpose.xlu0.b32.cont [6/16] 0.0, 128
        %4452 = vxpose.xlu0.b32.cont [7/16] 0.0, 128
        %4453 = vxpose.xlu0.b32.cont [8/16] 0.0, 128
        %4454 = vxpose.xlu0.b32.cont [9/16] 0.0, 128
        %4455 = vxpose.xlu0.b32.cont [10/16] 0.0, 128
        %4456 = vxpose.xlu0.b32.cont [11/16] 0.0, 128
        %4457 = vxpose.xlu0.b32.cont [12/16] 0.0, 128
        %4458 = vxpose.xlu0.b32.cont [13/16] 0.0, 128
        %4459 = vxpose.xlu0.b32.cont [14/16] 0.0, 128
        %4460 = vxpose.xlu0.b32.cont [15/16] 0.0, 128
        %4461 = vxpose.xlu0.b32.end [16/16] 0.0, 128
        %v4462 = vpop.trf.xlu0
        %v4463 = vpop.trf.xlu0
        %v4464 = vpop.trf.xlu0
        %v4465 = vpop.trf.xlu0
        %v4466 = vpop.trf.xlu0
        %v4467 = vpop.trf.xlu0
        %v4468 = vpop.trf.xlu0
        %v4469 = vpop.trf.xlu0
        %v4470 = vpop.trf.xlu0
        %v4471 = vpop.trf.xlu0
        %v4472 = vpop.trf.xlu0
        %v4473 = vpop.trf.xlu0
        %v4474 = vpop.trf.xlu0
        %v4475 = vpop.trf.xlu0
        %v4476 = vpop.trf.xlu0
        %v4477 = vpop.trf.xlu0
        %4478 = vxpose.xlu0.b32.start [1/16] %v4388, 128
        %4479 = vxpose.xlu0.b32.cont [2/16] %v4411, 128
        %4480 = vxpose.xlu0.b32.cont [3/16] 0.0, 128
        %4481 = vxpose.xlu0.b32.cont [4/16] 0.0, 128
        %4482 = vxpose.xlu0.b32.cont [5/16] 0.0, 128
        %4483 = vxpose.xlu0.b32.cont [6/16] 0.0, 128
        %4484 = vxpose.xlu0.b32.cont [7/16] 0.0, 128
        %4485 = vxpose.xlu0.b32.cont [8/16] 0.0, 128
        %4486 = vxpose.xlu0.b32.cont [9/16] 0.0, 128
        %4487 = vxpose.xlu0.b32.cont [10/16] 0.0, 128
        %4488 = vxpose.xlu0.b32.cont [11/16] 0.0, 128
        %4489 = vxpose.xlu0.b32.cont [12/16] 0.0, 128
        %4490 = vxpose.xlu0.b32.cont [13/16] 0.0, 128
        %4491 = vxpose.xlu0.b32.cont [14/16] 0.0, 128
        %4492 = vxpose.xlu0.b32.cont [15/16] 0.0, 128
        %4493 = vxpose.xlu0.b32.end [16/16] 0.0, 128
        %v4494 = vpop.trf.xlu0
        %v4495 = vpop.trf.xlu0
        %v4496 = vpop.trf.xlu0
        %v4497 = vpop.trf.xlu0
        %v4498 = vpop.trf.xlu0
        %v4499 = vpop.trf.xlu0
        %v4500 = vpop.trf.xlu0
        %v4501 = vpop.trf.xlu0
        %v4502 = vpop.trf.xlu0
        %v4503 = vpop.trf.xlu0
        %v4504 = vpop.trf.xlu0
        %v4505 = vpop.trf.xlu0
        %v4506 = vpop.trf.xlu0
        %v4507 = vpop.trf.xlu0
        %v4508 = vpop.trf.xlu0
        %v4509 = vpop.trf.xlu0
        %4510 = vxpose.xlu0.b32.start [1/16] %v4389, 128
        %4511 = vxpose.xlu0.b32.cont [2/16] %v4413, 128
        %4512 = vxpose.xlu0.b32.cont [3/16] 0.0, 128
        %4513 = vxpose.xlu0.b32.cont [4/16] 0.0, 128
        %4514 = vxpose.xlu0.b32.cont [5/16] 0.0, 128
        %4515 = vxpose.xlu0.b32.cont [6/16] 0.0, 128
        %4516 = vxpose.xlu0.b32.cont [7/16] 0.0, 128
        %4517 = vxpose.xlu0.b32.cont [8/16] 0.0, 128
        %4518 = vxpose.xlu0.b32.cont [9/16] 0.0, 128
        %4519 = vxpose.xlu0.b32.cont [10/16] 0.0, 128
        %4520 = vxpose.xlu0.b32.cont [11/16] 0.0, 128
        %4521 = vxpose.xlu0.b32.cont [12/16] 0.0, 128
        %4522 = vxpose.xlu0.b32.cont [13/16] 0.0, 128
        %4523 = vxpose.xlu0.b32.cont [14/16] 0.0, 128
        %4524 = vxpose.xlu0.b32.cont [15/16] 0.0, 128
        %4525 = vxpose.xlu0.b32.end [16/16] 0.0, 128
        %v4526 = vpop.trf.xlu0
        %v4527 = vpop.trf.xlu0
        %v4528 = vpop.trf.xlu0
        %v4529 = vpop.trf.xlu0
        %v4530 = vpop.trf.xlu0
        %v4531 = vpop.trf.xlu0
        %v4532 = vpop.trf.xlu0
        %v4533 = vpop.trf.xlu0
        %v4534 = vpop.trf.xlu0
        %v4535 = vpop.trf.xlu0
        %v4536 = vpop.trf.xlu0
        %v4537 = vpop.trf.xlu0
        %v4538 = vpop.trf.xlu0
        %v4539 = vpop.trf.xlu0
        %v4540 = vpop.trf.xlu0
        %v4541 = vpop.trf.xlu0
        %4543 = vset.pattern.permute.xlu0 0
        %4544 = vperm.xlu0 %4543, %v4430
        %v4545 = vpop.permute.xlu0 %4544
        %4548 = vset.pattern.permute.xlu0 0
        %4549 = vperm.xlu0 %4548, %v4462
        %v4550 = vpop.permute.xlu0 %4549
        %4553 = vset.pattern.permute.xlu0 0
        %4554 = vperm.xlu0 %4553, %v4494
        %v4555 = vpop.permute.xlu0 %4554
        %4558 = vset.pattern.permute.xlu0 0
        %4559 = vperm.xlu0 %4558, %v4526
        %v4560 = vpop.permute.xlu0 %4559
        %v4562 = vsel %vm2143, %v4545, 0.0
        %v4563 = vsel %vm2143, %v4550, 0.0
        %v4564 = vsel %vm2143, %v4555, 0.0
        %v4565 = vsel %vm2143, %v4560, 0.0
        %v4566 = vsel %vm1241, %v3592, 0
        %4568 = vmatprep.subr.mxu0 0.0
        %4569 = vmatpush1.msra.mxu0 %v3440
        %4570 = vmatprep.subr.mxu0 0.0
        %4571 = vmatpush1.msra.mxu0 0.0
        %4572 = vmatprep.subr.mxu0 0.0
        %4573 = vmatpush1.msra.mxu0 0.0
        %4574 = vmatprep.subr.mxu0 0.0
        %4575 = vmatpush1.msra.mxu0 0.0
        %4576 = vmatprep.subr.mxu0 0.0
        %4577 = vmatpush1.msra.mxu0 0.0
        %4578 = vmatprep.subr.mxu0 0.0
        %4579 = vmatpush1.msra.mxu0 0.0
        %4580 = vmatprep.subr.mxu0 0.0
        %4581 = vmatpush1.msra.mxu0 0.0
        %4582 = vmatprep.subr.mxu0 0.0
        %4583 = vmatpush1.msra.mxu0 0.0
        %4584 = vmatprep.subr.mxu0 0.0
        %4585 = vmatpush1.msra.mxu0 0.0
        %4586 = vmatprep.subr.mxu0 0.0
        %4587 = vmatpush1.msra.mxu0 0.0
        %4588 = vmatprep.subr.mxu0 0.0
        %4589 = vmatpush1.msra.mxu0 0.0
        %4590 = vmatprep.subr.mxu0 0.0
        %4591 = vmatpush1.msra.mxu0 0.0
        %4592 = vmatprep.subr.mxu0 0.0
        %4593 = vmatpush1.msra.mxu0 0.0
        %4594 = vmatprep.subr.mxu0 0.0
        %4595 = vmatpush1.msra.mxu0 0.0
        %4596 = vmatprep.subr.mxu0 0.0
        %4597 = vmatpush1.msra.mxu0 0.0
        %4598 = vmatprep.subr.mxu0 0.0
        %4599 = vmatpush1.msra.mxu0 0.0
        %4600 = vmatprep.subr.mxu0 0.0
        %4601 = vmatpush1.msra.mxu0 0.0
        %4602 = vmatprep.subr.mxu0 0.0
        %4603 = vmatpush1.msra.mxu0 0.0
        %4604 = vmatprep.subr.mxu0 0.0
        %4605 = vmatpush1.msra.mxu0 0.0
        %4606 = vmatprep.subr.mxu0 0.0
        %4607 = vmatpush1.msra.mxu0 0.0
        %4608 = vmatprep.subr.mxu0 0.0
        %4609 = vmatpush1.msra.mxu0 0.0
        %4610 = vmatprep.subr.mxu0 0.0
        %4611 = vmatpush1.msra.mxu0 0.0
        %4612 = vmatprep.subr.mxu0 0.0
        %4613 = vmatpush1.msra.mxu0 0.0
        %4614 = vmatprep.subr.mxu0 0.0
        %4615 = vmatpush1.msra.mxu0 0.0
        %4616 = vmatprep.subr.mxu0 0.0
        %4617 = vmatpush1.msra.mxu0 0.0
        %4618 = vmatprep.subr.mxu0 0.0
        %4619 = vmatpush1.msra.mxu0 0.0
        %4620 = vmatprep.subr.mxu0 0.0
        %4621 = vmatpush1.msra.mxu0 0.0
        %4622 = vmatprep.subr.mxu0 0.0
        %4623 = vmatpush1.msra.mxu0 0.0
        %4624 = vmatprep.subr.mxu0 0.0
        %4625 = vmatpush1.msra.mxu0 0.0
        %4626 = vmatprep.subr.mxu0 0.0
        %4627 = vmatpush1.msra.mxu0 0.0
        %4628 = vmatprep.subr.mxu0 0.0
        %4629 = vmatpush1.msra.mxu0 0.0
        %4630 = vmatprep.subr.mxu0 0.0
        %4631 = vmatpush1.msra.mxu0 0.0
        %4632 = vmatprep.mubr.f32.mxu0 0.0
        %4633 = vmatmul.mubr.f32.gmra.mrb[0].mxu0 %v4566
        %v4634 = vpop.f32.mrb[0].mxu0
        %v4635 = vadd.f32 %v4562, %v4634
        %v4636 = vpop.f32.mrb[0].mxu0
        %4637 = vdwg.mxu0
        %v4638 = vsel %vm1241, %v3595, 0
        %4640 = vmatprep.subr.mxu0 0.0
        %4641 = vmatpush1.msra.mxu0 %v3441
        %4642 = vmatprep.subr.mxu0 0.0
        %4643 = vmatpush1.msra.mxu0 0.0
        %4644 = vmatprep.subr.mxu0 0.0
        %4645 = vmatpush1.msra.mxu0 0.0
        %4646 = vmatprep.subr.mxu0 0.0
        %4647 = vmatpush1.msra.mxu0 0.0
        %4648 = vmatprep.subr.mxu0 0.0
        %4649 = vmatpush1.msra.mxu0 0.0
        %4650 = vmatprep.subr.mxu0 0.0
        %4651 = vmatpush1.msra.mxu0 0.0
        %4652 = vmatprep.subr.mxu0 0.0
        %4653 = vmatpush1.msra.mxu0 0.0
        %4654 = vmatprep.subr.mxu0 0.0
        %4655 = vmatpush1.msra.mxu0 0.0
        %4656 = vmatprep.subr.mxu0 0.0
        %4657 = vmatpush1.msra.mxu0 0.0
        %4658 = vmatprep.subr.mxu0 0.0
        %4659 = vmatpush1.msra.mxu0 0.0
        %4660 = vmatprep.subr.mxu0 0.0
        %4661 = vmatpush1.msra.mxu0 0.0
        %4662 = vmatprep.subr.mxu0 0.0
        %4663 = vmatpush1.msra.mxu0 0.0
        %4664 = vmatprep.subr.mxu0 0.0
        %4665 = vmatpush1.msra.mxu0 0.0
        %4666 = vmatprep.subr.mxu0 0.0
        %4667 = vmatpush1.msra.mxu0 0.0
        %4668 = vmatprep.subr.mxu0 0.0
        %4669 = vmatpush1.msra.mxu0 0.0
        %4670 = vmatprep.subr.mxu0 0.0
        %4671 = vmatpush1.msra.mxu0 0.0
        %4672 = vmatprep.subr.mxu0 0.0
        %4673 = vmatpush1.msra.mxu0 0.0
        %4674 = vmatprep.subr.mxu0 0.0
        %4675 = vmatpush1.msra.mxu0 0.0
        %4676 = vmatprep.subr.mxu0 0.0
        %4677 = vmatpush1.msra.mxu0 0.0
        %4678 = vmatprep.subr.mxu0 0.0
        %4679 = vmatpush1.msra.mxu0 0.0
        %4680 = vmatprep.subr.mxu0 0.0
        %4681 = vmatpush1.msra.mxu0 0.0
        %4682 = vmatprep.subr.mxu0 0.0
        %4683 = vmatpush1.msra.mxu0 0.0
        %4684 = vmatprep.subr.mxu0 0.0
        %4685 = vmatpush1.msra.mxu0 0.0
        %4686 = vmatprep.subr.mxu0 0.0
        %4687 = vmatpush1.msra.mxu0 0.0
        %4688 = vmatprep.subr.mxu0 0.0
        %4689 = vmatpush1.msra.mxu0 0.0
        %4690 = vmatprep.subr.mxu0 0.0
        %4691 = vmatpush1.msra.mxu0 0.0
        %4692 = vmatprep.subr.mxu0 0.0
        %4693 = vmatpush1.msra.mxu0 0.0
        %4694 = vmatprep.subr.mxu0 0.0
        %4695 = vmatpush1.msra.mxu0 0.0
        %4696 = vmatprep.subr.mxu0 0.0
        %4697 = vmatpush1.msra.mxu0 0.0
        %4698 = vmatprep.subr.mxu0 0.0
        %4699 = vmatpush1.msra.mxu0 0.0
        %4700 = vmatprep.subr.mxu0 0.0
        %4701 = vmatpush1.msra.mxu0 0.0
        %4702 = vmatprep.subr.mxu0 0.0
        %4703 = vmatpush1.msra.mxu0 0.0
        %4704 = vmatprep.mubr.f32.mxu0 0.0
        %4705 = vmatmul.mubr.f32.gmra.mrb[0].mxu0 %v4638
        %v4706 = vpop.f32.mrb[0].mxu0
        %v4707 = vadd.f32 %v4563, %v4706
        %v4708 = vpop.f32.mrb[0].mxu0
        %4709 = vdwg.mxu0
        %v4710 = vsel %vm1241, %v3598, 0
        %4712 = vmatprep.subr.mxu0 0.0
        %4713 = vmatpush1.msra.mxu0 %v3442
        %4714 = vmatprep.subr.mxu0 0.0
        %4715 = vmatpush1.msra.mxu0 0.0
        %4716 = vmatprep.subr.mxu0 0.0
        %4717 = vmatpush1.msra.mxu0 0.0
        %4718 = vmatprep.subr.mxu0 0.0
        %4719 = vmatpush1.msra.mxu0 0.0
        %4720 = vmatprep.subr.mxu0 0.0
        %4721 = vmatpush1.msra.mxu0 0.0
        %4722 = vmatprep.subr.mxu0 0.0
        %4723 = vmatpush1.msra.mxu0 0.0
        %4724 = vmatprep.subr.mxu0 0.0
        %4725 = vmatpush1.msra.mxu0 0.0
        %4726 = vmatprep.subr.mxu0 0.0
        %4727 = vmatpush1.msra.mxu0 0.0
        %4728 = vmatprep.subr.mxu0 0.0
        %4729 = vmatpush1.msra.mxu0 0.0
        %4730 = vmatprep.subr.mxu0 0.0
        %4731 = vmatpush1.msra.mxu0 0.0
        %4732 = vmatprep.subr.mxu0 0.0
        %4733 = vmatpush1.msra.mxu0 0.0
        %4734 = vmatprep.subr.mxu0 0.0
        %4735 = vmatpush1.msra.mxu0 0.0
        %4736 = vmatprep.subr.mxu0 0.0
        %4737 = vmatpush1.msra.mxu0 0.0
        %4738 = vmatprep.subr.mxu0 0.0
        %4739 = vmatpush1.msra.mxu0 0.0
        %4740 = vmatprep.subr.mxu0 0.0
        %4741 = vmatpush1.msra.mxu0 0.0
        %4742 = vmatprep.subr.mxu0 0.0
        %4743 = vmatpush1.msra.mxu0 0.0
        %4744 = vmatprep.subr.mxu0 0.0
        %4745 = vmatpush1.msra.mxu0 0.0
        %4746 = vmatprep.subr.mxu0 0.0
        %4747 = vmatpush1.msra.mxu0 0.0
        %4748 = vmatprep.subr.mxu0 0.0
        %4749 = vmatpush1.msra.mxu0 0.0
        %4750 = vmatprep.subr.mxu0 0.0
        %4751 = vmatpush1.msra.mxu0 0.0
        %4752 = vmatprep.subr.mxu0 0.0
        %4753 = vmatpush1.msra.mxu0 0.0
        %4754 = vmatprep.subr.mxu0 0.0
        %4755 = vmatpush1.msra.mxu0 0.0
        %4756 = vmatprep.subr.mxu0 0.0
        %4757 = vmatpush1.msra.mxu0 0.0
        %4758 = vmatprep.subr.mxu0 0.0
        %4759 = vmatpush1.msra.mxu0 0.0
        %4760 = vmatprep.subr.mxu0 0.0
        %4761 = vmatpush1.msra.mxu0 0.0
        %4762 = vmatprep.subr.mxu0 0.0
        %4763 = vmatpush1.msra.mxu0 0.0
        %4764 = vmatprep.subr.mxu0 0.0
        %4765 = vmatpush1.msra.mxu0 0.0
        %4766 = vmatprep.subr.mxu0 0.0
        %4767 = vmatpush1.msra.mxu0 0.0
        %4768 = vmatprep.subr.mxu0 0.0
        %4769 = vmatpush1.msra.mxu0 0.0
        %4770 = vmatprep.subr.mxu0 0.0
        %4771 = vmatpush1.msra.mxu0 0.0
        %4772 = vmatprep.subr.mxu0 0.0
        %4773 = vmatpush1.msra.mxu0 0.0
        %4774 = vmatprep.subr.mxu0 0.0
        %4775 = vmatpush1.msra.mxu0 0.0
        %4776 = vmatprep.mubr.f32.mxu0 0.0
        %4777 = vmatmul.mubr.f32.gmra.mrb[0].mxu0 %v4710
        %v4778 = vpop.f32.mrb[0].mxu0
        %v4779 = vadd.f32 %v4564, %v4778
        %v4780 = vpop.f32.mrb[0].mxu0
        %4781 = vdwg.mxu0
        %v4782 = vsel %vm1241, %v3601, 0
        %4784 = vmatprep.subr.mxu0 0.0
        %4785 = vmatpush1.msra.mxu0 %v3443
        %4786 = vmatprep.subr.mxu0 0.0
        %4787 = vmatpush1.msra.mxu0 0.0
        %4788 = vmatprep.subr.mxu0 0.0
        %4789 = vmatpush1.msra.mxu0 0.0
        %4790 = vmatprep.subr.mxu0 0.0
        %4791 = vmatpush1.msra.mxu0 0.0
        %4792 = vmatprep.subr.mxu0 0.0
        %4793 = vmatpush1.msra.mxu0 0.0
        %4794 = vmatprep.subr.mxu0 0.0
        %4795 = vmatpush1.msra.mxu0 0.0
        %4796 = vmatprep.subr.mxu0 0.0
        %4797 = vmatpush1.msra.mxu0 0.0
        %4798 = vmatprep.subr.mxu0 0.0
        %4799 = vmatpush1.msra.mxu0 0.0
        %4800 = vmatprep.subr.mxu0 0.0
        %4801 = vmatpush1.msra.mxu0 0.0
        %4802 = vmatprep.subr.mxu0 0.0
        %4803 = vmatpush1.msra.mxu0 0.0
        %4804 = vmatprep.subr.mxu0 0.0
        %4805 = vmatpush1.msra.mxu0 0.0
        %4806 = vmatprep.subr.mxu0 0.0
        %4807 = vmatpush1.msra.mxu0 0.0
        %4808 = vmatprep.subr.mxu0 0.0
        %4809 = vmatpush1.msra.mxu0 0.0
        %4810 = vmatprep.subr.mxu0 0.0
        %4811 = vmatpush1.msra.mxu0 0.0
        %4812 = vmatprep.subr.mxu0 0.0
        %4813 = vmatpush1.msra.mxu0 0.0
        %4814 = vmatprep.subr.mxu0 0.0
        %4815 = vmatpush1.msra.mxu0 0.0
        %4816 = vmatprep.subr.mxu0 0.0
        %4817 = vmatpush1.msra.mxu0 0.0
        %4818 = vmatprep.subr.mxu0 0.0
        %4819 = vmatpush1.msra.mxu0 0.0
        %4820 = vmatprep.subr.mxu0 0.0
        %4821 = vmatpush1.msra.mxu0 0.0
        %4822 = vmatprep.subr.mxu0 0.0
        %4823 = vmatpush1.msra.mxu0 0.0
        %4824 = vmatprep.subr.mxu0 0.0
        %4825 = vmatpush1.msra.mxu0 0.0
        %4826 = vmatprep.subr.mxu0 0.0
        %4827 = vmatpush1.msra.mxu0 0.0
        %4828 = vmatprep.subr.mxu0 0.0
        %4829 = vmatpush1.msra.mxu0 0.0
        %4830 = vmatprep.subr.mxu0 0.0
        %4831 = vmatpush1.msra.mxu0 0.0
        %4832 = vmatprep.subr.mxu0 0.0
        %4833 = vmatpush1.msra.mxu0 0.0
        %4834 = vmatprep.subr.mxu0 0.0
        %4835 = vmatpush1.msra.mxu0 0.0
        %4836 = vmatprep.subr.mxu0 0.0
        %4837 = vmatpush1.msra.mxu0 0.0
        %4838 = vmatprep.subr.mxu0 0.0
        %4839 = vmatpush1.msra.mxu0 0.0
        %4840 = vmatprep.subr.mxu0 0.0
        %4841 = vmatpush1.msra.mxu0 0.0
        %4842 = vmatprep.subr.mxu0 0.0
        %4843 = vmatpush1.msra.mxu0 0.0
        %4844 = vmatprep.subr.mxu0 0.0
        %4845 = vmatpush1.msra.mxu0 0.0
        %4846 = vmatprep.subr.mxu0 0.0
        %4847 = vmatpush1.msra.mxu0 0.0
        %4848 = vmatprep.mubr.f32.mxu0 0.0
        %4849 = vmatmul.mubr.f32.gmra.mrb[0].mxu0 %v4782
        %v4850 = vpop.f32.mrb[0].mxu0
        %v4851 = vadd.f32 %v4565, %v4850
        %v4852 = vpop.f32.mrb[0].mxu0
        %4853 = vdwg.mxu0
        %4854 = vset.pattern.permute.xlu0 1
        %4855 = vperm.xlu0 %4854, %v4430
        %v4856 = vpop.permute.xlu0 %4855
        %4858 = vset.pattern.permute.xlu0 1
        %4859 = vperm.xlu0 %4858, %v4462
        %v4860 = vpop.permute.xlu0 %4859
        %4862 = vset.pattern.permute.xlu0 1
        %4863 = vperm.xlu0 %4862, %v4494
        %v4864 = vpop.permute.xlu0 %4863
        %4866 = vset.pattern.permute.xlu0 1
        %4867 = vperm.xlu0 %4866, %v4526
        %v4868 = vpop.permute.xlu0 %4867
        %v4870 = vsel %vm2458, %v4856, 0.0
        %v4871 = vsel %vm2458, %v4860, 0.0
        %v4872 = vsel %vm2458, %v4864, 0.0
        %v4873 = vsel %vm2458, %v4868, 0.0
        %v4874 = vadd.f32 %v4635, %v4870
        %v4875 = vadd.f32 %v4707, %v4871
        %v4876 = vadd.f32 %v4779, %v4872
        %v4877 = vadd.f32 %v4851, %v4873
        %4878 = vset.pattern.permute.xlu0 2
        %4879 = vperm.xlu0 %4878, %v4430
        %v4880 = vpop.permute.xlu0 %4879
        %4882 = vset.pattern.permute.xlu0 2
        %4883 = vperm.xlu0 %4882, %v4462
        %v4884 = vpop.permute.xlu0 %4883
        %4886 = vset.pattern.permute.xlu0 2
        %4887 = vperm.xlu0 %4886, %v4494
        %v4888 = vpop.permute.xlu0 %4887
        %4890 = vset.pattern.permute.xlu0 2
        %4891 = vperm.xlu0 %4890, %v4526
        %v4892 = vpop.permute.xlu0 %4891
        %v4894 = vsel %vm2485, %v4880, 0.0
        %v4895 = vsel %vm2485, %v4884, 0.0
        %v4896 = vsel %vm2485, %v4888, 0.0
        %v4897 = vsel %vm2485, %v4892, 0.0
        %v4898 = vadd.f32 %v4874, %v4894
        %v4899 = vadd.f32 %v4875, %v4895
        %v4900 = vadd.f32 %v4876, %v4896
        %v4901 = vadd.f32 %v4877, %v4897
        %4902 = vset.pattern.permute.xlu0 3
        %4903 = vperm.xlu0 %4902, %v4430
        %v4904 = vpop.permute.xlu0 %4903
        %4906 = vset.pattern.permute.xlu0 3
        %4907 = vperm.xlu0 %4906, %v4462
        %v4908 = vpop.permute.xlu0 %4907
        %4910 = vset.pattern.permute.xlu0 3
        %4911 = vperm.xlu0 %4910, %v4494
        %v4912 = vpop.permute.xlu0 %4911
        %4914 = vset.pattern.permute.xlu0 3
        %4915 = vperm.xlu0 %4914, %v4526
        %v4916 = vpop.permute.xlu0 %4915
        %v4918 = vsel %vm2512, %v4904, 0.0
        %v4919 = vsel %vm2512, %v4908, 0.0
        %v4920 = vsel %vm2512, %v4912, 0.0
        %v4921 = vsel %vm2512, %v4916, 0.0
        %v4922 = vadd.f32 %v4898, %v4918
        %v4923 = vadd.f32 %v4899, %v4919
        %v4924 = vadd.f32 %v4900, %v4920
        %v4925 = vadd.f32 %v4901, %v4921
        %4926 = vset.pattern.permute.xlu0 4
        %4927 = vperm.xlu0 %4926, %v4430
        %v4928 = vpop.permute.xlu0 %4927
        %4930 = vset.pattern.permute.xlu0 4
        %4931 = vperm.xlu0 %4930, %v4462
        %v4932 = vpop.permute.xlu0 %4931
        %4934 = vset.pattern.permute.xlu0 4
        %4935 = vperm.xlu0 %4934, %v4494
        %v4936 = vpop.permute.xlu0 %4935
        %4938 = vset.pattern.permute.xlu0 4
        %4939 = vperm.xlu0 %4938, %v4526
        %v4940 = vpop.permute.xlu0 %4939
        %v4942 = vsel %vm2539, %v4928, 0.0
        %v4943 = vsel %vm2539, %v4932, 0.0
        %v4944 = vsel %vm2539, %v4936, 0.0
        %v4945 = vsel %vm2539, %v4940, 0.0
        %v4946 = vadd.f32 %v4922, %v4942
        %v4947 = vadd.f32 %v4923, %v4943
        %v4948 = vadd.f32 %v4924, %v4944
        %v4949 = vadd.f32 %v4925, %v4945
        %vm4950 = vcmp.eq.s32.totalorder %v2140, 5
        %v4951 = vsel %vm4950, 1, 0
        %vm4952 = vcmp.eq.s32.totalorder %v4951, 1
        %4953 = vset.pattern.permute.xlu0 5
        %4954 = vperm.xlu0 %4953, %v4430
        %v4955 = vpop.permute.xlu0 %4954
        %4957 = vset.pattern.permute.xlu0 5
        %4958 = vperm.xlu0 %4957, %v4462
        %v4959 = vpop.permute.xlu0 %4958
        %4961 = vset.pattern.permute.xlu0 5
        %4962 = vperm.xlu0 %4961, %v4494
        %v4963 = vpop.permute.xlu0 %4962
        %4965 = vset.pattern.permute.xlu0 5
        %4966 = vperm.xlu0 %4965, %v4526
        %v4967 = vpop.permute.xlu0 %4966
        %v4969 = vsel %vm4952, %v4955, 0.0
        %v4970 = vsel %vm4952, %v4959, 0.0
        %v4971 = vsel %vm4952, %v4963, 0.0
        %v4972 = vsel %vm4952, %v4967, 0.0
        %v4973 = vadd.f32 %v4946, %v4969
        %v4974 = vadd.f32 %v4947, %v4970
        %v4975 = vadd.f32 %v4948, %v4971
        %v4976 = vadd.f32 %v4949, %v4972
        %vm4977 = vcmp.eq.s32.totalorder %v2140, 6
        %v4978 = vsel %vm4977, 1, 0
        %vm4979 = vcmp.eq.s32.totalorder %v4978, 1
        %4980 = vset.pattern.permute.xlu0 6
        %4981 = vperm.xlu0 %4980, %v4430
        %v4982 = vpop.permute.xlu0 %4981
        %4984 = vset.pattern.permute.xlu0 6
        %4985 = vperm.xlu0 %4984, %v4462
        %v4986 = vpop.permute.xlu0 %4985
        %4988 = vset.pattern.permute.xlu0 6
        %4989 = vperm.xlu0 %4988, %v4494
        %v4990 = vpop.permute.xlu0 %4989
        %4992 = vset.pattern.permute.xlu0 6
        %4993 = vperm.xlu0 %4992, %v4526
        %v4994 = vpop.permute.xlu0 %4993
        %v4996 = vsel %vm4979, %v4982, 0.0
        %v4997 = vsel %vm4979, %v4986, 0.0
        %v4998 = vsel %vm4979, %v4990, 0.0
        %v4999 = vsel %vm4979, %v4994, 0.0
        %v5000 = vadd.f32 %v4973, %v4996
        %v5001 = vadd.f32 %v4974, %v4997
        %v5002 = vadd.f32 %v4975, %v4998
        %v5003 = vadd.f32 %v4976, %v4999
        %vm5004 = vcmp.eq.s32.totalorder %v2140, 7
        %v5005 = vsel %vm5004, 1, 0
        %vm5006 = vcmp.eq.s32.totalorder %v5005, 1
        %5007 = vset.pattern.permute.xlu0 7
        %5008 = vperm.xlu0 %5007, %v4430
        %v5009 = vpop.permute.xlu0 %5008
        %5011 = vset.pattern.permute.xlu0 7
        %5012 = vperm.xlu0 %5011, %v4462
        %v5013 = vpop.permute.xlu0 %5012
        %5015 = vset.pattern.permute.xlu0 7
        %5016 = vperm.xlu0 %5015, %v4494
        %v5017 = vpop.permute.xlu0 %5016
        %5019 = vset.pattern.permute.xlu0 7
        %5020 = vperm.xlu0 %5019, %v4526
        %v5021 = vpop.permute.xlu0 %5020
        %v5023 = vsel %vm5006, %v5009, 0.0
        %v5024 = vsel %vm5006, %v5013, 0.0
        %v5025 = vsel %vm5006, %v5017, 0.0
        %v5026 = vsel %vm5006, %v5021, 0.0
        %v5027 = vadd.f32 %v5000, %v5023
        %v5028 = vadd.f32 %v5001, %v5024
        %v5029 = vadd.f32 %v5002, %v5025
        %v5030 = vadd.f32 %v5003, %v5026
        %vm5031 = vcmp.eq.s32.totalorder %v2140, 8
        %v5032 = vsel %vm5031, 1, 0
        %vm5033 = vcmp.eq.s32.totalorder %v5032, 1
        %5034 = vset.pattern.permute.xlu0 8
        %5035 = vperm.xlu0 %5034, %v4430
        %v5036 = vpop.permute.xlu0 %5035
        %5038 = vset.pattern.permute.xlu0 8
        %5039 = vperm.xlu0 %5038, %v4462
        %v5040 = vpop.permute.xlu0 %5039
        %5042 = vset.pattern.permute.xlu0 8
        %5043 = vperm.xlu0 %5042, %v4494
        %v5044 = vpop.permute.xlu0 %5043
        %5046 = vset.pattern.permute.xlu0 8
        %5047 = vperm.xlu0 %5046, %v4526
        %v5048 = vpop.permute.xlu0 %5047
        %v5050 = vsel %vm5033, %v5036, 0.0
        %v5051 = vsel %vm5033, %v5040, 0.0
        %v5052 = vsel %vm5033, %v5044, 0.0
        %v5053 = vsel %vm5033, %v5048, 0.0
        %v5054 = vadd.f32 %v5027, %v5050
        %v5055 = vadd.f32 %v5028, %v5051
        %v5056 = vadd.f32 %v5029, %v5052
        %v5057 = vadd.f32 %v5030, %v5053
        %vm5058 = vcmp.lt.s32.totalorder %v2134, 10
        %v5059 = vsel %vm5058, 0.0, -1e+30
        %v5060 = vadd.f32 %v5054, %v5059
        %v5061 = vadd.f32 %v5055, %v5059
        %v5062 = vadd.f32 %v5056, %v5059
        %v5063 = vadd.f32 %v5057, %v5059
        %5064 = vmax.xlane.f32.xlu0 %v5060
        %v5065 = vpop.xlane.xlu0 %5064
        %5066 = vmax.xlane.f32.xlu0 %v5061
        %v5067 = vpop.xlane.xlu0 %5066
        %5068 = vmax.xlane.f32.xlu0 %v5062
        %v5069 = vpop.xlane.xlu0 %5068
        %5070 = vmax.xlane.f32.xlu0 %v5063
        %v5071 = vpop.xlane.xlu0 %5070
        %v5072 = vsub.f32 %v5060, %v5065
        %v5073 = vsub.f32 %v5061, %v5067
        %v5074 = vsub.f32 %v5062, %v5069
        %v5075 = vsub.f32 %v5063, %v5071
        %v5076 = vmul.f32 %v5072, 1.442695
        %v5077 = vpow.pop %v5076
        %v5078 = vmul.f32 %v5073, 1.442695
        %v5079 = vpow.pop %v5078
        %v5080 = vmul.f32 %v5074, 1.442695
        %v5081 = vpow.pop %v5080
        %v5082 = vmul.f32 %v5075, 1.442695
        %v5083 = vpow.pop %v5082
        %5084 = vadd.xlane.f32.xlu0 %v5077
        %v5085 = vpop.xlane.xlu0 %5084
        %5086 = vadd.xlane.f32.xlu0 %v5079
        %v5087 = vpop.xlane.xlu0 %5086
        %5088 = vadd.xlane.f32.xlu0 %v5081
        %v5089 = vpop.xlane.xlu0 %5088
        %5090 = vadd.xlane.f32.xlu0 %v5083
        %v5091 = vpop.xlane.xlu0 %5090
        %v5092 = vrcp.pop %v5085
        %v5093 = vmul.f32 %v5077, %v5092
        %v5094 = vrcp.pop %v5087
        %v5095 = vmul.f32 %v5079, %v5094
        %v5096 = vrcp.pop %v5089
        %v5097 = vmul.f32 %v5081, %v5096
        %v5098 = vrcp.pop %v5091
        %v5099 = vmul.f32 %v5083, %v5098
        %5100 = vxpose.xlu0.b32.start [1/16] %v3444, 128
        %5101 = vxpose.xlu0.b32.cont [2/16] %v3445, 128
        %5102 = vxpose.xlu0.b32.cont [3/16] %v3446, 128
        %5103 = vxpose.xlu0.b32.cont [4/16] %v3447, 128
        %5104 = vxpose.xlu0.b32.cont [5/16] %v3448, 128
        %5105 = vxpose.xlu0.b32.cont [6/16] %v3449, 128
        %5106 = vxpose.xlu0.b32.cont [7/16] %v3450, 128
        %5107 = vxpose.xlu0.b32.cont [8/16] %v3451, 128
        %5108 = vxpose.xlu0.b32.cont [9/16] %v3452, 128
        %5109 = vxpose.xlu0.b32.cont [10/16] %v3453, 128
        %5110 = vxpose.xlu0.b32.cont [11/16] %v3454, 128
        %5111 = vxpose.xlu0.b32.cont [12/16] %v3455, 128
        %5112 = vxpose.xlu0.b32.cont [13/16] %v3456, 128
        %5113 = vxpose.xlu0.b32.cont [14/16] %v3457, 128
        %5114 = vxpose.xlu0.b32.cont [15/16] %v3458, 128
        %5115 = vxpose.xlu0.b32.end [16/16] %v3459, 128
        %v5116 = vpop.trf.xlu0
        %v5117 = vpop.trf.xlu0
        %v5118 = vpop.trf.xlu0
        %v5119 = vpop.trf.xlu0
        %v5120 = vpop.trf.xlu0
        %v5121 = vpop.trf.xlu0
        %v5122 = vpop.trf.xlu0
        %v5123 = vpop.trf.xlu0
        %v5124 = vpop.trf.xlu0
        %v5125 = vpop.trf.xlu0
        %v5126 = vpop.trf.xlu0
        %v5127 = vpop.trf.xlu0
        %v5128 = vpop.trf.xlu0
        %v5129 = vpop.trf.xlu0
        %v5130 = vpop.trf.xlu0
        %v5131 = vpop.trf.xlu0
        %5132 = vmatprep.subr.mxu0 0.0
        %5133 = vmatpush1.xpose.msra.mxu0 %v5093
        %5134 = vmatprep.subr.mxu0 0.0
        %5135 = vmatpush1.xpose.msra.mxu0 0.0
        %5136 = vmatprep.subr.mxu0 0.0
        %5137 = vmatpush1.xpose.msra.mxu0 0.0
        %5138 = vmatprep.subr.mxu0 0.0
        %5139 = vmatpush1.xpose.msra.mxu0 0.0
        %5140 = vmatprep.subr.mxu0 0.0
        %5141 = vmatpush1.xpose.msra.mxu0 0.0
        %5142 = vmatprep.subr.mxu0 0.0
        %5143 = vmatpush1.xpose.msra.mxu0 0.0
        %5144 = vmatprep.subr.mxu0 0.0
        %5145 = vmatpush1.xpose.msra.mxu0 0.0
        %5146 = vmatprep.subr.mxu0 0.0
        %5147 = vmatpush1.xpose.msra.mxu0 0.0
        %5148 = vmatprep.subr.mxu0 0.0
        %5149 = vmatpush1.xpose.msra.mxu0 0.0
        %5150 = vmatprep.subr.mxu0 0.0
        %5151 = vmatpush1.xpose.msra.mxu0 0.0
        %5152 = vmatprep.subr.mxu0 0.0
        %5153 = vmatpush1.xpose.msra.mxu0 0.0
        %5154 = vmatprep.subr.mxu0 0.0
        %5155 = vmatpush1.xpose.msra.mxu0 0.0
        %5156 = vmatprep.subr.mxu0 0.0
        %5157 = vmatpush1.xpose.msra.mxu0 0.0
        %5158 = vmatprep.subr.mxu0 0.0
        %5159 = vmatpush1.xpose.msra.mxu0 0.0
        %5160 = vmatprep.subr.mxu0 0.0
        %5161 = vmatpush1.xpose.msra.mxu0 0.0
        %5162 = vmatprep.subr.mxu0 0.0
        %5163 = vmatpush1.xpose.msra.mxu0 0.0
        %5164 = vmatprep.subr.mxu0 0.0
        %5165 = vmatpush1.xpose.msra.mxu0 0.0
        %5166 = vmatprep.subr.mxu0 0.0
        %5167 = vmatpush1.xpose.msra.mxu0 0.0
        %5168 = vmatprep.subr.mxu0 0.0
        %5169 = vmatpush1.xpose.msra.mxu0 0.0
        %5170 = vmatprep.subr.mxu0 0.0
        %5171 = vmatpush1.xpose.msra.mxu0 0.0
        %5172 = vmatprep.subr.mxu0 0.0
        %5173 = vmatpush1.xpose.msra.mxu0 0.0
        %5174 = vmatprep.subr.mxu0 0.0
        %5175 = vmatpush1.xpose.msra.mxu0 0.0
        %5176 = vmatprep.subr.mxu0 0.0
        %5177 = vmatpush1.xpose.msra.mxu0 0.0
        %5178 = vmatprep.subr.mxu0 0.0
        %5179 = vmatpush1.xpose.msra.mxu0 0.0
        %5180 = vmatprep.subr.mxu0 0.0
        %5181 = vmatpush1.xpose.msra.mxu0 0.0
        %5182 = vmatprep.subr.mxu0 0.0
        %5183 = vmatpush1.xpose.msra.mxu0 0.0
        %5184 = vmatprep.subr.mxu0 0.0
        %5185 = vmatpush1.xpose.msra.mxu0 0.0
        %5186 = vmatprep.subr.mxu0 0.0
        %5187 = vmatpush1.xpose.msra.mxu0 0.0
        %5188 = vmatprep.subr.mxu0 0.0
        %5189 = vmatpush1.xpose.msra.mxu0 0.0
        %5190 = vmatprep.subr.mxu0 0.0
        %5191 = vmatpush1.xpose.msra.mxu0 0.0
        %5192 = vmatprep.subr.mxu0 0.0
        %5193 = vmatpush1.xpose.msra.mxu0 0.0
        %5194 = vmatprep.subr.mxu0 0.0
        %5195 = vmatpush1.xpose.msra.mxu0 0.0
        %5196 = vmatprep.mubr.f32.mxu0 0.0
        %5197 = vmatmul.mubr.f32.gmra.mrb[0].mxu0 %v5116
        %v5198 = vpop.f32.mrb[0].mxu0
        %v5199 = vadd.f32 0.0, %v5198
        %v5200 = vpop.f32.mrb[0].mxu0
        %5201 = vdwg.mxu0
        %5202 = vxpose.xlu0.b32.start [1/16] %v3460, 128
        %5203 = vxpose.xlu0.b32.cont [2/16] %v3461, 128
        %5204 = vxpose.xlu0.b32.cont [3/16] %v3462, 128
        %5205 = vxpose.xlu0.b32.cont [4/16] %v3463, 128
        %5206 = vxpose.xlu0.b32.cont [5/16] %v3464, 128
        %5207 = vxpose.xlu0.b32.cont [6/16] %v3465, 128
        %5208 = vxpose.xlu0.b32.cont [7/16] %v3466, 128
        %5209 = vxpose.xlu0.b32.cont [8/16] %v3467, 128
        %5210 = vxpose.xlu0.b32.cont [9/16] %v3468, 128
        %5211 = vxpose.xlu0.b32.cont [10/16] %v3469, 128
        %5212 = vxpose.xlu0.b32.cont [11/16] %v3470, 128
        %5213 = vxpose.xlu0.b32.cont [12/16] %v3471, 128
        %5214 = vxpose.xlu0.b32.cont [13/16] %v3472, 128
        %5215 = vxpose.xlu0.b32.cont [14/16] %v3473, 128
        %5216 = vxpose.xlu0.b32.cont [15/16] %v3474, 128
        %5217 = vxpose.xlu0.b32.end [16/16] %v3475, 128
        %v5218 = vpop.trf.xlu0
        %v5219 = vpop.trf.xlu0
        %v5220 = vpop.trf.xlu0
        %v5221 = vpop.trf.xlu0
        %v5222 = vpop.trf.xlu0
        %v5223 = vpop.trf.xlu0
        %v5224 = vpop.trf.xlu0
        %v5225 = vpop.trf.xlu0
        %v5226 = vpop.trf.xlu0
        %v5227 = vpop.trf.xlu0
        %v5228 = vpop.trf.xlu0
        %v5229 = vpop.trf.xlu0
        %v5230 = vpop.trf.xlu0
        %v5231 = vpop.trf.xlu0
        %v5232 = vpop.trf.xlu0
        %v5233 = vpop.trf.xlu0
        %5234 = vmatprep.subr.mxu0 0.0
        %5235 = vmatpush1.xpose.msra.mxu0 %v5095
        %5236 = vmatprep.subr.mxu0 0.0
        %5237 = vmatpush1.xpose.msra.mxu0 0.0
        %5238 = vmatprep.subr.mxu0 0.0
        %5239 = vmatpush1.xpose.msra.mxu0 0.0
        %5240 = vmatprep.subr.mxu0 0.0
        %5241 = vmatpush1.xpose.msra.mxu0 0.0
        %5242 = vmatprep.subr.mxu0 0.0
        %5243 = vmatpush1.xpose.msra.mxu0 0.0
        %5244 = vmatprep.subr.mxu0 0.0
        %5245 = vmatpush1.xpose.msra.mxu0 0.0
        %5246 = vmatprep.subr.mxu0 0.0
        %5247 = vmatpush1.xpose.msra.mxu0 0.0
        %5248 = vmatprep.subr.mxu0 0.0
        %5249 = vmatpush1.xpose.msra.mxu0 0.0
        %5250 = vmatprep.subr.mxu0 0.0
        %5251 = vmatpush1.xpose.msra.mxu0 0.0
        %5252 = vmatprep.subr.mxu0 0.0
        %5253 = vmatpush1.xpose.msra.mxu0 0.0
        %5254 = vmatprep.subr.mxu0 0.0
        %5255 = vmatpush1.xpose.msra.mxu0 0.0
        %5256 = vmatprep.subr.mxu0 0.0
        %5257 = vmatpush1.xpose.msra.mxu0 0.0
        %5258 = vmatprep.subr.mxu0 0.0
        %5259 = vmatpush1.xpose.msra.mxu0 0.0
        %5260 = vmatprep.subr.mxu0 0.0
        %5261 = vmatpush1.xpose.msra.mxu0 0.0
        %5262 = vmatprep.subr.mxu0 0.0
        %5263 = vmatpush1.xpose.msra.mxu0 0.0
        %5264 = vmatprep.subr.mxu0 0.0
        %5265 = vmatpush1.xpose.msra.mxu0 0.0
        %5266 = vmatprep.subr.mxu0 0.0
        %5267 = vmatpush1.xpose.msra.mxu0 0.0
        %5268 = vmatprep.subr.mxu0 0.0
        %5269 = vmatpush1.xpose.msra.mxu0 0.0
        %5270 = vmatprep.subr.mxu0 0.0
        %5271 = vmatpush1.xpose.msra.mxu0 0.0
        %5272 = vmatprep.subr.mxu0 0.0
        %5273 = vmatpush1.xpose.msra.mxu0 0.0
        %5274 = vmatprep.subr.mxu0 0.0
        %5275 = vmatpush1.xpose.msra.mxu0 0.0
        %5276 = vmatprep.subr.mxu0 0.0
        %5277 = vmatpush1.xpose.msra.mxu0 0.0
        %5278 = vmatprep.subr.mxu0 0.0
        %5279 = vmatpush1.xpose.msra.mxu0 0.0
        %5280 = vmatprep.subr.mxu0 0.0
        %5281 = vmatpush1.xpose.msra.mxu0 0.0
        %5282 = vmatprep.subr.mxu0 0.0
        %5283 = vmatpush1.xpose.msra.mxu0 0.0
        %5284 = vmatprep.subr.mxu0 0.0
        %5285 = vmatpush1.xpose.msra.mxu0 0.0
        %5286 = vmatprep.subr.mxu0 0.0
        %5287 = vmatpush1.xpose.msra.mxu0 0.0
        %5288 = vmatprep.subr.mxu0 0.0
        %5289 = vmatpush1.xpose.msra.mxu0 0.0
        %5290 = vmatprep.subr.mxu0 0.0
        %5291 = vmatpush1.xpose.msra.mxu0 0.0
        %5292 = vmatprep.subr.mxu0 0.0
        %5293 = vmatpush1.xpose.msra.mxu0 0.0
        %5294 = vmatprep.subr.mxu0 0.0
        %5295 = vmatpush1.xpose.msra.mxu0 0.0
        %5296 = vmatprep.subr.mxu0 0.0
        %5297 = vmatpush1.xpose.msra.mxu0 0.0
        %5298 = vmatprep.mubr.f32.mxu0 0.0
        %5299 = vmatmul.mubr.f32.gmra.mrb[0].mxu0 %v5218
        %v5300 = vpop.f32.mrb[0].mxu0
        %v5301 = vadd.f32 0.0, %v5300
        %v5302 = vpop.f32.mrb[0].mxu0
        %5303 = vdwg.mxu0
        %5304 = vxpose.xlu0.b32.start [1/16] %v3476, 128
        %5305 = vxpose.xlu0.b32.cont [2/16] %v3477, 128
        %5306 = vxpose.xlu0.b32.cont [3/16] %v3478, 128
        %5307 = vxpose.xlu0.b32.cont [4/16] %v3479, 128
        %5308 = vxpose.xlu0.b32.cont [5/16] %v3480, 128
        %5309 = vxpose.xlu0.b32.cont [6/16] %v3481, 128
        %5310 = vxpose.xlu0.b32.cont [7/16] %v3482, 128
        %5311 = vxpose.xlu0.b32.cont [8/16] %v3483, 128
        %5312 = vxpose.xlu0.b32.cont [9/16] %v3484, 128
        %5313 = vxpose.xlu0.b32.cont [10/16] %v3485, 128
        %5314 = vxpose.xlu0.b32.cont [11/16] %v3486, 128
        %5315 = vxpose.xlu0.b32.cont [12/16] %v3487, 128
        %5316 = vxpose.xlu0.b32.cont [13/16] %v3488, 128
        %5317 = vxpose.xlu0.b32.cont [14/16] %v3489, 128
        %5318 = vxpose.xlu0.b32.cont [15/16] %v3490, 128
        %5319 = vxpose.xlu0.b32.end [16/16] %v3491, 128
        %v5320 = vpop.trf.xlu0
        %v5321 = vpop.trf.xlu0
        %v5322 = vpop.trf.xlu0
        %v5323 = vpop.trf.xlu0
        %v5324 = vpop.trf.xlu0
        %v5325 = vpop.trf.xlu0
        %v5326 = vpop.trf.xlu0
        %v5327 = vpop.trf.xlu0
        %v5328 = vpop.trf.xlu0
        %v5329 = vpop.trf.xlu0
        %v5330 = vpop.trf.xlu0
        %v5331 = vpop.trf.xlu0
        %v5332 = vpop.trf.xlu0
        %v5333 = vpop.trf.xlu0
        %v5334 = vpop.trf.xlu0
        %v5335 = vpop.trf.xlu0
        %5336 = vmatprep.subr.mxu0 0.0
        %5337 = vmatpush1.xpose.msra.mxu0 %v5097
        %5338 = vmatprep.subr.mxu0 0.0
        %5339 = vmatpush1.xpose.msra.mxu0 0.0
        %5340 = vmatprep.subr.mxu0 0.0
        %5341 = vmatpush1.xpose.msra.mxu0 0.0
        %5342 = vmatprep.subr.mxu0 0.0
        %5343 = vmatpush1.xpose.msra.mxu0 0.0
        %5344 = vmatprep.subr.mxu0 0.0
        %5345 = vmatpush1.xpose.msra.mxu0 0.0
        %5346 = vmatprep.subr.mxu0 0.0
        %5347 = vmatpush1.xpose.msra.mxu0 0.0
        %5348 = vmatprep.subr.mxu0 0.0
        %5349 = vmatpush1.xpose.msra.mxu0 0.0
        %5350 = vmatprep.subr.mxu0 0.0
        %5351 = vmatpush1.xpose.msra.mxu0 0.0
        %5352 = vmatprep.subr.mxu0 0.0
        %5353 = vmatpush1.xpose.msra.mxu0 0.0
        %5354 = vmatprep.subr.mxu0 0.0
        %5355 = vmatpush1.xpose.msra.mxu0 0.0
        %5356 = vmatprep.subr.mxu0 0.0
        %5357 = vmatpush1.xpose.msra.mxu0 0.0
        %5358 = vmatprep.subr.mxu0 0.0
        %5359 = vmatpush1.xpose.msra.mxu0 0.0
        %5360 = vmatprep.subr.mxu0 0.0
        %5361 = vmatpush1.xpose.msra.mxu0 0.0
        %5362 = vmatprep.subr.mxu0 0.0
        %5363 = vmatpush1.xpose.msra.mxu0 0.0
        %5364 = vmatprep.subr.mxu0 0.0
        %5365 = vmatpush1.xpose.msra.mxu0 0.0
        %5366 = vmatprep.subr.mxu0 0.0
        %5367 = vmatpush1.xpose.msra.mxu0 0.0
        %5368 = vmatprep.subr.mxu0 0.0
        %5369 = vmatpush1.xpose.msra.mxu0 0.0
        %5370 = vmatprep.subr.mxu0 0.0
        %5371 = vmatpush1.xpose.msra.mxu0 0.0
        %5372 = vmatprep.subr.mxu0 0.0
        %5373 = vmatpush1.xpose.msra.mxu0 0.0
        %5374 = vmatprep.subr.mxu0 0.0
        %5375 = vmatpush1.xpose.msra.mxu0 0.0
        %5376 = vmatprep.subr.mxu0 0.0
        %5377 = vmatpush1.xpose.msra.mxu0 0.0
        %5378 = vmatprep.subr.mxu0 0.0
        %5379 = vmatpush1.xpose.msra.mxu0 0.0
        %5380 = vmatprep.subr.mxu0 0.0
        %5381 = vmatpush1.xpose.msra.mxu0 0.0
        %5382 = vmatprep.subr.mxu0 0.0
        %5383 = vmatpush1.xpose.msra.mxu0 0.0
        %5384 = vmatprep.subr.mxu0 0.0
        %5385 = vmatpush1.xpose.msra.mxu0 0.0
        %5386 = vmatprep.subr.mxu0 0.0
        %5387 = vmatpush1.xpose.msra.mxu0 0.0
        %5388 = vmatprep.subr.mxu0 0.0
        %5389 = vmatpush1.xpose.msra.mxu0 0.0
        %5390 = vmatprep.subr.mxu0 0.0
        %5391 = vmatpush1.xpose.msra.mxu0 0.0
        %5392 = vmatprep.subr.mxu0 0.0
        %5393 = vmatpush1.xpose.msra.mxu0 0.0
        %5394 = vmatprep.subr.mxu0 0.0
        %5395 = vmatpush1.xpose.msra.mxu0 0.0
        %5396 = vmatprep.subr.mxu0 0.0
        %5397 = vmatpush1.xpose.msra.mxu0 0.0
        %5398 = vmatprep.subr.mxu0 0.0
        %5399 = vmatpush1.xpose.msra.mxu0 0.0
        %5400 = vmatprep.mubr.f32.mxu0 0.0
        %5401 = vmatmul.mubr.f32.gmra.mrb[0].mxu0 %v5320
        %v5402 = vpop.f32.mrb[0].mxu0
        %v5403 = vadd.f32 0.0, %v5402
        %v5404 = vpop.f32.mrb[0].mxu0
        %5405 = vdwg.mxu0
        %5406 = vxpose.xlu0.b32.start [1/16] %v3492, 128
        %5407 = vxpose.xlu0.b32.cont [2/16] %v3493, 128
        %5408 = vxpose.xlu0.b32.cont [3/16] %v3494, 128
        %5409 = vxpose.xlu0.b32.cont [4/16] %v3495, 128
        %5410 = vxpose.xlu0.b32.cont [5/16] %v3496, 128
        %5411 = vxpose.xlu0.b32.cont [6/16] %v3497, 128
        %5412 = vxpose.xlu0.b32.cont [7/16] %v3498, 128
        %5413 = vxpose.xlu0.b32.cont [8/16] %v3499, 128
        %5414 = vxpose.xlu0.b32.cont [9/16] %v3500, 128
        %5415 = vxpose.xlu0.b32.cont [10/16] %v3501, 128
        %5416 = vxpose.xlu0.b32.cont [11/16] %v3502, 128
        %5417 = vxpose.xlu0.b32.cont [12/16] %v3503, 128
        %5418 = vxpose.xlu0.b32.cont [13/16] %v3504, 128
        %5419 = vxpose.xlu0.b32.cont [14/16] %v3505, 128
        %5420 = vxpose.xlu0.b32.cont [15/16] %v3506, 128
        %5421 = vxpose.xlu0.b32.end [16/16] %v3507, 128
        %v5422 = vpop.trf.xlu0
        %v5423 = vpop.trf.xlu0
        %v5424 = vpop.trf.xlu0
        %v5425 = vpop.trf.xlu0
        %v5426 = vpop.trf.xlu0
        %v5427 = vpop.trf.xlu0
        %v5428 = vpop.trf.xlu0
        %v5429 = vpop.trf.xlu0
        %v5430 = vpop.trf.xlu0
        %v5431 = vpop.trf.xlu0
        %v5432 = vpop.trf.xlu0
        %v5433 = vpop.trf.xlu0
        %v5434 = vpop.trf.xlu0
        %v5435 = vpop.trf.xlu0
        %v5436 = vpop.trf.xlu0
        %v5437 = vpop.trf.xlu0
        %5438 = vmatprep.subr.mxu0 0.0
        %5439 = vmatpush1.xpose.msra.mxu0 %v5099
        %5440 = vmatprep.subr.mxu0 0.0
        %5441 = vmatpush1.xpose.msra.mxu0 0.0
        %5442 = vmatprep.subr.mxu0 0.0
        %5443 = vmatpush1.xpose.msra.mxu0 0.0
        %5444 = vmatprep.subr.mxu0 0.0
        %5445 = vmatpush1.xpose.msra.mxu0 0.0
        %5446 = vmatprep.subr.mxu0 0.0
        %5447 = vmatpush1.xpose.msra.mxu0 0.0
        %5448 = vmatprep.subr.mxu0 0.0
        %5449 = vmatpush1.xpose.msra.mxu0 0.0
        %5450 = vmatprep.subr.mxu0 0.0
        %5451 = vmatpush1.xpose.msra.mxu0 0.0
        %5452 = vmatprep.subr.mxu0 0.0
        %5453 = vmatpush1.xpose.msra.mxu0 0.0
        %5454 = vmatprep.subr.mxu0 0.0
        %5455 = vmatpush1.xpose.msra.mxu0 0.0
        %5456 = vmatprep.subr.mxu0 0.0
        %5457 = vmatpush1.xpose.msra.mxu0 0.0
        %5458 = vmatprep.subr.mxu0 0.0
        %5459 = vmatpush1.xpose.msra.mxu0 0.0
        %5460 = vmatprep.subr.mxu0 0.0
        %5461 = vmatpush1.xpose.msra.mxu0 0.0
        %5462 = vmatprep.subr.mxu0 0.0
        %5463 = vmatpush1.xpose.msra.mxu0 0.0
        %5464 = vmatprep.subr.mxu0 0.0
        %5465 = vmatpush1.xpose.msra.mxu0 0.0
        %5466 = vmatprep.subr.mxu0 0.0
        %5467 = vmatpush1.xpose.msra.mxu0 0.0
        %5468 = vmatprep.subr.mxu0 0.0
        %5469 = vmatpush1.xpose.msra.mxu0 0.0
        %5470 = vmatprep.subr.mxu0 0.0
        %5471 = vmatpush1.xpose.msra.mxu0 0.0
        %5472 = vmatprep.subr.mxu0 0.0
        %5473 = vmatpush1.xpose.msra.mxu0 0.0
        %5474 = vmatprep.subr.mxu0 0.0
        %5475 = vmatpush1.xpose.msra.mxu0 0.0
        %5476 = vmatprep.subr.mxu0 0.0
        %5477 = vmatpush1.xpose.msra.mxu0 0.0
        %5478 = vmatprep.subr.mxu0 0.0
        %5479 = vmatpush1.xpose.msra.mxu0 0.0
        %5480 = vmatprep.subr.mxu0 0.0
        %5481 = vmatpush1.xpose.msra.mxu0 0.0
        %5482 = vmatprep.subr.mxu0 0.0
        %5483 = vmatpush1.xpose.msra.mxu0 0.0
        %5484 = vmatprep.subr.mxu0 0.0
        %5485 = vmatpush1.xpose.msra.mxu0 0.0
        %5486 = vmatprep.subr.mxu0 0.0
        %5487 = vmatpush1.xpose.msra.mxu0 0.0
        %5488 = vmatprep.subr.mxu0 0.0
        %5489 = vmatpush1.xpose.msra.mxu0 0.0
        %5490 = vmatprep.subr.mxu0 0.0
        %5491 = vmatpush1.xpose.msra.mxu0 0.0
        %5492 = vmatprep.subr.mxu0 0.0
        %5493 = vmatpush1.xpose.msra.mxu0 0.0
        %5494 = vmatprep.subr.mxu0 0.0
        %5495 = vmatpush1.xpose.msra.mxu0 0.0
        %5496 = vmatprep.subr.mxu0 0.0
        %5497 = vmatpush1.xpose.msra.mxu0 0.0
        %5498 = vmatprep.subr.mxu0 0.0
        %5499 = vmatpush1.xpose.msra.mxu0 0.0
        %5500 = vmatprep.subr.mxu0 0.0
        %5501 = vmatpush1.xpose.msra.mxu0 0.0
        %5502 = vmatprep.mubr.f32.mxu0 0.0
        %5503 = vmatmul.mubr.f32.gmra.mrb[0].mxu0 %v5422
        %v5504 = vpop.f32.mrb[0].mxu0
        %v5505 = vadd.f32 0.0, %v5504
        %v5506 = vpop.f32.mrb[0].mxu0
        %5507 = vdwg.mxu0
        %5508 = vxpose.xlu0.b32.start [1/16] %v5199, 128
        %5509 = vxpose.xlu0.b32.cont [2/16] 0.0, 128
        %5510 = vxpose.xlu0.b32.cont [3/16] 0.0, 128
        %5511 = vxpose.xlu0.b32.cont [4/16] 0.0, 128
        %5512 = vxpose.xlu0.b32.cont [5/16] 0.0, 128
        %5513 = vxpose.xlu0.b32.cont [6/16] 0.0, 128
        %5514 = vxpose.xlu0.b32.cont [7/16] 0.0, 128
        %5515 = vxpose.xlu0.b32.cont [8/16] 0.0, 128
        %5516 = vxpose.xlu0.b32.cont [9/16] 0.0, 128
        %5517 = vxpose.xlu0.b32.cont [10/16] 0.0, 128
        %5518 = vxpose.xlu0.b32.cont [11/16] 0.0, 128
        %5519 = vxpose.xlu0.b32.cont [12/16] 0.0, 128
        %5520 = vxpose.xlu0.b32.cont [13/16] 0.0, 128
        %5521 = vxpose.xlu0.b32.cont [14/16] 0.0, 128
        %5522 = vxpose.xlu0.b32.cont [15/16] 0.0, 128
        %5523 = vxpose.xlu0.b32.end [16/16] 0.0, 128
        %v5524 = vpop.trf.xlu0
        %v5525 = vpop.trf.xlu0
        %v5526 = vpop.trf.xlu0
        %v5527 = vpop.trf.xlu0
        %v5528 = vpop.trf.xlu0
        %v5529 = vpop.trf.xlu0
        %v5530 = vpop.trf.xlu0
        %v5531 = vpop.trf.xlu0
        %v5532 = vpop.trf.xlu0
        %v5533 = vpop.trf.xlu0
        %v5534 = vpop.trf.xlu0
        %v5535 = vpop.trf.xlu0
        %v5536 = vpop.trf.xlu0
        %v5537 = vpop.trf.xlu0
        %v5538 = vpop.trf.xlu0
        %v5539 = vpop.trf.xlu0
        %5540 = vxpose.xlu0.b32.start [1/16] %v5301, 128
        %5541 = vxpose.xlu0.b32.cont [2/16] 0.0, 128
        %5542 = vxpose.xlu0.b32.cont [3/16] 0.0, 128
        %5543 = vxpose.xlu0.b32.cont [4/16] 0.0, 128
        %5544 = vxpose.xlu0.b32.cont [5/16] 0.0, 128
        %5545 = vxpose.xlu0.b32.cont [6/16] 0.0, 128
        %5546 = vxpose.xlu0.b32.cont [7/16] 0.0, 128
        %5547 = vxpose.xlu0.b32.cont [8/16] 0.0, 128
        %5548 = vxpose.xlu0.b32.cont [9/16] 0.0, 128
        %5549 = vxpose.xlu0.b32.cont [10/16] 0.0, 128
        %5550 = vxpose.xlu0.b32.cont [11/16] 0.0, 128
        %5551 = vxpose.xlu0.b32.cont [12/16] 0.0, 128
        %5552 = vxpose.xlu0.b32.cont [13/16] 0.0, 128
        %5553 = vxpose.xlu0.b32.cont [14/16] 0.0, 128
        %5554 = vxpose.xlu0.b32.cont [15/16] 0.0, 128
        %5555 = vxpose.xlu0.b32.end [16/16] 0.0, 128
        %v5556 = vpop.trf.xlu0
        %v5557 = vpop.trf.xlu0
        %v5558 = vpop.trf.xlu0
        %v5559 = vpop.trf.xlu0
        %v5560 = vpop.trf.xlu0
        %v5561 = vpop.trf.xlu0
        %v5562 = vpop.trf.xlu0
        %v5563 = vpop.trf.xlu0
        %v5564 = vpop.trf.xlu0
        %v5565 = vpop.trf.xlu0
        %v5566 = vpop.trf.xlu0
        %v5567 = vpop.trf.xlu0
        %v5568 = vpop.trf.xlu0
        %v5569 = vpop.trf.xlu0
        %v5570 = vpop.trf.xlu0
        %v5571 = vpop.trf.xlu0
        %5572 = vxpose.xlu0.b32.start [1/16] %v5403, 128
        %5573 = vxpose.xlu0.b32.cont [2/16] 0.0, 128
        %5574 = vxpose.xlu0.b32.cont [3/16] 0.0, 128
        %5575 = vxpose.xlu0.b32.cont [4/16] 0.0, 128
        %5576 = vxpose.xlu0.b32.cont [5/16] 0.0, 128
        %5577 = vxpose.xlu0.b32.cont [6/16] 0.0, 128
        %5578 = vxpose.xlu0.b32.cont [7/16] 0.0, 128
        %5579 = vxpose.xlu0.b32.cont [8/16] 0.0, 128
        %5580 = vxpose.xlu0.b32.cont [9/16] 0.0, 128
        %5581 = vxpose.xlu0.b32.cont [10/16] 0.0, 128
        %5582 = vxpose.xlu0.b32.cont [11/16] 0.0, 128
        %5583 = vxpose.xlu0.b32.cont [12/16] 0.0, 128
        %5584 = vxpose.xlu0.b32.cont [13/16] 0.0, 128
        %5585 = vxpose.xlu0.b32.cont [14/16] 0.0, 128
        %5586 = vxpose.xlu0.b32.cont [15/16] 0.0, 128
        %5587 = vxpose.xlu0.b32.end [16/16] 0.0, 128
        %v5588 = vpop.trf.xlu0
        %v5589 = vpop.trf.xlu0
        %v5590 = vpop.trf.xlu0
        %v5591 = vpop.trf.xlu0
        %v5592 = vpop.trf.xlu0
        %v5593 = vpop.trf.xlu0
        %v5594 = vpop.trf.xlu0
        %v5595 = vpop.trf.xlu0
        %v5596 = vpop.trf.xlu0
        %v5597 = vpop.trf.xlu0
        %v5598 = vpop.trf.xlu0
        %v5599 = vpop.trf.xlu0
        %v5600 = vpop.trf.xlu0
        %v5601 = vpop.trf.xlu0
        %v5602 = vpop.trf.xlu0
        %v5603 = vpop.trf.xlu0
        %5604 = vxpose.xlu0.b32.start [1/16] %v5505, 128
        %5605 = vxpose.xlu0.b32.cont [2/16] 0.0, 128
        %5606 = vxpose.xlu0.b32.cont [3/16] 0.0, 128
        %5607 = vxpose.xlu0.b32.cont [4/16] 0.0, 128
        %5608 = vxpose.xlu0.b32.cont [5/16] 0.0, 128
        %5609 = vxpose.xlu0.b32.cont [6/16] 0.0, 128
        %5610 = vxpose.xlu0.b32.cont [7/16] 0.0, 128
        %5611 = vxpose.xlu0.b32.cont [8/16] 0.0, 128
        %5612 = vxpose.xlu0.b32.cont [9/16] 0.0, 128
        %5613 = vxpose.xlu0.b32.cont [10/16] 0.0, 128
        %5614 = vxpose.xlu0.b32.cont [11/16] 0.0, 128
        %5615 = vxpose.xlu0.b32.cont [12/16] 0.0, 128
        %5616 = vxpose.xlu0.b32.cont [13/16] 0.0, 128
        %5617 = vxpose.xlu0.b32.cont [14/16] 0.0, 128
        %5618 = vxpose.xlu0.b32.cont [15/16] 0.0, 128
        %5619 = vxpose.xlu0.b32.end [16/16] 0.0, 128
        %v5620 = vpop.trf.xlu0
        %v5621 = vpop.trf.xlu0
        %v5622 = vpop.trf.xlu0
        %v5623 = vpop.trf.xlu0
        %v5624 = vpop.trf.xlu0
        %v5625 = vpop.trf.xlu0
        %v5626 = vpop.trf.xlu0
        %v5627 = vpop.trf.xlu0
        %v5628 = vpop.trf.xlu0
        %v5629 = vpop.trf.xlu0
        %v5630 = vpop.trf.xlu0
        %v5631 = vpop.trf.xlu0
        %v5632 = vpop.trf.xlu0
        %v5633 = vpop.trf.xlu0
        %v5634 = vpop.trf.xlu0
        %v5635 = vpop.trf.xlu0
        %v5636 = vcombine.low %v5524, %v5588
        %v5637 = vcombine.high %v5524, %v5588
        %v5639 = vunpack.c.l.s4 1983009808
        %v5640 = vunpack.c.0.s8 %v5639
        %v5641 = vlaneseq
        %v5642 = vshrl.u32 %v5641, 7
        %v5643 = vsub.s32 %v5640, %v5642
        %v5644 = vrot.slane %v5636, %v5643
        %v5646 = vunpack.c.l.s4 1983009808
        %v5647 = vunpack.c.0.s8 %v5646
        %v5648 = vlaneseq
        %v5649 = vshrl.u32 %v5648, 7
        %v5650 = vsub.s32 %v5647, %v5649
        %v5651 = vrot.slane %v5637, %v5650
        %v5652 = vcombine.low %v5556, %v5620
        %v5653 = vcombine.high %v5556, %v5620
        %v5655 = vunpack.c.l.s4 1983009808
        %v5656 = vunpack.c.0.s8 %v5655
        %v5657 = vlaneseq
        %v5658 = vshrl.u32 %v5657, 7
        %v5659 = vsub.s32 %v5656, %v5658
        %v5660 = vrot.slane %v5652, %v5659
        %v5662 = vunpack.c.l.s4 1983009808
        %v5663 = vunpack.c.0.s8 %v5662
        %v5664 = vlaneseq
        %v5665 = vshrl.u32 %v5664, 7
        %v5666 = vsub.s32 %v5663, %v5665
        %v5667 = vrot.slane %v5653, %v5666
        %v5668 = vcombine.low %v5644, %v5660
        %v5669 = vcombine.high %v5644, %v5660
        %v5671 = vunpack.c.l.s4 1934713408
        %v5672 = vunpack.c.0.s8 %v5671
        %v5673 = vlaneseq
        %v5674 = vshrl.u32 %v5673, 7
        %v5675 = vsub.s32 %v5672, %v5674
        %v5676 = vrot.slane %v5668, %v5675
        %v5678 = vunpack.c.l.s4 1934713408
        %v5679 = vunpack.c.0.s8 %v5678
        %v5680 = vlaneseq
        %v5681 = vshrl.u32 %v5680, 7
        %v5682 = vsub.s32 %v5679, %v5681
        %v5683 = vrot.slane %v5669, %v5682
        %v5684 = vcombine.low %v5651, %v5667
        %v5685 = vcombine.high %v5651, %v5667
        %v5687 = vunpack.c.l.s4 1934713408
        %v5688 = vunpack.c.0.s8 %v5687
        %v5689 = vlaneseq
        %v5690 = vshrl.u32 %v5689, 7
        %v5691 = vsub.s32 %v5688, %v5690
        %v5692 = vrot.slane %v5684, %v5691
        %v5694 = vunpack.c.l.s4 1934713408
        %v5695 = vunpack.c.0.s8 %v5694
        %v5696 = vlaneseq
        %v5697 = vshrl.u32 %v5696, 7
        %v5698 = vsub.s32 %v5695, %v5697
        %v5699 = vrot.slane %v5685, %v5698
        %v5700 = vcombine.high %v5676, 0.0
        %v5701 = vcombine.high %v5683, 0.0
        %v5702 = vcombine.high %v5692, 0.0
        %v5703 = vcombine.high %v5699, 0.0
        %v5704 = vcombine.low %v5676, %v5683
        %v5706 = vunpack.c.l.s4 1983009808
        %v5707 = vunpack.c.0.s8 %v5706
        %v5708 = vlaneseq
        %v5709 = vshrl.u32 %v5708, 7
        %v5710 = vsub.s32 %v5707, %v5709
        %v5711 = vrot.slane %v5704, %v5710
        %v5712 = vcombine.low %v5700, %v5701
        %v5714 = vunpack.c.l.s4 1983009808
        %v5715 = vunpack.c.0.s8 %v5714
        %v5716 = vlaneseq
        %v5717 = vshrl.u32 %v5716, 7
        %v5718 = vsub.s32 %v5715, %v5717
        %v5719 = vrot.slane %v5712, %v5718
        %v5720 = vcombine.low %v5692, %v5699
        %v5722 = vunpack.c.l.s4 1983009808
        %v5723 = vunpack.c.0.s8 %v5722
        %v5724 = vlaneseq
        %v5725 = vshrl.u32 %v5724, 7
        %v5726 = vsub.s32 %v5723, %v5725
        %v5727 = vrot.slane %v5720, %v5726
        %v5728 = vcombine.low %v5702, %v5703
        %v5730 = vunpack.c.l.s4 1983009808
        %v5731 = vunpack.c.0.s8 %v5730
        %v5732 = vlaneseq
        %v5733 = vshrl.u32 %v5732, 7
        %v5734 = vsub.s32 %v5731, %v5733
        %v5735 = vrot.slane %v5728, %v5734
        %v5736 = vcombine.low %v5711, %v5719
        %v5737 = vcombine.high %v5711, %v5719
        %v5739 = vunpack.c.l.s4 1934713408
        %v5740 = vunpack.c.0.s8 %v5739
        %v5741 = vlaneseq
        %v5742 = vshrl.u32 %v5741, 7
        %v5743 = vsub.s32 %v5740, %v5742
        %v5744 = vrot.slane %v5736, %v5743
        %v5746 = vunpack.c.l.s4 1934713408
        %v5747 = vunpack.c.0.s8 %v5746
        %v5748 = vlaneseq
        %v5749 = vshrl.u32 %v5748, 7
        %v5750 = vsub.s32 %v5747, %v5749
        %v5751 = vrot.slane %v5737, %v5750
        %v5752 = vcombine.low %v5727, %v5735
        %v5753 = vcombine.high %v5727, %v5735
        %v5755 = vunpack.c.l.s4 1934713408
        %v5756 = vunpack.c.0.s8 %v5755
        %v5757 = vlaneseq
        %v5758 = vshrl.u32 %v5757, 7
        %v5759 = vsub.s32 %v5756, %v5758
        %v5760 = vrot.slane %v5752, %v5759
        %v5762 = vunpack.c.l.s4 1934713408
        %v5763 = vunpack.c.0.s8 %v5762
        %v5764 = vlaneseq
        %v5765 = vshrl.u32 %v5764, 7
        %v5766 = vsub.s32 %v5763, %v5765
        %v5767 = vrot.slane %v5753, %v5766
        %v5768 = vcombine.low %v5744, %v5760
        %v5769 = vcombine.high %v5744, %v5760
        %v5770 = vcombine.low %v5751, %v5767
        %v5771 = vcombine.high %v5751, %v5767
        %5773 = vrot.lane.b32.xlu0 %v5769, 8
        %v5774 = vpop.permute.xlu0 %5773
        %5777 = vrot.lane.b32.xlu0 %v5770, 16
        %v5778 = vpop.permute.xlu0 %5777
        %5781 = vrot.lane.b32.xlu0 %v5771, 24
        %v5782 = vpop.permute.xlu0 %5781
        %v5784 = vsel %vm1241, %v5768, %v5774
        %v5785 = vsel %vm1247, %v5784, %v5778
        %v5786 = vsel %vm1253, %v5785, %v5782
        %v5787 = vld [vmem:[%s14] sm:$0xff]
        %v5788 = vld [vmem:[%s14 + $0x8] sm:$0xff]
        %v5789 = vld [vmem:[%s14 + $0x10] sm:$0xff]
        %v5790 = vld [vmem:[%s14 + $0x18] sm:$0xff]
        %v5791 = vld [vmem:[%s15] sm:$0x1]
        %v5793 = vlaneseq
        %v5794 = vshrl.u32 %v5793, 7
        %v5795 = vsub.s32 0, %v5794
        %v5796 = vrot.slane %v5791, %v5795
        %v5799 = vsel %vm933, %v5786, 0
        %5801 = vmatprep.subr.mxu0 0.0
        %5802 = vmatpush1.msra.mxu0 %v5787
        %5803 = vmatprep.subr.mxu0 0.0
        %5804 = vmatpush1.msra.mxu0 %v5788
        %5805 = vmatprep.subr.mxu0 0.0
        %5806 = vmatpush1.msra.mxu0 %v5789
        %5807 = vmatprep.subr.mxu0 0.0
        %5808 = vmatpush1.msra.mxu0 %v5790
        %5809 = vmatprep.subr.mxu0 0.0
        %5810 = vmatpush1.msra.mxu0 0.0
        %5811 = vmatprep.subr.mxu0 0.0
        %5812 = vmatpush1.msra.mxu0 0.0
        %5813 = vmatprep.subr.mxu0 0.0
        %5814 = vmatpush1.msra.mxu0 0.0
        %5815 = vmatprep.subr.mxu0 0.0
        %5816 = vmatpush1.msra.mxu0 0.0
        %5817 = vmatprep.subr.mxu0 0.0
        %5818 = vmatpush1.msra.mxu0 0.0
        %5819 = vmatprep.subr.mxu0 0.0
        %5820 = vmatpush1.msra.mxu0 0.0
        %5821 = vmatprep.subr.mxu0 0.0
        %5822 = vmatpush1.msra.mxu0 0.0
        %5823 = vmatprep.subr.mxu0 0.0
        %5824 = vmatpush1.msra.mxu0 0.0
        %5825 = vmatprep.subr.mxu0 0.0
        %5826 = vmatpush1.msra.mxu0 0.0
        %5827 = vmatprep.subr.mxu0 0.0
        %5828 = vmatpush1.msra.mxu0 0.0
        %5829 = vmatprep.subr.mxu0 0.0
        %5830 = vmatpush1.msra.mxu0 0.0
        %5831 = vmatprep.subr.mxu0 0.0
        %5832 = vmatpush1.msra.mxu0 0.0
        %5833 = vmatprep.subr.mxu0 0.0
        %5834 = vmatpush1.msra.mxu0 0.0
        %5835 = vmatprep.subr.mxu0 0.0
        %5836 = vmatpush1.msra.mxu0 0.0
        %5837 = vmatprep.subr.mxu0 0.0
        %5838 = vmatpush1.msra.mxu0 0.0
        %5839 = vmatprep.subr.mxu0 0.0
        %5840 = vmatpush1.msra.mxu0 0.0
        %5841 = vmatprep.subr.mxu0 0.0
        %5842 = vmatpush1.msra.mxu0 0.0
        %5843 = vmatprep.subr.mxu0 0.0
        %5844 = vmatpush1.msra.mxu0 0.0
        %5845 = vmatprep.subr.mxu0 0.0
        %5846 = vmatpush1.msra.mxu0 0.0
        %5847 = vmatprep.subr.mxu0 0.0
        %5848 = vmatpush1.msra.mxu0 0.0
        %5849 = vmatprep.subr.mxu0 0.0
        %5850 = vmatpush1.msra.mxu0 0.0
        %5851 = vmatprep.subr.mxu0 0.0
        %5852 = vmatpush1.msra.mxu0 0.0
        %5853 = vmatprep.subr.mxu0 0.0
        %5854 = vmatpush1.msra.mxu0 0.0
        %5855 = vmatprep.subr.mxu0 0.0
        %5856 = vmatpush1.msra.mxu0 0.0
        %5857 = vmatprep.subr.mxu0 0.0
        %5858 = vmatpush1.msra.mxu0 0.0
        %5859 = vmatprep.subr.mxu0 0.0
        %5860 = vmatpush1.msra.mxu0 0.0
        %5861 = vmatprep.subr.mxu0 0.0
        %5862 = vmatpush1.msra.mxu0 0.0
        %5863 = vmatprep.subr.mxu0 0.0
        %5864 = vmatpush1.msra.mxu0 0.0
        %5865 = vmatprep.mubr.f32.mxu0 0.0
        %5866 = vmatmul.mubr.f32.gmra.mrb[0].mxu0 %v5799
        %v5867 = vpop.f32.mrb[0].mxu0
        %v5868 = vadd.f32 %v5796, %v5867
        %v5869 = vpop.f32.mrb[0].mxu0
        %5870 = vdwg.mxu0
        %v5871 = vadd.f32 %v3439, %v5868
        %v5872 = vld [vmem:[%s17] sm:$0x1]
        %v5873 = vld [vmem:[%s18] sm:$0x1]
        %v5874 = vsel %vm933, %v5871, 0.0
        %5875 = vadd.xlane.f32.xlu0 %v5874
        %v5876 = vpop.xlane.xlu0 %5875
        %v5877 = vmul.f32 %v5876, %v3415
        %v5878 = vsub.f32 %v5871, %v5877
        %v5879 = vmul.f32 %v5878, %v5878
        %v5880 = vsel %vm933, %v5879, 0.0
        %5881 = vadd.xlane.f32.xlu0 %v5880
        %v5882 = vpop.xlane.xlu0 %5881
        %v5883 = vmul.f32 %v5882, %v3415
        %v5884 = vadd.f32 %v5883, 1e-05
        %v5885 = vrsqrt.pop %v5884
        %v5886 = vmul.f32 %v5878, %v5885
        %v5888 = vlaneseq
        %v5889 = vshrl.u32 %v5888, 7
        %v5890 = vsub.s32 0, %v5889
        %v5891 = vrot.slane %v5872, %v5890
        %v5893 = vmul.f32 %v5886, %v5891
        %v5895 = vlaneseq
        %v5896 = vshrl.u32 %v5895, 7
        %v5897 = vsub.s32 0, %v5896
        %v5898 = vrot.slane %v5873, %v5897
        %v5900 = vadd.f32 %v5893, %v5898
        %v5901 = vld [vmem:[%s19] sm:$0xff]
        %v5902 = vld [vmem:[%s19 + $0x8] sm:$0xff]
        %v5903 = vld [vmem:[%s19 + $0x10] sm:$0xff]
        %v5904 = vld [vmem:[%s19 + $0x18] sm:$0xff]
        %v5905 = vld [vmem:[%s20] sm:$0x1]
        %v5907 = vlaneseq
        %v5908 = vshrl.u32 %v5907, 7
        %v5909 = vsub.s32 0, %v5908
        %v5910 = vrot.slane %v5905, %v5909
        %v5913 = vsel %vm933, %v5900, 0
        %5915 = vmatprep.subr.mxu0 0.0
        %5916 = vmatpush1.msra.mxu0 %v5901
        %5917 = vmatprep.subr.mxu0 0.0
        %5918 = vmatpush1.msra.mxu0 %v5902
        %5919 = vmatprep.subr.mxu0 0.0
        %5920 = vmatpush1.msra.mxu0 %v5903
        %5921 = vmatprep.subr.mxu0 0.0
        %5922 = vmatpush1.msra.mxu0 %v5904
        %5923 = vmatprep.subr.mxu0 0.0
        %5924 = vmatpush1.msra.mxu0 0.0
        %5925 = vmatprep.subr.mxu0 0.0
        %5926 = vmatpush1.msra.mxu0 0.0
        %5927 = vmatprep.subr.mxu0 0.0
        %5928 = vmatpush1.msra.mxu0 0.0
        %5929 = vmatprep.subr.mxu0 0.0
        %5930 = vmatpush1.msra.mxu0 0.0
        %5931 = vmatprep.subr.mxu0 0.0
        %5932 = vmatpush1.msra.mxu0 0.0
        %5933 = vmatprep.subr.mxu0 0.0
        %5934 = vmatpush1.msra.mxu0 0.0
        %5935 = vmatprep.subr.mxu0 0.0
        %5936 = vmatpush1.msra.mxu0 0.0
        %5937 = vmatprep.subr.mxu0 0.0
        %5938 = vmatpush1.msra.mxu0 0.0
        %5939 = vmatprep.subr.mxu0 0.0
        %5940 = vmatpush1.msra.mxu0 0.0
        %5941 = vmatprep.subr.mxu0 0.0
        %5942 = vmatpush1.msra.mxu0 0.0
        %5943 = vmatprep.subr.mxu0 0.0
        %5944 = vmatpush1.msra.mxu0 0.0
        %5945 = vmatprep.subr.mxu0 0.0
        %5946 = vmatpush1.msra.mxu0 0.0
        %5947 = vmatprep.subr.mxu0 0.0
        %5948 = vmatpush1.msra.mxu0 0.0
        %5949 = vmatprep.subr.mxu0 0.0
        %5950 = vmatpush1.msra.mxu0 0.0
        %5951 = vmatprep.subr.mxu0 0.0
        %5952 = vmatpush1.msra.mxu0 0.0
        %5953 = vmatprep.subr.mxu0 0.0
        %5954 = vmatpush1.msra.mxu0 0.0
        %5955 = vmatprep.subr.mxu0 0.0
        %5956 = vmatpush1.msra.mxu0 0.0
        %5957 = vmatprep.subr.mxu0 0.0
        %5958 = vmatpush1.msra.mxu0 0.0
        %5959 = vmatprep.subr.mxu0 0.0
        %5960 = vmatpush1.msra.mxu0 0.0
        %5961 = vmatprep.subr.mxu0 0.0
        %5962 = vmatpush1.msra.mxu0 0.0
        %5963 = vmatprep.subr.mxu0 0.0
        %5964 = vmatpush1.msra.mxu0 0.0
        %5965 = vmatprep.subr.mxu0 0.0
        %5966 = vmatpush1.msra.mxu0 0.0
        %5967 = vmatprep.subr.mxu0 0.0
        %5968 = vmatpush1.msra.mxu0 0.0
        %5969 = vmatprep.subr.mxu0 0.0
        %5970 = vmatpush1.msra.mxu0 0.0
        %5971 = vmatprep.subr.mxu0 0.0
        %5972 = vmatpush1.msra.mxu0 0.0
        %5973 = vmatprep.subr.mxu0 0.0
        %5974 = vmatpush1.msra.mxu0 0.0
        %5975 = vmatprep.subr.mxu0 0.0
        %5976 = vmatpush1.msra.mxu0 0.0
        %5977 = vmatprep.subr.mxu0 0.0
        %5978 = vmatpush1.msra.mxu0 0.0
        %5979 = vmatprep.mubr.f32.mxu0 0.0
        %5980 = vmatmul.mubr.f32.gmra.mrb[0].mxu0 %v5913
        %v5981 = vpop.f32.mrb[0].mxu0
        %v5982 = vadd.f32 %v5910, %v5981
        %v5983 = vpop.f32.mrb[0].mxu0
        %5984 = vdwg.mxu0
        %v5985 = vmax.f32 %v5982, 0.0
        %v5986 = vld [vmem:[%s21] sm:$0xff]
        %v5987 = vld [vmem:[%s21 + $0x8] sm:$0xff]
        %v5988 = vld [vmem:[%s21 + $0x10] sm:$0xff]
        %v5989 = vld [vmem:[%s21 + $0x18] sm:$0xff]
        %v5990 = vld [vmem:[%s21 + $0x20] sm:$0xff]
        %v5991 = vld [vmem:[%s21 + $0x28] sm:$0xff]
        %v5992 = vld [vmem:[%s21 + $0x30] sm:$0xff]
        %v5993 = vld [vmem:[%s21 + $0x38] sm:$0xff]
        %v5994 = vld [vmem:[%s22] sm:$0x1]
        %v5996 = vlaneseq
        %v5997 = vshrl.u32 %v5996, 7
        %v5998 = vsub.s32 0, %v5997
        %v5999 = vrot.slane %v5994, %v5998
        %vm6001 = vcmask 523264
        %v6003 = vsel %vm6001, %v5985, 0
        %6005 = vmatprep.subr.mxu0 0.0
        %6006 = vmatpush1.msra.mxu0 %v5986
        %6007 = vmatprep.subr.mxu0 0.0
        %6008 = vmatpush1.msra.mxu0 %v5987
        %6009 = vmatprep.subr.mxu0 0.0
        %6010 = vmatpush1.msra.mxu0 %v5988
        %6011 = vmatprep.subr.mxu0 0.0
        %6012 = vmatpush1.msra.mxu0 %v5989
        %6013 = vmatprep.subr.mxu0 0.0
        %6014 = vmatpush1.msra.mxu0 %v5990
        %6015 = vmatprep.subr.mxu0 0.0
        %6016 = vmatpush1.msra.mxu0 %v5991
        %6017 = vmatprep.subr.mxu0 0.0
        %6018 = vmatpush1.msra.mxu0 %v5992
        %6019 = vmatprep.subr.mxu0 0.0
        %6020 = vmatpush1.msra.mxu0 %v5993
        %6021 = vmatprep.subr.mxu0 0.0
        %6022 = vmatpush1.msra.mxu0 0.0
        %6023 = vmatprep.subr.mxu0 0.0
        %6024 = vmatpush1.msra.mxu0 0.0
        %6025 = vmatprep.subr.mxu0 0.0
        %6026 = vmatpush1.msra.mxu0 0.0
        %6027 = vmatprep.subr.mxu0 0.0
        %6028 = vmatpush1.msra.mxu0 0.0
        %6029 = vmatprep.subr.mxu0 0.0
        %6030 = vmatpush1.msra.mxu0 0.0
        %6031 = vmatprep.subr.mxu0 0.0
        %6032 = vmatpush1.msra.mxu0 0.0
        %6033 = vmatprep.subr.mxu0 0.0
        %6034 = vmatpush1.msra.mxu0 0.0
        %6035 = vmatprep.subr.mxu0 0.0
        %6036 = vmatpush1.msra.mxu0 0.0
        %6037 = vmatprep.subr.mxu0 0.0
        %6038 = vmatpush1.msra.mxu0 0.0
        %6039 = vmatprep.subr.mxu0 0.0
        %6040 = vmatpush1.msra.mxu0 0.0
        %6041 = vmatprep.subr.mxu0 0.0
        %6042 = vmatpush1.msra.mxu0 0.0
        %6043 = vmatprep.subr.mxu0 0.0
        %6044 = vmatpush1.msra.mxu0 0.0
        %6045 = vmatprep.subr.mxu0 0.0
        %6046 = vmatpush1.msra.mxu0 0.0
        %6047 = vmatprep.subr.mxu0 0.0
        %6048 = vmatpush1.msra.mxu0 0.0
        %6049 = vmatprep.subr.mxu0 0.0
        %6050 = vmatpush1.msra.mxu0 0.0
        %6051 = vmatprep.subr.mxu0 0.0
        %6052 = vmatpush1.msra.mxu0 0.0
        %6053 = vmatprep.subr.mxu0 0.0
        %6054 = vmatpush1.msra.mxu0 0.0
        %6055 = vmatprep.subr.mxu0 0.0
        %6056 = vmatpush1.msra.mxu0 0.0
        %6057 = vmatprep.subr.mxu0 0.0
        %6058 = vmatpush1.msra.mxu0 0.0
        %6059 = vmatprep.subr.mxu0 0.0
        %6060 = vmatpush1.msra.mxu0 0.0
        %6061 = vmatprep.subr.mxu0 0.0
        %6062 = vmatpush1.msra.mxu0 0.0
        %6063 = vmatprep.subr.mxu0 0.0
        %6064 = vmatpush1.msra.mxu0 0.0
        %6065 = vmatprep.subr.mxu0 0.0
        %6066 = vmatpush1.msra.mxu0 0.0
        %6067 = vmatprep.subr.mxu0 0.0
        %6068 = vmatpush1.msra.mxu0 0.0
        %6069 = vmatprep.mubr.f32.mxu0 0.0
        %6070 = vmatmul.mubr.f32.gmra.mrb[0].mxu0 %v6003
        %v6071 = vpop.f32.mrb[0].mxu0
        %v6072 = vadd.f32 %v5999, %v6071
        %v6073 = vpop.f32.mrb[0].mxu0
        %6074 = vdwg.mxu0
        %v6075 = vadd.f32 %v5900, %v6072
        %v6076 = vld [vmem:[%s23] sm:$0x1]
        %v6077 = vld [vmem:[%s24] sm:$0x1]
        %v6078 = vsel %vm933, %v6075, 0.0
        %6079 = vadd.xlane.f32.xlu0 %v6078
        %v6080 = vpop.xlane.xlu0 %6079
        %v6081 = vmul.f32 %v6080, %v3415
        %v6082 = vsub.f32 %v6075, %v6081
        %v6083 = vmul.f32 %v6082, %v6082
        %v6084 = vsel %vm933, %v6083, 0.0
        %6085 = vadd.xlane.f32.xlu0 %v6084
        %v6086 = vpop.xlane.xlu0 %6085
        %v6087 = vmul.f32 %v6086, %v3415
        %v6088 = vadd.f32 %v6087, 1e-05
        %v6089 = vrsqrt.pop %v6088
        %v6090 = vmul.f32 %v6082, %v6089
        %v6092 = vlaneseq
        %v6093 = vshrl.u32 %v6092, 7
        %v6094 = vsub.s32 0, %v6093
        %v6095 = vrot.slane %v6076, %v6094
        %v6097 = vmul.f32 %v6090, %v6095
        %v6099 = vlaneseq
        %v6100 = vshrl.u32 %v6099, 7
        %v6101 = vsub.s32 0, %v6100
        %v6102 = vrot.slane %v6077, %v6101
        %v6104 = vadd.f32 %v6097, %v6102
        %6105 = vst.msk [vmem:[%s872] sm:$0xff] %vm933, %v6104
        %6106 = vst [vmem:[%s879] sm:$0xff] %v5093
        %6107 = vst [vmem:[%s879 + $0x8] sm:$0xff] %v5095
        %6108 = vst [vmem:[%s879 + $0x10] sm:$0xff] %v5097
        %6109 = vst [vmem:[%s879 + $0x18] sm:$0xff] %v5099
        %s6110 = sand.u32 %s618, 1
        %s6111 = scalar_lea.sflag [#allocation3], %s6110
        %s6112 = sand.u32 %s618, 1
        %s6113 = smul.addr %s6112, 8
        %s6114 = scalar_lea.vmem [#allocation2], %s6113
        %s6115 = sand.u32 %s646, 1
        %s6116 = scalar_lea.sflag [#allocation5], %s6115
        %s6117 = sand.u32 %s646, 1
        %s6118 = smul.addr %s6117, 32
        %s6119 = scalar_lea.vmem [#allocation4], %s6118
        // Predicated region
        $region121: #{tpu_custom_call.1} parent=119 // pred_check
          %p6120 = pneg %p628
        $region122: #{tpu_custom_call.1} parent=119 // pred_check_branch
          %6122 = sbr.rel (%p6120) target = $region124
        $region123: #{tpu_custom_call.1} parent=119 // pred_region
          %s6124 = ssub.s32 128, 128
          %6125 = vsyncadd %s6111, %s6124
          %s6126 = smul.addr %s48, 2
          %s6127 = sadd.s32 %s49, %s6126
          %s6128 = smul.addr %s6127, 128
          %s6129 = scalar_lea.hbm %s25, %s6128
          %s6131 = sshll.u32 %s6114, 4
          %s6132 = int_to_ptr.vmem [resolvable:$true] %s6131
          %6134 = dma.vmem_to_hbm [thread:$0]  %s6132, 128, %s6129, %s6111
        $region124: #{tpu_custom_call.1} parent=119 // pred_fallthru
          _
        // Predicated region
        $region125: #{tpu_custom_call.1} parent=119 // pred_check
          %p6135 = pneg %p656
        $region126: #{tpu_custom_call.1} parent=119 // pred_check_branch
          %6137 = sbr.rel (%p6135) target = $region128
        $region127: #{tpu_custom_call.1} parent=119 // pred_region
          %s6139 = ssub.s32 512, 512
          %6140 = vsyncadd %s6116, %s6139
          %s6141 = smul.addr %s48, 8
          %s6142 = sadd.s32 %s49, %s6141
          %s6143 = smul.addr %s6142, 128
          %s6144 = scalar_lea.hbm %s26, %s6143
          %s6145 = sshll.u32 %s6119, 4
          %s6146 = int_to_ptr.vmem [resolvable:$true] %s6145
          %6151 = dma.vmem_to_hbm [thread:$0]  %s6146, 512, %s6144, %s6116, 128, 256, 8
        $region128: #{tpu_custom_call.1} parent=119 // pred_fallthru
          _
      $region120: #{tpu_custom_call.1} parent=5 // pred_fallthru
        _
      %p6152 = scmp.le.s32.totalorder 2, %s39
      // Predicated region
      $region129: #{tpu_custom_call.1} parent=5 // pred_check
        %p6153 = pneg %p6152
      $region130: #{tpu_custom_call.1} parent=5 // pred_check_branch
        %6155 = sbr.rel (%p6153) target = $region132
      $region131: #{tpu_custom_call.1} parent=5 // pred_region
        %s6156 = ssub.s32 %s39, 2
        // Predicated region
        $region133: #{tpu_custom_call.1} parent=131 // pred_check
          %p6157 = pneg %p634
        $region134: #{tpu_custom_call.1} parent=131 // pred_check_branch
          %6159 = sbr.rel (%p6157) target = $region136
        $region135: #{tpu_custom_call.1} parent=131 // pred_region
          %s6160 = sand.u32 %s619, 1
          %s6161 = scalar_lea.sflag [#allocation3], %s6160
          %s6162 = sand.u32 %s619, 1
          %s6163 = smul.addr %s6162, 8
          %s6164 = scalar_lea.vmem [#allocation2], %s6163
          %6165 = dma.done %s6161, 128
        $region136: #{tpu_custom_call.1} parent=131 // pred_fallthru
          _
        // Predicated region
        $region137: #{tpu_custom_call.1} parent=131 // pred_check
          %p6166 = pneg %p662
        $region138: #{tpu_custom_call.1} parent=131 // pred_check_branch
          %6168 = sbr.rel (%p6166) target = $region140
        $region139: #{tpu_custom_call.1} parent=131 // pred_region
          %s6169 = sand.u32 %s647, 1
          %s6170 = scalar_lea.sflag [#allocation5], %s6169
          %s6171 = sand.u32 %s647, 1
          %s6172 = smul.addr %s6171, 32
          %s6173 = scalar_lea.vmem [#allocation4], %s6172
          %6174 = dma.done %s6170, 512
        $region140: #{tpu_custom_call.1} parent=131 // pred_fallthru
          _
      $region132: #{tpu_custom_call.1} parent=5 // pred_fallthru
        _
    $region6: #{tpu_custom_call.1} parent=1 // loop_footer
      %s43 = sadd.s32 1, %s39
    $region7: #{tpu_custom_call.1} parent=1 // loop_footer_branch
      %38 = sbr.rel target = $region3
    $region8: #{tpu_custom_call.1} parent=1 // loop_exit
      _
    %6175 = vsyncpa [#allocation3], 1
    %s6176 = scalar_lea.sflag [#allocation3], 1
    %6177 = vsyncpa %s6176, 1
    %6178 = vsyncpa [#allocation5], 1
    %s6179 = scalar_lea.sflag [#allocation5], 1
    %6180 = vsyncpa %s6179, 1

</llo_original>
